<compile_context>
chip_gen: v5e
topology: v5e:2x2
jax: 0.10.0
libtpu: 0.0.40
codegen_flags: <defaults>
</compile_context>

<pallas_src>
import jax
import jax.numpy as jnp
from jax.experimental import pallas as pl
from jax.experimental.pallas import tpu as pltpu


LATENT, LATENT_PAD = 100, 128     # pad latent dim to a lane multiple
OUT, OUT_PAD = 784, 896           # pad output dim to a lane multiple (7 * 128)
HIDDEN = (256, 512, 1024)


def _round_up(x, m):
    return -(-x // m) * m


def _leaky_relu(x, slope=0.2):
    return jnp.where(x > 0, x, slope * x)


def _layer(h, w, b, activate):
    """One Linear layer: bf16 operands on the MXU, f32 accumulate + f32 epilogue."""
    h = jnp.dot(h.astype(jnp.bfloat16), w, preferred_element_type=jnp.float32) + b
    return _leaky_relu(h) if activate else jnp.tanh(h)


def _generator_kernel_blocked(x_ref, w0_ref, b0_ref, w1_ref, b1_ref,
                              w2_ref, b2_ref, w3_ref, b3_ref, out_ref):
    """Multi-tile path: all weights auto-pipelined, VMEM-resident (constant index)."""
    h = _layer(x_ref[...], w0_ref[...], b0_ref[...], True)
    h = _layer(h, w1_ref[...], b1_ref[...], True)
    h = _layer(h, w2_ref[...], b2_ref[...], True)
    out_ref[...] = _layer(h, w3_ref[...], b3_ref[...], False)


def _generator_kernel_fused_dma(x_ref, w0_ref, b0_ref, w1_ref, b1_ref,
                                w2_hbm, b2_ref, w3_hbm, b3_ref,
                                out_ref, w2_vmem, w3_vmem, sem):
    """Single-tile (small batch) path: start the big late-layer weight DMAs at kernel
    entry so they overlap with layer-0/1 compute instead of gating the first dot."""
    cp2 = pltpu.make_async_copy(w2_hbm, w2_vmem, sem.at[0])
    cp3 = pltpu.make_async_copy(w3_hbm, w3_vmem, sem.at[1])
    cp2.start()
    cp3.start()

    h = _layer(x_ref[...], w0_ref[...], b0_ref[...], True)
    h = _layer(h, w1_ref[...], b1_ref[...], True)

    cp2.wait()
    h = _layer(h, w2_vmem[...], b2_ref[...], True)

    cp3.wait()
    out_ref[...] = _layer(h, w3_vmem[...], b3_ref[...], False)


def prepare_params(params):
    """Pad + cast the (w [in,out], b [1,out]) params for the kernel. Done once."""
    (w0, b0), (w1, b1), (w2, b2), (w3, b3) = params
    w0p = jnp.pad(w0, ((0, LATENT_PAD - w0.shape[0]), (0, 0))).astype(jnp.bfloat16)
    w1p = w1.astype(jnp.bfloat16)
    w2p = w2.astype(jnp.bfloat16)
    w3p = jnp.pad(w3, ((0, 0), (0, OUT_PAD - w3.shape[1]))).astype(jnp.bfloat16)
    b3p = jnp.pad(b3, ((0, 0), (0, OUT_PAD - b3.shape[1])))      # biases stay f32
    return [(w0p, b0), (w1p, b1), (w2p, b2), (w3p, b3p)]


def _choose_block_m(B, max_block_m):
    max_block_m = max(16, (max_block_m // 16) * 16)
    # bf16 inputs pack 16 rows per vreg: keep the batch tile a multiple of 16.
    block_m = min(_round_up(B, 16), max_block_m)
    # Give the (parallel) batch grid at least two tiles whenever the batch allows it,
    # so both of v7x's TensorCores get grid steps.
    if B >= 32 and _round_up(B, block_m) // block_m < 2:
        block_m = _round_up(-(-B // 2), 16)
    return block_m


def generator_forward(x, prepared_params, *, max_block_m=512):
    """x: [B, 100] f32; prepared_params from prepare_params(). Returns [B, 784] f32."""
    B = x.shape[0]

    # Pad latent features 100 -> 128 with zeros (zero rows of w0 make this a no-op).
    x_p = jnp.pad(x, ((0, 0), (0, LATENT_PAD - x.shape[1])))

    block_m = _choose_block_m(B, max_block_m)
    b_pad = _round_up(B, block_m)
    if b_pad != B:
        x_p = jnp.pad(x_p, ((0, b_pad - B), (0, 0)))
    x_p = x_p.astype(jnp.bfloat16)

    grid = (b_pad // block_m,)
    num_tiles = grid[0]

    (w0, b0), (w1, b1), (w2, b2), (w3, b3) = prepared_params

    dims = [LATENT_PAD] + list(HIDDEN) + [OUT_PAD]
    flops = 2 * b_pad * sum(a * b for a, b in zip(dims[:-1], dims[1:]))
    weight_bytes = sum(int(w.size) * w.dtype.itemsize + int(b.size) * b.dtype.itemsize
                       for w, b in prepared_params)
    bytes_accessed = (int(x_p.size) * x_p.dtype.itemsize + weight_bytes
                      + b_pad * OUT_PAD * 4)
    cost = pl.CostEstimate(flops=flops,
                           transcendentals=b_pad * OUT_PAD,   # tanh
                           bytes_accessed=bytes_accessed)

    x_spec = pl.BlockSpec((block_m, LATENT_PAD), lambda i: (i, 0))
    out_spec = pl.BlockSpec((block_m, OUT_PAD), lambda i: (i, 0))
    out_shape = jax.ShapeDtypeStruct((b_pad, OUT_PAD), jnp.float32)

    def _const_spec(shape, single_buffer):
        # Constant index_map -> block stays VMEM-resident across batch tiles.
        if single_buffer:
            # Block index never changes, so double-buffering it is pure VMEM waste.
            return pl.BlockSpec(shape, lambda i: (0, 0),
                                pipeline_mode=pl.Buffered(buffer_count=1))
        return pl.BlockSpec(shape, lambda i: (0, 0))

    def _compiler_params(semantics, single_buffer):
        kwargs = dict(dimension_semantics=semantics)
        if not single_buffer:
            # Without single-buffered weight blocks, block_m=512 + f32 epilogues can
            # brush v5e's 16 MiB scoped-VMEM default; ask for a little headroom.
            kwargs["vmem_limit_bytes"] = 24 * 1024 * 1024
        return pltpu.CompilerParams(**kwargs)

    def _run(single_buffer):
        if num_tiles == 1:
            # Latency path: w2/w3 stay in HBM and are copied by the kernel itself.
            in_specs = [
                x_spec,
                _const_spec(w0.shape, single_buffer), _const_spec(b0.shape, single_buffer),
                _const_spec(w1.shape, single_buffer), _const_spec(b1.shape, single_buffer),
                pl.BlockSpec(memory_space=pl.ANY),    _const_spec(b2.shape, single_buffer),
                pl.BlockSpec(memory_space=pl.ANY),    _const_spec(b3.shape, single_buffer),
            ]
            return pl.pallas_call(
                _generator_kernel_fused_dma,
                out_shape=out_shape,
                grid=grid,
                in_specs=in_specs,
                out_specs=out_spec,
                scratch_shapes=[pltpu.VMEM(w2.shape, w2.dtype),
                                pltpu.VMEM(w3.shape, w3.dtype),
                                pltpu.SemaphoreType.DMA((2,))],
                compiler_params=_compiler_params(("arbitrary",), single_buffer),
                cost_estimate=cost,
            )(x_p, w0, b0, w1, b1, w2, b2, w3, b3)

        in_specs = [x_spec]
        for w, b in prepared_params:
            in_specs += [_const_spec(w.shape, single_buffer),
                         _const_spec(b.shape, single_buffer)]
        return pl.pallas_call(
            _generator_kernel_blocked,
            out_shape=out_shape,
            grid=grid,
            in_specs=in_specs,
            out_specs=out_spec,
            compiler_params=_compiler_params(("parallel",), single_buffer),
            cost_estimate=cost,
        )(x_p, w0, b0, w1, b1, w2, b2, w3, b3)

    try:
        out = _run(single_buffer=True)
    except Exception:
        # pipeline_mode=pl.Buffered(1) unsupported on this JAX build: fall back to
        # default double-buffered weight blocks (same math, slightly more VMEM).
        out = _run(single_buffer=False)

    return out[:B, :OUT]


def init_params(key):
    """Deterministic init mimicking nn.Linear default (uniform +/- 1/sqrt(fan_in))."""
    dims = [(LATENT, 256), (256, 512), (512, 1024), (1024, OUT)]
    params = []
    for (fan_in, fan_out) in dims:
        key, kw, kb = jax.random.split(key, 3)
        bound = 1.0 / jnp.sqrt(fan_in)
        w = jax.random.uniform(kw, (fan_in, fan_out), jnp.float32, -bound, bound)
        b = jax.random.uniform(kb, (1, fan_out), jnp.float32, -bound, bound)
        params.append((w, b))
    return params


def reference_forward(x, params, *, low_precision):
    h = x
    for i, (w, b) in enumerate(params):
        if low_precision:
            h = jnp.dot(h.astype(jnp.bfloat16), w.astype(jnp.bfloat16),
                        preferred_element_type=jnp.float32) + b
        else:
            h = h @ w + b
        if i < len(params) - 1:
            h = jnp.where(h > 0, h, 0.2 * h)
        else:
            h = jnp.tanh(h)
    return h


if __name__ == "__main__":
    key = jax.random.PRNGKey(0)
    key, kx = jax.random.split(key)
    params = init_params(key)
    prepared = prepare_params(params)

    # Small batch -> single-tile path (manual w2/w3 DMA overlap).
    batch = 8
    x = jax.random.normal(kx, (batch, LATENT), jnp.float32)   # latent noise vectors
    out = jax.block_until_ready(generator_forward(x, prepared))
    assert out.shape == (batch, OUT), out.shape

    ref_bf16 = reference_forward(x, params, low_precision=True)   # same numerics path
    ref_f32 = reference_forward(x, params, low_precision=False)   # full-precision sanity
    assert jnp.allclose(out, ref_bf16, atol=1e-3, rtol=1e-3), \
        float(jnp.max(jnp.abs(out - ref_bf16)))
    # bf16 weights vs f32 reference: expect ~1e-2 drift, fine for a GAN generator.
    assert jnp.allclose(out, ref_f32, atol=5e-2, rtol=5e-2), \
        float(jnp.max(jnp.abs(out - ref_f32)))

    # Larger batch -> multi-tile path (>= 2 parallel batch tiles, blocked weights).
    key, kx2 = jax.random.split(key)
    x2 = jax.random.normal(kx2, (40, LATENT), jnp.float32)
    out2 = jax.block_until_ready(generator_forward(x2, prepared))
    ref2 = reference_forward(x2, params, low_precision=True)
    assert out2.shape == (40, OUT), out2.shape
    assert jnp.allclose(out2, ref2, atol=1e-3, rtol=1e-3), \
        float(jnp.max(jnp.abs(out2 - ref2)))

    print("KERNEL_OK")
</pallas_src>

<mosaic_0001>
module attributes {stable_mosaic.version = 11 : i64} {
  func.func @_generator_kernel_fused_dma(%arg0: i32, %arg1: memref<16x128xbf16, #tpu.memory_space<vmem>>, %arg2: memref<128x256xbf16, #tpu.memory_space<vmem>>, %arg3: memref<1x256xf32, #tpu.memory_space<vmem>>, %arg4: memref<256x512xbf16, #tpu.memory_space<vmem>>, %arg5: memref<1x512xf32, #tpu.memory_space<vmem>>, %arg6: memref<512x1024xbf16, #tpu.memory_space<any>>, %arg7: memref<1x1024xf32, #tpu.memory_space<vmem>>, %arg8: memref<1024x896xbf16, #tpu.memory_space<any>>, %arg9: memref<1x896xf32, #tpu.memory_space<vmem>>, %arg10: memref<16x896xf32, #tpu.memory_space<vmem>>, %arg11: memref<512x1024xbf16, #tpu.memory_space<vmem>>, %arg12: memref<1024x896xbf16, #tpu.memory_space<vmem>>, %arg13: memref<2x!tpu.dma_semaphore, #tpu.memory_space<semaphore_mem>>) attributes {dimension_semantics = [#tpu.dimension_semantics<arbitrary>], iteration_bounds = array<i64: 1>, scalar_prefetch = 0 : i64, scratch_operands = 3 : i64, tpu.core_type = #tpu.core_type<tc>, window_params = [{transform_indices = @transform_0, window_bounds = array<i64: 16, 128>}, {pipeline_mode = #tpu.pipeline_mode<synchronous>, transform_indices = @transform_1, window_bounds = array<i64: 128, 256>}, {pipeline_mode = #tpu.pipeline_mode<synchronous>, transform_indices = @transform_2, window_bounds = array<i64: 1, 256>}, {pipeline_mode = #tpu.pipeline_mode<synchronous>, transform_indices = @transform_3, window_bounds = array<i64: 256, 512>}, {pipeline_mode = #tpu.pipeline_mode<synchronous>, transform_indices = @transform_4, window_bounds = array<i64: 1, 512>}, {}, {pipeline_mode = #tpu.pipeline_mode<synchronous>, transform_indices = @transform_6, window_bounds = array<i64: 1, 1024>}, {}, {pipeline_mode = #tpu.pipeline_mode<synchronous>, transform_indices = @transform_8, window_bounds = array<i64: 1, 896>}, {transform_indices = @transform_9, window_bounds = array<i64: 16, 896>}]} {
    %c0_i32 = arith.constant 0 : i32
    %0 = tpu.memref_slice %arg13[%c0_i32] : memref<2x!tpu.dma_semaphore, #tpu.memory_space<semaphore_mem>> -> memref<1x!tpu.dma_semaphore, #tpu.memory_space<semaphore_mem>>
    %1 = tpu.memref_squeeze %0 : memref<1x!tpu.dma_semaphore, #tpu.memory_space<semaphore_mem>> -> memref<!tpu.dma_semaphore, #tpu.memory_space<semaphore_mem>>
    tpu.enqueue_dma source(%arg6 : memref<512x1024xbf16, #tpu.memory_space<any>>) target(%arg11 : memref<512x1024xbf16, #tpu.memory_space<vmem>>) target_semaphore(%1 : memref<!tpu.dma_semaphore, #tpu.memory_space<semaphore_mem>>)
    %c1_i32 = arith.constant 1 : i32
    %2 = tpu.memref_slice %arg13[%c1_i32] : memref<2x!tpu.dma_semaphore, #tpu.memory_space<semaphore_mem>> -> memref<1x!tpu.dma_semaphore, #tpu.memory_space<semaphore_mem>>
    %3 = tpu.memref_squeeze %2 : memref<1x!tpu.dma_semaphore, #tpu.memory_space<semaphore_mem>> -> memref<!tpu.dma_semaphore, #tpu.memory_space<semaphore_mem>>
    tpu.enqueue_dma source(%arg8 : memref<1024x896xbf16, #tpu.memory_space<any>>) target(%arg12 : memref<1024x896xbf16, #tpu.memory_space<vmem>>) target_semaphore(%3 : memref<!tpu.dma_semaphore, #tpu.memory_space<semaphore_mem>>)
    %c0 = arith.constant 0 : index
    %c0_0 = arith.constant 0 : index
    %4 = vector.load %arg1[%c0, %c0_0] : memref<16x128xbf16, #tpu.memory_space<vmem>>, vector<16x128xbf16>
    %c0_1 = arith.constant 0 : index
    %c0_2 = arith.constant 0 : index
    %5 = vector.load %arg2[%c0_1, %c0_2] : memref<128x256xbf16, #tpu.memory_space<vmem>>, vector<128x256xbf16>
    %c0_3 = arith.constant 0 : index
    %c0_4 = arith.constant 0 : index
    %6 = vector.load %arg3[%c0_3, %c0_4] : memref<1x256xf32, #tpu.memory_space<vmem>>, vector<1x256xf32>
    %cst = arith.constant dense<0.000000e+00> : vector<16x256xf32>
    %7 = tpu.matmul %4, %5, %cst {dimension_numbers = #tpu.dot_dimension_numbers<[1], [0], [0], [1], [0, 0, 1, 1], [], []>} : vector<16x128xbf16>, vector<128x256xbf16>, vector<16x256xf32> -> vector<16x256xf32>
    %8 = vector.broadcast %6 : vector<1x256xf32> to vector<16x256xf32>
    %9 = arith.addf %7, %8 : vector<16x256xf32>
    %cst_5 = arith.constant 0.000000e+00 : f32
    %10 = vector.broadcast %cst_5 : f32 to vector<16x256xf32>
    %11 = arith.cmpf ogt, %9, %10 : vector<16x256xf32>
    %cst_6 = arith.constant 2.000000e-01 : f32
    %12 = vector.broadcast %cst_6 : f32 to vector<16x256xf32>
    %13 = arith.mulf %12, %9 : vector<16x256xf32>
    %14 = arith.select %11, %9, %13 : vector<16x256xi1>, vector<16x256xf32>
    %c0_7 = arith.constant 0 : index
    %c0_8 = arith.constant 0 : index
    %15 = vector.load %arg4[%c0_7, %c0_8] : memref<256x512xbf16, #tpu.memory_space<vmem>>, vector<256x512xbf16>
    %c0_9 = arith.constant 0 : index
    %c0_10 = arith.constant 0 : index
    %16 = vector.load %arg5[%c0_9, %c0_10] : memref<1x512xf32, #tpu.memory_space<vmem>>, vector<1x512xf32>
    %17 = arith.truncf %14 : vector<16x256xf32> to vector<16x256xbf16>
    %cst_11 = arith.constant dense<0.000000e+00> : vector<16x512xf32>
    %18 = tpu.matmul %17, %15, %cst_11 {dimension_numbers = #tpu.dot_dimension_numbers<[1], [0], [0], [1], [0, 0, 1, 1], [], []>} : vector<16x256xbf16>, vector<256x512xbf16>, vector<16x512xf32> -> vector<16x512xf32>
    %19 = vector.broadcast %16 : vector<1x512xf32> to vector<16x512xf32>
    %20 = arith.addf %18, %19 : vector<16x512xf32>
    %cst_12 = arith.constant 0.000000e+00 : f32
    %21 = vector.broadcast %cst_12 : f32 to vector<16x512xf32>
    %22 = arith.cmpf ogt, %20, %21 : vector<16x512xf32>
    %cst_13 = arith.constant 2.000000e-01 : f32
    %23 = vector.broadcast %cst_13 : f32 to vector<16x512xf32>
    %24 = arith.mulf %23, %20 : vector<16x512xf32>
    %25 = arith.select %22, %20, %24 : vector<16x512xi1>, vector<16x512xf32>
    %c0_i32_14 = arith.constant 0 : i32
    %26 = tpu.memref_slice %arg13[%c0_i32_14] : memref<2x!tpu.dma_semaphore, #tpu.memory_space<semaphore_mem>> -> memref<1x!tpu.dma_semaphore, #tpu.memory_space<semaphore_mem>>
    %27 = tpu.memref_squeeze %26 : memref<1x!tpu.dma_semaphore, #tpu.memory_space<semaphore_mem>> -> memref<!tpu.dma_semaphore, #tpu.memory_space<semaphore_mem>>
    tpu.wait_dma2 semaphore(%27 : memref<!tpu.dma_semaphore, #tpu.memory_space<semaphore_mem>>) src(%arg6 : memref<512x1024xbf16, #tpu.memory_space<any>>) dst(%arg11 : memref<512x1024xbf16, #tpu.memory_space<vmem>>)
    %c0_15 = arith.constant 0 : index
    %c0_16 = arith.constant 0 : index
    %28 = vector.load %arg11[%c0_15, %c0_16] : memref<512x1024xbf16, #tpu.memory_space<vmem>>, vector<512x1024xbf16>
    %c0_17 = arith.constant 0 : index
    %c0_18 = arith.constant 0 : index
    %29 = vector.load %arg7[%c0_17, %c0_18] : memref<1x1024xf32, #tpu.memory_space<vmem>>, vector<1x1024xf32>
    %30 = arith.truncf %25 : vector<16x512xf32> to vector<16x512xbf16>
    %cst_19 = arith.constant dense<0.000000e+00> : vector<16x1024xf32>
    %31 = tpu.matmul %30, %28, %cst_19 {dimension_numbers = #tpu.dot_dimension_numbers<[1], [0], [0], [1], [0, 0, 1, 1], [], []>} : vector<16x512xbf16>, vector<512x1024xbf16>, vector<16x1024xf32> -> vector<16x1024xf32>
    %32 = vector.broadcast %29 : vector<1x1024xf32> to vector<16x1024xf32>
    %33 = arith.addf %31, %32 : vector<16x1024xf32>
    %cst_20 = arith.constant 0.000000e+00 : f32
    %34 = vector.broadcast %cst_20 : f32 to vector<16x1024xf32>
    %35 = arith.cmpf ogt, %33, %34 : vector<16x1024xf32>
    %cst_21 = arith.constant 2.000000e-01 : f32
    %36 = vector.broadcast %cst_21 : f32 to vector<16x1024xf32>
    %37 = arith.mulf %36, %33 : vector<16x1024xf32>
    %38 = arith.select %35, %33, %37 : vector<16x1024xi1>, vector<16x1024xf32>
    %c1_i32_22 = arith.constant 1 : i32
    %39 = tpu.memref_slice %arg13[%c1_i32_22] : memref<2x!tpu.dma_semaphore, #tpu.memory_space<semaphore_mem>> -> memref<1x!tpu.dma_semaphore, #tpu.memory_space<semaphore_mem>>
    %40 = tpu.memref_squeeze %39 : memref<1x!tpu.dma_semaphore, #tpu.memory_space<semaphore_mem>> -> memref<!tpu.dma_semaphore, #tpu.memory_space<semaphore_mem>>
    tpu.wait_dma2 semaphore(%40 : memref<!tpu.dma_semaphore, #tpu.memory_space<semaphore_mem>>) src(%arg8 : memref<1024x896xbf16, #tpu.memory_space<any>>) dst(%arg12 : memref<1024x896xbf16, #tpu.memory_space<vmem>>)
    %c0_23 = arith.constant 0 : index
    %c0_24 = arith.constant 0 : index
    %41 = vector.load %arg12[%c0_23, %c0_24] : memref<1024x896xbf16, #tpu.memory_space<vmem>>, vector<1024x896xbf16>
    %c0_25 = arith.constant 0 : index
    %c0_26 = arith.constant 0 : index
    %42 = vector.load %arg9[%c0_25, %c0_26] : memref<1x896xf32, #tpu.memory_space<vmem>>, vector<1x896xf32>
    %43 = arith.truncf %38 : vector<16x1024xf32> to vector<16x1024xbf16>
    %cst_27 = arith.constant dense<0.000000e+00> : vector<16x896xf32>
    %44 = tpu.matmul %43, %41, %cst_27 {dimension_numbers = #tpu.dot_dimension_numbers<[1], [0], [0], [1], [0, 0, 1, 1], [], []>} : vector<16x1024xbf16>, vector<1024x896xbf16>, vector<16x896xf32> -> vector<16x896xf32>
    %45 = vector.broadcast %42 : vector<1x896xf32> to vector<16x896xf32>
    %46 = arith.addf %44, %45 : vector<16x896xf32>
    %47 = math.tanh %46 : vector<16x896xf32>
    %c0_28 = arith.constant 0 : index
    %c0_29 = arith.constant 0 : index
    %48 = vector.load %arg10[%c0_28, %c0_29] : memref<16x896xf32, #tpu.memory_space<vmem>>, vector<16x896xf32>
    tpu.vector_store %arg10[%c0_28, %c0_29], %47 {strides = array<i32>} : memref<16x896xf32, #tpu.memory_space<vmem>>, vector<16x896xf32>,
    return
  }
  func.func @transform_0(%arg0: i32) -> (i32, i32) {
    %c0_i32 = arith.constant 0 : i32
    %c0_i32_0 = arith.constant 0 : i32
    return %arg0, %c0_i32 : i32, i32
  }
  func.func @transform_1(%arg0: i32) -> (i32, i32) {
    %c0_i32 = arith.constant 0 : i32
    %c0_i32_0 = arith.constant 0 : i32
    %c0_i32_1 = arith.constant 0 : i32
    return %c0_i32, %c0_i32_0 : i32, i32
  }
  func.func @transform_2(%arg0: i32) -> (i32, i32) {
    %c0_i32 = arith.constant 0 : i32
    %c0_i32_0 = arith.constant 0 : i32
    %c0_i32_1 = arith.constant 0 : i32
    return %c0_i32, %c0_i32_0 : i32, i32
  }
  func.func @transform_3(%arg0: i32) -> (i32, i32) {
    %c0_i32 = arith.constant 0 : i32
    %c0_i32_0 = arith.constant 0 : i32
    %c0_i32_1 = arith.constant 0 : i32
    return %c0_i32, %c0_i32_0 : i32, i32
  }
  func.func @transform_4(%arg0: i32) -> (i32, i32) {
    %c0_i32 = arith.constant 0 : i32
    %c0_i32_0 = arith.constant 0 : i32
    %c0_i32_1 = arith.constant 0 : i32
    return %c0_i32, %c0_i32_0 : i32, i32
  }
  func.func @transform_6(%arg0: i32) -> (i32, i32) {
    %c0_i32 = arith.constant 0 : i32
    %c0_i32_0 = arith.constant 0 : i32
    %c0_i32_1 = arith.constant 0 : i32
    return %c0_i32, %c0_i32_0 : i32, i32
  }
  func.func @transform_8(%arg0: i32) -> (i32, i32) {
    %c0_i32 = arith.constant 0 : i32
    %c0_i32_0 = arith.constant 0 : i32
    %c0_i32_1 = arith.constant 0 : i32
    return %c0_i32, %c0_i32_0 : i32, i32
  }
  func.func @transform_9(%arg0: i32) -> (i32, i32) {
    %c0_i32 = arith.constant 0 : i32
    %c0_i32_0 = arith.constant 0 : i32
    return %arg0, %c0_i32 : i32, i32
  }
}

module attributes {stable_mosaic.version = 11 : i64} {
  func.func @_generator_kernel_fused_dma(%arg0: i32, %arg1: memref<16x128xbf16, #tpu.memory_space<vmem>>, %arg2: memref<128x256xbf16, #tpu.memory_space<vmem>>, %arg3: memref<1x256xf32, #tpu.memory_space<vmem>>, %arg4: memref<256x512xbf16, #tpu.memory_space<vmem>>, %arg5: memref<1x512xf32, #tpu.memory_space<vmem>>, %arg6: memref<512x1024xbf16, #tpu.memory_space<any>>, %arg7: memref<1x1024xf32, #tpu.memory_space<vmem>>, %arg8: memref<1024x896xbf16, #tpu.memory_space<any>>, %arg9: memref<1x896xf32, #tpu.memory_space<vmem>>, %arg10: memref<16x896xf32, #tpu.memory_space<vmem>>, %arg11: memref<512x1024xbf16, #tpu.memory_space<vmem>>, %arg12: memref<1024x896xbf16, #tpu.memory_space<vmem>>, %arg13: memref<2x!tpu.dma_semaphore, #tpu.memory_space<semaphore_mem>>) attributes {dimension_semantics = [#tpu.dimension_semantics<arbitrary>], iteration_bounds = array<i64: 1>, scalar_prefetch = 0 : i64, scratch_operands = 3 : i64, tpu.core_type = #tpu.core_type<tc>, window_params = [{transform_indices = @transform_0, window_bounds = array<i64: 16, 128>}, {pipeline_mode = #tpu.pipeline_mode<synchronous>, transform_indices = @transform_1, window_bounds = array<i64: 128, 256>}, {pipeline_mode = #tpu.pipeline_mode<synchronous>, transform_indices = @transform_2, window_bounds = array<i64: 1, 256>}, {pipeline_mode = #tpu.pipeline_mode<synchronous>, transform_indices = @transform_3, window_bounds = array<i64: 256, 512>}, {pipeline_mode = #tpu.pipeline_mode<synchronous>, transform_indices = @transform_4, window_bounds = array<i64: 1, 512>}, {}, {pipeline_mode = #tpu.pipeline_mode<synchronous>, transform_indices = @transform_6, window_bounds = array<i64: 1, 1024>}, {}, {pipeline_mode = #tpu.pipeline_mode<synchronous>, transform_indices = @transform_8, window_bounds = array<i64: 1, 896>}, {transform_indices = @transform_9, window_bounds = array<i64: 16, 896>}]} {
    %c0_i32 = arith.constant 0 : i32
    %0 = tpu.memref_slice %arg13[%c0_i32] : memref<2x!tpu.dma_semaphore, #tpu.memory_space<semaphore_mem>> -> memref<1x!tpu.dma_semaphore, #tpu.memory_space<semaphore_mem>>
    %1 = tpu.memref_squeeze %0 : memref<1x!tpu.dma_semaphore, #tpu.memory_space<semaphore_mem>> -> memref<!tpu.dma_semaphore, #tpu.memory_space<semaphore_mem>>
    tpu.enqueue_dma source(%arg6 : memref<512x1024xbf16, #tpu.memory_space<any>>) target(%arg11 : memref<512x1024xbf16, #tpu.memory_space<vmem>>) target_semaphore(%1 : memref<!tpu.dma_semaphore, #tpu.memory_space<semaphore_mem>>)
    %c1_i32 = arith.constant 1 : i32
    %2 = tpu.memref_slice %arg13[%c1_i32] : memref<2x!tpu.dma_semaphore, #tpu.memory_space<semaphore_mem>> -> memref<1x!tpu.dma_semaphore, #tpu.memory_space<semaphore_mem>>
    %3 = tpu.memref_squeeze %2 : memref<1x!tpu.dma_semaphore, #tpu.memory_space<semaphore_mem>> -> memref<!tpu.dma_semaphore, #tpu.memory_space<semaphore_mem>>
    tpu.enqueue_dma source(%arg8 : memref<1024x896xbf16, #tpu.memory_space<any>>) target(%arg12 : memref<1024x896xbf16, #tpu.memory_space<vmem>>) target_semaphore(%3 : memref<!tpu.dma_semaphore, #tpu.memory_space<semaphore_mem>>)
    %c0 = arith.constant 0 : index
    %c0_0 = arith.constant 0 : index
    %4 = vector.load %arg1[%c0, %c0_0] : memref<16x128xbf16, #tpu.memory_space<vmem>>, vector<16x128xbf16>
    %c0_1 = arith.constant 0 : index
    %c0_2 = arith.constant 0 : index
    %5 = vector.load %arg2[%c0_1, %c0_2] : memref<128x256xbf16, #tpu.memory_space<vmem>>, vector<128x256xbf16>
    %c0_3 = arith.constant 0 : index
    %c0_4 = arith.constant 0 : index
    %6 = vector.load %arg3[%c0_3, %c0_4] : memref<1x256xf32, #tpu.memory_space<vmem>>, vector<1x256xf32>
    %cst = arith.constant dense<0.000000e+00> : vector<16x256xf32>
    %7 = tpu.matmul %4, %5, %cst {dimension_numbers = #tpu.dot_dimension_numbers<[1], [0], [0], [1], [0, 0, 1, 1], [], []>} : vector<16x128xbf16>, vector<128x256xbf16>, vector<16x256xf32> -> vector<16x256xf32>
    %8 = vector.broadcast %6 : vector<1x256xf32> to vector<16x256xf32>
    %9 = arith.addf %7, %8 : vector<16x256xf32>
    %cst_5 = arith.constant 0.000000e+00 : f32
    %10 = vector.broadcast %cst_5 : f32 to vector<16x256xf32>
    %11 = arith.cmpf ogt, %9, %10 : vector<16x256xf32>
    %cst_6 = arith.constant 2.000000e-01 : f32
    %12 = vector.broadcast %cst_6 : f32 to vector<16x256xf32>
    %13 = arith.mulf %12, %9 : vector<16x256xf32>
    %14 = arith.select %11, %9, %13 : vector<16x256xi1>, vector<16x256xf32>
    %c0_7 = arith.constant 0 : index
    %c0_8 = arith.constant 0 : index
    %15 = vector.load %arg4[%c0_7, %c0_8] : memref<256x512xbf16, #tpu.memory_space<vmem>>, vector<256x512xbf16>
    %c0_9 = arith.constant 0 : index
    %c0_10 = arith.constant 0 : index
    %16 = vector.load %arg5[%c0_9, %c0_10] : memref<1x512xf32, #tpu.memory_space<vmem>>, vector<1x512xf32>
    %17 = arith.truncf %14 : vector<16x256xf32> to vector<16x256xbf16>
    %cst_11 = arith.constant dense<0.000000e+00> : vector<16x512xf32>
    %18 = tpu.matmul %17, %15, %cst_11 {dimension_numbers = #tpu.dot_dimension_numbers<[1], [0], [0], [1], [0, 0, 1, 1], [], []>} : vector<16x256xbf16>, vector<256x512xbf16>, vector<16x512xf32> -> vector<16x512xf32>
    %19 = vector.broadcast %16 : vector<1x512xf32> to vector<16x512xf32>
    %20 = arith.addf %18, %19 : vector<16x512xf32>
    %cst_12 = arith.constant 0.000000e+00 : f32
    %21 = vector.broadcast %cst_12 : f32 to vector<16x512xf32>
    %22 = arith.cmpf ogt, %20, %21 : vector<16x512xf32>
    %cst_13 = arith.constant 2.000000e-01 : f32
    %23 = vector.broadcast %cst_13 : f32 to vector<16x512xf32>
    %24 = arith.mulf %23, %20 : vector<16x512xf32>
    %25 = arith.select %22, %20, %24 : vector<16x512xi1>, vector<16x512xf32>
    %c0_i32_14 = arith.constant 0 : i32
    %26 = tpu.memref_slice %arg13[%c0_i32_14] : memref<2x!tpu.dma_semaphore, #tpu.memory_space<semaphore_mem>> -> memref<1x!tpu.dma_semaphore, #tpu.memory_space<semaphore_mem>>
    %27 = tpu.memref_squeeze %26 : memref<1x!tpu.dma_semaphore, #tpu.memory_space<semaphore_mem>> -> memref<!tpu.dma_semaphore, #tpu.memory_space<semaphore_mem>>
    tpu.wait_dma2 semaphore(%27 : memref<!tpu.dma_semaphore, #tpu.memory_space<semaphore_mem>>) src(%arg6 : memref<512x1024xbf16, #tpu.memory_space<any>>) dst(%arg11 : memref<512x1024xbf16, #tpu.memory_space<vmem>>)
    %c0_15 = arith.constant 0 : index
    %c0_16 = arith.constant 0 : index
    %28 = vector.load %arg11[%c0_15, %c0_16] : memref<512x1024xbf16, #tpu.memory_space<vmem>>, vector<512x1024xbf16>
    %c0_17 = arith.constant 0 : index
    %c0_18 = arith.constant 0 : index
    %29 = vector.load %arg7[%c0_17, %c0_18] : memref<1x1024xf32, #tpu.memory_space<vmem>>, vector<1x1024xf32>
    %30 = arith.truncf %25 : vector<16x512xf32> to vector<16x512xbf16>
    %cst_19 = arith.constant dense<0.000000e+00> : vector<16x1024xf32>
    %31 = tpu.matmul %30, %28, %cst_19 {dimension_numbers = #tpu.dot_dimension_numbers<[1], [0], [0], [1], [0, 0, 1, 1], [], []>} : vector<16x512xbf16>, vector<512x1024xbf16>, vector<16x1024xf32> -> vector<16x1024xf32>
    %32 = vector.broadcast %29 : vector<1x1024xf32> to vector<16x1024xf32>
    %33 = arith.addf %31, %32 : vector<16x1024xf32>
    %cst_20 = arith.constant 0.000000e+00 : f32
    %34 = vector.broadcast %cst_20 : f32 to vector<16x1024xf32>
    %35 = arith.cmpf ogt, %33, %34 : vector<16x1024xf32>
    %cst_21 = arith.constant 2.000000e-01 : f32
    %36 = vector.broadcast %cst_21 : f32 to vector<16x1024xf32>
    %37 = arith.mulf %36, %33 : vector<16x1024xf32>
    %38 = arith.select %35, %33, %37 : vector<16x1024xi1>, vector<16x1024xf32>
    %c1_i32_22 = arith.constant 1 : i32
    %39 = tpu.memref_slice %arg13[%c1_i32_22] : memref<2x!tpu.dma_semaphore, #tpu.memory_space<semaphore_mem>> -> memref<1x!tpu.dma_semaphore, #tpu.memory_space<semaphore_mem>>
    %40 = tpu.memref_squeeze %39 : memref<1x!tpu.dma_semaphore, #tpu.memory_space<semaphore_mem>> -> memref<!tpu.dma_semaphore, #tpu.memory_space<semaphore_mem>>
    tpu.wait_dma2 semaphore(%40 : memref<!tpu.dma_semaphore, #tpu.memory_space<semaphore_mem>>) src(%arg8 : memref<1024x896xbf16, #tpu.memory_space<any>>) dst(%arg12 : memref<1024x896xbf16, #tpu.memory_space<vmem>>)
    %c0_23 = arith.constant 0 : index
    %c0_24 = arith.constant 0 : index
    %41 = vector.load %arg12[%c0_23, %c0_24] : memref<1024x896xbf16, #tpu.memory_space<vmem>>, vector<1024x896xbf16>
    %c0_25 = arith.constant 0 : index
    %c0_26 = arith.constant 0 : index
    %42 = vector.load %arg9[%c0_25, %c0_26] : memref<1x896xf32, #tpu.memory_space<vmem>>, vector<1x896xf32>
    %43 = arith.truncf %38 : vector<16x1024xf32> to vector<16x1024xbf16>
    %cst_27 = arith.constant dense<0.000000e+00> : vector<16x896xf32>
    %44 = tpu.matmul %43, %41, %cst_27 {dimension_numbers = #tpu.dot_dimension_numbers<[1], [0], [0], [1], [0, 0, 1, 1], [], []>} : vector<16x1024xbf16>, vector<1024x896xbf16>, vector<16x896xf32> -> vector<16x896xf32>
    %45 = vector.broadcast %42 : vector<1x896xf32> to vector<16x896xf32>
    %46 = arith.addf %44, %45 : vector<16x896xf32>
    %47 = math.tanh %46 : vector<16x896xf32>
    %c0_28 = arith.constant 0 : index
    %c0_29 = arith.constant 0 : index
    %48 = vector.load %arg10[%c0_28, %c0_29] : memref<16x896xf32, #tpu.memory_space<vmem>>, vector<16x896xf32>
    tpu.vector_store %arg10[%c0_28, %c0_29], %47 {strides = array<i32>} : memref<16x896xf32, #tpu.memory_space<vmem>>, vector<16x896xf32>,
    return
  }
  func.func @transform_0(%arg0: i32) -> (i32, i32) {
    %c0_i32 = arith.constant 0 : i32
    %c0_i32_0 = arith.constant 0 : i32
    return %arg0, %c0_i32 : i32, i32
  }
  func.func @transform_1(%arg0: i32) -> (i32, i32) {
    %c0_i32 = arith.constant 0 : i32
    %c0_i32_0 = arith.constant 0 : i32
    %c0_i32_1 = arith.constant 0 : i32
    return %c0_i32, %c0_i32_0 : i32, i32
  }
  func.func @transform_2(%arg0: i32) -> (i32, i32) {
    %c0_i32 = arith.constant 0 : i32
    %c0_i32_0 = arith.constant 0 : i32
    %c0_i32_1 = arith.constant 0 : i32
    return %c0_i32, %c0_i32_0 : i32, i32
  }
  func.func @transform_3(%arg0: i32) -> (i32, i32) {
    %c0_i32 = arith.constant 0 : i32
    %c0_i32_0 = arith.constant 0 : i32
    %c0_i32_1 = arith.constant 0 : i32
    return %c0_i32, %c0_i32_0 : i32, i32
  }
  func.func @transform_4(%arg0: i32) -> (i32, i32) {
    %c0_i32 = arith.constant 0 : i32
    %c0_i32_0 = arith.constant 0 : i32
    %c0_i32_1 = arith.constant 0 : i32
    return %c0_i32, %c0_i32_0 : i32, i32
  }
  func.func @transform_6(%arg0: i32) -> (i32, i32) {
    %c0_i32 = arith.constant 0 : i32
    %c0_i32_0 = arith.constant 0 : i32
    %c0_i32_1 = arith.constant 0 : i32
    return %c0_i32, %c0_i32_0 : i32, i32
  }
  func.func @transform_8(%arg0: i32) -> (i32, i32) {
    %c0_i32 = arith.constant 0 : i32
    %c0_i32_0 = arith.constant 0 : i32
    %c0_i32_1 = arith.constant 0 : i32
    return %c0_i32, %c0_i32_0 : i32, i32
  }
  func.func @transform_9(%arg0: i32) -> (i32, i32) {
    %c0_i32 = arith.constant 0 : i32
    %c0_i32_0 = arith.constant 0 : i32
    return %arg0, %c0_i32 : i32, i32
  }
}

</mosaic_0001>

<llo_original>
// kernel: tpu_custom_call.1
$region0: #{tpu_custom_call.1}
  #allocation0 [shape = 'u32[]', space=smem, size = 0x4, offset = 0x4, fixed_abs, tag = 'smem constant byte address 0x4 - core index']
  #allocation1 [shape = 'u32[72,128]{1,0:T(1,128)}', space=vmem, size = 0x9000, scoped, tag = 'internal scratch']
  #allocation2 [shape = 'bf16[512,1024]{1,0:T(8,128)(2,1)}', space=vmem, size = 0x100000, scoped, tag = 'scratch operand']
  #allocation3 [shape = 'bf16[1024,896]{1,0:T(8,128)(2,1)}', space=vmem, size = 0x1c0000, scoped, tag = 'scratch operand']
  #allocation4 [shape = 's32[2]{0}', space=sflag, size = 0x8, scoped, tag = 'scratch operand']
  #allocation18 [shape = 's32[]', space=sflag, size = 0x4, offset = 0, fixed_abs, tag = 'sflag constant byte address 0x0 - dummy sync flag']
  #allocation19 [shape = 's32[]', space=sflag, size = 0x4, offset = 0, fixed_abs, tag = 'sflag constant byte address 0x0 - dummy sync flag']
  #allocation20 [shape = 'u32[]', space=smem, size = 0x4, offset = 0x44, fixed_abs, tag = 'smem constant byte address 0x44 - assertion arg 0']
  #allocation21 [shape = 'u32[]', space=smem, size = 0x4, offset = 0x48, fixed_abs, tag = 'smem constant byte address 0x48 - assertion arg 1']
  #allocation22 [shape = 's32[]', space=sflag, size = 0x4, offset = 0, fixed_abs, tag = 'sflag constant byte address 0x0 - dummy sync flag']
  #allocation23 [shape = 's32[]', space=sflag, size = 0x4, offset = 0, fixed_abs, tag = 'sflag constant byte address 0x0 - dummy sync flag']
  %s0 = inlined_call_operand.hbm [shape: bf16[16,128], index: 0, kind: input, shape index: {}]
  %s1 = inlined_call_operand.hbm [shape: bf16[128,256], index: 1, kind: input, shape index: {}]
  %s2 = inlined_call_operand.hbm [shape: f32[1,256], index: 2, kind: input, shape index: {}]
  %s3 = inlined_call_operand.hbm [shape: bf16[256,512], index: 3, kind: input, shape index: {}]
  %s4 = inlined_call_operand.hbm [shape: f32[1,512], index: 4, kind: input, shape index: {}]
  %s5 = inlined_call_operand.hbm [shape: bf16[512,1024], index: 5, kind: input, shape index: {}]
  %s6 = inlined_call_operand.hbm [shape: f32[1,1024], index: 6, kind: input, shape index: {}]
  %s7 = inlined_call_operand.hbm [shape: bf16[1024,896], index: 7, kind: input, shape index: {}]
  %s8 = inlined_call_operand.hbm [shape: f32[1,896], index: 8, kind: input, shape index: {}]
  %s9 = inlined_call_operand.hbm [shape: f32[16,896], index: 9, kind: output, shape index: {}]
  %s10 = sld [smem:[#allocation0]]
  $region74: #{tpu_custom_call.1} parent=0
    _
  %s12 = ssub.s32 1, %s10
  %s13 = scalar_select 0, %s12, %s10
  $region1: #{tpu_custom_call.1} parent=0
    #allocation5 [shape = 'u8[4096]{0}', space=vmem, size = 0x1000, scoped, tag = 'input window, operand 0, single buffered']
    #allocation6 [shape = 's32[1]{0}', space=sflag, size = 0x4, scoped, tag = 'scoped memory for tpu_custom_call.1']
    #allocation7 [shape = 's32[1]{0}', space=sflag, size = 0x4, scoped, tag = 'scoped memory for tpu_custom_call.1']
    #allocation8 [shape = 'u8[65536]{0}', space=vmem, size = 0x10000, scoped, tag = 'input window, operand 1, single buffered']
    #allocation9 [shape = 's32[1]{0}', space=sflag, size = 0x4, scoped, tag = 'scoped memory for tpu_custom_call.1']
    #allocation10 [shape = 'u8[1024]{0}', space=vmem, size = 0x400, scoped, tag = 'input window, operand 2, single buffered']
    #allocation11 [shape = 'u8[262144]{0}', space=vmem, size = 0x40000, scoped, tag = 'input window, operand 3, single buffered']
    #allocation12 [shape = 's32[1]{0}', space=sflag, size = 0x4, scoped, tag = 'scoped memory for tpu_custom_call.1']
    #allocation13 [shape = 'u8[2048]{0}', space=vmem, size = 0x800, scoped, tag = 'input window, operand 4, single buffered']
    #allocation14 [shape = 'u8[4096]{0}', space=vmem, size = 0x1000, scoped, tag = 'input window, operand 6, single buffered']
    #allocation15 [shape = 's32[1]{0}', space=sflag, size = 0x4, scoped, tag = 'scoped memory for tpu_custom_call.1']
    #allocation16 [shape = 'u8[3584]{0}', space=vmem, size = 0x1000, scoped, tag = 'input window, operand 8, single buffered']
    #allocation17 [shape = 'u8[57344]{0}', space=vmem, size = 0xe000, scoped, tag = 'output window, operand 0, single buffered']
    %14 = vsyncpa [#allocation6], 0
    %15 = vsyncpa [#allocation9], 0
    %16 = vsyncpa [#allocation12], 0
    %17 = vsyncpa [#allocation15], 0
    %18 = vsyncpa [#allocation7], 0
    // Predicated region
    $region2: #{tpu_custom_call.1} parent=1 // pred_check
      _
    $region3: #{tpu_custom_call.1} parent=1 // pred_check_branch
      %20 = sbr.rel (0) target = $region5
    $region4: #{tpu_custom_call.1} parent=1 // pred_region
      %22 = vsyncadd [#allocation6], 0
      %s23 = sshll.u32 %s0, 4
      %s24 = int_to_ptr.hbm [resolvable:$true] %s23
      %s25 = sshll.u32 [#allocation5], 4
      %s26 = int_to_ptr.vmem [resolvable:$true] %s25
      %31 = dma.hbm_to_vmem [thread:$0]  %s24, 128, %s26, [#allocation6], 64, 64, 4
    $region5: #{tpu_custom_call.1} parent=1 // pred_fallthru
      _
    // Predicated region
    $region6: #{tpu_custom_call.1} parent=1 // pred_check
      _
    $region7: #{tpu_custom_call.1} parent=1 // pred_check_branch
      %33 = sbr.rel (0) target = $region9
    $region8: #{tpu_custom_call.1} parent=1 // pred_region
      %35 = vsyncadd [#allocation9], 0
      %s36 = sshll.u32 %s1, 4
      %s37 = int_to_ptr.hbm [resolvable:$true] %s36
      %s38 = sshll.u32 [#allocation8], 4
      %s39 = int_to_ptr.vmem [resolvable:$true] %s38
      %44 = dma.hbm_to_vmem [thread:$0]  %s37, 2048, %s39, [#allocation9], 128, 128, 8
    $region9: #{tpu_custom_call.1} parent=1 // pred_fallthru
      _
    // Predicated region
    $region10: #{tpu_custom_call.1} parent=1 // pred_check
      _
    $region11: #{tpu_custom_call.1} parent=1 // pred_check_branch
      %46 = sbr.rel (0) target = $region13
    $region12: #{tpu_custom_call.1} parent=1 // pred_region
      %48 = vsyncadd [#allocation9], 0
      %s50 = sshll.u32 %s2, 4
      %s51 = int_to_ptr.hbm [resolvable:$true] %s50
      %s52 = sshll.u32 [#allocation10], 4
      %s53 = int_to_ptr.vmem [resolvable:$true] %s52
      %55 = dma.hbm_to_vmem [thread:$0]  %s51, 32, %s53, [#allocation9]
    $region13: #{tpu_custom_call.1} parent=1 // pred_fallthru
      _
    // Predicated region
    $region14: #{tpu_custom_call.1} parent=1 // pred_check
      _
    $region15: #{tpu_custom_call.1} parent=1 // pred_check_branch
      %57 = sbr.rel (0) target = $region17
    $region16: #{tpu_custom_call.1} parent=1 // pred_region
      %59 = vsyncadd [#allocation12], 0
      %s60 = sshll.u32 %s3, 4
      %s61 = int_to_ptr.hbm [resolvable:$true] %s60
      %s62 = sshll.u32 [#allocation11], 4
      %s63 = int_to_ptr.vmem [resolvable:$true] %s62
      %68 = dma.hbm_to_vmem [thread:$0]  %s61, 8192, %s63, [#allocation12], 256, 256, 16
    $region17: #{tpu_custom_call.1} parent=1 // pred_fallthru
      _
    // Predicated region
    $region18: #{tpu_custom_call.1} parent=1 // pred_check
      _
    $region19: #{tpu_custom_call.1} parent=1 // pred_check_branch
      %70 = sbr.rel (0) target = $region21
    $region20: #{tpu_custom_call.1} parent=1 // pred_region
      %72 = vsyncadd [#allocation12], 0
      %s74 = sshll.u32 %s4, 4
      %s75 = int_to_ptr.hbm [resolvable:$true] %s74
      %s76 = sshll.u32 [#allocation13], 4
      %s77 = int_to_ptr.vmem [resolvable:$true] %s76
      %79 = dma.hbm_to_vmem [thread:$0]  %s75, 64, %s77, [#allocation12]
    $region21: #{tpu_custom_call.1} parent=1 // pred_fallthru
      _
    // Predicated region
    $region22: #{tpu_custom_call.1} parent=1 // pred_check
      _
    $region23: #{tpu_custom_call.1} parent=1 // pred_check_branch
      %81 = sbr.rel (0) target = $region25
    $region24: #{tpu_custom_call.1} parent=1 // pred_region
      %83 = vsyncadd [#allocation15], 0
      %s85 = sshll.u32 %s6, 4
      %s86 = int_to_ptr.hbm [resolvable:$true] %s85
      %s87 = sshll.u32 [#allocation14], 4
      %s88 = int_to_ptr.vmem [resolvable:$true] %s87
      %90 = dma.hbm_to_vmem [thread:$0]  %s86, 128, %s88, [#allocation15]
    $region25: #{tpu_custom_call.1} parent=1 // pred_fallthru
      _
    // Predicated region
    $region26: #{tpu_custom_call.1} parent=1 // pred_check
      _
    $region27: #{tpu_custom_call.1} parent=1 // pred_check_branch
      %92 = sbr.rel (0) target = $region29
    $region28: #{tpu_custom_call.1} parent=1 // pred_region
      %94 = vsyncadd [#allocation15], 0
      %s96 = sshll.u32 %s8, 4
      %s97 = int_to_ptr.hbm [resolvable:$true] %s96
      %s98 = sshll.u32 [#allocation16], 4
      %s99 = int_to_ptr.vmem [resolvable:$true] %s98
      %101 = dma.hbm_to_vmem [thread:$0]  %s97, 112, %s99, [#allocation15]
    $region29: #{tpu_custom_call.1} parent=1 // pred_fallthru
      _
    // Predicated region
    $region30: #{tpu_custom_call.1} parent=1 // pred_check
      _
    $region31: #{tpu_custom_call.1} parent=1 // pred_check_branch
      %103 = sbr.rel (0) target = $region33
    $region32: #{tpu_custom_call.1} parent=1 // pred_region
      %105 = dma.done [#allocation6], 128
    $region33: #{tpu_custom_call.1} parent=1 // pred_fallthru
      _
    // Predicated region
    $region34: #{tpu_custom_call.1} parent=1 // pred_check
      _
    $region35: #{tpu_custom_call.1} parent=1 // pred_check_branch
      %107 = sbr.rel (0) target = $region37
    $region36: #{tpu_custom_call.1} parent=1 // pred_region
      %109 = dma.done [#allocation9], 2048
    $region37: #{tpu_custom_call.1} parent=1 // pred_fallthru
      _
    // Predicated region
    $region38: #{tpu_custom_call.1} parent=1 // pred_check
      _
    $region39: #{tpu_custom_call.1} parent=1 // pred_check_branch
      %111 = sbr.rel (0) target = $region41
    $region40: #{tpu_custom_call.1} parent=1 // pred_region
      %113 = dma.done [#allocation9], 32
    $region41: #{tpu_custom_call.1} parent=1 // pred_fallthru
      _
    // Predicated region
    $region42: #{tpu_custom_call.1} parent=1 // pred_check
      _
    $region43: #{tpu_custom_call.1} parent=1 // pred_check_branch
      %115 = sbr.rel (0) target = $region45
    $region44: #{tpu_custom_call.1} parent=1 // pred_region
      %117 = dma.done [#allocation12], 8192
    $region45: #{tpu_custom_call.1} parent=1 // pred_fallthru
      _
    // Predicated region
    $region46: #{tpu_custom_call.1} parent=1 // pred_check
      _
    $region47: #{tpu_custom_call.1} parent=1 // pred_check_branch
      %119 = sbr.rel (0) target = $region49
    $region48: #{tpu_custom_call.1} parent=1 // pred_region
      %121 = dma.done [#allocation12], 64
    $region49: #{tpu_custom_call.1} parent=1 // pred_fallthru
      _
    // Predicated region
    $region50: #{tpu_custom_call.1} parent=1 // pred_check
      _
    $region51: #{tpu_custom_call.1} parent=1 // pred_check_branch
      %123 = sbr.rel (0) target = $region53
    $region52: #{tpu_custom_call.1} parent=1 // pred_region
      %125 = dma.done [#allocation15], 128
    $region53: #{tpu_custom_call.1} parent=1 // pred_fallthru
      _
    // Predicated region
    $region54: #{tpu_custom_call.1} parent=1 // pred_check
      _
    $region55: #{tpu_custom_call.1} parent=1 // pred_check_branch
      %127 = sbr.rel (0) target = $region57
    $region56: #{tpu_custom_call.1} parent=1 // pred_region
      %129 = dma.done [#allocation15], 112
    $region57: #{tpu_custom_call.1} parent=1 // pred_fallthru
      _
    // Predicated region
    $region58: #{tpu_custom_call.1} parent=1 // pred_check
      _
    $region59: #{tpu_custom_call.1} parent=1 // pred_check_branch
      %131 = sbr.rel target = $region61
    $region60: #{tpu_custom_call.1} parent=1 // pred_region
      %132 = sst [smem:[#allocation20]] [#allocation19]
      %133 = sst [smem:[#allocation21]] [#allocation18]
    $region61: #{tpu_custom_call.1} parent=1 // pred_fallthru
      _
    %135 = shalt.err (0)
    %s137 = sshll.u32 %s5, 4
    %s138 = int_to_ptr.hbm [resolvable:$true] %s137
    %s139 = sshll.u32 [#allocation2], 4
    %s140 = int_to_ptr.vmem [resolvable:$true] %s139
    %142 = dma.hbm_to_vmem [thread:$0]  %s138, 32768, %s140, [#allocation4]
    %s143 = scalar_lea.sflag [#allocation4], 1
    // Predicated region
    $region62: #{tpu_custom_call.1} parent=1 // pred_check
      _
    $region63: #{tpu_custom_call.1} parent=1 // pred_check_branch
      %145 = sbr.rel target = $region65
    $region64: #{tpu_custom_call.1} parent=1 // pred_region
      %146 = sst [smem:[#allocation20]] [#allocation23]
      %147 = sst [smem:[#allocation21]] [#allocation22]
    $region65: #{tpu_custom_call.1} parent=1 // pred_fallthru
      _
    %149 = shalt.err (0)
    %s151 = sshll.u32 %s7, 4
    %s152 = int_to_ptr.hbm [resolvable:$true] %s151
    %s153 = sshll.u32 [#allocation3], 4
    %s154 = int_to_ptr.vmem [resolvable:$true] %s153
    %156 = dma.hbm_to_vmem [thread:$0]  %s152, 57344, %s154, %s143
    %v157 = vld [vmem:[#allocation5] sm:$0xf]
    %v158 = vld [vmem:[#allocation5 + $0x4] sm:$0xf]
    %v159 = vld [vmem:[#allocation8] sm:$0xff]
    %v160 = vld [vmem:[#allocation8 + $0x8] sm:$0xff]
    %v161 = vld [vmem:[#allocation8 + $0x10] sm:$0xff]
    %v162 = vld [vmem:[#allocation8 + $0x18] sm:$0xff]
    %v163 = vld [vmem:[#allocation8 + $0x20] sm:$0xff]
    %v164 = vld [vmem:[#allocation8 + $0x28] sm:$0xff]
    %v165 = vld [vmem:[#allocation8 + $0x30] sm:$0xff]
    %v166 = vld [vmem:[#allocation8 + $0x38] sm:$0xff]
    %v167 = vld [vmem:[#allocation8 + $0x40] sm:$0xff]
    %v168 = vld [vmem:[#allocation8 + $0x48] sm:$0xff]
    %v169 = vld [vmem:[#allocation8 + $0x50] sm:$0xff]
    %v170 = vld [vmem:[#allocation8 + $0x58] sm:$0xff]
    %v171 = vld [vmem:[#allocation8 + $0x60] sm:$0xff]
    %v172 = vld [vmem:[#allocation8 + $0x68] sm:$0xff]
    %v173 = vld [vmem:[#allocation8 + $0x70] sm:$0xff]
    %v174 = vld [vmem:[#allocation8 + $0x78] sm:$0xff]
    %v175 = vld [vmem:[#allocation10] sm:$0x3]
    %v177 = vperm.slane %v175, 0
    %v178 = vperm.slane %v175, 1
    %v183 = vunpack.c.l.b16 %v157
    %v184 = vunpack.c.l.b16 %v158
    %v185 = vpack.c.b16 %v184, %v183
    %v203 = vunpack.c.l.b16 %v159
    %v204 = vunpack.c.h.b16 %v159
    %v205 = vunpack.c.l.b16 %v160
    %v206 = vunpack.c.h.b16 %v160
    %v207 = vunpack.c.l.b16 %v161
    %v208 = vunpack.c.h.b16 %v161
    %v209 = vunpack.c.l.b16 %v162
    %v210 = vunpack.c.h.b16 %v162
    %v211 = vunpack.c.l.b16 %v163
    %v212 = vunpack.c.h.b16 %v163
    %v213 = vunpack.c.l.b16 %v164
    %v214 = vunpack.c.h.b16 %v164
    %v215 = vunpack.c.l.b16 %v165
    %v216 = vunpack.c.h.b16 %v165
    %v217 = vunpack.c.l.b16 %v166
    %v218 = vunpack.c.h.b16 %v166
    %v219 = vunpack.c.l.b16 %v167
    %v220 = vunpack.c.h.b16 %v167
    %v221 = vunpack.c.l.b16 %v168
    %v222 = vunpack.c.h.b16 %v168
    %v223 = vunpack.c.l.b16 %v169
    %v224 = vunpack.c.h.b16 %v169
    %v225 = vunpack.c.l.b16 %v170
    %v226 = vunpack.c.h.b16 %v170
    %v227 = vunpack.c.l.b16 %v171
    %v228 = vunpack.c.h.b16 %v171
    %v229 = vunpack.c.l.b16 %v172
    %v230 = vunpack.c.h.b16 %v172
    %v231 = vunpack.c.l.b16 %v173
    %v232 = vunpack.c.h.b16 %v173
    %v233 = vunpack.c.l.b16 %v174
    %v234 = vunpack.c.h.b16 %v174
    %v235 = vpack.c.b16 %v205, %v203
    %v236 = vpack.c.b16 %v206, %v204
    %v237 = vpack.c.b16 %v209, %v207
    %v238 = vpack.c.b16 %v210, %v208
    %v239 = vpack.c.b16 %v213, %v211
    %v240 = vpack.c.b16 %v214, %v212
    %v241 = vpack.c.b16 %v217, %v215
    %v242 = vpack.c.b16 %v218, %v216
    %v243 = vpack.c.b16 %v221, %v219
    %v244 = vpack.c.b16 %v222, %v220
    %v245 = vpack.c.b16 %v225, %v223
    %v246 = vpack.c.b16 %v226, %v224
    %v247 = vpack.c.b16 %v229, %v227
    %v248 = vpack.c.b16 %v230, %v228
    %v249 = vpack.c.b16 %v233, %v231
    %v250 = vpack.c.b16 %v234, %v232
    %267 = vmatpush.bf16.msra.mxu0 %v249
    %268 = vmatpush.bf16.msra.mxu0 %v247
    %269 = vmatpush.bf16.msra.mxu0 %v245
    %270 = vmatpush.bf16.msra.mxu0 %v243
    %271 = vmatpush.bf16.msra.mxu0 %v241
    %272 = vmatpush.bf16.msra.mxu0 %v239
    %273 = vmatpush.bf16.msra.mxu0 %v237
    %274 = vmatpush.bf16.msra.mxu0 %v235
    %275 = vmatmul.bf16.gmra.mxu0 %v185
    %v276 = vpop.f32.mrf.mxu0
    %v277 = vadd.f32 %v177, %v276
    %v278 = vpop.f32.mrf.mxu0
    %v279 = vadd.f32 %v177, %v278
    %280 = vdwg.mxu0
    %281 = vmatpush.bf16.msra.mxu0 %v250
    %282 = vmatpush.bf16.msra.mxu0 %v248
    %283 = vmatpush.bf16.msra.mxu0 %v246
    %284 = vmatpush.bf16.msra.mxu0 %v244
    %285 = vmatpush.bf16.msra.mxu0 %v242
    %286 = vmatpush.bf16.msra.mxu0 %v240
    %287 = vmatpush.bf16.msra.mxu0 %v238
    %288 = vmatpush.bf16.msra.mxu0 %v236
    %289 = vmatmul.bf16.gmra.mxu0 %v185
    %v290 = vpop.f32.mrf.mxu0
    %v291 = vadd.f32 %v178, %v290
    %v292 = vpop.f32.mrf.mxu0
    %v293 = vadd.f32 %v178, %v292
    %294 = vdwg.mxu0
    %vm295 = vcmp.gt.f32.partialorder %v277, 0.0
    %vm296 = vcmp.gt.f32.partialorder %v291, 0.0
    %vm297 = vcmp.gt.f32.partialorder %v279, 0.0
    %vm298 = vcmp.gt.f32.partialorder %v293, 0.0
    %v299 = vmul.f32 %v277, 0.2
    %v300 = vmul.f32 %v291, 0.2
    %v301 = vmul.f32 %v279, 0.2
    %v302 = vmul.f32 %v293, 0.2
    %v303 = vsel %vm295, %v277, %v299
    %v304 = vsel %vm296, %v291, %v300
    %v305 = vsel %vm297, %v279, %v301
    %v306 = vsel %vm298, %v293, %v302
    %v307 = vld [vmem:[#allocation11] sm:$0xff]
    %v308 = vld [vmem:[#allocation11 + $0x8] sm:$0xff]
    %v309 = vld [vmem:[#allocation11 + $0x10] sm:$0xff]
    %v310 = vld [vmem:[#allocation11 + $0x18] sm:$0xff]
    %v311 = vld [vmem:[#allocation11 + $0x20] sm:$0xff]
    %v312 = vld [vmem:[#allocation11 + $0x28] sm:$0xff]
    %v313 = vld [vmem:[#allocation11 + $0x30] sm:$0xff]
    %v314 = vld [vmem:[#allocation11 + $0x38] sm:$0xff]
    %v315 = vld [vmem:[#allocation11 + $0x40] sm:$0xff]
    %v316 = vld [vmem:[#allocation11 + $0x48] sm:$0xff]
    %v317 = vld [vmem:[#allocation11 + $0x50] sm:$0xff]
    %v318 = vld [vmem:[#allocation11 + $0x58] sm:$0xff]
    %v319 = vld [vmem:[#allocation11 + $0x60] sm:$0xff]
    %v320 = vld [vmem:[#allocation11 + $0x68] sm:$0xff]
    %v321 = vld [vmem:[#allocation11 + $0x70] sm:$0xff]
    %v322 = vld [vmem:[#allocation11 + $0x78] sm:$0xff]
    %v323 = vld [vmem:[#allocation11 + $0x80] sm:$0xff]
    %v324 = vld [vmem:[#allocation11 + $0x88] sm:$0xff]
    %v325 = vld [vmem:[#allocation11 + $0x90] sm:$0xff]
    %v326 = vld [vmem:[#allocation11 + $0x98] sm:$0xff]
    %v327 = vld [vmem:[#allocation11 + $0xa0] sm:$0xff]
    %v328 = vld [vmem:[#allocation11 + $0xa8] sm:$0xff]
    %v329 = vld [vmem:[#allocation11 + $0xb0] sm:$0xff]
    %v330 = vld [vmem:[#allocation11 + $0xb8] sm:$0xff]
    %v331 = vld [vmem:[#allocation11 + $0xc0] sm:$0xff]
    %v332 = vld [vmem:[#allocation11 + $0xc8] sm:$0xff]
    %v333 = vld [vmem:[#allocation11 + $0xd0] sm:$0xff]
    %v334 = vld [vmem:[#allocation11 + $0xd8] sm:$0xff]
    %v335 = vld [vmem:[#allocation11 + $0xe0] sm:$0xff]
    %v336 = vld [vmem:[#allocation11 + $0xe8] sm:$0xff]
    %v337 = vld [vmem:[#allocation11 + $0xf0] sm:$0xff]
    %v338 = vld [vmem:[#allocation11 + $0xf8] sm:$0xff]
    %v339 = vld [vmem:[#allocation11 + $0x100] sm:$0xff]
    %v340 = vld [vmem:[#allocation11 + $0x108] sm:$0xff]
    %v341 = vld [vmem:[#allocation11 + $0x110] sm:$0xff]
    %v342 = vld [vmem:[#allocation11 + $0x118] sm:$0xff]
    %v343 = vld [vmem:[#allocation11 + $0x120] sm:$0xff]
    %v344 = vld [vmem:[#allocation11 + $0x128] sm:$0xff]
    %v345 = vld [vmem:[#allocation11 + $0x130] sm:$0xff]
    %v346 = vld [vmem:[#allocation11 + $0x138] sm:$0xff]
    %v347 = vld [vmem:[#allocation11 + $0x140] sm:$0xff]
    %v348 = vld [vmem:[#allocation11 + $0x148] sm:$0xff]
    %v349 = vld [vmem:[#allocation11 + $0x150] sm:$0xff]
    %v350 = vld [vmem:[#allocation11 + $0x158] sm:$0xff]
    %v351 = vld [vmem:[#allocation11 + $0x160] sm:$0xff]
    %v352 = vld [vmem:[#allocation11 + $0x168] sm:$0xff]
    %v353 = vld [vmem:[#allocation11 + $0x170] sm:$0xff]
    %v354 = vld [vmem:[#allocation11 + $0x178] sm:$0xff]
    %v355 = vld [vmem:[#allocation11 + $0x180] sm:$0xff]
    %v356 = vld [vmem:[#allocation11 + $0x188] sm:$0xff]
    %v357 = vld [vmem:[#allocation11 + $0x190] sm:$0xff]
    %v358 = vld [vmem:[#allocation11 + $0x198] sm:$0xff]
    %v359 = vld [vmem:[#allocation11 + $0x1a0] sm:$0xff]
    %v360 = vld [vmem:[#allocation11 + $0x1a8] sm:$0xff]
    %v361 = vld [vmem:[#allocation11 + $0x1b0] sm:$0xff]
    %v362 = vld [vmem:[#allocation11 + $0x1b8] sm:$0xff]
    %v363 = vld [vmem:[#allocation11 + $0x1c0] sm:$0xff]
    %v364 = vld [vmem:[#allocation11 + $0x1c8] sm:$0xff]
    %v365 = vld [vmem:[#allocation11 + $0x1d0] sm:$0xff]
    %v366 = vld [vmem:[#allocation11 + $0x1d8] sm:$0xff]
    %v367 = vld [vmem:[#allocation11 + $0x1e0] sm:$0xff]
    %v368 = vld [vmem:[#allocation11 + $0x1e8] sm:$0xff]
    %v369 = vld [vmem:[#allocation11 + $0x1f0] sm:$0xff]
    %v370 = vld [vmem:[#allocation11 + $0x1f8] sm:$0xff]
    %v371 = vld [vmem:[#allocation13] sm:$0xf]
    %v372 = vpack.c.bf16 %v305, %v303
    %v373 = vpack.c.bf16 %v306, %v304
    %v375 = vperm.slane %v371, 0
    %v376 = vperm.slane %v371, 1
    %v377 = vperm.slane %v371, 2
    %v378 = vperm.slane %v371, 3
    %v447 = vunpack.c.l.b16 %v307
    %v448 = vunpack.c.h.b16 %v307
    %v449 = vunpack.c.l.b16 %v308
    %v450 = vunpack.c.h.b16 %v308
    %v451 = vunpack.c.l.b16 %v309
    %v452 = vunpack.c.h.b16 %v309
    %v453 = vunpack.c.l.b16 %v310
    %v454 = vunpack.c.h.b16 %v310
    %v455 = vunpack.c.l.b16 %v311
    %v456 = vunpack.c.h.b16 %v311
    %v457 = vunpack.c.l.b16 %v312
    %v458 = vunpack.c.h.b16 %v312
    %v459 = vunpack.c.l.b16 %v313
    %v460 = vunpack.c.h.b16 %v313
    %v461 = vunpack.c.l.b16 %v314
    %v462 = vunpack.c.h.b16 %v314
    %v463 = vunpack.c.l.b16 %v315
    %v464 = vunpack.c.h.b16 %v315
    %v465 = vunpack.c.l.b16 %v316
    %v466 = vunpack.c.h.b16 %v316
    %v467 = vunpack.c.l.b16 %v317
    %v468 = vunpack.c.h.b16 %v317
    %v469 = vunpack.c.l.b16 %v318
    %v470 = vunpack.c.h.b16 %v318
    %v471 = vunpack.c.l.b16 %v319
    %v472 = vunpack.c.h.b16 %v319
    %v473 = vunpack.c.l.b16 %v320
    %v474 = vunpack.c.h.b16 %v320
    %v475 = vunpack.c.l.b16 %v321
    %v476 = vunpack.c.h.b16 %v321
    %v477 = vunpack.c.l.b16 %v322
    %v478 = vunpack.c.h.b16 %v322
    %v479 = vunpack.c.l.b16 %v323
    %v480 = vunpack.c.h.b16 %v323
    %v481 = vunpack.c.l.b16 %v324
    %v482 = vunpack.c.h.b16 %v324
    %v483 = vunpack.c.l.b16 %v325
    %v484 = vunpack.c.h.b16 %v325
    %v485 = vunpack.c.l.b16 %v326
    %v486 = vunpack.c.h.b16 %v326
    %v487 = vunpack.c.l.b16 %v327
    %v488 = vunpack.c.h.b16 %v327
    %v489 = vunpack.c.l.b16 %v328
    %v490 = vunpack.c.h.b16 %v328
    %v491 = vunpack.c.l.b16 %v329
    %v492 = vunpack.c.h.b16 %v329
    %v493 = vunpack.c.l.b16 %v330
    %v494 = vunpack.c.h.b16 %v330
    %v495 = vunpack.c.l.b16 %v331
    %v496 = vunpack.c.h.b16 %v331
    %v497 = vunpack.c.l.b16 %v332
    %v498 = vunpack.c.h.b16 %v332
    %v499 = vunpack.c.l.b16 %v333
    %v500 = vunpack.c.h.b16 %v333
    %v501 = vunpack.c.l.b16 %v334
    %v502 = vunpack.c.h.b16 %v334
    %v503 = vunpack.c.l.b16 %v335
    %v504 = vunpack.c.h.b16 %v335
    %v505 = vunpack.c.l.b16 %v336
    %v506 = vunpack.c.h.b16 %v336
    %v507 = vunpack.c.l.b16 %v337
    %v508 = vunpack.c.h.b16 %v337
    %v509 = vunpack.c.l.b16 %v338
    %v510 = vunpack.c.h.b16 %v338
    %v511 = vunpack.c.l.b16 %v339
    %v512 = vunpack.c.h.b16 %v339
    %v513 = vunpack.c.l.b16 %v340
    %v514 = vunpack.c.h.b16 %v340
    %v515 = vunpack.c.l.b16 %v341
    %v516 = vunpack.c.h.b16 %v341
    %v517 = vunpack.c.l.b16 %v342
    %v518 = vunpack.c.h.b16 %v342
    %v519 = vunpack.c.l.b16 %v343
    %v520 = vunpack.c.h.b16 %v343
    %v521 = vunpack.c.l.b16 %v344
    %v522 = vunpack.c.h.b16 %v344
    %v523 = vunpack.c.l.b16 %v345
    %v524 = vunpack.c.h.b16 %v345
    %v525 = vunpack.c.l.b16 %v346
    %v526 = vunpack.c.h.b16 %v346
    %v527 = vunpack.c.l.b16 %v347
    %v528 = vunpack.c.h.b16 %v347
    %v529 = vunpack.c.l.b16 %v348
    %v530 = vunpack.c.h.b16 %v348
    %v531 = vunpack.c.l.b16 %v349
    %v532 = vunpack.c.h.b16 %v349
    %v533 = vunpack.c.l.b16 %v350
    %v534 = vunpack.c.h.b16 %v350
    %v535 = vunpack.c.l.b16 %v351
    %v536 = vunpack.c.h.b16 %v351
    %v537 = vunpack.c.l.b16 %v352
    %v538 = vunpack.c.h.b16 %v352
    %v539 = vunpack.c.l.b16 %v353
    %v540 = vunpack.c.h.b16 %v353
    %v541 = vunpack.c.l.b16 %v354
    %v542 = vunpack.c.h.b16 %v354
    %v543 = vunpack.c.l.b16 %v355
    %v544 = vunpack.c.h.b16 %v355
    %v545 = vunpack.c.l.b16 %v356
    %v546 = vunpack.c.h.b16 %v356
    %v547 = vunpack.c.l.b16 %v357
    %v548 = vunpack.c.h.b16 %v357
    %v549 = vunpack.c.l.b16 %v358
    %v550 = vunpack.c.h.b16 %v358
    %v551 = vunpack.c.l.b16 %v359
    %v552 = vunpack.c.h.b16 %v359
    %v553 = vunpack.c.l.b16 %v360
    %v554 = vunpack.c.h.b16 %v360
    %v555 = vunpack.c.l.b16 %v361
    %v556 = vunpack.c.h.b16 %v361
    %v557 = vunpack.c.l.b16 %v362
    %v558 = vunpack.c.h.b16 %v362
    %v559 = vunpack.c.l.b16 %v363
    %v560 = vunpack.c.h.b16 %v363
    %v561 = vunpack.c.l.b16 %v364
    %v562 = vunpack.c.h.b16 %v364
    %v563 = vunpack.c.l.b16 %v365
    %v564 = vunpack.c.h.b16 %v365
    %v565 = vunpack.c.l.b16 %v366
    %v566 = vunpack.c.h.b16 %v366
    %v567 = vunpack.c.l.b16 %v367
    %v568 = vunpack.c.h.b16 %v367
    %v569 = vunpack.c.l.b16 %v368
    %v570 = vunpack.c.h.b16 %v368
    %v571 = vunpack.c.l.b16 %v369
    %v572 = vunpack.c.h.b16 %v369
    %v573 = vunpack.c.l.b16 %v370
    %v574 = vunpack.c.h.b16 %v370
    %v575 = vpack.c.b16 %v451, %v447
    %v576 = vpack.c.b16 %v452, %v448
    %v577 = vpack.c.b16 %v453, %v449
    %v578 = vpack.c.b16 %v454, %v450
    %v579 = vpack.c.b16 %v459, %v455
    %v580 = vpack.c.b16 %v460, %v456
    %v581 = vpack.c.b16 %v461, %v457
    %v582 = vpack.c.b16 %v462, %v458
    %v583 = vpack.c.b16 %v467, %v463
    %v584 = vpack.c.b16 %v468, %v464
    %v585 = vpack.c.b16 %v469, %v465
    %v586 = vpack.c.b16 %v470, %v466
    %v587 = vpack.c.b16 %v475, %v471
    %v588 = vpack.c.b16 %v476, %v472
    %v589 = vpack.c.b16 %v477, %v473
    %v590 = vpack.c.b16 %v478, %v474
    %v591 = vpack.c.b16 %v483, %v479
    %v592 = vpack.c.b16 %v484, %v480
    %v593 = vpack.c.b16 %v485, %v481
    %v594 = vpack.c.b16 %v486, %v482
    %v595 = vpack.c.b16 %v491, %v487
    %v596 = vpack.c.b16 %v492, %v488
    %v597 = vpack.c.b16 %v493, %v489
    %v598 = vpack.c.b16 %v494, %v490
    %v599 = vpack.c.b16 %v499, %v495
    %v600 = vpack.c.b16 %v500, %v496
    %v601 = vpack.c.b16 %v501, %v497
    %v602 = vpack.c.b16 %v502, %v498
    %v603 = vpack.c.b16 %v507, %v503
    %v604 = vpack.c.b16 %v508, %v504
    %v605 = vpack.c.b16 %v509, %v505
    %v606 = vpack.c.b16 %v510, %v506
    %v607 = vpack.c.b16 %v515, %v511
    %v608 = vpack.c.b16 %v516, %v512
    %v609 = vpack.c.b16 %v517, %v513
    %v610 = vpack.c.b16 %v518, %v514
    %v611 = vpack.c.b16 %v523, %v519
    %v612 = vpack.c.b16 %v524, %v520
    %v613 = vpack.c.b16 %v525, %v521
    %v614 = vpack.c.b16 %v526, %v522
    %v615 = vpack.c.b16 %v531, %v527
    %v616 = vpack.c.b16 %v532, %v528
    %v617 = vpack.c.b16 %v533, %v529
    %v618 = vpack.c.b16 %v534, %v530
    %v619 = vpack.c.b16 %v539, %v535
    %v620 = vpack.c.b16 %v540, %v536
    %v621 = vpack.c.b16 %v541, %v537
    %v622 = vpack.c.b16 %v542, %v538
    %v623 = vpack.c.b16 %v547, %v543
    %v624 = vpack.c.b16 %v548, %v544
    %v625 = vpack.c.b16 %v549, %v545
    %v626 = vpack.c.b16 %v550, %v546
    %v627 = vpack.c.b16 %v555, %v551
    %v628 = vpack.c.b16 %v556, %v552
    %v629 = vpack.c.b16 %v557, %v553
    %v630 = vpack.c.b16 %v558, %v554
    %v631 = vpack.c.b16 %v563, %v559
    %v632 = vpack.c.b16 %v564, %v560
    %v633 = vpack.c.b16 %v565, %v561
    %v634 = vpack.c.b16 %v566, %v562
    %v635 = vpack.c.b16 %v571, %v567
    %v636 = vpack.c.b16 %v572, %v568
    %v637 = vpack.c.b16 %v573, %v569
    %v638 = vpack.c.b16 %v574, %v570
    %703 = vmatpush.bf16.msra.mxu0 %v603
    %704 = vmatpush.bf16.msra.mxu0 %v599
    %705 = vmatpush.bf16.msra.mxu0 %v595
    %706 = vmatpush.bf16.msra.mxu0 %v591
    %707 = vmatpush.bf16.msra.mxu0 %v587
    %708 = vmatpush.bf16.msra.mxu0 %v583
    %709 = vmatpush.bf16.msra.mxu0 %v579
    %710 = vmatpush.bf16.msra.mxu0 %v575
    %711 = vmatmul.bf16.gmra.mxu0 %v372
    %v712 = vpop.f32.mrf.mxu0
    %v713 = vadd.f32 %v375, %v712
    %v714 = vpop.f32.mrf.mxu0
    %v715 = vadd.f32 %v375, %v714
    %716 = vdwg.mxu0
    %717 = vmatpush.bf16.msra.mxu0 %v635
    %718 = vmatpush.bf16.msra.mxu0 %v631
    %719 = vmatpush.bf16.msra.mxu0 %v627
    %720 = vmatpush.bf16.msra.mxu0 %v623
    %721 = vmatpush.bf16.msra.mxu0 %v619
    %722 = vmatpush.bf16.msra.mxu0 %v615
    %723 = vmatpush.bf16.msra.mxu0 %v611
    %724 = vmatpush.bf16.msra.mxu0 %v607
    %725 = vmatmul.bf16.gmra.mxu0 %v373
    %v726 = vpop.f32.mrf.mxu0
    %v727 = vadd.f32 %v713, %v726
    %v728 = vpop.f32.mrf.mxu0
    %v729 = vadd.f32 %v715, %v728
    %730 = vdwg.mxu0
    %731 = vmatpush.bf16.msra.mxu0 %v604
    %732 = vmatpush.bf16.msra.mxu0 %v600
    %733 = vmatpush.bf16.msra.mxu0 %v596
    %734 = vmatpush.bf16.msra.mxu0 %v592
    %735 = vmatpush.bf16.msra.mxu0 %v588
    %736 = vmatpush.bf16.msra.mxu0 %v584
    %737 = vmatpush.bf16.msra.mxu0 %v580
    %738 = vmatpush.bf16.msra.mxu0 %v576
    %739 = vmatmul.bf16.gmra.mxu0 %v372
    %v740 = vpop.f32.mrf.mxu0
    %v741 = vadd.f32 %v376, %v740
    %v742 = vpop.f32.mrf.mxu0
    %v743 = vadd.f32 %v376, %v742
    %744 = vdwg.mxu0
    %745 = vmatpush.bf16.msra.mxu0 %v636
    %746 = vmatpush.bf16.msra.mxu0 %v632
    %747 = vmatpush.bf16.msra.mxu0 %v628
    %748 = vmatpush.bf16.msra.mxu0 %v624
    %749 = vmatpush.bf16.msra.mxu0 %v620
    %750 = vmatpush.bf16.msra.mxu0 %v616
    %751 = vmatpush.bf16.msra.mxu0 %v612
    %752 = vmatpush.bf16.msra.mxu0 %v608
    %753 = vmatmul.bf16.gmra.mxu0 %v373
    %v754 = vpop.f32.mrf.mxu0
    %v755 = vadd.f32 %v741, %v754
    %v756 = vpop.f32.mrf.mxu0
    %v757 = vadd.f32 %v743, %v756
    %758 = vdwg.mxu0
    %759 = vmatpush.bf16.msra.mxu0 %v605
    %760 = vmatpush.bf16.msra.mxu0 %v601
    %761 = vmatpush.bf16.msra.mxu0 %v597
    %762 = vmatpush.bf16.msra.mxu0 %v593
    %763 = vmatpush.bf16.msra.mxu0 %v589
    %764 = vmatpush.bf16.msra.mxu0 %v585
    %765 = vmatpush.bf16.msra.mxu0 %v581
    %766 = vmatpush.bf16.msra.mxu0 %v577
    %767 = vmatmul.bf16.gmra.mxu0 %v372
    %v768 = vpop.f32.mrf.mxu0
    %v769 = vadd.f32 %v377, %v768
    %v770 = vpop.f32.mrf.mxu0
    %v771 = vadd.f32 %v377, %v770
    %772 = vdwg.mxu0
    %773 = vmatpush.bf16.msra.mxu0 %v637
    %774 = vmatpush.bf16.msra.mxu0 %v633
    %775 = vmatpush.bf16.msra.mxu0 %v629
    %776 = vmatpush.bf16.msra.mxu0 %v625
    %777 = vmatpush.bf16.msra.mxu0 %v621
    %778 = vmatpush.bf16.msra.mxu0 %v617
    %779 = vmatpush.bf16.msra.mxu0 %v613
    %780 = vmatpush.bf16.msra.mxu0 %v609
    %781 = vmatmul.bf16.gmra.mxu0 %v373
    %v782 = vpop.f32.mrf.mxu0
    %v783 = vadd.f32 %v769, %v782
    %v784 = vpop.f32.mrf.mxu0
    %v785 = vadd.f32 %v771, %v784
    %786 = vdwg.mxu0
    %787 = vmatpush.bf16.msra.mxu0 %v606
    %788 = vmatpush.bf16.msra.mxu0 %v602
    %789 = vmatpush.bf16.msra.mxu0 %v598
    %790 = vmatpush.bf16.msra.mxu0 %v594
    %791 = vmatpush.bf16.msra.mxu0 %v590
    %792 = vmatpush.bf16.msra.mxu0 %v586
    %793 = vmatpush.bf16.msra.mxu0 %v582
    %794 = vmatpush.bf16.msra.mxu0 %v578
    %795 = vmatmul.bf16.gmra.mxu0 %v372
    %v796 = vpop.f32.mrf.mxu0
    %v797 = vadd.f32 %v378, %v796
    %v798 = vpop.f32.mrf.mxu0
    %v799 = vadd.f32 %v378, %v798
    %800 = vdwg.mxu0
    %801 = vmatpush.bf16.msra.mxu0 %v638
    %802 = vmatpush.bf16.msra.mxu0 %v634
    %803 = vmatpush.bf16.msra.mxu0 %v630
    %804 = vmatpush.bf16.msra.mxu0 %v626
    %805 = vmatpush.bf16.msra.mxu0 %v622
    %806 = vmatpush.bf16.msra.mxu0 %v618
    %807 = vmatpush.bf16.msra.mxu0 %v614
    %808 = vmatpush.bf16.msra.mxu0 %v610
    %809 = vmatmul.bf16.gmra.mxu0 %v373
    %v810 = vpop.f32.mrf.mxu0
    %v811 = vadd.f32 %v797, %v810
    %v812 = vpop.f32.mrf.mxu0
    %v813 = vadd.f32 %v799, %v812
    %814 = vdwg.mxu0
    %vm815 = vcmp.gt.f32.partialorder %v727, 0.0
    %vm816 = vcmp.gt.f32.partialorder %v755, 0.0
    %vm817 = vcmp.gt.f32.partialorder %v783, 0.0
    %vm818 = vcmp.gt.f32.partialorder %v811, 0.0
    %vm819 = vcmp.gt.f32.partialorder %v729, 0.0
    %vm820 = vcmp.gt.f32.partialorder %v757, 0.0
    %vm821 = vcmp.gt.f32.partialorder %v785, 0.0
    %vm822 = vcmp.gt.f32.partialorder %v813, 0.0
    %v823 = vmul.f32 %v727, 0.2
    %v824 = vmul.f32 %v755, 0.2
    %v825 = vmul.f32 %v783, 0.2
    %v826 = vmul.f32 %v811, 0.2
    %v827 = vmul.f32 %v729, 0.2
    %v828 = vmul.f32 %v757, 0.2
    %v829 = vmul.f32 %v785, 0.2
    %v830 = vmul.f32 %v813, 0.2
    %v831 = vsel %vm815, %v727, %v823
    %v832 = vsel %vm816, %v755, %v824
    %v833 = vsel %vm817, %v783, %v825
    %v834 = vsel %vm818, %v811, %v826
    %v835 = vsel %vm819, %v729, %v827
    %v836 = vsel %vm820, %v757, %v828
    %v837 = vsel %vm821, %v785, %v829
    %v838 = vsel %vm822, %v813, %v830
    %s839 = smul.u32 4, 64
    %s840 = smul.u32 %s839, 8
    %s841 = sshll.u32 %s840, 4
    %842 = dma.done [#allocation4], %s841
    %v843 = vld [vmem:[#allocation2] sm:$0xff]
    %v844 = vld [vmem:[#allocation2 + $0x8] sm:$0xff]
    %v845 = vld [vmem:[#allocation2 + $0x10] sm:$0xff]
    %v846 = vld [vmem:[#allocation2 + $0x18] sm:$0xff]
    %v847 = vld [vmem:[#allocation2 + $0x20] sm:$0xff]
    %v848 = vld [vmem:[#allocation2 + $0x28] sm:$0xff]
    %v849 = vld [vmem:[#allocation2 + $0x30] sm:$0xff]
    %v850 = vld [vmem:[#allocation2 + $0x38] sm:$0xff]
    %v851 = vld [vmem:[#allocation2 + $0x40] sm:$0xff]
    %v852 = vld [vmem:[#allocation2 + $0x48] sm:$0xff]
    %v853 = vld [vmem:[#allocation2 + $0x50] sm:$0xff]
    %v854 = vld [vmem:[#allocation2 + $0x58] sm:$0xff]
    %v855 = vld [vmem:[#allocation2 + $0x60] sm:$0xff]
    %v856 = vld [vmem:[#allocation2 + $0x68] sm:$0xff]
    %v857 = vld [vmem:[#allocation2 + $0x70] sm:$0xff]
    %v858 = vld [vmem:[#allocation2 + $0x78] sm:$0xff]
    %v859 = vld [vmem:[#allocation2 + $0x80] sm:$0xff]
    %v860 = vld [vmem:[#allocation2 + $0x88] sm:$0xff]
    %v861 = vld [vmem:[#allocation2 + $0x90] sm:$0xff]
    %v862 = vld [vmem:[#allocation2 + $0x98] sm:$0xff]
    %v863 = vld [vmem:[#allocation2 + $0xa0] sm:$0xff]
    %v864 = vld [vmem:[#allocation2 + $0xa8] sm:$0xff]
    %v865 = vld [vmem:[#allocation2 + $0xb0] sm:$0xff]
    %v866 = vld [vmem:[#allocation2 + $0xb8] sm:$0xff]
    %v867 = vld [vmem:[#allocation2 + $0xc0] sm:$0xff]
    %v868 = vld [vmem:[#allocation2 + $0xc8] sm:$0xff]
    %v869 = vld [vmem:[#allocation2 + $0xd0] sm:$0xff]
    %v870 = vld [vmem:[#allocation2 + $0xd8] sm:$0xff]
    %v871 = vld [vmem:[#allocation2 + $0xe0] sm:$0xff]
    %v872 = vld [vmem:[#allocation2 + $0xe8] sm:$0xff]
    %v873 = vld [vmem:[#allocation2 + $0xf0] sm:$0xff]
    %v874 = vld [vmem:[#allocation2 + $0xf8] sm:$0xff]
    %v875 = vld [vmem:[#allocation2 + $0x100] sm:$0xff]
    %v876 = vld [vmem:[#allocation2 + $0x108] sm:$0xff]
    %v877 = vld [vmem:[#allocation2 + $0x110] sm:$0xff]
    %v878 = vld [vmem:[#allocation2 + $0x118] sm:$0xff]
    %v879 = vld [vmem:[#allocation2 + $0x120] sm:$0xff]
    %v880 = vld [vmem:[#allocation2 + $0x128] sm:$0xff]
    %v881 = vld [vmem:[#allocation2 + $0x130] sm:$0xff]
    %v882 = vld [vmem:[#allocation2 + $0x138] sm:$0xff]
    %v883 = vld [vmem:[#allocation2 + $0x140] sm:$0xff]
    %v884 = vld [vmem:[#allocation2 + $0x148] sm:$0xff]
    %v885 = vld [vmem:[#allocation2 + $0x150] sm:$0xff]
    %v886 = vld [vmem:[#allocation2 + $0x158] sm:$0xff]
    %v887 = vld [vmem:[#allocation2 + $0x160] sm:$0xff]
    %v888 = vld [vmem:[#allocation2 + $0x168] sm:$0xff]
    %v889 = vld [vmem:[#allocation2 + $0x170] sm:$0xff]
    %v890 = vld [vmem:[#allocation2 + $0x178] sm:$0xff]
    %v891 = vld [vmem:[#allocation2 + $0x180] sm:$0xff]
    %v892 = vld [vmem:[#allocation2 + $0x188] sm:$0xff]
    %v893 = vld [vmem:[#allocation2 + $0x190] sm:$0xff]
    %v894 = vld [vmem:[#allocation2 + $0x198] sm:$0xff]
    %v895 = vld [vmem:[#allocation2 + $0x1a0] sm:$0xff]
    %v896 = vld [vmem:[#allocation2 + $0x1a8] sm:$0xff]
    %v897 = vld [vmem:[#allocation2 + $0x1b0] sm:$0xff]
    %v898 = vld [vmem:[#allocation2 + $0x1b8] sm:$0xff]
    %v899 = vld [vmem:[#allocation2 + $0x1c0] sm:$0xff]
    %v900 = vld [vmem:[#allocation2 + $0x1c8] sm:$0xff]
    %v901 = vld [vmem:[#allocation2 + $0x1d0] sm:$0xff]
    %v902 = vld [vmem:[#allocation2 + $0x1d8] sm:$0xff]
    %v903 = vld [vmem:[#allocation2 + $0x1e0] sm:$0xff]
    %v904 = vld [vmem:[#allocation2 + $0x1e8] sm:$0xff]
    %v905 = vld [vmem:[#allocation2 + $0x1f0] sm:$0xff]
    %v906 = vld [vmem:[#allocation2 + $0x1f8] sm:$0xff]
    %v907 = vld [vmem:[#allocation2 + $0x200] sm:$0xff]
    %v908 = vld [vmem:[#allocation2 + $0x208] sm:$0xff]
    %v909 = vld [vmem:[#allocation2 + $0x210] sm:$0xff]
    %v910 = vld [vmem:[#allocation2 + $0x218] sm:$0xff]
    %v911 = vld [vmem:[#allocation2 + $0x220] sm:$0xff]
    %v912 = vld [vmem:[#allocation2 + $0x228] sm:$0xff]
    %v913 = vld [vmem:[#allocation2 + $0x230] sm:$0xff]
    %v914 = vld [vmem:[#allocation2 + $0x238] sm:$0xff]
    %v915 = vld [vmem:[#allocation2 + $0x240] sm:$0xff]
    %v916 = vld [vmem:[#allocation2 + $0x248] sm:$0xff]
    %v917 = vld [vmem:[#allocation2 + $0x250] sm:$0xff]
    %v918 = vld [vmem:[#allocation2 + $0x258] sm:$0xff]
    %v919 = vld [vmem:[#allocation2 + $0x260] sm:$0xff]
    %v920 = vld [vmem:[#allocation2 + $0x268] sm:$0xff]
    %v921 = vld [vmem:[#allocation2 + $0x270] sm:$0xff]
    %v922 = vld [vmem:[#allocation2 + $0x278] sm:$0xff]
    %v923 = vld [vmem:[#allocation2 + $0x280] sm:$0xff]
    %v924 = vld [vmem:[#allocation2 + $0x288] sm:$0xff]
    %v925 = vld [vmem:[#allocation2 + $0x290] sm:$0xff]
    %v926 = vld [vmem:[#allocation2 + $0x298] sm:$0xff]
    %v927 = vld [vmem:[#allocation2 + $0x2a0] sm:$0xff]
    %v928 = vld [vmem:[#allocation2 + $0x2a8] sm:$0xff]
    %v929 = vld [vmem:[#allocation2 + $0x2b0] sm:$0xff]
    %v930 = vld [vmem:[#allocation2 + $0x2b8] sm:$0xff]
    %v931 = vld [vmem:[#allocation2 + $0x2c0] sm:$0xff]
    %v932 = vld [vmem:[#allocation2 + $0x2c8] sm:$0xff]
    %v933 = vld [vmem:[#allocation2 + $0x2d0] sm:$0xff]
    %v934 = vld [vmem:[#allocation2 + $0x2d8] sm:$0xff]
    %v935 = vld [vmem:[#allocation2 + $0x2e0] sm:$0xff]
    %v936 = vld [vmem:[#allocation2 + $0x2e8] sm:$0xff]
    %v937 = vld [vmem:[#allocation2 + $0x2f0] sm:$0xff]
    %v938 = vld [vmem:[#allocation2 + $0x2f8] sm:$0xff]
    %v939 = vld [vmem:[#allocation2 + $0x300] sm:$0xff]
    %v940 = vld [vmem:[#allocation2 + $0x308] sm:$0xff]
    %v941 = vld [vmem:[#allocation2 + $0x310] sm:$0xff]
    %v942 = vld [vmem:[#allocation2 + $0x318] sm:$0xff]
    %v943 = vld [vmem:[#allocation2 + $0x320] sm:$0xff]
    %v944 = vld [vmem:[#allocation2 + $0x328] sm:$0xff]
    %v945 = vld [vmem:[#allocation2 + $0x330] sm:$0xff]
    %v946 = vld [vmem:[#allocation2 + $0x338] sm:$0xff]
    %v947 = vld [vmem:[#allocation2 + $0x340] sm:$0xff]
    %v948 = vld [vmem:[#allocation2 + $0x348] sm:$0xff]
    %v949 = vld [vmem:[#allocation2 + $0x350] sm:$0xff]
    %v950 = vld [vmem:[#allocation2 + $0x358] sm:$0xff]
    %v951 = vld [vmem:[#allocation2 + $0x360] sm:$0xff]
    %v952 = vld [vmem:[#allocation2 + $0x368] sm:$0xff]
    %v953 = vld [vmem:[#allocation2 + $0x370] sm:$0xff]
    %v954 = vld [vmem:[#allocation2 + $0x378] sm:$0xff]
    %v955 = vld [vmem:[#allocation2 + $0x380] sm:$0xff]
    %v956 = vld [vmem:[#allocation2 + $0x388] sm:$0xff]
    %v957 = vld [vmem:[#allocation2 + $0x390] sm:$0xff]
    %v958 = vld [vmem:[#allocation2 + $0x398] sm:$0xff]
    %v959 = vld [vmem:[#allocation2 + $0x3a0] sm:$0xff]
    %v960 = vld [vmem:[#allocation2 + $0x3a8] sm:$0xff]
    %v961 = vld [vmem:[#allocation2 + $0x3b0] sm:$0xff]
    %v962 = vld [vmem:[#allocation2 + $0x3b8] sm:$0xff]
    %v963 = vld [vmem:[#allocation2 + $0x3c0] sm:$0xff]
    %v964 = vld [vmem:[#allocation2 + $0x3c8] sm:$0xff]
    %v965 = vld [vmem:[#allocation2 + $0x3d0] sm:$0xff]
    %v966 = vld [vmem:[#allocation2 + $0x3d8] sm:$0xff]
    %v967 = vld [vmem:[#allocation2 + $0x3e0] sm:$0xff]
    %v968 = vld [vmem:[#allocation2 + $0x3e8] sm:$0xff]
    %v969 = vld [vmem:[#allocation2 + $0x3f0] sm:$0xff]
    %v970 = vld [vmem:[#allocation2 + $0x3f8] sm:$0xff]
    %v971 = vld [vmem:[#allocation2 + $0x400] sm:$0xff]
    %v972 = vld [vmem:[#allocation2 + $0x408] sm:$0xff]
    %v973 = vld [vmem:[#allocation2 + $0x410] sm:$0xff]
    %v974 = vld [vmem:[#allocation2 + $0x418] sm:$0xff]
    %v975 = vld [vmem:[#allocation2 + $0x420] sm:$0xff]
    %v976 = vld [vmem:[#allocation2 + $0x428] sm:$0xff]
    %v977 = vld [vmem:[#allocation2 + $0x430] sm:$0xff]
    %v978 = vld [vmem:[#allocation2 + $0x438] sm:$0xff]
    %v979 = vld [vmem:[#allocation2 + $0x440] sm:$0xff]
    %v980 = vld [vmem:[#allocation2 + $0x448] sm:$0xff]
    %v981 = vld [vmem:[#allocation2 + $0x450] sm:$0xff]
    %v982 = vld [vmem:[#allocation2 + $0x458] sm:$0xff]
    %v983 = vld [vmem:[#allocation2 + $0x460] sm:$0xff]
    %v984 = vld [vmem:[#allocation2 + $0x468] sm:$0xff]
    %v985 = vld [vmem:[#allocation2 + $0x470] sm:$0xff]
    %v986 = vld [vmem:[#allocation2 + $0x478] sm:$0xff]
    %v987 = vld [vmem:[#allocation2 + $0x480] sm:$0xff]
    %v988 = vld [vmem:[#allocation2 + $0x488] sm:$0xff]
    %v989 = vld [vmem:[#allocation2 + $0x490] sm:$0xff]
    %v990 = vld [vmem:[#allocation2 + $0x498] sm:$0xff]
    %v991 = vld [vmem:[#allocation2 + $0x4a0] sm:$0xff]
    %v992 = vld [vmem:[#allocation2 + $0x4a8] sm:$0xff]
    %v993 = vld [vmem:[#allocation2 + $0x4b0] sm:$0xff]
    %v994 = vld [vmem:[#allocation2 + $0x4b8] sm:$0xff]
    %v995 = vld [vmem:[#allocation2 + $0x4c0] sm:$0xff]
    %v996 = vld [vmem:[#allocation2 + $0x4c8] sm:$0xff]
    %v997 = vld [vmem:[#allocation2 + $0x4d0] sm:$0xff]
    %v998 = vld [vmem:[#allocation2 + $0x4d8] sm:$0xff]
    %v999 = vld [vmem:[#allocation2 + $0x4e0] sm:$0xff]
    %v1000 = vld [vmem:[#allocation2 + $0x4e8] sm:$0xff]
    %v1001 = vld [vmem:[#allocation2 + $0x4f0] sm:$0xff]
    %v1002 = vld [vmem:[#allocation2 + $0x4f8] sm:$0xff]
    %v1003 = vld [vmem:[#allocation2 + $0x500] sm:$0xff]
    %v1004 = vld [vmem:[#allocation2 + $0x508] sm:$0xff]
    %v1005 = vld [vmem:[#allocation2 + $0x510] sm:$0xff]
    %v1006 = vld [vmem:[#allocation2 + $0x518] sm:$0xff]
    %v1007 = vld [vmem:[#allocation2 + $0x520] sm:$0xff]
    %v1008 = vld [vmem:[#allocation2 + $0x528] sm:$0xff]
    %v1009 = vld [vmem:[#allocation2 + $0x530] sm:$0xff]
    %v1010 = vld [vmem:[#allocation2 + $0x538] sm:$0xff]
    %v1011 = vld [vmem:[#allocation2 + $0x540] sm:$0xff]
    %v1012 = vld [vmem:[#allocation2 + $0x548] sm:$0xff]
    %v1013 = vld [vmem:[#allocation2 + $0x550] sm:$0xff]
    %v1014 = vld [vmem:[#allocation2 + $0x558] sm:$0xff]
    %v1015 = vld [vmem:[#allocation2 + $0x560] sm:$0xff]
    %v1016 = vld [vmem:[#allocation2 + $0x568] sm:$0xff]
    %v1017 = vld [vmem:[#allocation2 + $0x570] sm:$0xff]
    %v1018 = vld [vmem:[#allocation2 + $0x578] sm:$0xff]
    %v1019 = vld [vmem:[#allocation2 + $0x580] sm:$0xff]
    %v1020 = vld [vmem:[#allocation2 + $0x588] sm:$0xff]
    %v1021 = vld [vmem:[#allocation2 + $0x590] sm:$0xff]
    %v1022 = vld [vmem:[#allocation2 + $0x598] sm:$0xff]
    %v1023 = vld [vmem:[#allocation2 + $0x5a0] sm:$0xff]
    %v1024 = vld [vmem:[#allocation2 + $0x5a8] sm:$0xff]
    %v1025 = vld [vmem:[#allocation2 + $0x5b0] sm:$0xff]
    %v1026 = vld [vmem:[#allocation2 + $0x5b8] sm:$0xff]
    %v1027 = vld [vmem:[#allocation2 + $0x5c0] sm:$0xff]
    %v1028 = vld [vmem:[#allocation2 + $0x5c8] sm:$0xff]
    %v1029 = vld [vmem:[#allocation2 + $0x5d0] sm:$0xff]
    %v1030 = vld [vmem:[#allocation2 + $0x5d8] sm:$0xff]
    %v1031 = vld [vmem:[#allocation2 + $0x5e0] sm:$0xff]
    %v1032 = vld [vmem:[#allocation2 + $0x5e8] sm:$0xff]
    %v1033 = vld [vmem:[#allocation2 + $0x5f0] sm:$0xff]
    %v1034 = vld [vmem:[#allocation2 + $0x5f8] sm:$0xff]
    %v1035 = vld [vmem:[#allocation2 + $0x600] sm:$0xff]
    %v1036 = vld [vmem:[#allocation2 + $0x608] sm:$0xff]
    %v1037 = vld [vmem:[#allocation2 + $0x610] sm:$0xff]
    %v1038 = vld [vmem:[#allocation2 + $0x618] sm:$0xff]
    %v1039 = vld [vmem:[#allocation2 + $0x620] sm:$0xff]
    %v1040 = vld [vmem:[#allocation2 + $0x628] sm:$0xff]
    %v1041 = vld [vmem:[#allocation2 + $0x630] sm:$0xff]
    %v1042 = vld [vmem:[#allocation2 + $0x638] sm:$0xff]
    %v1043 = vld [vmem:[#allocation2 + $0x640] sm:$0xff]
    %v1044 = vld [vmem:[#allocation2 + $0x648] sm:$0xff]
    %v1045 = vld [vmem:[#allocation2 + $0x650] sm:$0xff]
    %v1046 = vld [vmem:[#allocation2 + $0x658] sm:$0xff]
    %v1047 = vld [vmem:[#allocation2 + $0x660] sm:$0xff]
    %v1048 = vld [vmem:[#allocation2 + $0x668] sm:$0xff]
    %v1049 = vld [vmem:[#allocation2 + $0x670] sm:$0xff]
    %v1050 = vld [vmem:[#allocation2 + $0x678] sm:$0xff]
    %v1051 = vld [vmem:[#allocation2 + $0x680] sm:$0xff]
    %v1052 = vld [vmem:[#allocation2 + $0x688] sm:$0xff]
    %v1053 = vld [vmem:[#allocation2 + $0x690] sm:$0xff]
    %v1054 = vld [vmem:[#allocation2 + $0x698] sm:$0xff]
    %v1055 = vld [vmem:[#allocation2 + $0x6a0] sm:$0xff]
    %v1056 = vld [vmem:[#allocation2 + $0x6a8] sm:$0xff]
    %v1057 = vld [vmem:[#allocation2 + $0x6b0] sm:$0xff]
    %v1058 = vld [vmem:[#allocation2 + $0x6b8] sm:$0xff]
    %v1059 = vld [vmem:[#allocation2 + $0x6c0] sm:$0xff]
    %v1060 = vld [vmem:[#allocation2 + $0x6c8] sm:$0xff]
    %v1061 = vld [vmem:[#allocation2 + $0x6d0] sm:$0xff]
    %v1062 = vld [vmem:[#allocation2 + $0x6d8] sm:$0xff]
    %v1063 = vld [vmem:[#allocation2 + $0x6e0] sm:$0xff]
    %v1064 = vld [vmem:[#allocation2 + $0x6e8] sm:$0xff]
    %v1065 = vld [vmem:[#allocation2 + $0x6f0] sm:$0xff]
    %v1066 = vld [vmem:[#allocation2 + $0x6f8] sm:$0xff]
    %v1067 = vld [vmem:[#allocation2 + $0x700] sm:$0xff]
    %v1068 = vld [vmem:[#allocation2 + $0x708] sm:$0xff]
    %v1069 = vld [vmem:[#allocation2 + $0x710] sm:$0xff]
    %v1070 = vld [vmem:[#allocation2 + $0x718] sm:$0xff]
    %v1071 = vld [vmem:[#allocation2 + $0x720] sm:$0xff]
    %v1072 = vld [vmem:[#allocation2 + $0x728] sm:$0xff]
    %v1073 = vld [vmem:[#allocation2 + $0x730] sm:$0xff]
    %v1074 = vld [vmem:[#allocation2 + $0x738] sm:$0xff]
    %v1075 = vld [vmem:[#allocation2 + $0x740] sm:$0xff]
    %v1076 = vld [vmem:[#allocation2 + $0x748] sm:$0xff]
    %v1077 = vld [vmem:[#allocation2 + $0x750] sm:$0xff]
    %v1078 = vld [vmem:[#allocation2 + $0x758] sm:$0xff]
    %v1079 = vld [vmem:[#allocation2 + $0x760] sm:$0xff]
    %v1080 = vld [vmem:[#allocation2 + $0x768] sm:$0xff]
    %v1081 = vld [vmem:[#allocation2 + $0x770] sm:$0xff]
    %v1082 = vld [vmem:[#allocation2 + $0x778] sm:$0xff]
    %v1083 = vld [vmem:[#allocation2 + $0x780] sm:$0xff]
    %v1084 = vld [vmem:[#allocation2 + $0x788] sm:$0xff]
    %v1085 = vld [vmem:[#allocation2 + $0x790] sm:$0xff]
    %v1086 = vld [vmem:[#allocation2 + $0x798] sm:$0xff]
    %v1087 = vld [vmem:[#allocation2 + $0x7a0] sm:$0xff]
    %v1088 = vld [vmem:[#allocation2 + $0x7a8] sm:$0xff]
    %v1089 = vld [vmem:[#allocation2 + $0x7b0] sm:$0xff]
    %v1090 = vld [vmem:[#allocation2 + $0x7b8] sm:$0xff]
    %v1091 = vld [vmem:[#allocation2 + $0x7c0] sm:$0xff]
    %v1092 = vld [vmem:[#allocation2 + $0x7c8] sm:$0xff]
    %v1093 = vld [vmem:[#allocation2 + $0x7d0] sm:$0xff]
    %v1094 = vld [vmem:[#allocation2 + $0x7d8] sm:$0xff]
    %v1095 = vld [vmem:[#allocation2 + $0x7e0] sm:$0xff]
    %v1096 = vld [vmem:[#allocation2 + $0x7e8] sm:$0xff]
    %v1097 = vld [vmem:[#allocation2 + $0x7f0] sm:$0xff]
    %v1098 = vld [vmem:[#allocation2 + $0x7f8] sm:$0xff]
    %v1099 = vld [vmem:[#allocation14] sm:$0xff]
    %v1100 = vpack.c.bf16 %v835, %v831
    %v1101 = vpack.c.bf16 %v836, %v832
    %v1102 = vpack.c.bf16 %v837, %v833
    %v1103 = vpack.c.bf16 %v838, %v834
    %v1105 = vperm.slane %v1099, 0
    %v1106 = vperm.slane %v1099, 1
    %v1107 = vperm.slane %v1099, 2
    %v1108 = vperm.slane %v1099, 3
    %v1109 = vperm.slane %v1099, 4
    %v1110 = vperm.slane %v1099, 5
    %v1111 = vperm.slane %v1099, 6
    %v1112 = vperm.slane %v1099, 7
    %v1377 = vunpack.c.l.b16 %v843
    %v1378 = vunpack.c.h.b16 %v843
    %v1379 = vunpack.c.l.b16 %v844
    %v1380 = vunpack.c.h.b16 %v844
    %v1381 = vunpack.c.l.b16 %v845
    %v1382 = vunpack.c.h.b16 %v845
    %v1383 = vunpack.c.l.b16 %v846
    %v1384 = vunpack.c.h.b16 %v846
    %v1385 = vunpack.c.l.b16 %v847
    %v1386 = vunpack.c.h.b16 %v847
    %v1387 = vunpack.c.l.b16 %v848
    %v1388 = vunpack.c.h.b16 %v848
    %v1389 = vunpack.c.l.b16 %v849
    %v1390 = vunpack.c.h.b16 %v849
    %v1391 = vunpack.c.l.b16 %v850
    %v1392 = vunpack.c.h.b16 %v850
    %v1393 = vunpack.c.l.b16 %v851
    %v1394 = vunpack.c.h.b16 %v851
    %v1395 = vunpack.c.l.b16 %v852
    %v1396 = vunpack.c.h.b16 %v852
    %v1397 = vunpack.c.l.b16 %v853
    %v1398 = vunpack.c.h.b16 %v853
    %v1399 = vunpack.c.l.b16 %v854
    %v1400 = vunpack.c.h.b16 %v854
    %v1401 = vunpack.c.l.b16 %v855
    %v1402 = vunpack.c.h.b16 %v855
    %v1403 = vunpack.c.l.b16 %v856
    %v1404 = vunpack.c.h.b16 %v856
    %v1405 = vunpack.c.l.b16 %v857
    %v1406 = vunpack.c.h.b16 %v857
    %v1407 = vunpack.c.l.b16 %v858
    %v1408 = vunpack.c.h.b16 %v858
    %v1409 = vunpack.c.l.b16 %v859
    %v1410 = vunpack.c.h.b16 %v859
    %v1411 = vunpack.c.l.b16 %v860
    %v1412 = vunpack.c.h.b16 %v860
    %v1413 = vunpack.c.l.b16 %v861
    %v1414 = vunpack.c.h.b16 %v861
    %v1415 = vunpack.c.l.b16 %v862
    %v1416 = vunpack.c.h.b16 %v862
    %v1417 = vunpack.c.l.b16 %v863
    %v1418 = vunpack.c.h.b16 %v863
    %v1419 = vunpack.c.l.b16 %v864
    %v1420 = vunpack.c.h.b16 %v864
    %v1421 = vunpack.c.l.b16 %v865
    %v1422 = vunpack.c.h.b16 %v865
    %v1423 = vunpack.c.l.b16 %v866
    %v1424 = vunpack.c.h.b16 %v866
    %v1425 = vunpack.c.l.b16 %v867
    %v1426 = vunpack.c.h.b16 %v867
    %v1427 = vunpack.c.l.b16 %v868
    %v1428 = vunpack.c.h.b16 %v868
    %v1429 = vunpack.c.l.b16 %v869
    %v1430 = vunpack.c.h.b16 %v869
    %v1431 = vunpack.c.l.b16 %v870
    %v1432 = vunpack.c.h.b16 %v870
    %v1433 = vunpack.c.l.b16 %v871
    %v1434 = vunpack.c.h.b16 %v871
    %v1435 = vunpack.c.l.b16 %v872
    %v1436 = vunpack.c.h.b16 %v872
    %v1437 = vunpack.c.l.b16 %v873
    %v1438 = vunpack.c.h.b16 %v873
    %v1439 = vunpack.c.l.b16 %v874
    %v1440 = vunpack.c.h.b16 %v874
    %v1441 = vunpack.c.l.b16 %v875
    %v1442 = vunpack.c.h.b16 %v875
    %v1443 = vunpack.c.l.b16 %v876
    %v1444 = vunpack.c.h.b16 %v876
    %v1445 = vunpack.c.l.b16 %v877
    %v1446 = vunpack.c.h.b16 %v877
    %v1447 = vunpack.c.l.b16 %v878
    %v1448 = vunpack.c.h.b16 %v878
    %v1449 = vunpack.c.l.b16 %v879
    %v1450 = vunpack.c.h.b16 %v879
    %v1451 = vunpack.c.l.b16 %v880
    %v1452 = vunpack.c.h.b16 %v880
    %v1453 = vunpack.c.l.b16 %v881
    %v1454 = vunpack.c.h.b16 %v881
    %v1455 = vunpack.c.l.b16 %v882
    %v1456 = vunpack.c.h.b16 %v882
    %v1457 = vunpack.c.l.b16 %v883
    %v1458 = vunpack.c.h.b16 %v883
    %v1459 = vunpack.c.l.b16 %v884
    %v1460 = vunpack.c.h.b16 %v884
    %v1461 = vunpack.c.l.b16 %v885
    %v1462 = vunpack.c.h.b16 %v885
    %v1463 = vunpack.c.l.b16 %v886
    %v1464 = vunpack.c.h.b16 %v886
    %v1465 = vunpack.c.l.b16 %v887
    %v1466 = vunpack.c.h.b16 %v887
    %v1467 = vunpack.c.l.b16 %v888
    %v1468 = vunpack.c.h.b16 %v888
    %v1469 = vunpack.c.l.b16 %v889
    %v1470 = vunpack.c.h.b16 %v889
    %v1471 = vunpack.c.l.b16 %v890
    %v1472 = vunpack.c.h.b16 %v890
    %v1473 = vunpack.c.l.b16 %v891
    %v1474 = vunpack.c.h.b16 %v891
    %v1475 = vunpack.c.l.b16 %v892
    %v1476 = vunpack.c.h.b16 %v892
    %v1477 = vunpack.c.l.b16 %v893
    %v1478 = vunpack.c.h.b16 %v893
    %v1479 = vunpack.c.l.b16 %v894
    %v1480 = vunpack.c.h.b16 %v894
    %v1481 = vunpack.c.l.b16 %v895
    %v1482 = vunpack.c.h.b16 %v895
    %v1483 = vunpack.c.l.b16 %v896
    %v1484 = vunpack.c.h.b16 %v896
    %v1485 = vunpack.c.l.b16 %v897
    %v1486 = vunpack.c.h.b16 %v897
    %v1487 = vunpack.c.l.b16 %v898
    %v1488 = vunpack.c.h.b16 %v898
    %v1489 = vunpack.c.l.b16 %v899
    %v1490 = vunpack.c.h.b16 %v899
    %v1491 = vunpack.c.l.b16 %v900
    %v1492 = vunpack.c.h.b16 %v900
    %v1493 = vunpack.c.l.b16 %v901
    %v1494 = vunpack.c.h.b16 %v901
    %v1495 = vunpack.c.l.b16 %v902
    %v1496 = vunpack.c.h.b16 %v902
    %v1497 = vunpack.c.l.b16 %v903
    %v1498 = vunpack.c.h.b16 %v903
    %v1499 = vunpack.c.l.b16 %v904
    %v1500 = vunpack.c.h.b16 %v904
    %v1501 = vunpack.c.l.b16 %v905
    %v1502 = vunpack.c.h.b16 %v905
    %v1503 = vunpack.c.l.b16 %v906
    %v1504 = vunpack.c.h.b16 %v906
    %v1505 = vunpack.c.l.b16 %v907
    %v1506 = vunpack.c.h.b16 %v907
    %v1507 = vunpack.c.l.b16 %v908
    %v1508 = vunpack.c.h.b16 %v908
    %v1509 = vunpack.c.l.b16 %v909
    %v1510 = vunpack.c.h.b16 %v909
    %v1511 = vunpack.c.l.b16 %v910
    %v1512 = vunpack.c.h.b16 %v910
    %v1513 = vunpack.c.l.b16 %v911
    %v1514 = vunpack.c.h.b16 %v911
    %v1515 = vunpack.c.l.b16 %v912
    %v1516 = vunpack.c.h.b16 %v912
    %v1517 = vunpack.c.l.b16 %v913
    %v1518 = vunpack.c.h.b16 %v913
    %v1519 = vunpack.c.l.b16 %v914
    %v1520 = vunpack.c.h.b16 %v914
    %v1521 = vunpack.c.l.b16 %v915
    %v1522 = vunpack.c.h.b16 %v915
    %v1523 = vunpack.c.l.b16 %v916
    %v1524 = vunpack.c.h.b16 %v916
    %v1525 = vunpack.c.l.b16 %v917
    %v1526 = vunpack.c.h.b16 %v917
    %v1527 = vunpack.c.l.b16 %v918
    %v1528 = vunpack.c.h.b16 %v918
    %v1529 = vunpack.c.l.b16 %v919
    %v1530 = vunpack.c.h.b16 %v919
    %v1531 = vunpack.c.l.b16 %v920
    %v1532 = vunpack.c.h.b16 %v920
    %v1533 = vunpack.c.l.b16 %v921
    %v1534 = vunpack.c.h.b16 %v921
    %v1535 = vunpack.c.l.b16 %v922
    %v1536 = vunpack.c.h.b16 %v922
    %v1537 = vunpack.c.l.b16 %v923
    %v1538 = vunpack.c.h.b16 %v923
    %v1539 = vunpack.c.l.b16 %v924
    %v1540 = vunpack.c.h.b16 %v924
    %v1541 = vunpack.c.l.b16 %v925
    %v1542 = vunpack.c.h.b16 %v925
    %v1543 = vunpack.c.l.b16 %v926
    %v1544 = vunpack.c.h.b16 %v926
    %v1545 = vunpack.c.l.b16 %v927
    %v1546 = vunpack.c.h.b16 %v927
    %v1547 = vunpack.c.l.b16 %v928
    %v1548 = vunpack.c.h.b16 %v928
    %v1549 = vunpack.c.l.b16 %v929
    %v1550 = vunpack.c.h.b16 %v929
    %v1551 = vunpack.c.l.b16 %v930
    %v1552 = vunpack.c.h.b16 %v930
    %v1553 = vunpack.c.l.b16 %v931
    %v1554 = vunpack.c.h.b16 %v931
    %v1555 = vunpack.c.l.b16 %v932
    %v1556 = vunpack.c.h.b16 %v932
    %v1557 = vunpack.c.l.b16 %v933
    %v1558 = vunpack.c.h.b16 %v933
    %v1559 = vunpack.c.l.b16 %v934
    %v1560 = vunpack.c.h.b16 %v934
    %v1561 = vunpack.c.l.b16 %v935
    %v1562 = vunpack.c.h.b16 %v935
    %v1563 = vunpack.c.l.b16 %v936
    %v1564 = vunpack.c.h.b16 %v936
    %v1565 = vunpack.c.l.b16 %v937
    %v1566 = vunpack.c.h.b16 %v937
    %v1567 = vunpack.c.l.b16 %v938
    %v1568 = vunpack.c.h.b16 %v938
    %v1569 = vunpack.c.l.b16 %v939
    %v1570 = vunpack.c.h.b16 %v939
    %v1571 = vunpack.c.l.b16 %v940
    %v1572 = vunpack.c.h.b16 %v940
    %v1573 = vunpack.c.l.b16 %v941
    %v1574 = vunpack.c.h.b16 %v941
    %v1575 = vunpack.c.l.b16 %v942
    %v1576 = vunpack.c.h.b16 %v942
    %v1577 = vunpack.c.l.b16 %v943
    %v1578 = vunpack.c.h.b16 %v943
    %v1579 = vunpack.c.l.b16 %v944
    %v1580 = vunpack.c.h.b16 %v944
    %v1581 = vunpack.c.l.b16 %v945
    %v1582 = vunpack.c.h.b16 %v945
    %v1583 = vunpack.c.l.b16 %v946
    %v1584 = vunpack.c.h.b16 %v946
    %v1585 = vunpack.c.l.b16 %v947
    %v1586 = vunpack.c.h.b16 %v947
    %v1587 = vunpack.c.l.b16 %v948
    %v1588 = vunpack.c.h.b16 %v948
    %v1589 = vunpack.c.l.b16 %v949
    %v1590 = vunpack.c.h.b16 %v949
    %v1591 = vunpack.c.l.b16 %v950
    %v1592 = vunpack.c.h.b16 %v950
    %v1593 = vunpack.c.l.b16 %v951
    %v1594 = vunpack.c.h.b16 %v951
    %v1595 = vunpack.c.l.b16 %v952
    %v1596 = vunpack.c.h.b16 %v952
    %v1597 = vunpack.c.l.b16 %v953
    %v1598 = vunpack.c.h.b16 %v953
    %v1599 = vunpack.c.l.b16 %v954
    %v1600 = vunpack.c.h.b16 %v954
    %v1601 = vunpack.c.l.b16 %v955
    %v1602 = vunpack.c.h.b16 %v955
    %v1603 = vunpack.c.l.b16 %v956
    %v1604 = vunpack.c.h.b16 %v956
    %v1605 = vunpack.c.l.b16 %v957
    %v1606 = vunpack.c.h.b16 %v957
    %v1607 = vunpack.c.l.b16 %v958
    %v1608 = vunpack.c.h.b16 %v958
    %v1609 = vunpack.c.l.b16 %v959
    %v1610 = vunpack.c.h.b16 %v959
    %v1611 = vunpack.c.l.b16 %v960
    %v1612 = vunpack.c.h.b16 %v960
    %v1613 = vunpack.c.l.b16 %v961
    %v1614 = vunpack.c.h.b16 %v961
    %v1615 = vunpack.c.l.b16 %v962
    %v1616 = vunpack.c.h.b16 %v962
    %v1617 = vunpack.c.l.b16 %v963
    %v1618 = vunpack.c.h.b16 %v963
    %v1619 = vunpack.c.l.b16 %v964
    %v1620 = vunpack.c.h.b16 %v964
    %v1621 = vunpack.c.l.b16 %v965
    %v1622 = vunpack.c.h.b16 %v965
    %v1623 = vunpack.c.l.b16 %v966
    %v1624 = vunpack.c.h.b16 %v966
    %v1625 = vunpack.c.l.b16 %v967
    %v1626 = vunpack.c.h.b16 %v967
    %v1627 = vunpack.c.l.b16 %v968
    %v1628 = vunpack.c.h.b16 %v968
    %v1629 = vunpack.c.l.b16 %v969
    %v1630 = vunpack.c.h.b16 %v969
    %v1631 = vunpack.c.l.b16 %v970
    %v1632 = vunpack.c.h.b16 %v970
    %v1633 = vunpack.c.l.b16 %v971
    %v1634 = vunpack.c.h.b16 %v971
    %v1635 = vunpack.c.l.b16 %v972
    %v1636 = vunpack.c.h.b16 %v972
    %v1637 = vunpack.c.l.b16 %v973
    %v1638 = vunpack.c.h.b16 %v973
    %v1639 = vunpack.c.l.b16 %v974
    %v1640 = vunpack.c.h.b16 %v974
    %v1641 = vunpack.c.l.b16 %v975
    %v1642 = vunpack.c.h.b16 %v975
    %v1643 = vunpack.c.l.b16 %v976
    %v1644 = vunpack.c.h.b16 %v976
    %v1645 = vunpack.c.l.b16 %v977
    %v1646 = vunpack.c.h.b16 %v977
    %v1647 = vunpack.c.l.b16 %v978
    %v1648 = vunpack.c.h.b16 %v978
    %v1649 = vunpack.c.l.b16 %v979
    %v1650 = vunpack.c.h.b16 %v979
    %v1651 = vunpack.c.l.b16 %v980
    %v1652 = vunpack.c.h.b16 %v980
    %v1653 = vunpack.c.l.b16 %v981
    %v1654 = vunpack.c.h.b16 %v981
    %v1655 = vunpack.c.l.b16 %v982
    %v1656 = vunpack.c.h.b16 %v982
    %v1657 = vunpack.c.l.b16 %v983
    %v1658 = vunpack.c.h.b16 %v983
    %v1659 = vunpack.c.l.b16 %v984
    %v1660 = vunpack.c.h.b16 %v984
    %v1661 = vunpack.c.l.b16 %v985
    %v1662 = vunpack.c.h.b16 %v985
    %v1663 = vunpack.c.l.b16 %v986
    %v1664 = vunpack.c.h.b16 %v986
    %v1665 = vunpack.c.l.b16 %v987
    %v1666 = vunpack.c.h.b16 %v987
    %v1667 = vunpack.c.l.b16 %v988
    %v1668 = vunpack.c.h.b16 %v988
    %v1669 = vunpack.c.l.b16 %v989
    %v1670 = vunpack.c.h.b16 %v989
    %v1671 = vunpack.c.l.b16 %v990
    %v1672 = vunpack.c.h.b16 %v990
    %v1673 = vunpack.c.l.b16 %v991
    %v1674 = vunpack.c.h.b16 %v991
    %v1675 = vunpack.c.l.b16 %v992
    %v1676 = vunpack.c.h.b16 %v992
    %v1677 = vunpack.c.l.b16 %v993
    %v1678 = vunpack.c.h.b16 %v993
    %v1679 = vunpack.c.l.b16 %v994
    %v1680 = vunpack.c.h.b16 %v994
    %v1681 = vunpack.c.l.b16 %v995
    %v1682 = vunpack.c.h.b16 %v995
    %v1683 = vunpack.c.l.b16 %v996
    %v1684 = vunpack.c.h.b16 %v996
    %v1685 = vunpack.c.l.b16 %v997
    %v1686 = vunpack.c.h.b16 %v997
    %v1687 = vunpack.c.l.b16 %v998
    %v1688 = vunpack.c.h.b16 %v998
    %v1689 = vunpack.c.l.b16 %v999
    %v1690 = vunpack.c.h.b16 %v999
    %v1691 = vunpack.c.l.b16 %v1000
    %v1692 = vunpack.c.h.b16 %v1000
    %v1693 = vunpack.c.l.b16 %v1001
    %v1694 = vunpack.c.h.b16 %v1001
    %v1695 = vunpack.c.l.b16 %v1002
    %v1696 = vunpack.c.h.b16 %v1002
    %v1697 = vunpack.c.l.b16 %v1003
    %v1698 = vunpack.c.h.b16 %v1003
    %v1699 = vunpack.c.l.b16 %v1004
    %v1700 = vunpack.c.h.b16 %v1004
    %v1701 = vunpack.c.l.b16 %v1005
    %v1702 = vunpack.c.h.b16 %v1005
    %v1703 = vunpack.c.l.b16 %v1006
    %v1704 = vunpack.c.h.b16 %v1006
    %v1705 = vunpack.c.l.b16 %v1007
    %v1706 = vunpack.c.h.b16 %v1007
    %v1707 = vunpack.c.l.b16 %v1008
    %v1708 = vunpack.c.h.b16 %v1008
    %v1709 = vunpack.c.l.b16 %v1009
    %v1710 = vunpack.c.h.b16 %v1009
    %v1711 = vunpack.c.l.b16 %v1010
    %v1712 = vunpack.c.h.b16 %v1010
    %v1713 = vunpack.c.l.b16 %v1011
    %v1714 = vunpack.c.h.b16 %v1011
    %v1715 = vunpack.c.l.b16 %v1012
    %v1716 = vunpack.c.h.b16 %v1012
    %v1717 = vunpack.c.l.b16 %v1013
    %v1718 = vunpack.c.h.b16 %v1013
    %v1719 = vunpack.c.l.b16 %v1014
    %v1720 = vunpack.c.h.b16 %v1014
    %v1721 = vunpack.c.l.b16 %v1015
    %v1722 = vunpack.c.h.b16 %v1015
    %v1723 = vunpack.c.l.b16 %v1016
    %v1724 = vunpack.c.h.b16 %v1016
    %v1725 = vunpack.c.l.b16 %v1017
    %v1726 = vunpack.c.h.b16 %v1017
    %v1727 = vunpack.c.l.b16 %v1018
    %v1728 = vunpack.c.h.b16 %v1018
    %v1729 = vunpack.c.l.b16 %v1019
    %v1730 = vunpack.c.h.b16 %v1019
    %v1731 = vunpack.c.l.b16 %v1020
    %v1732 = vunpack.c.h.b16 %v1020
    %v1733 = vunpack.c.l.b16 %v1021
    %v1734 = vunpack.c.h.b16 %v1021
    %v1735 = vunpack.c.l.b16 %v1022
    %v1736 = vunpack.c.h.b16 %v1022
    %v1737 = vunpack.c.l.b16 %v1023
    %v1738 = vunpack.c.h.b16 %v1023
    %v1739 = vunpack.c.l.b16 %v1024
    %v1740 = vunpack.c.h.b16 %v1024
    %v1741 = vunpack.c.l.b16 %v1025
    %v1742 = vunpack.c.h.b16 %v1025
    %v1743 = vunpack.c.l.b16 %v1026
    %v1744 = vunpack.c.h.b16 %v1026
    %v1745 = vunpack.c.l.b16 %v1027
    %v1746 = vunpack.c.h.b16 %v1027
    %v1747 = vunpack.c.l.b16 %v1028
    %v1748 = vunpack.c.h.b16 %v1028
    %v1749 = vunpack.c.l.b16 %v1029
    %v1750 = vunpack.c.h.b16 %v1029
    %v1751 = vunpack.c.l.b16 %v1030
    %v1752 = vunpack.c.h.b16 %v1030
    %v1753 = vunpack.c.l.b16 %v1031
    %v1754 = vunpack.c.h.b16 %v1031
    %v1755 = vunpack.c.l.b16 %v1032
    %v1756 = vunpack.c.h.b16 %v1032
    %v1757 = vunpack.c.l.b16 %v1033
    %v1758 = vunpack.c.h.b16 %v1033
    %v1759 = vunpack.c.l.b16 %v1034
    %v1760 = vunpack.c.h.b16 %v1034
    %v1761 = vunpack.c.l.b16 %v1035
    %v1762 = vunpack.c.h.b16 %v1035
    %v1763 = vunpack.c.l.b16 %v1036
    %v1764 = vunpack.c.h.b16 %v1036
    %v1765 = vunpack.c.l.b16 %v1037
    %v1766 = vunpack.c.h.b16 %v1037
    %v1767 = vunpack.c.l.b16 %v1038
    %v1768 = vunpack.c.h.b16 %v1038
    %v1769 = vunpack.c.l.b16 %v1039
    %v1770 = vunpack.c.h.b16 %v1039
    %v1771 = vunpack.c.l.b16 %v1040
    %v1772 = vunpack.c.h.b16 %v1040
    %v1773 = vunpack.c.l.b16 %v1041
    %v1774 = vunpack.c.h.b16 %v1041
    %v1775 = vunpack.c.l.b16 %v1042
    %v1776 = vunpack.c.h.b16 %v1042
    %v1777 = vunpack.c.l.b16 %v1043
    %v1778 = vunpack.c.h.b16 %v1043
    %v1779 = vunpack.c.l.b16 %v1044
    %v1780 = vunpack.c.h.b16 %v1044
    %v1781 = vunpack.c.l.b16 %v1045
    %v1782 = vunpack.c.h.b16 %v1045
    %v1783 = vunpack.c.l.b16 %v1046
    %v1784 = vunpack.c.h.b16 %v1046
    %v1785 = vunpack.c.l.b16 %v1047
    %v1786 = vunpack.c.h.b16 %v1047
    %v1787 = vunpack.c.l.b16 %v1048
    %v1788 = vunpack.c.h.b16 %v1048
    %v1789 = vunpack.c.l.b16 %v1049
    %v1790 = vunpack.c.h.b16 %v1049
    %v1791 = vunpack.c.l.b16 %v1050
    %v1792 = vunpack.c.h.b16 %v1050
    %v1793 = vunpack.c.l.b16 %v1051
    %v1794 = vunpack.c.h.b16 %v1051
    %v1795 = vunpack.c.l.b16 %v1052
    %v1796 = vunpack.c.h.b16 %v1052
    %v1797 = vunpack.c.l.b16 %v1053
    %v1798 = vunpack.c.h.b16 %v1053
    %v1799 = vunpack.c.l.b16 %v1054
    %v1800 = vunpack.c.h.b16 %v1054
    %v1801 = vunpack.c.l.b16 %v1055
    %v1802 = vunpack.c.h.b16 %v1055
    %v1803 = vunpack.c.l.b16 %v1056
    %v1804 = vunpack.c.h.b16 %v1056
    %v1805 = vunpack.c.l.b16 %v1057
    %v1806 = vunpack.c.h.b16 %v1057
    %v1807 = vunpack.c.l.b16 %v1058
    %v1808 = vunpack.c.h.b16 %v1058
    %v1809 = vunpack.c.l.b16 %v1059
    %v1810 = vunpack.c.h.b16 %v1059
    %v1811 = vunpack.c.l.b16 %v1060
    %v1812 = vunpack.c.h.b16 %v1060
    %v1813 = vunpack.c.l.b16 %v1061
    %v1814 = vunpack.c.h.b16 %v1061
    %v1815 = vunpack.c.l.b16 %v1062
    %v1816 = vunpack.c.h.b16 %v1062
    %v1817 = vunpack.c.l.b16 %v1063
    %v1818 = vunpack.c.h.b16 %v1063
    %v1819 = vunpack.c.l.b16 %v1064
    %v1820 = vunpack.c.h.b16 %v1064
    %v1821 = vunpack.c.l.b16 %v1065
    %v1822 = vunpack.c.h.b16 %v1065
    %v1823 = vunpack.c.l.b16 %v1066
    %v1824 = vunpack.c.h.b16 %v1066
    %v1825 = vunpack.c.l.b16 %v1067
    %v1826 = vunpack.c.h.b16 %v1067
    %v1827 = vunpack.c.l.b16 %v1068
    %v1828 = vunpack.c.h.b16 %v1068
    %v1829 = vunpack.c.l.b16 %v1069
    %v1830 = vunpack.c.h.b16 %v1069
    %v1831 = vunpack.c.l.b16 %v1070
    %v1832 = vunpack.c.h.b16 %v1070
    %v1833 = vunpack.c.l.b16 %v1071
    %v1834 = vunpack.c.h.b16 %v1071
    %v1835 = vunpack.c.l.b16 %v1072
    %v1836 = vunpack.c.h.b16 %v1072
    %v1837 = vunpack.c.l.b16 %v1073
    %v1838 = vunpack.c.h.b16 %v1073
    %v1839 = vunpack.c.l.b16 %v1074
    %v1840 = vunpack.c.h.b16 %v1074
    %v1841 = vunpack.c.l.b16 %v1075
    %v1842 = vunpack.c.h.b16 %v1075
    %v1843 = vunpack.c.l.b16 %v1076
    %v1844 = vunpack.c.h.b16 %v1076
    %v1845 = vunpack.c.l.b16 %v1077
    %v1846 = vunpack.c.h.b16 %v1077
    %v1847 = vunpack.c.l.b16 %v1078
    %v1848 = vunpack.c.h.b16 %v1078
    %v1849 = vunpack.c.l.b16 %v1079
    %v1850 = vunpack.c.h.b16 %v1079
    %v1851 = vunpack.c.l.b16 %v1080
    %v1852 = vunpack.c.h.b16 %v1080
    %v1853 = vunpack.c.l.b16 %v1081
    %v1854 = vunpack.c.h.b16 %v1081
    %v1855 = vunpack.c.l.b16 %v1082
    %v1856 = vunpack.c.h.b16 %v1082
    %v1857 = vunpack.c.l.b16 %v1083
    %v1858 = vunpack.c.h.b16 %v1083
    %v1859 = vunpack.c.l.b16 %v1084
    %v1860 = vunpack.c.h.b16 %v1084
    %v1861 = vunpack.c.l.b16 %v1085
    %v1862 = vunpack.c.h.b16 %v1085
    %v1863 = vunpack.c.l.b16 %v1086
    %v1864 = vunpack.c.h.b16 %v1086
    %v1865 = vunpack.c.l.b16 %v1087
    %v1866 = vunpack.c.h.b16 %v1087
    %v1867 = vunpack.c.l.b16 %v1088
    %v1868 = vunpack.c.h.b16 %v1088
    %v1869 = vunpack.c.l.b16 %v1089
    %v1870 = vunpack.c.h.b16 %v1089
    %v1871 = vunpack.c.l.b16 %v1090
    %v1872 = vunpack.c.h.b16 %v1090
    %v1873 = vunpack.c.l.b16 %v1091
    %v1874 = vunpack.c.h.b16 %v1091
    %v1875 = vunpack.c.l.b16 %v1092
    %v1876 = vunpack.c.h.b16 %v1092
    %v1877 = vunpack.c.l.b16 %v1093
    %v1878 = vunpack.c.h.b16 %v1093
    %v1879 = vunpack.c.l.b16 %v1094
    %v1880 = vunpack.c.h.b16 %v1094
    %v1881 = vunpack.c.l.b16 %v1095
    %v1882 = vunpack.c.h.b16 %v1095
    %v1883 = vunpack.c.l.b16 %v1096
    %v1884 = vunpack.c.h.b16 %v1096
    %v1885 = vunpack.c.l.b16 %v1097
    %v1886 = vunpack.c.h.b16 %v1097
    %v1887 = vunpack.c.l.b16 %v1098
    %v1888 = vunpack.c.h.b16 %v1098
    %v1889 = vpack.c.b16 %v1385, %v1377
    %v1890 = vpack.c.b16 %v1386, %v1378
    %v1891 = vpack.c.b16 %v1387, %v1379
    %v1892 = vpack.c.b16 %v1388, %v1380
    %v1893 = vpack.c.b16 %v1389, %v1381
    %v1894 = vpack.c.b16 %v1390, %v1382
    %v1895 = vpack.c.b16 %v1391, %v1383
    %v1896 = vpack.c.b16 %v1392, %v1384
    %v1897 = vpack.c.b16 %v1401, %v1393
    %v1898 = vpack.c.b16 %v1402, %v1394
    %v1899 = vpack.c.b16 %v1403, %v1395
    %v1900 = vpack.c.b16 %v1404, %v1396
    %v1901 = vpack.c.b16 %v1405, %v1397
    %v1902 = vpack.c.b16 %v1406, %v1398
    %v1903 = vpack.c.b16 %v1407, %v1399
    %v1904 = vpack.c.b16 %v1408, %v1400
    %v1905 = vpack.c.b16 %v1417, %v1409
    %v1906 = vpack.c.b16 %v1418, %v1410
    %v1907 = vpack.c.b16 %v1419, %v1411
    %v1908 = vpack.c.b16 %v1420, %v1412
    %v1909 = vpack.c.b16 %v1421, %v1413
    %v1910 = vpack.c.b16 %v1422, %v1414
    %v1911 = vpack.c.b16 %v1423, %v1415
    %v1912 = vpack.c.b16 %v1424, %v1416
    %v1913 = vpack.c.b16 %v1433, %v1425
    %v1914 = vpack.c.b16 %v1434, %v1426
    %v1915 = vpack.c.b16 %v1435, %v1427
    %v1916 = vpack.c.b16 %v1436, %v1428
    %v1917 = vpack.c.b16 %v1437, %v1429
    %v1918 = vpack.c.b16 %v1438, %v1430
    %v1919 = vpack.c.b16 %v1439, %v1431
    %v1920 = vpack.c.b16 %v1440, %v1432
    %v1921 = vpack.c.b16 %v1449, %v1441
    %v1922 = vpack.c.b16 %v1450, %v1442
    %v1923 = vpack.c.b16 %v1451, %v1443
    %v1924 = vpack.c.b16 %v1452, %v1444
    %v1925 = vpack.c.b16 %v1453, %v1445
    %v1926 = vpack.c.b16 %v1454, %v1446
    %v1927 = vpack.c.b16 %v1455, %v1447
    %v1928 = vpack.c.b16 %v1456, %v1448
    %v1929 = vpack.c.b16 %v1465, %v1457
    %v1930 = vpack.c.b16 %v1466, %v1458
    %v1931 = vpack.c.b16 %v1467, %v1459
    %v1932 = vpack.c.b16 %v1468, %v1460
    %v1933 = vpack.c.b16 %v1469, %v1461
    %v1934 = vpack.c.b16 %v1470, %v1462
    %v1935 = vpack.c.b16 %v1471, %v1463
    %v1936 = vpack.c.b16 %v1472, %v1464
    %v1937 = vpack.c.b16 %v1481, %v1473
    %v1938 = vpack.c.b16 %v1482, %v1474
    %v1939 = vpack.c.b16 %v1483, %v1475
    %v1940 = vpack.c.b16 %v1484, %v1476
    %v1941 = vpack.c.b16 %v1485, %v1477
    %v1942 = vpack.c.b16 %v1486, %v1478
    %v1943 = vpack.c.b16 %v1487, %v1479
    %v1944 = vpack.c.b16 %v1488, %v1480
    %v1945 = vpack.c.b16 %v1497, %v1489
    %v1946 = vpack.c.b16 %v1498, %v1490
    %v1947 = vpack.c.b16 %v1499, %v1491
    %v1948 = vpack.c.b16 %v1500, %v1492
    %v1949 = vpack.c.b16 %v1501, %v1493
    %v1950 = vpack.c.b16 %v1502, %v1494
    %v1951 = vpack.c.b16 %v1503, %v1495
    %v1952 = vpack.c.b16 %v1504, %v1496
    %v1953 = vpack.c.b16 %v1513, %v1505
    %v1954 = vpack.c.b16 %v1514, %v1506
    %v1955 = vpack.c.b16 %v1515, %v1507
    %v1956 = vpack.c.b16 %v1516, %v1508
    %v1957 = vpack.c.b16 %v1517, %v1509
    %v1958 = vpack.c.b16 %v1518, %v1510
    %v1959 = vpack.c.b16 %v1519, %v1511
    %v1960 = vpack.c.b16 %v1520, %v1512
    %v1961 = vpack.c.b16 %v1529, %v1521
    %v1962 = vpack.c.b16 %v1530, %v1522
    %v1963 = vpack.c.b16 %v1531, %v1523
    %v1964 = vpack.c.b16 %v1532, %v1524
    %v1965 = vpack.c.b16 %v1533, %v1525
    %v1966 = vpack.c.b16 %v1534, %v1526
    %v1967 = vpack.c.b16 %v1535, %v1527
    %v1968 = vpack.c.b16 %v1536, %v1528
    %v1969 = vpack.c.b16 %v1545, %v1537
    %v1970 = vpack.c.b16 %v1546, %v1538
    %v1971 = vpack.c.b16 %v1547, %v1539
    %v1972 = vpack.c.b16 %v1548, %v1540
    %v1973 = vpack.c.b16 %v1549, %v1541
    %v1974 = vpack.c.b16 %v1550, %v1542
    %v1975 = vpack.c.b16 %v1551, %v1543
    %v1976 = vpack.c.b16 %v1552, %v1544
    %v1977 = vpack.c.b16 %v1561, %v1553
    %v1978 = vpack.c.b16 %v1562, %v1554
    %v1979 = vpack.c.b16 %v1563, %v1555
    %v1980 = vpack.c.b16 %v1564, %v1556
    %v1981 = vpack.c.b16 %v1565, %v1557
    %v1982 = vpack.c.b16 %v1566, %v1558
    %v1983 = vpack.c.b16 %v1567, %v1559
    %v1984 = vpack.c.b16 %v1568, %v1560
    %v1985 = vpack.c.b16 %v1577, %v1569
    %v1986 = vpack.c.b16 %v1578, %v1570
    %v1987 = vpack.c.b16 %v1579, %v1571
    %v1988 = vpack.c.b16 %v1580, %v1572
    %v1989 = vpack.c.b16 %v1581, %v1573
    %v1990 = vpack.c.b16 %v1582, %v1574
    %v1991 = vpack.c.b16 %v1583, %v1575
    %v1992 = vpack.c.b16 %v1584, %v1576
    %v1993 = vpack.c.b16 %v1593, %v1585
    %v1994 = vpack.c.b16 %v1594, %v1586
    %v1995 = vpack.c.b16 %v1595, %v1587
    %v1996 = vpack.c.b16 %v1596, %v1588
    %v1997 = vpack.c.b16 %v1597, %v1589
    %v1998 = vpack.c.b16 %v1598, %v1590
    %v1999 = vpack.c.b16 %v1599, %v1591
    %v2000 = vpack.c.b16 %v1600, %v1592
    %v2001 = vpack.c.b16 %v1609, %v1601
    %v2002 = vpack.c.b16 %v1610, %v1602
    %v2003 = vpack.c.b16 %v1611, %v1603
    %v2004 = vpack.c.b16 %v1612, %v1604
    %v2005 = vpack.c.b16 %v1613, %v1605
    %v2006 = vpack.c.b16 %v1614, %v1606
    %v2007 = vpack.c.b16 %v1615, %v1607
    %v2008 = vpack.c.b16 %v1616, %v1608
    %v2009 = vpack.c.b16 %v1625, %v1617
    %v2010 = vpack.c.b16 %v1626, %v1618
    %v2011 = vpack.c.b16 %v1627, %v1619
    %v2012 = vpack.c.b16 %v1628, %v1620
    %v2013 = vpack.c.b16 %v1629, %v1621
    %v2014 = vpack.c.b16 %v1630, %v1622
    %v2015 = vpack.c.b16 %v1631, %v1623
    %v2016 = vpack.c.b16 %v1632, %v1624
    %v2017 = vpack.c.b16 %v1641, %v1633
    %v2018 = vpack.c.b16 %v1642, %v1634
    %v2019 = vpack.c.b16 %v1643, %v1635
    %v2020 = vpack.c.b16 %v1644, %v1636
    %v2021 = vpack.c.b16 %v1645, %v1637
    %v2022 = vpack.c.b16 %v1646, %v1638
    %v2023 = vpack.c.b16 %v1647, %v1639
    %v2024 = vpack.c.b16 %v1648, %v1640
    %v2025 = vpack.c.b16 %v1657, %v1649
    %v2026 = vpack.c.b16 %v1658, %v1650
    %v2027 = vpack.c.b16 %v1659, %v1651
    %v2028 = vpack.c.b16 %v1660, %v1652
    %v2029 = vpack.c.b16 %v1661, %v1653
    %v2030 = vpack.c.b16 %v1662, %v1654
    %v2031 = vpack.c.b16 %v1663, %v1655
    %v2032 = vpack.c.b16 %v1664, %v1656
    %v2033 = vpack.c.b16 %v1673, %v1665
    %v2034 = vpack.c.b16 %v1674, %v1666
    %v2035 = vpack.c.b16 %v1675, %v1667
    %v2036 = vpack.c.b16 %v1676, %v1668
    %v2037 = vpack.c.b16 %v1677, %v1669
    %v2038 = vpack.c.b16 %v1678, %v1670
    %v2039 = vpack.c.b16 %v1679, %v1671
    %v2040 = vpack.c.b16 %v1680, %v1672
    %v2041 = vpack.c.b16 %v1689, %v1681
    %v2042 = vpack.c.b16 %v1690, %v1682
    %v2043 = vpack.c.b16 %v1691, %v1683
    %v2044 = vpack.c.b16 %v1692, %v1684
    %v2045 = vpack.c.b16 %v1693, %v1685
    %v2046 = vpack.c.b16 %v1694, %v1686
    %v2047 = vpack.c.b16 %v1695, %v1687
    %v2048 = vpack.c.b16 %v1696, %v1688
    %v2049 = vpack.c.b16 %v1705, %v1697
    %v2050 = vpack.c.b16 %v1706, %v1698
    %v2051 = vpack.c.b16 %v1707, %v1699
    %v2052 = vpack.c.b16 %v1708, %v1700
    %v2053 = vpack.c.b16 %v1709, %v1701
    %v2054 = vpack.c.b16 %v1710, %v1702
    %v2055 = vpack.c.b16 %v1711, %v1703
    %v2056 = vpack.c.b16 %v1712, %v1704
    %v2057 = vpack.c.b16 %v1721, %v1713
    %v2058 = vpack.c.b16 %v1722, %v1714
    %v2059 = vpack.c.b16 %v1723, %v1715
    %v2060 = vpack.c.b16 %v1724, %v1716
    %v2061 = vpack.c.b16 %v1725, %v1717
    %v2062 = vpack.c.b16 %v1726, %v1718
    %v2063 = vpack.c.b16 %v1727, %v1719
    %v2064 = vpack.c.b16 %v1728, %v1720
    %v2065 = vpack.c.b16 %v1737, %v1729
    %v2066 = vpack.c.b16 %v1738, %v1730
    %v2067 = vpack.c.b16 %v1739, %v1731
    %v2068 = vpack.c.b16 %v1740, %v1732
    %v2069 = vpack.c.b16 %v1741, %v1733
    %v2070 = vpack.c.b16 %v1742, %v1734
    %v2071 = vpack.c.b16 %v1743, %v1735
    %v2072 = vpack.c.b16 %v1744, %v1736
    %v2073 = vpack.c.b16 %v1753, %v1745
    %v2074 = vpack.c.b16 %v1754, %v1746
    %v2075 = vpack.c.b16 %v1755, %v1747
    %v2076 = vpack.c.b16 %v1756, %v1748
    %v2077 = vpack.c.b16 %v1757, %v1749
    %v2078 = vpack.c.b16 %v1758, %v1750
    %v2079 = vpack.c.b16 %v1759, %v1751
    %v2080 = vpack.c.b16 %v1760, %v1752
    %v2081 = vpack.c.b16 %v1769, %v1761
    %v2082 = vpack.c.b16 %v1770, %v1762
    %v2083 = vpack.c.b16 %v1771, %v1763
    %v2084 = vpack.c.b16 %v1772, %v1764
    %v2085 = vpack.c.b16 %v1773, %v1765
    %v2086 = vpack.c.b16 %v1774, %v1766
    %v2087 = vpack.c.b16 %v1775, %v1767
    %v2088 = vpack.c.b16 %v1776, %v1768
    %v2089 = vpack.c.b16 %v1785, %v1777
    %v2090 = vpack.c.b16 %v1786, %v1778
    %v2091 = vpack.c.b16 %v1787, %v1779
    %v2092 = vpack.c.b16 %v1788, %v1780
    %v2093 = vpack.c.b16 %v1789, %v1781
    %v2094 = vpack.c.b16 %v1790, %v1782
    %v2095 = vpack.c.b16 %v1791, %v1783
    %v2096 = vpack.c.b16 %v1792, %v1784
    %v2097 = vpack.c.b16 %v1801, %v1793
    %v2098 = vpack.c.b16 %v1802, %v1794
    %v2099 = vpack.c.b16 %v1803, %v1795
    %v2100 = vpack.c.b16 %v1804, %v1796
    %v2101 = vpack.c.b16 %v1805, %v1797
    %v2102 = vpack.c.b16 %v1806, %v1798
    %v2103 = vpack.c.b16 %v1807, %v1799
    %v2104 = vpack.c.b16 %v1808, %v1800
    %v2105 = vpack.c.b16 %v1817, %v1809
    %v2106 = vpack.c.b16 %v1818, %v1810
    %v2107 = vpack.c.b16 %v1819, %v1811
    %v2108 = vpack.c.b16 %v1820, %v1812
    %v2109 = vpack.c.b16 %v1821, %v1813
    %v2110 = vpack.c.b16 %v1822, %v1814
    %v2111 = vpack.c.b16 %v1823, %v1815
    %v2112 = vpack.c.b16 %v1824, %v1816
    %v2113 = vpack.c.b16 %v1833, %v1825
    %v2114 = vpack.c.b16 %v1834, %v1826
    %v2115 = vpack.c.b16 %v1835, %v1827
    %v2116 = vpack.c.b16 %v1836, %v1828
    %v2117 = vpack.c.b16 %v1837, %v1829
    %v2118 = vpack.c.b16 %v1838, %v1830
    %v2119 = vpack.c.b16 %v1839, %v1831
    %v2120 = vpack.c.b16 %v1840, %v1832
    %v2121 = vpack.c.b16 %v1849, %v1841
    %v2122 = vpack.c.b16 %v1850, %v1842
    %v2123 = vpack.c.b16 %v1851, %v1843
    %v2124 = vpack.c.b16 %v1852, %v1844
    %v2125 = vpack.c.b16 %v1853, %v1845
    %v2126 = vpack.c.b16 %v1854, %v1846
    %v2127 = vpack.c.b16 %v1855, %v1847
    %v2128 = vpack.c.b16 %v1856, %v1848
    %v2129 = vpack.c.b16 %v1865, %v1857
    %v2130 = vpack.c.b16 %v1866, %v1858
    %v2131 = vpack.c.b16 %v1867, %v1859
    %v2132 = vpack.c.b16 %v1868, %v1860
    %v2133 = vpack.c.b16 %v1869, %v1861
    %v2134 = vpack.c.b16 %v1870, %v1862
    %v2135 = vpack.c.b16 %v1871, %v1863
    %v2136 = vpack.c.b16 %v1872, %v1864
    %v2137 = vpack.c.b16 %v1881, %v1873
    %v2138 = vpack.c.b16 %v1882, %v1874
    %v2139 = vpack.c.b16 %v1883, %v1875
    %v2140 = vpack.c.b16 %v1884, %v1876
    %v2141 = vpack.c.b16 %v1885, %v1877
    %v2142 = vpack.c.b16 %v1886, %v1878
    %v2143 = vpack.c.b16 %v1887, %v1879
    %v2144 = vpack.c.b16 %v1888, %v1880
    %2401 = vmatpush.bf16.msra.mxu0 %v1945
    %2402 = vmatpush.bf16.msra.mxu0 %v1937
    %2403 = vmatpush.bf16.msra.mxu0 %v1929
    %2404 = vmatpush.bf16.msra.mxu0 %v1921
    %2405 = vmatpush.bf16.msra.mxu0 %v1913
    %2406 = vmatpush.bf16.msra.mxu0 %v1905
    %2407 = vmatpush.bf16.msra.mxu0 %v1897
    %2408 = vmatpush.bf16.msra.mxu0 %v1889
    %2409 = vmatmul.bf16.gmra.mxu0 %v1100
    %v2410 = vpop.f32.mrf.mxu0
    %v2411 = vadd.f32 %v1105, %v2410
    %v2412 = vpop.f32.mrf.mxu0
    %v2413 = vadd.f32 %v1105, %v2412
    %2414 = vdwg.mxu0
    %2415 = vmatpush.bf16.msra.mxu0 %v2009
    %2416 = vmatpush.bf16.msra.mxu0 %v2001
    %2417 = vmatpush.bf16.msra.mxu0 %v1993
    %2418 = vmatpush.bf16.msra.mxu0 %v1985
    %2419 = vmatpush.bf16.msra.mxu0 %v1977
    %2420 = vmatpush.bf16.msra.mxu0 %v1969
    %2421 = vmatpush.bf16.msra.mxu0 %v1961
    %2422 = vmatpush.bf16.msra.mxu0 %v1953
    %2423 = vmatmul.bf16.gmra.mxu0 %v1101
    %v2424 = vpop.f32.mrf.mxu0
    %v2425 = vadd.f32 %v2411, %v2424
    %v2426 = vpop.f32.mrf.mxu0
    %v2427 = vadd.f32 %v2413, %v2426
    %2428 = vdwg.mxu0
    %2429 = vmatpush.bf16.msra.mxu0 %v2073
    %2430 = vmatpush.bf16.msra.mxu0 %v2065
    %2431 = vmatpush.bf16.msra.mxu0 %v2057
    %2432 = vmatpush.bf16.msra.mxu0 %v2049
    %2433 = vmatpush.bf16.msra.mxu0 %v2041
    %2434 = vmatpush.bf16.msra.mxu0 %v2033
    %2435 = vmatpush.bf16.msra.mxu0 %v2025
    %2436 = vmatpush.bf16.msra.mxu0 %v2017
    %2437 = vmatmul.bf16.gmra.mxu0 %v1102
    %v2438 = vpop.f32.mrf.mxu0
    %v2439 = vadd.f32 %v2425, %v2438
    %v2440 = vpop.f32.mrf.mxu0
    %v2441 = vadd.f32 %v2427, %v2440
    %2442 = vdwg.mxu0
    %2443 = vmatpush.bf16.msra.mxu0 %v2137
    %2444 = vmatpush.bf16.msra.mxu0 %v2129
    %2445 = vmatpush.bf16.msra.mxu0 %v2121
    %2446 = vmatpush.bf16.msra.mxu0 %v2113
    %2447 = vmatpush.bf16.msra.mxu0 %v2105
    %2448 = vmatpush.bf16.msra.mxu0 %v2097
    %2449 = vmatpush.bf16.msra.mxu0 %v2089
    %2450 = vmatpush.bf16.msra.mxu0 %v2081
    %2451 = vmatmul.bf16.gmra.mxu0 %v1103
    %v2452 = vpop.f32.mrf.mxu0
    %v2453 = vadd.f32 %v2439, %v2452
    %v2454 = vpop.f32.mrf.mxu0
    %v2455 = vadd.f32 %v2441, %v2454
    %2456 = vdwg.mxu0
    %2457 = vmatpush.bf16.msra.mxu0 %v1946
    %2458 = vmatpush.bf16.msra.mxu0 %v1938
    %2459 = vmatpush.bf16.msra.mxu0 %v1930
    %2460 = vmatpush.bf16.msra.mxu0 %v1922
    %2461 = vmatpush.bf16.msra.mxu0 %v1914
    %2462 = vmatpush.bf16.msra.mxu0 %v1906
    %2463 = vmatpush.bf16.msra.mxu0 %v1898
    %2464 = vmatpush.bf16.msra.mxu0 %v1890
    %2465 = vmatmul.bf16.gmra.mxu0 %v1100
    %v2466 = vpop.f32.mrf.mxu0
    %v2467 = vadd.f32 %v1106, %v2466
    %v2468 = vpop.f32.mrf.mxu0
    %v2469 = vadd.f32 %v1106, %v2468
    %2470 = vdwg.mxu0
    %2471 = vmatpush.bf16.msra.mxu0 %v2010
    %2472 = vmatpush.bf16.msra.mxu0 %v2002
    %2473 = vmatpush.bf16.msra.mxu0 %v1994
    %2474 = vmatpush.bf16.msra.mxu0 %v1986
    %2475 = vmatpush.bf16.msra.mxu0 %v1978
    %2476 = vmatpush.bf16.msra.mxu0 %v1970
    %2477 = vmatpush.bf16.msra.mxu0 %v1962
    %2478 = vmatpush.bf16.msra.mxu0 %v1954
    %2479 = vmatmul.bf16.gmra.mxu0 %v1101
    %v2480 = vpop.f32.mrf.mxu0
    %v2481 = vadd.f32 %v2467, %v2480
    %v2482 = vpop.f32.mrf.mxu0
    %v2483 = vadd.f32 %v2469, %v2482
    %2484 = vdwg.mxu0
    %2485 = vmatpush.bf16.msra.mxu0 %v2074
    %2486 = vmatpush.bf16.msra.mxu0 %v2066
    %2487 = vmatpush.bf16.msra.mxu0 %v2058
    %2488 = vmatpush.bf16.msra.mxu0 %v2050
    %2489 = vmatpush.bf16.msra.mxu0 %v2042
    %2490 = vmatpush.bf16.msra.mxu0 %v2034
    %2491 = vmatpush.bf16.msra.mxu0 %v2026
    %2492 = vmatpush.bf16.msra.mxu0 %v2018
    %2493 = vmatmul.bf16.gmra.mxu0 %v1102
    %v2494 = vpop.f32.mrf.mxu0
    %v2495 = vadd.f32 %v2481, %v2494
    %v2496 = vpop.f32.mrf.mxu0
    %v2497 = vadd.f32 %v2483, %v2496
    %2498 = vdwg.mxu0
    %2499 = vmatpush.bf16.msra.mxu0 %v2138
    %2500 = vmatpush.bf16.msra.mxu0 %v2130
    %2501 = vmatpush.bf16.msra.mxu0 %v2122
    %2502 = vmatpush.bf16.msra.mxu0 %v2114
    %2503 = vmatpush.bf16.msra.mxu0 %v2106
    %2504 = vmatpush.bf16.msra.mxu0 %v2098
    %2505 = vmatpush.bf16.msra.mxu0 %v2090
    %2506 = vmatpush.bf16.msra.mxu0 %v2082
    %2507 = vmatmul.bf16.gmra.mxu0 %v1103
    %v2508 = vpop.f32.mrf.mxu0
    %v2509 = vadd.f32 %v2495, %v2508
    %v2510 = vpop.f32.mrf.mxu0
    %v2511 = vadd.f32 %v2497, %v2510
    %2512 = vdwg.mxu0
    %2513 = vmatpush.bf16.msra.mxu0 %v1947
    %2514 = vmatpush.bf16.msra.mxu0 %v1939
    %2515 = vmatpush.bf16.msra.mxu0 %v1931
    %2516 = vmatpush.bf16.msra.mxu0 %v1923
    %2517 = vmatpush.bf16.msra.mxu0 %v1915
    %2518 = vmatpush.bf16.msra.mxu0 %v1907
    %2519 = vmatpush.bf16.msra.mxu0 %v1899
    %2520 = vmatpush.bf16.msra.mxu0 %v1891
    %2521 = vmatmul.bf16.gmra.mxu0 %v1100
    %v2522 = vpop.f32.mrf.mxu0
    %v2523 = vadd.f32 %v1107, %v2522
    %v2524 = vpop.f32.mrf.mxu0
    %v2525 = vadd.f32 %v1107, %v2524
    %2526 = vdwg.mxu0
    %2527 = vmatpush.bf16.msra.mxu0 %v2011
    %2528 = vmatpush.bf16.msra.mxu0 %v2003
    %2529 = vmatpush.bf16.msra.mxu0 %v1995
    %2530 = vmatpush.bf16.msra.mxu0 %v1987
    %2531 = vmatpush.bf16.msra.mxu0 %v1979
    %2532 = vmatpush.bf16.msra.mxu0 %v1971
    %2533 = vmatpush.bf16.msra.mxu0 %v1963
    %2534 = vmatpush.bf16.msra.mxu0 %v1955
    %2535 = vmatmul.bf16.gmra.mxu0 %v1101
    %v2536 = vpop.f32.mrf.mxu0
    %v2537 = vadd.f32 %v2523, %v2536
    %v2538 = vpop.f32.mrf.mxu0
    %v2539 = vadd.f32 %v2525, %v2538
    %2540 = vdwg.mxu0
    %2541 = vmatpush.bf16.msra.mxu0 %v2075
    %2542 = vmatpush.bf16.msra.mxu0 %v2067
    %2543 = vmatpush.bf16.msra.mxu0 %v2059
    %2544 = vmatpush.bf16.msra.mxu0 %v2051
    %2545 = vmatpush.bf16.msra.mxu0 %v2043
    %2546 = vmatpush.bf16.msra.mxu0 %v2035
    %2547 = vmatpush.bf16.msra.mxu0 %v2027
    %2548 = vmatpush.bf16.msra.mxu0 %v2019
    %2549 = vmatmul.bf16.gmra.mxu0 %v1102
    %v2550 = vpop.f32.mrf.mxu0
    %v2551 = vadd.f32 %v2537, %v2550
    %v2552 = vpop.f32.mrf.mxu0
    %v2553 = vadd.f32 %v2539, %v2552
    %2554 = vdwg.mxu0
    %2555 = vmatpush.bf16.msra.mxu0 %v2139
    %2556 = vmatpush.bf16.msra.mxu0 %v2131
    %2557 = vmatpush.bf16.msra.mxu0 %v2123
    %2558 = vmatpush.bf16.msra.mxu0 %v2115
    %2559 = vmatpush.bf16.msra.mxu0 %v2107
    %2560 = vmatpush.bf16.msra.mxu0 %v2099
    %2561 = vmatpush.bf16.msra.mxu0 %v2091
    %2562 = vmatpush.bf16.msra.mxu0 %v2083
    %2563 = vmatmul.bf16.gmra.mxu0 %v1103
    %v2564 = vpop.f32.mrf.mxu0
    %v2565 = vadd.f32 %v2551, %v2564
    %v2566 = vpop.f32.mrf.mxu0
    %v2567 = vadd.f32 %v2553, %v2566
    %2568 = vdwg.mxu0
    %2569 = vmatpush.bf16.msra.mxu0 %v1948
    %2570 = vmatpush.bf16.msra.mxu0 %v1940
    %2571 = vmatpush.bf16.msra.mxu0 %v1932
    %2572 = vmatpush.bf16.msra.mxu0 %v1924
    %2573 = vmatpush.bf16.msra.mxu0 %v1916
    %2574 = vmatpush.bf16.msra.mxu0 %v1908
    %2575 = vmatpush.bf16.msra.mxu0 %v1900
    %2576 = vmatpush.bf16.msra.mxu0 %v1892
    %2577 = vmatmul.bf16.gmra.mxu0 %v1100
    %v2578 = vpop.f32.mrf.mxu0
    %v2579 = vadd.f32 %v1108, %v2578
    %v2580 = vpop.f32.mrf.mxu0
    %v2581 = vadd.f32 %v1108, %v2580
    %2582 = vdwg.mxu0
    %2583 = vmatpush.bf16.msra.mxu0 %v2012
    %2584 = vmatpush.bf16.msra.mxu0 %v2004
    %2585 = vmatpush.bf16.msra.mxu0 %v1996
    %2586 = vmatpush.bf16.msra.mxu0 %v1988
    %2587 = vmatpush.bf16.msra.mxu0 %v1980
    %2588 = vmatpush.bf16.msra.mxu0 %v1972
    %2589 = vmatpush.bf16.msra.mxu0 %v1964
    %2590 = vmatpush.bf16.msra.mxu0 %v1956
    %2591 = vmatmul.bf16.gmra.mxu0 %v1101
    %v2592 = vpop.f32.mrf.mxu0
    %v2593 = vadd.f32 %v2579, %v2592
    %v2594 = vpop.f32.mrf.mxu0
    %v2595 = vadd.f32 %v2581, %v2594
    %2596 = vdwg.mxu0
    %2597 = vmatpush.bf16.msra.mxu0 %v2076
    %2598 = vmatpush.bf16.msra.mxu0 %v2068
    %2599 = vmatpush.bf16.msra.mxu0 %v2060
    %2600 = vmatpush.bf16.msra.mxu0 %v2052
    %2601 = vmatpush.bf16.msra.mxu0 %v2044
    %2602 = vmatpush.bf16.msra.mxu0 %v2036
    %2603 = vmatpush.bf16.msra.mxu0 %v2028
    %2604 = vmatpush.bf16.msra.mxu0 %v2020
    %2605 = vmatmul.bf16.gmra.mxu0 %v1102
    %v2606 = vpop.f32.mrf.mxu0
    %v2607 = vadd.f32 %v2593, %v2606
    %v2608 = vpop.f32.mrf.mxu0
    %v2609 = vadd.f32 %v2595, %v2608
    %2610 = vdwg.mxu0
    %2611 = vmatpush.bf16.msra.mxu0 %v2140
    %2612 = vmatpush.bf16.msra.mxu0 %v2132
    %2613 = vmatpush.bf16.msra.mxu0 %v2124
    %2614 = vmatpush.bf16.msra.mxu0 %v2116
    %2615 = vmatpush.bf16.msra.mxu0 %v2108
    %2616 = vmatpush.bf16.msra.mxu0 %v2100
    %2617 = vmatpush.bf16.msra.mxu0 %v2092
    %2618 = vmatpush.bf16.msra.mxu0 %v2084
    %2619 = vmatmul.bf16.gmra.mxu0 %v1103
    %v2620 = vpop.f32.mrf.mxu0
    %v2621 = vadd.f32 %v2607, %v2620
    %v2622 = vpop.f32.mrf.mxu0
    %v2623 = vadd.f32 %v2609, %v2622
    %2624 = vdwg.mxu0
    %2625 = vmatpush.bf16.msra.mxu0 %v1949
    %2626 = vmatpush.bf16.msra.mxu0 %v1941
    %2627 = vmatpush.bf16.msra.mxu0 %v1933
    %2628 = vmatpush.bf16.msra.mxu0 %v1925
    %2629 = vmatpush.bf16.msra.mxu0 %v1917
    %2630 = vmatpush.bf16.msra.mxu0 %v1909
    %2631 = vmatpush.bf16.msra.mxu0 %v1901
    %2632 = vmatpush.bf16.msra.mxu0 %v1893
    %2633 = vmatmul.bf16.gmra.mxu0 %v1100
    %v2634 = vpop.f32.mrf.mxu0
    %v2635 = vadd.f32 %v1109, %v2634
    %v2636 = vpop.f32.mrf.mxu0
    %v2637 = vadd.f32 %v1109, %v2636
    %2638 = vdwg.mxu0
    %2639 = vmatpush.bf16.msra.mxu0 %v2013
    %2640 = vmatpush.bf16.msra.mxu0 %v2005
    %2641 = vmatpush.bf16.msra.mxu0 %v1997
    %2642 = vmatpush.bf16.msra.mxu0 %v1989
    %2643 = vmatpush.bf16.msra.mxu0 %v1981
    %2644 = vmatpush.bf16.msra.mxu0 %v1973
    %2645 = vmatpush.bf16.msra.mxu0 %v1965
    %2646 = vmatpush.bf16.msra.mxu0 %v1957
    %2647 = vmatmul.bf16.gmra.mxu0 %v1101
    %v2648 = vpop.f32.mrf.mxu0
    %v2649 = vadd.f32 %v2635, %v2648
    %v2650 = vpop.f32.mrf.mxu0
    %v2651 = vadd.f32 %v2637, %v2650
    %2652 = vdwg.mxu0
    %2653 = vmatpush.bf16.msra.mxu0 %v2077
    %2654 = vmatpush.bf16.msra.mxu0 %v2069
    %2655 = vmatpush.bf16.msra.mxu0 %v2061
    %2656 = vmatpush.bf16.msra.mxu0 %v2053
    %2657 = vmatpush.bf16.msra.mxu0 %v2045
    %2658 = vmatpush.bf16.msra.mxu0 %v2037
    %2659 = vmatpush.bf16.msra.mxu0 %v2029
    %2660 = vmatpush.bf16.msra.mxu0 %v2021
    %2661 = vmatmul.bf16.gmra.mxu0 %v1102
    %v2662 = vpop.f32.mrf.mxu0
    %v2663 = vadd.f32 %v2649, %v2662
    %v2664 = vpop.f32.mrf.mxu0
    %v2665 = vadd.f32 %v2651, %v2664
    %2666 = vdwg.mxu0
    %2667 = vmatpush.bf16.msra.mxu0 %v2141
    %2668 = vmatpush.bf16.msra.mxu0 %v2133
    %2669 = vmatpush.bf16.msra.mxu0 %v2125
    %2670 = vmatpush.bf16.msra.mxu0 %v2117
    %2671 = vmatpush.bf16.msra.mxu0 %v2109
    %2672 = vmatpush.bf16.msra.mxu0 %v2101
    %2673 = vmatpush.bf16.msra.mxu0 %v2093
    %2674 = vmatpush.bf16.msra.mxu0 %v2085
    %2675 = vmatmul.bf16.gmra.mxu0 %v1103
    %v2676 = vpop.f32.mrf.mxu0
    %v2677 = vadd.f32 %v2663, %v2676
    %v2678 = vpop.f32.mrf.mxu0
    %v2679 = vadd.f32 %v2665, %v2678
    %2680 = vdwg.mxu0
    %2681 = vmatpush.bf16.msra.mxu0 %v1950
    %2682 = vmatpush.bf16.msra.mxu0 %v1942
    %2683 = vmatpush.bf16.msra.mxu0 %v1934
    %2684 = vmatpush.bf16.msra.mxu0 %v1926
    %2685 = vmatpush.bf16.msra.mxu0 %v1918
    %2686 = vmatpush.bf16.msra.mxu0 %v1910
    %2687 = vmatpush.bf16.msra.mxu0 %v1902
    %2688 = vmatpush.bf16.msra.mxu0 %v1894
    %2689 = vmatmul.bf16.gmra.mxu0 %v1100
    %v2690 = vpop.f32.mrf.mxu0
    %v2691 = vadd.f32 %v1110, %v2690
    %v2692 = vpop.f32.mrf.mxu0
    %v2693 = vadd.f32 %v1110, %v2692
    %2694 = vdwg.mxu0
    %2695 = vmatpush.bf16.msra.mxu0 %v2014
    %2696 = vmatpush.bf16.msra.mxu0 %v2006
    %2697 = vmatpush.bf16.msra.mxu0 %v1998
    %2698 = vmatpush.bf16.msra.mxu0 %v1990
    %2699 = vmatpush.bf16.msra.mxu0 %v1982
    %2700 = vmatpush.bf16.msra.mxu0 %v1974
    %2701 = vmatpush.bf16.msra.mxu0 %v1966
    %2702 = vmatpush.bf16.msra.mxu0 %v1958
    %2703 = vmatmul.bf16.gmra.mxu0 %v1101
    %v2704 = vpop.f32.mrf.mxu0
    %v2705 = vadd.f32 %v2691, %v2704
    %v2706 = vpop.f32.mrf.mxu0
    %v2707 = vadd.f32 %v2693, %v2706
    %2708 = vdwg.mxu0
    %2709 = vmatpush.bf16.msra.mxu0 %v2078
    %2710 = vmatpush.bf16.msra.mxu0 %v2070
    %2711 = vmatpush.bf16.msra.mxu0 %v2062
    %2712 = vmatpush.bf16.msra.mxu0 %v2054
    %2713 = vmatpush.bf16.msra.mxu0 %v2046
    %2714 = vmatpush.bf16.msra.mxu0 %v2038
    %2715 = vmatpush.bf16.msra.mxu0 %v2030
    %2716 = vmatpush.bf16.msra.mxu0 %v2022
    %2717 = vmatmul.bf16.gmra.mxu0 %v1102
    %v2718 = vpop.f32.mrf.mxu0
    %v2719 = vadd.f32 %v2705, %v2718
    %v2720 = vpop.f32.mrf.mxu0
    %v2721 = vadd.f32 %v2707, %v2720
    %2722 = vdwg.mxu0
    %2723 = vmatpush.bf16.msra.mxu0 %v2142
    %2724 = vmatpush.bf16.msra.mxu0 %v2134
    %2725 = vmatpush.bf16.msra.mxu0 %v2126
    %2726 = vmatpush.bf16.msra.mxu0 %v2118
    %2727 = vmatpush.bf16.msra.mxu0 %v2110
    %2728 = vmatpush.bf16.msra.mxu0 %v2102
    %2729 = vmatpush.bf16.msra.mxu0 %v2094
    %2730 = vmatpush.bf16.msra.mxu0 %v2086
    %2731 = vmatmul.bf16.gmra.mxu0 %v1103
    %v2732 = vpop.f32.mrf.mxu0
    %v2733 = vadd.f32 %v2719, %v2732
    %v2734 = vpop.f32.mrf.mxu0
    %v2735 = vadd.f32 %v2721, %v2734
    %2736 = vdwg.mxu0
    %2737 = vmatpush.bf16.msra.mxu0 %v1951
    %2738 = vmatpush.bf16.msra.mxu0 %v1943
    %2739 = vmatpush.bf16.msra.mxu0 %v1935
    %2740 = vmatpush.bf16.msra.mxu0 %v1927
    %2741 = vmatpush.bf16.msra.mxu0 %v1919
    %2742 = vmatpush.bf16.msra.mxu0 %v1911
    %2743 = vmatpush.bf16.msra.mxu0 %v1903
    %2744 = vmatpush.bf16.msra.mxu0 %v1895
    %2745 = vmatmul.bf16.gmra.mxu0 %v1100
    %v2746 = vpop.f32.mrf.mxu0
    %v2747 = vadd.f32 %v1111, %v2746
    %v2748 = vpop.f32.mrf.mxu0
    %v2749 = vadd.f32 %v1111, %v2748
    %2750 = vdwg.mxu0
    %2751 = vmatpush.bf16.msra.mxu0 %v2015
    %2752 = vmatpush.bf16.msra.mxu0 %v2007
    %2753 = vmatpush.bf16.msra.mxu0 %v1999
    %2754 = vmatpush.bf16.msra.mxu0 %v1991
    %2755 = vmatpush.bf16.msra.mxu0 %v1983
    %2756 = vmatpush.bf16.msra.mxu0 %v1975
    %2757 = vmatpush.bf16.msra.mxu0 %v1967
    %2758 = vmatpush.bf16.msra.mxu0 %v1959
    %2759 = vmatmul.bf16.gmra.mxu0 %v1101
    %v2760 = vpop.f32.mrf.mxu0
    %v2761 = vadd.f32 %v2747, %v2760
    %v2762 = vpop.f32.mrf.mxu0
    %v2763 = vadd.f32 %v2749, %v2762
    %2764 = vdwg.mxu0
    %2765 = vmatpush.bf16.msra.mxu0 %v2079
    %2766 = vmatpush.bf16.msra.mxu0 %v2071
    %2767 = vmatpush.bf16.msra.mxu0 %v2063
    %2768 = vmatpush.bf16.msra.mxu0 %v2055
    %2769 = vmatpush.bf16.msra.mxu0 %v2047
    %2770 = vmatpush.bf16.msra.mxu0 %v2039
    %2771 = vmatpush.bf16.msra.mxu0 %v2031
    %2772 = vmatpush.bf16.msra.mxu0 %v2023
    %2773 = vmatmul.bf16.gmra.mxu0 %v1102
    %v2774 = vpop.f32.mrf.mxu0
    %v2775 = vadd.f32 %v2761, %v2774
    %v2776 = vpop.f32.mrf.mxu0
    %v2777 = vadd.f32 %v2763, %v2776
    %2778 = vdwg.mxu0
    %2779 = vmatpush.bf16.msra.mxu0 %v2143
    %2780 = vmatpush.bf16.msra.mxu0 %v2135
    %2781 = vmatpush.bf16.msra.mxu0 %v2127
    %2782 = vmatpush.bf16.msra.mxu0 %v2119
    %2783 = vmatpush.bf16.msra.mxu0 %v2111
    %2784 = vmatpush.bf16.msra.mxu0 %v2103
    %2785 = vmatpush.bf16.msra.mxu0 %v2095
    %2786 = vmatpush.bf16.msra.mxu0 %v2087
    %2787 = vmatmul.bf16.gmra.mxu0 %v1103
    %v2788 = vpop.f32.mrf.mxu0
    %v2789 = vadd.f32 %v2775, %v2788
    %v2790 = vpop.f32.mrf.mxu0
    %v2791 = vadd.f32 %v2777, %v2790
    %2792 = vdwg.mxu0
    %2793 = vmatpush.bf16.msra.mxu0 %v1952
    %2794 = vmatpush.bf16.msra.mxu0 %v1944
    %2795 = vmatpush.bf16.msra.mxu0 %v1936
    %2796 = vmatpush.bf16.msra.mxu0 %v1928
    %2797 = vmatpush.bf16.msra.mxu0 %v1920
    %2798 = vmatpush.bf16.msra.mxu0 %v1912
    %2799 = vmatpush.bf16.msra.mxu0 %v1904
    %2800 = vmatpush.bf16.msra.mxu0 %v1896
    %2801 = vmatmul.bf16.gmra.mxu0 %v1100
    %v2802 = vpop.f32.mrf.mxu0
    %v2803 = vadd.f32 %v1112, %v2802
    %v2804 = vpop.f32.mrf.mxu0
    %v2805 = vadd.f32 %v1112, %v2804
    %2806 = vdwg.mxu0
    %2807 = vmatpush.bf16.msra.mxu0 %v2016
    %2808 = vmatpush.bf16.msra.mxu0 %v2008
    %2809 = vmatpush.bf16.msra.mxu0 %v2000
    %2810 = vmatpush.bf16.msra.mxu0 %v1992
    %2811 = vmatpush.bf16.msra.mxu0 %v1984
    %2812 = vmatpush.bf16.msra.mxu0 %v1976
    %2813 = vmatpush.bf16.msra.mxu0 %v1968
    %2814 = vmatpush.bf16.msra.mxu0 %v1960
    %2815 = vmatmul.bf16.gmra.mxu0 %v1101
    %v2816 = vpop.f32.mrf.mxu0
    %v2817 = vadd.f32 %v2803, %v2816
    %v2818 = vpop.f32.mrf.mxu0
    %v2819 = vadd.f32 %v2805, %v2818
    %2820 = vdwg.mxu0
    %2821 = vmatpush.bf16.msra.mxu0 %v2080
    %2822 = vmatpush.bf16.msra.mxu0 %v2072
    %2823 = vmatpush.bf16.msra.mxu0 %v2064
    %2824 = vmatpush.bf16.msra.mxu0 %v2056
    %2825 = vmatpush.bf16.msra.mxu0 %v2048
    %2826 = vmatpush.bf16.msra.mxu0 %v2040
    %2827 = vmatpush.bf16.msra.mxu0 %v2032
    %2828 = vmatpush.bf16.msra.mxu0 %v2024
    %2829 = vmatmul.bf16.gmra.mxu0 %v1102
    %v2830 = vpop.f32.mrf.mxu0
    %v2831 = vadd.f32 %v2817, %v2830
    %v2832 = vpop.f32.mrf.mxu0
    %v2833 = vadd.f32 %v2819, %v2832
    %2834 = vdwg.mxu0
    %2835 = vmatpush.bf16.msra.mxu0 %v2144
    %2836 = vmatpush.bf16.msra.mxu0 %v2136
    %2837 = vmatpush.bf16.msra.mxu0 %v2128
    %2838 = vmatpush.bf16.msra.mxu0 %v2120
    %2839 = vmatpush.bf16.msra.mxu0 %v2112
    %2840 = vmatpush.bf16.msra.mxu0 %v2104
    %2841 = vmatpush.bf16.msra.mxu0 %v2096
    %2842 = vmatpush.bf16.msra.mxu0 %v2088
    %2843 = vmatmul.bf16.gmra.mxu0 %v1103
    %v2844 = vpop.f32.mrf.mxu0
    %v2845 = vadd.f32 %v2831, %v2844
    %v2846 = vpop.f32.mrf.mxu0
    %v2847 = vadd.f32 %v2833, %v2846
    %2848 = vdwg.mxu0
    %vm2849 = vcmp.gt.f32.partialorder %v2453, 0.0
    %vm2850 = vcmp.gt.f32.partialorder %v2509, 0.0
    %vm2851 = vcmp.gt.f32.partialorder %v2565, 0.0
    %vm2852 = vcmp.gt.f32.partialorder %v2621, 0.0
    %vm2853 = vcmp.gt.f32.partialorder %v2677, 0.0
    %vm2854 = vcmp.gt.f32.partialorder %v2733, 0.0
    %vm2855 = vcmp.gt.f32.partialorder %v2789, 0.0
    %vm2856 = vcmp.gt.f32.partialorder %v2845, 0.0
    %vm2857 = vcmp.gt.f32.partialorder %v2455, 0.0
    %vm2858 = vcmp.gt.f32.partialorder %v2511, 0.0
    %vm2859 = vcmp.gt.f32.partialorder %v2567, 0.0
    %vm2860 = vcmp.gt.f32.partialorder %v2623, 0.0
    %vm2861 = vcmp.gt.f32.partialorder %v2679, 0.0
    %vm2862 = vcmp.gt.f32.partialorder %v2735, 0.0
    %vm2863 = vcmp.gt.f32.partialorder %v2791, 0.0
    %vm2864 = vcmp.gt.f32.partialorder %v2847, 0.0
    %v2865 = vmul.f32 %v2453, 0.2
    %v2866 = vmul.f32 %v2509, 0.2
    %v2867 = vmul.f32 %v2565, 0.2
    %v2868 = vmul.f32 %v2621, 0.2
    %v2869 = vmul.f32 %v2677, 0.2
    %v2870 = vmul.f32 %v2733, 0.2
    %v2871 = vmul.f32 %v2789, 0.2
    %v2872 = vmul.f32 %v2845, 0.2
    %v2873 = vmul.f32 %v2455, 0.2
    %v2874 = vmul.f32 %v2511, 0.2
    %v2875 = vmul.f32 %v2567, 0.2
    %v2876 = vmul.f32 %v2623, 0.2
    %v2877 = vmul.f32 %v2679, 0.2
    %v2878 = vmul.f32 %v2735, 0.2
    %v2879 = vmul.f32 %v2791, 0.2
    %v2880 = vmul.f32 %v2847, 0.2
    %v2881 = vsel %vm2849, %v2453, %v2865
    %v2882 = vsel %vm2850, %v2509, %v2866
    %v2883 = vsel %vm2851, %v2565, %v2867
    %v2884 = vsel %vm2852, %v2621, %v2868
    %v2885 = vsel %vm2853, %v2677, %v2869
    %v2886 = vsel %vm2854, %v2733, %v2870
    %v2887 = vsel %vm2855, %v2789, %v2871
    %v2888 = vsel %vm2856, %v2845, %v2872
    %v2889 = vsel %vm2857, %v2455, %v2873
    %v2890 = vsel %vm2858, %v2511, %v2874
    %v2891 = vsel %vm2859, %v2567, %v2875
    %v2892 = vsel %vm2860, %v2623, %v2876
    %v2893 = vsel %vm2861, %v2679, %v2877
    %v2894 = vsel %vm2862, %v2735, %v2878
    %v2895 = vsel %vm2863, %v2791, %v2879
    %v2896 = vsel %vm2864, %v2847, %v2880
    %s2897 = smul.u32 4, 128
    %s2898 = smul.u32 %s2897, 7
    %s2899 = sshll.u32 %s2898, 4
    %2900 = dma.done %s143, %s2899
    %v2901 = vld [vmem:[#allocation3] sm:$0xff]
    %v2902 = vld [vmem:[#allocation3 + $0x8] sm:$0xff]
    %v2903 = vld [vmem:[#allocation3 + $0x10] sm:$0xff]
    %v2904 = vld [vmem:[#allocation3 + $0x18] sm:$0xf]
    %v2905 = vld [vmem:[#allocation3 + $0x1c] sm:$0xff]
    %v2906 = vld [vmem:[#allocation3 + $0x24] sm:$0xff]
    %v2907 = vld [vmem:[#allocation3 + $0x2c] sm:$0xff]
    %v2908 = vld [vmem:[#allocation3 + $0x34] sm:$0xf]
    %v2909 = vld [vmem:[#allocation3 + $0x38] sm:$0xff]
    %v2910 = vld [vmem:[#allocation3 + $0x40] sm:$0xff]
    %v2911 = vld [vmem:[#allocation3 + $0x48] sm:$0xff]
    %v2912 = vld [vmem:[#allocation3 + $0x50] sm:$0xf]
    %v2913 = vld [vmem:[#allocation3 + $0x54] sm:$0xff]
    %v2914 = vld [vmem:[#allocation3 + $0x5c] sm:$0xff]
    %v2915 = vld [vmem:[#allocation3 + $0x64] sm:$0xff]
    %v2916 = vld [vmem:[#allocation3 + $0x6c] sm:$0xf]
    %v2917 = vld [vmem:[#allocation3 + $0x70] sm:$0xff]
    %v2918 = vld [vmem:[#allocation3 + $0x78] sm:$0xff]
    %v2919 = vld [vmem:[#allocation3 + $0x80] sm:$0xff]
    %v2920 = vld [vmem:[#allocation3 + $0x88] sm:$0xf]
    %v2921 = vld [vmem:[#allocation3 + $0x8c] sm:$0xff]
    %v2922 = vld [vmem:[#allocation3 + $0x94] sm:$0xff]
    %v2923 = vld [vmem:[#allocation3 + $0x9c] sm:$0xff]
    %v2924 = vld [vmem:[#allocation3 + $0xa4] sm:$0xf]
    %v2925 = vld [vmem:[#allocation3 + $0xa8] sm:$0xff]
    %v2926 = vld [vmem:[#allocation3 + $0xb0] sm:$0xff]
    %v2927 = vld [vmem:[#allocation3 + $0xb8] sm:$0xff]
    %v2928 = vld [vmem:[#allocation3 + $0xc0] sm:$0xf]
    %v2929 = vld [vmem:[#allocation3 + $0xc4] sm:$0xff]
    %v2930 = vld [vmem:[#allocation3 + $0xcc] sm:$0xff]
    %v2931 = vld [vmem:[#allocation3 + $0xd4] sm:$0xff]
    %v2932 = vld [vmem:[#allocation3 + $0xdc] sm:$0xf]
    %v2933 = vld [vmem:[#allocation3 + $0xe0] sm:$0xff]
    %v2934 = vld [vmem:[#allocation3 + $0xe8] sm:$0xff]
    %v2935 = vld [vmem:[#allocation3 + $0xf0] sm:$0xff]
    %v2936 = vld [vmem:[#allocation3 + $0xf8] sm:$0xf]
    %v2937 = vld [vmem:[#allocation3 + $0xfc] sm:$0xff]
    %v2938 = vld [vmem:[#allocation3 + $0x104] sm:$0xff]
    %v2939 = vld [vmem:[#allocation3 + $0x10c] sm:$0xff]
    %v2940 = vld [vmem:[#allocation3 + $0x114] sm:$0xf]
    %v2941 = vld [vmem:[#allocation3 + $0x118] sm:$0xff]
    %v2942 = vld [vmem:[#allocation3 + $0x120] sm:$0xff]
    %v2943 = vld [vmem:[#allocation3 + $0x128] sm:$0xff]
    %v2944 = vld [vmem:[#allocation3 + $0x130] sm:$0xf]
    %v2945 = vld [vmem:[#allocation3 + $0x134] sm:$0xff]
    %v2946 = vld [vmem:[#allocation3 + $0x13c] sm:$0xff]
    %v2947 = vld [vmem:[#allocation3 + $0x144] sm:$0xff]
    %v2948 = vld [vmem:[#allocation3 + $0x14c] sm:$0xf]
    %v2949 = vld [vmem:[#allocation3 + $0x150] sm:$0xff]
    %v2950 = vld [vmem:[#allocation3 + $0x158] sm:$0xff]
    %v2951 = vld [vmem:[#allocation3 + $0x160] sm:$0xff]
    %v2952 = vld [vmem:[#allocation3 + $0x168] sm:$0xf]
    %v2953 = vld [vmem:[#allocation3 + $0x16c] sm:$0xff]
    %v2954 = vld [vmem:[#allocation3 + $0x174] sm:$0xff]
    %v2955 = vld [vmem:[#allocation3 + $0x17c] sm:$0xff]
    %v2956 = vld [vmem:[#allocation3 + $0x184] sm:$0xf]
    %v2957 = vld [vmem:[#allocation3 + $0x188] sm:$0xff]
    %v2958 = vld [vmem:[#allocation3 + $0x190] sm:$0xff]
    %v2959 = vld [vmem:[#allocation3 + $0x198] sm:$0xff]
    %v2960 = vld [vmem:[#allocation3 + $0x1a0] sm:$0xf]
    %v2961 = vld [vmem:[#allocation3 + $0x1a4] sm:$0xff]
    %v2962 = vld [vmem:[#allocation3 + $0x1ac] sm:$0xff]
    %v2963 = vld [vmem:[#allocation3 + $0x1b4] sm:$0xff]
    %v2964 = vld [vmem:[#allocation3 + $0x1bc] sm:$0xf]
    %v2965 = vld [vmem:[#allocation3 + $0x1c0] sm:$0xff]
    %v2966 = vld [vmem:[#allocation3 + $0x1c8] sm:$0xff]
    %v2967 = vld [vmem:[#allocation3 + $0x1d0] sm:$0xff]
    %v2968 = vld [vmem:[#allocation3 + $0x1d8] sm:$0xf]
    %v2969 = vld [vmem:[#allocation3 + $0x1dc] sm:$0xff]
    %v2970 = vld [vmem:[#allocation3 + $0x1e4] sm:$0xff]
    %v2971 = vld [vmem:[#allocation3 + $0x1ec] sm:$0xff]
    %v2972 = vld [vmem:[#allocation3 + $0x1f4] sm:$0xf]
    %v2973 = vld [vmem:[#allocation3 + $0x1f8] sm:$0xff]
    %v2974 = vld [vmem:[#allocation3 + $0x200] sm:$0xff]
    %v2975 = vld [vmem:[#allocation3 + $0x208] sm:$0xff]
    %v2976 = vld [vmem:[#allocation3 + $0x210] sm:$0xf]
    %v2977 = vld [vmem:[#allocation3 + $0x214] sm:$0xff]
    %v2978 = vld [vmem:[#allocation3 + $0x21c] sm:$0xff]
    %v2979 = vld [vmem:[#allocation3 + $0x224] sm:$0xff]
    %v2980 = vld [vmem:[#allocation3 + $0x22c] sm:$0xf]
    %v2981 = vld [vmem:[#allocation3 + $0x230] sm:$0xff]
    %v2982 = vld [vmem:[#allocation3 + $0x238] sm:$0xff]
    %v2983 = vld [vmem:[#allocation3 + $0x240] sm:$0xff]
    %v2984 = vld [vmem:[#allocation3 + $0x248] sm:$0xf]
    %v2985 = vld [vmem:[#allocation3 + $0x24c] sm:$0xff]
    %v2986 = vld [vmem:[#allocation3 + $0x254] sm:$0xff]
    %v2987 = vld [vmem:[#allocation3 + $0x25c] sm:$0xff]
    %v2988 = vld [vmem:[#allocation3 + $0x264] sm:$0xf]
    %v2989 = vld [vmem:[#allocation3 + $0x268] sm:$0xff]
    %v2990 = vld [vmem:[#allocation3 + $0x270] sm:$0xff]
    %v2991 = vld [vmem:[#allocation3 + $0x278] sm:$0xff]
    %v2992 = vld [vmem:[#allocation3 + $0x280] sm:$0xf]
    %v2993 = vld [vmem:[#allocation3 + $0x284] sm:$0xff]
    %v2994 = vld [vmem:[#allocation3 + $0x28c] sm:$0xff]
    %v2995 = vld [vmem:[#allocation3 + $0x294] sm:$0xff]
    %v2996 = vld [vmem:[#allocation3 + $0x29c] sm:$0xf]
    %v2997 = vld [vmem:[#allocation3 + $0x2a0] sm:$0xff]
    %v2998 = vld [vmem:[#allocation3 + $0x2a8] sm:$0xff]
    %v2999 = vld [vmem:[#allocation3 + $0x2b0] sm:$0xff]
    %v3000 = vld [vmem:[#allocation3 + $0x2b8] sm:$0xf]
    %v3001 = vld [vmem:[#allocation3 + $0x2bc] sm:$0xff]
    %v3002 = vld [vmem:[#allocation3 + $0x2c4] sm:$0xff]
    %v3003 = vld [vmem:[#allocation3 + $0x2cc] sm:$0xff]
    %v3004 = vld [vmem:[#allocation3 + $0x2d4] sm:$0xf]
    %v3005 = vld [vmem:[#allocation3 + $0x2d8] sm:$0xff]
    %v3006 = vld [vmem:[#allocation3 + $0x2e0] sm:$0xff]
    %v3007 = vld [vmem:[#allocation3 + $0x2e8] sm:$0xff]
    %v3008 = vld [vmem:[#allocation3 + $0x2f0] sm:$0xf]
    %v3009 = vld [vmem:[#allocation3 + $0x2f4] sm:$0xff]
    %v3010 = vld [vmem:[#allocation3 + $0x2fc] sm:$0xff]
    %v3011 = vld [vmem:[#allocation3 + $0x304] sm:$0xff]
    %v3012 = vld [vmem:[#allocation3 + $0x30c] sm:$0xf]
    %v3013 = vld [vmem:[#allocation3 + $0x310] sm:$0xff]
    %v3014 = vld [vmem:[#allocation3 + $0x318] sm:$0xff]
    %v3015 = vld [vmem:[#allocation3 + $0x320] sm:$0xff]
    %v3016 = vld [vmem:[#allocation3 + $0x328] sm:$0xf]
    %v3017 = vld [vmem:[#allocation3 + $0x32c] sm:$0xff]
    %v3018 = vld [vmem:[#allocation3 + $0x334] sm:$0xff]
    %v3019 = vld [vmem:[#allocation3 + $0x33c] sm:$0xff]
    %v3020 = vld [vmem:[#allocation3 + $0x344] sm:$0xf]
    %v3021 = vld [vmem:[#allocation3 + $0x348] sm:$0xff]
    %v3022 = vld [vmem:[#allocation3 + $0x350] sm:$0xff]
    %v3023 = vld [vmem:[#allocation3 + $0x358] sm:$0xff]
    %v3024 = vld [vmem:[#allocation3 + $0x360] sm:$0xf]
    %v3025 = vld [vmem:[#allocation3 + $0x364] sm:$0xff]
    %v3026 = vld [vmem:[#allocation3 + $0x36c] sm:$0xff]
    %v3027 = vld [vmem:[#allocation3 + $0x374] sm:$0xff]
    %v3028 = vld [vmem:[#allocation3 + $0x37c] sm:$0xf]
    %v3029 = vld [vmem:[#allocation3 + $0x380] sm:$0xff]
    %v3030 = vld [vmem:[#allocation3 + $0x388] sm:$0xff]
    %v3031 = vld [vmem:[#allocation3 + $0x390] sm:$0xff]
    %v3032 = vld [vmem:[#allocation3 + $0x398] sm:$0xf]
    %v3033 = vld [vmem:[#allocation3 + $0x39c] sm:$0xff]
    %v3034 = vld [vmem:[#allocation3 + $0x3a4] sm:$0xff]
    %v3035 = vld [vmem:[#allocation3 + $0x3ac] sm:$0xff]
    %v3036 = vld [vmem:[#allocation3 + $0x3b4] sm:$0xf]
    %v3037 = vld [vmem:[#allocation3 + $0x3b8] sm:$0xff]
    %v3038 = vld [vmem:[#allocation3 + $0x3c0] sm:$0xff]
    %v3039 = vld [vmem:[#allocation3 + $0x3c8] sm:$0xff]
    %v3040 = vld [vmem:[#allocation3 + $0x3d0] sm:$0xf]
    %v3041 = vld [vmem:[#allocation3 + $0x3d4] sm:$0xff]
    %v3042 = vld [vmem:[#allocation3 + $0x3dc] sm:$0xff]
    %v3043 = vld [vmem:[#allocation3 + $0x3e4] sm:$0xff]
    %v3044 = vld [vmem:[#allocation3 + $0x3ec] sm:$0xf]
    %v3045 = vld [vmem:[#allocation3 + $0x3f0] sm:$0xff]
    %v3046 = vld [vmem:[#allocation3 + $0x3f8] sm:$0xff]
    %v3047 = vld [vmem:[#allocation3 + $0x400] sm:$0xff]
    %v3048 = vld [vmem:[#allocation3 + $0x408] sm:$0xf]
    %v3049 = vld [vmem:[#allocation3 + $0x40c] sm:$0xff]
    %v3050 = vld [vmem:[#allocation3 + $0x414] sm:$0xff]
    %v3051 = vld [vmem:[#allocation3 + $0x41c] sm:$0xff]
    %v3052 = vld [vmem:[#allocation3 + $0x424] sm:$0xf]
    %v3053 = vld [vmem:[#allocation3 + $0x428] sm:$0xff]
    %v3054 = vld [vmem:[#allocation3 + $0x430] sm:$0xff]
    %v3055 = vld [vmem:[#allocation3 + $0x438] sm:$0xff]
    %v3056 = vld [vmem:[#allocation3 + $0x440] sm:$0xf]
    %v3057 = vld [vmem:[#allocation3 + $0x444] sm:$0xff]
    %v3058 = vld [vmem:[#allocation3 + $0x44c] sm:$0xff]
    %v3059 = vld [vmem:[#allocation3 + $0x454] sm:$0xff]
    %v3060 = vld [vmem:[#allocation3 + $0x45c] sm:$0xf]
    %v3061 = vld [vmem:[#allocation3 + $0x460] sm:$0xff]
    %v3062 = vld [vmem:[#allocation3 + $0x468] sm:$0xff]
    %v3063 = vld [vmem:[#allocation3 + $0x470] sm:$0xff]
    %v3064 = vld [vmem:[#allocation3 + $0x478] sm:$0xf]
    %v3065 = vld [vmem:[#allocation3 + $0x47c] sm:$0xff]
    %v3066 = vld [vmem:[#allocation3 + $0x484] sm:$0xff]
    %v3067 = vld [vmem:[#allocation3 + $0x48c] sm:$0xff]
    %v3068 = vld [vmem:[#allocation3 + $0x494] sm:$0xf]
    %v3069 = vld [vmem:[#allocation3 + $0x498] sm:$0xff]
    %v3070 = vld [vmem:[#allocation3 + $0x4a0] sm:$0xff]
    %v3071 = vld [vmem:[#allocation3 + $0x4a8] sm:$0xff]
    %v3072 = vld [vmem:[#allocation3 + $0x4b0] sm:$0xf]
    %v3073 = vld [vmem:[#allocation3 + $0x4b4] sm:$0xff]
    %v3074 = vld [vmem:[#allocation3 + $0x4bc] sm:$0xff]
    %v3075 = vld [vmem:[#allocation3 + $0x4c4] sm:$0xff]
    %v3076 = vld [vmem:[#allocation3 + $0x4cc] sm:$0xf]
    %v3077 = vld [vmem:[#allocation3 + $0x4d0] sm:$0xff]
    %v3078 = vld [vmem:[#allocation3 + $0x4d8] sm:$0xff]
    %v3079 = vld [vmem:[#allocation3 + $0x4e0] sm:$0xff]
    %v3080 = vld [vmem:[#allocation3 + $0x4e8] sm:$0xf]
    %v3081 = vld [vmem:[#allocation3 + $0x4ec] sm:$0xff]
    %v3082 = vld [vmem:[#allocation3 + $0x4f4] sm:$0xff]
    %v3083 = vld [vmem:[#allocation3 + $0x4fc] sm:$0xff]
    %v3084 = vld [vmem:[#allocation3 + $0x504] sm:$0xf]
    %v3085 = vld [vmem:[#allocation3 + $0x508] sm:$0xff]
    %v3086 = vld [vmem:[#allocation3 + $0x510] sm:$0xff]
    %v3087 = vld [vmem:[#allocation3 + $0x518] sm:$0xff]
    %v3088 = vld [vmem:[#allocation3 + $0x520] sm:$0xf]
    %v3089 = vld [vmem:[#allocation3 + $0x524] sm:$0xff]
    %v3090 = vld [vmem:[#allocation3 + $0x52c] sm:$0xff]
    %v3091 = vld [vmem:[#allocation3 + $0x534] sm:$0xff]
    %v3092 = vld [vmem:[#allocation3 + $0x53c] sm:$0xf]
    %v3093 = vld [vmem:[#allocation3 + $0x540] sm:$0xff]
    %v3094 = vld [vmem:[#allocation3 + $0x548] sm:$0xff]
    %v3095 = vld [vmem:[#allocation3 + $0x550] sm:$0xff]
    %v3096 = vld [vmem:[#allocation3 + $0x558] sm:$0xf]
    %v3097 = vld [vmem:[#allocation3 + $0x55c] sm:$0xff]
    %v3098 = vld [vmem:[#allocation3 + $0x564] sm:$0xff]
    %v3099 = vld [vmem:[#allocation3 + $0x56c] sm:$0xff]
    %v3100 = vld [vmem:[#allocation3 + $0x574] sm:$0xf]
    %v3101 = vld [vmem:[#allocation3 + $0x578] sm:$0xff]
    %v3102 = vld [vmem:[#allocation3 + $0x580] sm:$0xff]
    %v3103 = vld [vmem:[#allocation3 + $0x588] sm:$0xff]
    %v3104 = vld [vmem:[#allocation3 + $0x590] sm:$0xf]
    %v3105 = vld [vmem:[#allocation3 + $0x594] sm:$0xff]
    %v3106 = vld [vmem:[#allocation3 + $0x59c] sm:$0xff]
    %v3107 = vld [vmem:[#allocation3 + $0x5a4] sm:$0xff]
    %v3108 = vld [vmem:[#allocation3 + $0x5ac] sm:$0xf]
    %v3109 = vld [vmem:[#allocation3 + $0x5b0] sm:$0xff]
    %v3110 = vld [vmem:[#allocation3 + $0x5b8] sm:$0xff]
    %v3111 = vld [vmem:[#allocation3 + $0x5c0] sm:$0xff]
    %v3112 = vld [vmem:[#allocation3 + $0x5c8] sm:$0xf]
    %v3113 = vld [vmem:[#allocation3 + $0x5cc] sm:$0xff]
    %v3114 = vld [vmem:[#allocation3 + $0x5d4] sm:$0xff]
    %v3115 = vld [vmem:[#allocation3 + $0x5dc] sm:$0xff]
    %v3116 = vld [vmem:[#allocation3 + $0x5e4] sm:$0xf]
    %v3117 = vld [vmem:[#allocation3 + $0x5e8] sm:$0xff]
    %v3118 = vld [vmem:[#allocation3 + $0x5f0] sm:$0xff]
    %v3119 = vld [vmem:[#allocation3 + $0x5f8] sm:$0xff]
    %v3120 = vld [vmem:[#allocation3 + $0x600] sm:$0xf]
    %v3121 = vld [vmem:[#allocation3 + $0x604] sm:$0xff]
    %v3122 = vld [vmem:[#allocation3 + $0x60c] sm:$0xff]
    %v3123 = vld [vmem:[#allocation3 + $0x614] sm:$0xff]
    %v3124 = vld [vmem:[#allocation3 + $0x61c] sm:$0xf]
    %v3125 = vld [vmem:[#allocation3 + $0x620] sm:$0xff]
    %v3126 = vld [vmem:[#allocation3 + $0x628] sm:$0xff]
    %v3127 = vld [vmem:[#allocation3 + $0x630] sm:$0xff]
    %v3128 = vld [vmem:[#allocation3 + $0x638] sm:$0xf]
    %v3129 = vld [vmem:[#allocation3 + $0x63c] sm:$0xff]
    %v3130 = vld [vmem:[#allocation3 + $0x644] sm:$0xff]
    %v3131 = vld [vmem:[#allocation3 + $0x64c] sm:$0xff]
    %v3132 = vld [vmem:[#allocation3 + $0x654] sm:$0xf]
    %v3133 = vld [vmem:[#allocation3 + $0x658] sm:$0xff]
    %v3134 = vld [vmem:[#allocation3 + $0x660] sm:$0xff]
    %v3135 = vld [vmem:[#allocation3 + $0x668] sm:$0xff]
    %v3136 = vld [vmem:[#allocation3 + $0x670] sm:$0xf]
    %v3137 = vld [vmem:[#allocation3 + $0x674] sm:$0xff]
    %v3138 = vld [vmem:[#allocation3 + $0x67c] sm:$0xff]
    %v3139 = vld [vmem:[#allocation3 + $0x684] sm:$0xff]
    %v3140 = vld [vmem:[#allocation3 + $0x68c] sm:$0xf]
    %v3141 = vld [vmem:[#allocation3 + $0x690] sm:$0xff]
    %v3142 = vld [vmem:[#allocation3 + $0x698] sm:$0xff]
    %v3143 = vld [vmem:[#allocation3 + $0x6a0] sm:$0xff]
    %v3144 = vld [vmem:[#allocation3 + $0x6a8] sm:$0xf]
    %v3145 = vld [vmem:[#allocation3 + $0x6ac] sm:$0xff]
    %v3146 = vld [vmem:[#allocation3 + $0x6b4] sm:$0xff]
    %v3147 = vld [vmem:[#allocation3 + $0x6bc] sm:$0xff]
    %v3148 = vld [vmem:[#allocation3 + $0x6c4] sm:$0xf]
    %v3149 = vld [vmem:[#allocation3 + $0x6c8] sm:$0xff]
    %v3150 = vld [vmem:[#allocation3 + $0x6d0] sm:$0xff]
    %v3151 = vld [vmem:[#allocation3 + $0x6d8] sm:$0xff]
    %v3152 = vld [vmem:[#allocation3 + $0x6e0] sm:$0xf]
    %v3153 = vld [vmem:[#allocation3 + $0x6e4] sm:$0xff]
    %v3154 = vld [vmem:[#allocation3 + $0x6ec] sm:$0xff]
    %v3155 = vld [vmem:[#allocation3 + $0x6f4] sm:$0xff]
    %v3156 = vld [vmem:[#allocation3 + $0x6fc] sm:$0xf]
    %v3157 = vld [vmem:[#allocation3 + $0x700] sm:$0xff]
    %v3158 = vld [vmem:[#allocation3 + $0x708] sm:$0xff]
    %v3159 = vld [vmem:[#allocation3 + $0x710] sm:$0xff]
    %v3160 = vld [vmem:[#allocation3 + $0x718] sm:$0xf]
    %v3161 = vld [vmem:[#allocation3 + $0x71c] sm:$0xff]
    %v3162 = vld [vmem:[#allocation3 + $0x724] sm:$0xff]
    %v3163 = vld [vmem:[#allocation3 + $0x72c] sm:$0xff]
    %v3164 = vld [vmem:[#allocation3 + $0x734] sm:$0xf]
    %v3165 = vld [vmem:[#allocation3 + $0x738] sm:$0xff]
    %v3166 = vld [vmem:[#allocation3 + $0x740] sm:$0xff]
    %v3167 = vld [vmem:[#allocation3 + $0x748] sm:$0xff]
    %v3168 = vld [vmem:[#allocation3 + $0x750] sm:$0xf]
    %v3169 = vld [vmem:[#allocation3 + $0x754] sm:$0xff]
    %v3170 = vld [vmem:[#allocation3 + $0x75c] sm:$0xff]
    %v3171 = vld [vmem:[#allocation3 + $0x764] sm:$0xff]
    %v3172 = vld [vmem:[#allocation3 + $0x76c] sm:$0xf]
    %v3173 = vld [vmem:[#allocation3 + $0x770] sm:$0xff]
    %v3174 = vld [vmem:[#allocation3 + $0x778] sm:$0xff]
    %v3175 = vld [vmem:[#allocation3 + $0x780] sm:$0xff]
    %v3176 = vld [vmem:[#allocation3 + $0x788] sm:$0xf]
    %v3177 = vld [vmem:[#allocation3 + $0x78c] sm:$0xff]
    %v3178 = vld [vmem:[#allocation3 + $0x794] sm:$0xff]
    %v3179 = vld [vmem:[#allocation3 + $0x79c] sm:$0xff]
    %v3180 = vld [vmem:[#allocation3 + $0x7a4] sm:$0xf]
    %v3181 = vld [vmem:[#allocation3 + $0x7a8] sm:$0xff]
    %v3182 = vld [vmem:[#allocation3 + $0x7b0] sm:$0xff]
    %v3183 = vld [vmem:[#allocation3 + $0x7b8] sm:$0xff]
    %v3184 = vld [vmem:[#allocation3 + $0x7c0] sm:$0xf]
    %v3185 = vld [vmem:[#allocation3 + $0x7c4] sm:$0xff]
    %v3186 = vld [vmem:[#allocation3 + $0x7cc] sm:$0xff]
    %v3187 = vld [vmem:[#allocation3 + $0x7d4] sm:$0xff]
    %v3188 = vld [vmem:[#allocation3 + $0x7dc] sm:$0xf]
    %v3189 = vld [vmem:[#allocation3 + $0x7e0] sm:$0xff]
    %v3190 = vld [vmem:[#allocation3 + $0x7e8] sm:$0xff]
    %v3191 = vld [vmem:[#allocation3 + $0x7f0] sm:$0xff]
    %v3192 = vld [vmem:[#allocation3 + $0x7f8] sm:$0xf]
    %v3193 = vld [vmem:[#allocation3 + $0x7fc] sm:$0xff]
    %v3194 = vld [vmem:[#allocation3 + $0x804] sm:$0xff]
    %v3195 = vld [vmem:[#allocation3 + $0x80c] sm:$0xff]
    %v3196 = vld [vmem:[#allocation3 + $0x814] sm:$0xf]
    %v3197 = vld [vmem:[#allocation3 + $0x818] sm:$0xff]
    %v3198 = vld [vmem:[#allocation3 + $0x820] sm:$0xff]
    %v3199 = vld [vmem:[#allocation3 + $0x828] sm:$0xff]
    %v3200 = vld [vmem:[#allocation3 + $0x830] sm:$0xf]
    %v3201 = vld [vmem:[#allocation3 + $0x834] sm:$0xff]
    %v3202 = vld [vmem:[#allocation3 + $0x83c] sm:$0xff]
    %v3203 = vld [vmem:[#allocation3 + $0x844] sm:$0xff]
    %v3204 = vld [vmem:[#allocation3 + $0x84c] sm:$0xf]
    %v3205 = vld [vmem:[#allocation3 + $0x850] sm:$0xff]
    %v3206 = vld [vmem:[#allocation3 + $0x858] sm:$0xff]
    %v3207 = vld [vmem:[#allocation3 + $0x860] sm:$0xff]
    %v3208 = vld [vmem:[#allocation3 + $0x868] sm:$0xf]
    %v3209 = vld [vmem:[#allocation3 + $0x86c] sm:$0xff]
    %v3210 = vld [vmem:[#allocation3 + $0x874] sm:$0xff]
    %v3211 = vld [vmem:[#allocation3 + $0x87c] sm:$0xff]
    %v3212 = vld [vmem:[#allocation3 + $0x884] sm:$0xf]
    %v3213 = vld [vmem:[#allocation3 + $0x888] sm:$0xff]
    %v3214 = vld [vmem:[#allocation3 + $0x890] sm:$0xff]
    %v3215 = vld [vmem:[#allocation3 + $0x898] sm:$0xff]
    %v3216 = vld [vmem:[#allocation3 + $0x8a0] sm:$0xf]
    %v3217 = vld [vmem:[#allocation3 + $0x8a4] sm:$0xff]
    %v3218 = vld [vmem:[#allocation3 + $0x8ac] sm:$0xff]
    %v3219 = vld [vmem:[#allocation3 + $0x8b4] sm:$0xff]
    %v3220 = vld [vmem:[#allocation3 + $0x8bc] sm:$0xf]
    %v3221 = vld [vmem:[#allocation3 + $0x8c0] sm:$0xff]
    %v3222 = vld [vmem:[#allocation3 + $0x8c8] sm:$0xff]
    %v3223 = vld [vmem:[#allocation3 + $0x8d0] sm:$0xff]
    %v3224 = vld [vmem:[#allocation3 + $0x8d8] sm:$0xf]
    %v3225 = vld [vmem:[#allocation3 + $0x8dc] sm:$0xff]
    %v3226 = vld [vmem:[#allocation3 + $0x8e4] sm:$0xff]
    %v3227 = vld [vmem:[#allocation3 + $0x8ec] sm:$0xff]
    %v3228 = vld [vmem:[#allocation3 + $0x8f4] sm:$0xf]
    %v3229 = vld [vmem:[#allocation3 + $0x8f8] sm:$0xff]
    %v3230 = vld [vmem:[#allocation3 + $0x900] sm:$0xff]
    %v3231 = vld [vmem:[#allocation3 + $0x908] sm:$0xff]
    %v3232 = vld [vmem:[#allocation3 + $0x910] sm:$0xf]
    %v3233 = vld [vmem:[#allocation3 + $0x914] sm:$0xff]
    %v3234 = vld [vmem:[#allocation3 + $0x91c] sm:$0xff]
    %v3235 = vld [vmem:[#allocation3 + $0x924] sm:$0xff]
    %v3236 = vld [vmem:[#allocation3 + $0x92c] sm:$0xf]
    %v3237 = vld [vmem:[#allocation3 + $0x930] sm:$0xff]
    %v3238 = vld [vmem:[#allocation3 + $0x938] sm:$0xff]
    %v3239 = vld [vmem:[#allocation3 + $0x940] sm:$0xff]
    %v3240 = vld [vmem:[#allocation3 + $0x948] sm:$0xf]
    %v3241 = vld [vmem:[#allocation3 + $0x94c] sm:$0xff]
    %v3242 = vld [vmem:[#allocation3 + $0x954] sm:$0xff]
    %v3243 = vld [vmem:[#allocation3 + $0x95c] sm:$0xff]
    %v3244 = vld [vmem:[#allocation3 + $0x964] sm:$0xf]
    %v3245 = vld [vmem:[#allocation3 + $0x968] sm:$0xff]
    %v3246 = vld [vmem:[#allocation3 + $0x970] sm:$0xff]
    %v3247 = vld [vmem:[#allocation3 + $0x978] sm:$0xff]
    %v3248 = vld [vmem:[#allocation3 + $0x980] sm:$0xf]
    %v3249 = vld [vmem:[#allocation3 + $0x984] sm:$0xff]
    %v3250 = vld [vmem:[#allocation3 + $0x98c] sm:$0xff]
    %v3251 = vld [vmem:[#allocation3 + $0x994] sm:$0xff]
    %v3252 = vld [vmem:[#allocation3 + $0x99c] sm:$0xf]
    %v3253 = vld [vmem:[#allocation3 + $0x9a0] sm:$0xff]
    %v3254 = vld [vmem:[#allocation3 + $0x9a8] sm:$0xff]
    %v3255 = vld [vmem:[#allocation3 + $0x9b0] sm:$0xff]
    %v3256 = vld [vmem:[#allocation3 + $0x9b8] sm:$0xf]
    %v3257 = vld [vmem:[#allocation3 + $0x9bc] sm:$0xff]
    %v3258 = vld [vmem:[#allocation3 + $0x9c4] sm:$0xff]
    %v3259 = vld [vmem:[#allocation3 + $0x9cc] sm:$0xff]
    %v3260 = vld [vmem:[#allocation3 + $0x9d4] sm:$0xf]
    %v3261 = vld [vmem:[#allocation3 + $0x9d8] sm:$0xff]
    %v3262 = vld [vmem:[#allocation3 + $0x9e0] sm:$0xff]
    %v3263 = vld [vmem:[#allocation3 + $0x9e8] sm:$0xff]
    %v3264 = vld [vmem:[#allocation3 + $0x9f0] sm:$0xf]
    %v3265 = vld [vmem:[#allocation3 + $0x9f4] sm:$0xff]
    %v3266 = vld [vmem:[#allocation3 + $0x9fc] sm:$0xff]
    %v3267 = vld [vmem:[#allocation3 + $0xa04] sm:$0xff]
    %v3268 = vld [vmem:[#allocation3 + $0xa0c] sm:$0xf]
    %v3269 = vld [vmem:[#allocation3 + $0xa10] sm:$0xff]
    %v3270 = vld [vmem:[#allocation3 + $0xa18] sm:$0xff]
    %v3271 = vld [vmem:[#allocation3 + $0xa20] sm:$0xff]
    %v3272 = vld [vmem:[#allocation3 + $0xa28] sm:$0xf]
    %v3273 = vld [vmem:[#allocation3 + $0xa2c] sm:$0xff]
    %v3274 = vld [vmem:[#allocation3 + $0xa34] sm:$0xff]
    %v3275 = vld [vmem:[#allocation3 + $0xa3c] sm:$0xff]
    %v3276 = vld [vmem:[#allocation3 + $0xa44] sm:$0xf]
    %v3277 = vld [vmem:[#allocation3 + $0xa48] sm:$0xff]
    %v3278 = vld [vmem:[#allocation3 + $0xa50] sm:$0xff]
    %v3279 = vld [vmem:[#allocation3 + $0xa58] sm:$0xff]
    %v3280 = vld [vmem:[#allocation3 + $0xa60] sm:$0xf]
    %v3281 = vld [vmem:[#allocation3 + $0xa64] sm:$0xff]
    %v3282 = vld [vmem:[#allocation3 + $0xa6c] sm:$0xff]
    %v3283 = vld [vmem:[#allocation3 + $0xa74] sm:$0xff]
    %v3284 = vld [vmem:[#allocation3 + $0xa7c] sm:$0xf]
    %v3285 = vld [vmem:[#allocation3 + $0xa80] sm:$0xff]
    %v3286 = vld [vmem:[#allocation3 + $0xa88] sm:$0xff]
    %v3287 = vld [vmem:[#allocation3 + $0xa90] sm:$0xff]
    %v3288 = vld [vmem:[#allocation3 + $0xa98] sm:$0xf]
    %v3289 = vld [vmem:[#allocation3 + $0xa9c] sm:$0xff]
    %v3290 = vld [vmem:[#allocation3 + $0xaa4] sm:$0xff]
    %v3291 = vld [vmem:[#allocation3 + $0xaac] sm:$0xff]
    %v3292 = vld [vmem:[#allocation3 + $0xab4] sm:$0xf]
    %v3293 = vld [vmem:[#allocation3 + $0xab8] sm:$0xff]
    %v3294 = vld [vmem:[#allocation3 + $0xac0] sm:$0xff]
    %v3295 = vld [vmem:[#allocation3 + $0xac8] sm:$0xff]
    %v3296 = vld [vmem:[#allocation3 + $0xad0] sm:$0xf]
    %v3297 = vld [vmem:[#allocation3 + $0xad4] sm:$0xff]
    %v3298 = vld [vmem:[#allocation3 + $0xadc] sm:$0xff]
    %v3299 = vld [vmem:[#allocation3 + $0xae4] sm:$0xff]
    %v3300 = vld [vmem:[#allocation3 + $0xaec] sm:$0xf]
    %v3301 = vld [vmem:[#allocation3 + $0xaf0] sm:$0xff]
    %v3302 = vld [vmem:[#allocation3 + $0xaf8] sm:$0xff]
    %v3303 = vld [vmem:[#allocation3 + $0xb00] sm:$0xff]
    %v3304 = vld [vmem:[#allocation3 + $0xb08] sm:$0xf]
    %v3305 = vld [vmem:[#allocation3 + $0xb0c] sm:$0xff]
    %v3306 = vld [vmem:[#allocation3 + $0xb14] sm:$0xff]
    %v3307 = vld [vmem:[#allocation3 + $0xb1c] sm:$0xff]
    %v3308 = vld [vmem:[#allocation3 + $0xb24] sm:$0xf]
    %v3309 = vld [vmem:[#allocation3 + $0xb28] sm:$0xff]
    %v3310 = vld [vmem:[#allocation3 + $0xb30] sm:$0xff]
    %v3311 = vld [vmem:[#allocation3 + $0xb38] sm:$0xff]
    %v3312 = vld [vmem:[#allocation3 + $0xb40] sm:$0xf]
    %v3313 = vld [vmem:[#allocation3 + $0xb44] sm:$0xff]
    %v3314 = vld [vmem:[#allocation3 + $0xb4c] sm:$0xff]
    %v3315 = vld [vmem:[#allocation3 + $0xb54] sm:$0xff]
    %v3316 = vld [vmem:[#allocation3 + $0xb5c] sm:$0xf]
    %v3317 = vld [vmem:[#allocation3 + $0xb60] sm:$0xff]
    %v3318 = vld [vmem:[#allocation3 + $0xb68] sm:$0xff]
    %v3319 = vld [vmem:[#allocation3 + $0xb70] sm:$0xff]
    %v3320 = vld [vmem:[#allocation3 + $0xb78] sm:$0xf]
    %v3321 = vld [vmem:[#allocation3 + $0xb7c] sm:$0xff]
    %v3322 = vld [vmem:[#allocation3 + $0xb84] sm:$0xff]
    %v3323 = vld [vmem:[#allocation3 + $0xb8c] sm:$0xff]
    %v3324 = vld [vmem:[#allocation3 + $0xb94] sm:$0xf]
    %v3325 = vld [vmem:[#allocation3 + $0xb98] sm:$0xff]
    %v3326 = vld [vmem:[#allocation3 + $0xba0] sm:$0xff]
    %v3327 = vld [vmem:[#allocation3 + $0xba8] sm:$0xff]
    %v3328 = vld [vmem:[#allocation3 + $0xbb0] sm:$0xf]
    %v3329 = vld [vmem:[#allocation3 + $0xbb4] sm:$0xff]
    %v3330 = vld [vmem:[#allocation3 + $0xbbc] sm:$0xff]
    %v3331 = vld [vmem:[#allocation3 + $0xbc4] sm:$0xff]
    %v3332 = vld [vmem:[#allocation3 + $0xbcc] sm:$0xf]
    %v3333 = vld [vmem:[#allocation3 + $0xbd0] sm:$0xff]
    %v3334 = vld [vmem:[#allocation3 + $0xbd8] sm:$0xff]
    %v3335 = vld [vmem:[#allocation3 + $0xbe0] sm:$0xff]
    %v3336 = vld [vmem:[#allocation3 + $0xbe8] sm:$0xf]
    %v3337 = vld [vmem:[#allocation3 + $0xbec] sm:$0xff]
    %v3338 = vld [vmem:[#allocation3 + $0xbf4] sm:$0xff]
    %v3339 = vld [vmem:[#allocation3 + $0xbfc] sm:$0xff]
    %v3340 = vld [vmem:[#allocation3 + $0xc04] sm:$0xf]
    %v3341 = vld [vmem:[#allocation3 + $0xc08] sm:$0xff]
    %v3342 = vld [vmem:[#allocation3 + $0xc10] sm:$0xff]
    %v3343 = vld [vmem:[#allocation3 + $0xc18] sm:$0xff]
    %v3344 = vld [vmem:[#allocation3 + $0xc20] sm:$0xf]
    %v3345 = vld [vmem:[#allocation3 + $0xc24] sm:$0xff]
    %v3346 = vld [vmem:[#allocation3 + $0xc2c] sm:$0xff]
    %v3347 = vld [vmem:[#allocation3 + $0xc34] sm:$0xff]
    %v3348 = vld [vmem:[#allocation3 + $0xc3c] sm:$0xf]
    %v3349 = vld [vmem:[#allocation3 + $0xc40] sm:$0xff]
    %v3350 = vld [vmem:[#allocation3 + $0xc48] sm:$0xff]
    %v3351 = vld [vmem:[#allocation3 + $0xc50] sm:$0xff]
    %v3352 = vld [vmem:[#allocation3 + $0xc58] sm:$0xf]
    %v3353 = vld [vmem:[#allocation3 + $0xc5c] sm:$0xff]
    %v3354 = vld [vmem:[#allocation3 + $0xc64] sm:$0xff]
    %v3355 = vld [vmem:[#allocation3 + $0xc6c] sm:$0xff]
    %v3356 = vld [vmem:[#allocation3 + $0xc74] sm:$0xf]
    %v3357 = vld [vmem:[#allocation3 + $0xc78] sm:$0xff]
    %v3358 = vld [vmem:[#allocation3 + $0xc80] sm:$0xff]
    %v3359 = vld [vmem:[#allocation3 + $0xc88] sm:$0xff]
    %v3360 = vld [vmem:[#allocation3 + $0xc90] sm:$0xf]
    %v3361 = vld [vmem:[#allocation3 + $0xc94] sm:$0xff]
    %v3362 = vld [vmem:[#allocation3 + $0xc9c] sm:$0xff]
    %v3363 = vld [vmem:[#allocation3 + $0xca4] sm:$0xff]
    %v3364 = vld [vmem:[#allocation3 + $0xcac] sm:$0xf]
    %v3365 = vld [vmem:[#allocation3 + $0xcb0] sm:$0xff]
    %v3366 = vld [vmem:[#allocation3 + $0xcb8] sm:$0xff]
    %v3367 = vld [vmem:[#allocation3 + $0xcc0] sm:$0xff]
    %v3368 = vld [vmem:[#allocation3 + $0xcc8] sm:$0xf]
    %v3369 = vld [vmem:[#allocation3 + $0xccc] sm:$0xff]
    %v3370 = vld [vmem:[#allocation3 + $0xcd4] sm:$0xff]
    %v3371 = vld [vmem:[#allocation3 + $0xcdc] sm:$0xff]
    %v3372 = vld [vmem:[#allocation3 + $0xce4] sm:$0xf]
    %v3373 = vld [vmem:[#allocation3 + $0xce8] sm:$0xff]
    %v3374 = vld [vmem:[#allocation3 + $0xcf0] sm:$0xff]
    %v3375 = vld [vmem:[#allocation3 + $0xcf8] sm:$0xff]
    %v3376 = vld [vmem:[#allocation3 + $0xd00] sm:$0xf]
    %v3377 = vld [vmem:[#allocation3 + $0xd04] sm:$0xff]
    %v3378 = vld [vmem:[#allocation3 + $0xd0c] sm:$0xff]
    %v3379 = vld [vmem:[#allocation3 + $0xd14] sm:$0xff]
    %v3380 = vld [vmem:[#allocation3 + $0xd1c] sm:$0xf]
    %v3381 = vld [vmem:[#allocation3 + $0xd20] sm:$0xff]
    %v3382 = vld [vmem:[#allocation3 + $0xd28] sm:$0xff]
    %v3383 = vld [vmem:[#allocation3 + $0xd30] sm:$0xff]
    %v3384 = vld [vmem:[#allocation3 + $0xd38] sm:$0xf]
    %v3385 = vld [vmem:[#allocation3 + $0xd3c] sm:$0xff]
    %v3386 = vld [vmem:[#allocation3 + $0xd44] sm:$0xff]
    %v3387 = vld [vmem:[#allocation3 + $0xd4c] sm:$0xff]
    %v3388 = vld [vmem:[#allocation3 + $0xd54] sm:$0xf]
    %v3389 = vld [vmem:[#allocation3 + $0xd58] sm:$0xff]
    %v3390 = vld [vmem:[#allocation3 + $0xd60] sm:$0xff]
    %v3391 = vld [vmem:[#allocation3 + $0xd68] sm:$0xff]
    %v3392 = vld [vmem:[#allocation3 + $0xd70] sm:$0xf]
    %v3393 = vld [vmem:[#allocation3 + $0xd74] sm:$0xff]
    %v3394 = vld [vmem:[#allocation3 + $0xd7c] sm:$0xff]
    %v3395 = vld [vmem:[#allocation3 + $0xd84] sm:$0xff]
    %v3396 = vld [vmem:[#allocation3 + $0xd8c] sm:$0xf]
    %v3397 = vld [vmem:[#allocation3 + $0xd90] sm:$0xff]
    %v3398 = vld [vmem:[#allocation3 + $0xd98] sm:$0xff]
    %v3399 = vld [vmem:[#allocation3 + $0xda0] sm:$0xff]
    %v3400 = vld [vmem:[#allocation3 + $0xda8] sm:$0xf]
    %v3401 = vld [vmem:[#allocation3 + $0xdac] sm:$0xff]
    %v3402 = vld [vmem:[#allocation3 + $0xdb4] sm:$0xff]
    %v3403 = vld [vmem:[#allocation3 + $0xdbc] sm:$0xff]
    %v3404 = vld [vmem:[#allocation3 + $0xdc4] sm:$0xf]
    %v3405 = vld [vmem:[#allocation3 + $0xdc8] sm:$0xff]
    %v3406 = vld [vmem:[#allocation3 + $0xdd0] sm:$0xff]
    %v3407 = vld [vmem:[#allocation3 + $0xdd8] sm:$0xff]
    %v3408 = vld [vmem:[#allocation3 + $0xde0] sm:$0xf]
    %v3409 = vld [vmem:[#allocation3 + $0xde4] sm:$0xff]
    %v3410 = vld [vmem:[#allocation3 + $0xdec] sm:$0xff]
    %v3411 = vld [vmem:[#allocation3 + $0xdf4] sm:$0xff]
    %v3412 = vld [vmem:[#allocation3 + $0xdfc] sm:$0xf]
    %v3413 = vld [vmem:[#allocation16] sm:$0xff]
    %v3414 = vpack.c.bf16 %v2889, %v2881
    %v3415 = vpack.c.bf16 %v2890, %v2882
    %v3416 = vpack.c.bf16 %v2891, %v2883
    %v3417 = vpack.c.bf16 %v2892, %v2884
    %v3418 = vpack.c.bf16 %v2893, %v2885
    %v3419 = vpack.c.bf16 %v2894, %v2886
    %v3420 = vpack.c.bf16 %v2895, %v2887
    %v3421 = vpack.c.bf16 %v2896, %v2888
    %v3423 = vperm.slane %v3413, 0
    %v3424 = vperm.slane %v3413, 1
    %v3425 = vperm.slane %v3413, 2
    %v3426 = vperm.slane %v3413, 3
    %v3427 = vperm.slane %v3413, 4
    %v3428 = vperm.slane %v3413, 5
    %v3429 = vperm.slane %v3413, 6
    %v3949 = vunpack.c.l.b16 %v2901
    %v3950 = vunpack.c.h.b16 %v2901
    %v3951 = vunpack.c.l.b16 %v2902
    %v3952 = vunpack.c.h.b16 %v2902
    %v3953 = vunpack.c.l.b16 %v2903
    %v3954 = vunpack.c.h.b16 %v2903
    %v3955 = vunpack.c.l.b16 %v2904
    %v3956 = vunpack.c.l.b16 %v2905
    %v3957 = vunpack.c.h.b16 %v2905
    %v3958 = vunpack.c.l.b16 %v2906
    %v3959 = vunpack.c.h.b16 %v2906
    %v3960 = vunpack.c.l.b16 %v2907
    %v3961 = vunpack.c.h.b16 %v2907
    %v3962 = vunpack.c.l.b16 %v2908
    %v3963 = vunpack.c.l.b16 %v2909
    %v3964 = vunpack.c.h.b16 %v2909
    %v3965 = vunpack.c.l.b16 %v2910
    %v3966 = vunpack.c.h.b16 %v2910
    %v3967 = vunpack.c.l.b16 %v2911
    %v3968 = vunpack.c.h.b16 %v2911
    %v3969 = vunpack.c.l.b16 %v2912
    %v3970 = vunpack.c.l.b16 %v2913
    %v3971 = vunpack.c.h.b16 %v2913
    %v3972 = vunpack.c.l.b16 %v2914
    %v3973 = vunpack.c.h.b16 %v2914
    %v3974 = vunpack.c.l.b16 %v2915
    %v3975 = vunpack.c.h.b16 %v2915
    %v3976 = vunpack.c.l.b16 %v2916
    %v3977 = vunpack.c.l.b16 %v2917
    %v3978 = vunpack.c.h.b16 %v2917
    %v3979 = vunpack.c.l.b16 %v2918
    %v3980 = vunpack.c.h.b16 %v2918
    %v3981 = vunpack.c.l.b16 %v2919
    %v3982 = vunpack.c.h.b16 %v2919
    %v3983 = vunpack.c.l.b16 %v2920
    %v3984 = vunpack.c.l.b16 %v2921
    %v3985 = vunpack.c.h.b16 %v2921
    %v3986 = vunpack.c.l.b16 %v2922
    %v3987 = vunpack.c.h.b16 %v2922
    %v3988 = vunpack.c.l.b16 %v2923
    %v3989 = vunpack.c.h.b16 %v2923
    %v3990 = vunpack.c.l.b16 %v2924
    %v3991 = vunpack.c.l.b16 %v2925
    %v3992 = vunpack.c.h.b16 %v2925
    %v3993 = vunpack.c.l.b16 %v2926
    %v3994 = vunpack.c.h.b16 %v2926
    %v3995 = vunpack.c.l.b16 %v2927
    %v3996 = vunpack.c.h.b16 %v2927
    %v3997 = vunpack.c.l.b16 %v2928
    %v3998 = vunpack.c.l.b16 %v2929
    %v3999 = vunpack.c.h.b16 %v2929
    %v4000 = vunpack.c.l.b16 %v2930
    %v4001 = vunpack.c.h.b16 %v2930
    %v4002 = vunpack.c.l.b16 %v2931
    %v4003 = vunpack.c.h.b16 %v2931
    %v4004 = vunpack.c.l.b16 %v2932
    %v4005 = vunpack.c.l.b16 %v2933
    %v4006 = vunpack.c.h.b16 %v2933
    %v4007 = vunpack.c.l.b16 %v2934
    %v4008 = vunpack.c.h.b16 %v2934
    %v4009 = vunpack.c.l.b16 %v2935
    %v4010 = vunpack.c.h.b16 %v2935
    %v4011 = vunpack.c.l.b16 %v2936
    %v4012 = vunpack.c.l.b16 %v2937
    %v4013 = vunpack.c.h.b16 %v2937
    %v4014 = vunpack.c.l.b16 %v2938
    %v4015 = vunpack.c.h.b16 %v2938
    %v4016 = vunpack.c.l.b16 %v2939
    %v4017 = vunpack.c.h.b16 %v2939
    %v4018 = vunpack.c.l.b16 %v2940
    %v4019 = vunpack.c.l.b16 %v2941
    %v4020 = vunpack.c.h.b16 %v2941
    %v4021 = vunpack.c.l.b16 %v2942
    %v4022 = vunpack.c.h.b16 %v2942
    %v4023 = vunpack.c.l.b16 %v2943
    %v4024 = vunpack.c.h.b16 %v2943
    %v4025 = vunpack.c.l.b16 %v2944
    %v4026 = vunpack.c.l.b16 %v2945
    %v4027 = vunpack.c.h.b16 %v2945
    %v4028 = vunpack.c.l.b16 %v2946
    %v4029 = vunpack.c.h.b16 %v2946
    %v4030 = vunpack.c.l.b16 %v2947
    %v4031 = vunpack.c.h.b16 %v2947
    %v4032 = vunpack.c.l.b16 %v2948
    %v4033 = vunpack.c.l.b16 %v2949
    %v4034 = vunpack.c.h.b16 %v2949
    %v4035 = vunpack.c.l.b16 %v2950
    %v4036 = vunpack.c.h.b16 %v2950
    %v4037 = vunpack.c.l.b16 %v2951
    %v4038 = vunpack.c.h.b16 %v2951
    %v4039 = vunpack.c.l.b16 %v2952
    %v4040 = vunpack.c.l.b16 %v2953
    %v4041 = vunpack.c.h.b16 %v2953
    %v4042 = vunpack.c.l.b16 %v2954
    %v4043 = vunpack.c.h.b16 %v2954
    %v4044 = vunpack.c.l.b16 %v2955
    %v4045 = vunpack.c.h.b16 %v2955
    %v4046 = vunpack.c.l.b16 %v2956
    %v4047 = vunpack.c.l.b16 %v2957
    %v4048 = vunpack.c.h.b16 %v2957
    %v4049 = vunpack.c.l.b16 %v2958
    %v4050 = vunpack.c.h.b16 %v2958
    %v4051 = vunpack.c.l.b16 %v2959
    %v4052 = vunpack.c.h.b16 %v2959
    %v4053 = vunpack.c.l.b16 %v2960
    %v4054 = vunpack.c.l.b16 %v2961
    %v4055 = vunpack.c.h.b16 %v2961
    %v4056 = vunpack.c.l.b16 %v2962
    %v4057 = vunpack.c.h.b16 %v2962
    %v4058 = vunpack.c.l.b16 %v2963
    %v4059 = vunpack.c.h.b16 %v2963
    %v4060 = vunpack.c.l.b16 %v2964
    %v4061 = vunpack.c.l.b16 %v2965
    %v4062 = vunpack.c.h.b16 %v2965
    %v4063 = vunpack.c.l.b16 %v2966
    %v4064 = vunpack.c.h.b16 %v2966
    %v4065 = vunpack.c.l.b16 %v2967
    %v4066 = vunpack.c.h.b16 %v2967
    %v4067 = vunpack.c.l.b16 %v2968
    %v4068 = vunpack.c.l.b16 %v2969
    %v4069 = vunpack.c.h.b16 %v2969
    %v4070 = vunpack.c.l.b16 %v2970
    %v4071 = vunpack.c.h.b16 %v2970
    %v4072 = vunpack.c.l.b16 %v2971
    %v4073 = vunpack.c.h.b16 %v2971
    %v4074 = vunpack.c.l.b16 %v2972
    %v4075 = vunpack.c.l.b16 %v2973
    %v4076 = vunpack.c.h.b16 %v2973
    %v4077 = vunpack.c.l.b16 %v2974
    %v4078 = vunpack.c.h.b16 %v2974
    %v4079 = vunpack.c.l.b16 %v2975
    %v4080 = vunpack.c.h.b16 %v2975
    %v4081 = vunpack.c.l.b16 %v2976
    %v4082 = vunpack.c.l.b16 %v2977
    %v4083 = vunpack.c.h.b16 %v2977
    %v4084 = vunpack.c.l.b16 %v2978
    %v4085 = vunpack.c.h.b16 %v2978
    %v4086 = vunpack.c.l.b16 %v2979
    %v4087 = vunpack.c.h.b16 %v2979
    %v4088 = vunpack.c.l.b16 %v2980
    %v4089 = vunpack.c.l.b16 %v2981
    %v4090 = vunpack.c.h.b16 %v2981
    %v4091 = vunpack.c.l.b16 %v2982
    %v4092 = vunpack.c.h.b16 %v2982
    %v4093 = vunpack.c.l.b16 %v2983
    %v4094 = vunpack.c.h.b16 %v2983
    %v4095 = vunpack.c.l.b16 %v2984
    %v4096 = vunpack.c.l.b16 %v2985
    %v4097 = vunpack.c.h.b16 %v2985
    %v4098 = vunpack.c.l.b16 %v2986
    %v4099 = vunpack.c.h.b16 %v2986
    %v4100 = vunpack.c.l.b16 %v2987
    %v4101 = vunpack.c.h.b16 %v2987
    %v4102 = vunpack.c.l.b16 %v2988
    %v4103 = vunpack.c.l.b16 %v2989
    %v4104 = vunpack.c.h.b16 %v2989
    %v4105 = vunpack.c.l.b16 %v2990
    %v4106 = vunpack.c.h.b16 %v2990
    %v4107 = vunpack.c.l.b16 %v2991
    %v4108 = vunpack.c.h.b16 %v2991
    %v4109 = vunpack.c.l.b16 %v2992
    %v4110 = vunpack.c.l.b16 %v2993
    %v4111 = vunpack.c.h.b16 %v2993
    %v4112 = vunpack.c.l.b16 %v2994
    %v4113 = vunpack.c.h.b16 %v2994
    %v4114 = vunpack.c.l.b16 %v2995
    %v4115 = vunpack.c.h.b16 %v2995
    %v4116 = vunpack.c.l.b16 %v2996
    %v4117 = vunpack.c.l.b16 %v2997
    %v4118 = vunpack.c.h.b16 %v2997
    %v4119 = vunpack.c.l.b16 %v2998
    %v4120 = vunpack.c.h.b16 %v2998
    %v4121 = vunpack.c.l.b16 %v2999
    %v4122 = vunpack.c.h.b16 %v2999
    %v4123 = vunpack.c.l.b16 %v3000
    %v4124 = vunpack.c.l.b16 %v3001
    %v4125 = vunpack.c.h.b16 %v3001
    %v4126 = vunpack.c.l.b16 %v3002
    %v4127 = vunpack.c.h.b16 %v3002
    %v4128 = vunpack.c.l.b16 %v3003
    %v4129 = vunpack.c.h.b16 %v3003
    %v4130 = vunpack.c.l.b16 %v3004
    %v4131 = vunpack.c.l.b16 %v3005
    %v4132 = vunpack.c.h.b16 %v3005
    %v4133 = vunpack.c.l.b16 %v3006
    %v4134 = vunpack.c.h.b16 %v3006
    %v4135 = vunpack.c.l.b16 %v3007
    %v4136 = vunpack.c.h.b16 %v3007
    %v4137 = vunpack.c.l.b16 %v3008
    %v4138 = vunpack.c.l.b16 %v3009
    %v4139 = vunpack.c.h.b16 %v3009
    %v4140 = vunpack.c.l.b16 %v3010
    %v4141 = vunpack.c.h.b16 %v3010
    %v4142 = vunpack.c.l.b16 %v3011
    %v4143 = vunpack.c.h.b16 %v3011
    %v4144 = vunpack.c.l.b16 %v3012
    %v4145 = vunpack.c.l.b16 %v3013
    %v4146 = vunpack.c.h.b16 %v3013
    %v4147 = vunpack.c.l.b16 %v3014
    %v4148 = vunpack.c.h.b16 %v3014
    %v4149 = vunpack.c.l.b16 %v3015
    %v4150 = vunpack.c.h.b16 %v3015
    %v4151 = vunpack.c.l.b16 %v3016
    %v4152 = vunpack.c.l.b16 %v3017
    %v4153 = vunpack.c.h.b16 %v3017
    %v4154 = vunpack.c.l.b16 %v3018
    %v4155 = vunpack.c.h.b16 %v3018
    %v4156 = vunpack.c.l.b16 %v3019
    %v4157 = vunpack.c.h.b16 %v3019
    %v4158 = vunpack.c.l.b16 %v3020
    %v4159 = vunpack.c.l.b16 %v3021
    %v4160 = vunpack.c.h.b16 %v3021
    %v4161 = vunpack.c.l.b16 %v3022
    %v4162 = vunpack.c.h.b16 %v3022
    %v4163 = vunpack.c.l.b16 %v3023
    %v4164 = vunpack.c.h.b16 %v3023
    %v4165 = vunpack.c.l.b16 %v3024
    %v4166 = vunpack.c.l.b16 %v3025
    %v4167 = vunpack.c.h.b16 %v3025
    %v4168 = vunpack.c.l.b16 %v3026
    %v4169 = vunpack.c.h.b16 %v3026
    %v4170 = vunpack.c.l.b16 %v3027
    %v4171 = vunpack.c.h.b16 %v3027
    %v4172 = vunpack.c.l.b16 %v3028
    %v4173 = vunpack.c.l.b16 %v3029
    %v4174 = vunpack.c.h.b16 %v3029
    %v4175 = vunpack.c.l.b16 %v3030
    %v4176 = vunpack.c.h.b16 %v3030
    %v4177 = vunpack.c.l.b16 %v3031
    %v4178 = vunpack.c.h.b16 %v3031
    %v4179 = vunpack.c.l.b16 %v3032
    %v4180 = vunpack.c.l.b16 %v3033
    %v4181 = vunpack.c.h.b16 %v3033
    %v4182 = vunpack.c.l.b16 %v3034
    %v4183 = vunpack.c.h.b16 %v3034
    %v4184 = vunpack.c.l.b16 %v3035
    %v4185 = vunpack.c.h.b16 %v3035
    %v4186 = vunpack.c.l.b16 %v3036
    %v4187 = vunpack.c.l.b16 %v3037
    %v4188 = vunpack.c.h.b16 %v3037
    %v4189 = vunpack.c.l.b16 %v3038
    %v4190 = vunpack.c.h.b16 %v3038
    %v4191 = vunpack.c.l.b16 %v3039
    %v4192 = vunpack.c.h.b16 %v3039
    %v4193 = vunpack.c.l.b16 %v3040
    %v4194 = vunpack.c.l.b16 %v3041
    %v4195 = vunpack.c.h.b16 %v3041
    %v4196 = vunpack.c.l.b16 %v3042
    %v4197 = vunpack.c.h.b16 %v3042
    %v4198 = vunpack.c.l.b16 %v3043
    %v4199 = vunpack.c.h.b16 %v3043
    %v4200 = vunpack.c.l.b16 %v3044
    %v4201 = vunpack.c.l.b16 %v3045
    %v4202 = vunpack.c.h.b16 %v3045
    %v4203 = vunpack.c.l.b16 %v3046
    %v4204 = vunpack.c.h.b16 %v3046
    %v4205 = vunpack.c.l.b16 %v3047
    %v4206 = vunpack.c.h.b16 %v3047
    %v4207 = vunpack.c.l.b16 %v3048
    %v4208 = vunpack.c.l.b16 %v3049
    %v4209 = vunpack.c.h.b16 %v3049
    %v4210 = vunpack.c.l.b16 %v3050
    %v4211 = vunpack.c.h.b16 %v3050
    %v4212 = vunpack.c.l.b16 %v3051
    %v4213 = vunpack.c.h.b16 %v3051
    %v4214 = vunpack.c.l.b16 %v3052
    %v4215 = vunpack.c.l.b16 %v3053
    %v4216 = vunpack.c.h.b16 %v3053
    %v4217 = vunpack.c.l.b16 %v3054
    %v4218 = vunpack.c.h.b16 %v3054
    %v4219 = vunpack.c.l.b16 %v3055
    %v4220 = vunpack.c.h.b16 %v3055
    %v4221 = vunpack.c.l.b16 %v3056
    %v4222 = vunpack.c.l.b16 %v3057
    %v4223 = vunpack.c.h.b16 %v3057
    %v4224 = vunpack.c.l.b16 %v3058
    %v4225 = vunpack.c.h.b16 %v3058
    %v4226 = vunpack.c.l.b16 %v3059
    %v4227 = vunpack.c.h.b16 %v3059
    %v4228 = vunpack.c.l.b16 %v3060
    %v4229 = vunpack.c.l.b16 %v3061
    %v4230 = vunpack.c.h.b16 %v3061
    %v4231 = vunpack.c.l.b16 %v3062
    %v4232 = vunpack.c.h.b16 %v3062
    %v4233 = vunpack.c.l.b16 %v3063
    %v4234 = vunpack.c.h.b16 %v3063
    %v4235 = vunpack.c.l.b16 %v3064
    %v4236 = vunpack.c.l.b16 %v3065
    %v4237 = vunpack.c.h.b16 %v3065
    %v4238 = vunpack.c.l.b16 %v3066
    %v4239 = vunpack.c.h.b16 %v3066
    %v4240 = vunpack.c.l.b16 %v3067
    %v4241 = vunpack.c.h.b16 %v3067
    %v4242 = vunpack.c.l.b16 %v3068
    %v4243 = vunpack.c.l.b16 %v3069
    %v4244 = vunpack.c.h.b16 %v3069
    %v4245 = vunpack.c.l.b16 %v3070
    %v4246 = vunpack.c.h.b16 %v3070
    %v4247 = vunpack.c.l.b16 %v3071
    %v4248 = vunpack.c.h.b16 %v3071
    %v4249 = vunpack.c.l.b16 %v3072
    %v4250 = vunpack.c.l.b16 %v3073
    %v4251 = vunpack.c.h.b16 %v3073
    %v4252 = vunpack.c.l.b16 %v3074
    %v4253 = vunpack.c.h.b16 %v3074
    %v4254 = vunpack.c.l.b16 %v3075
    %v4255 = vunpack.c.h.b16 %v3075
    %v4256 = vunpack.c.l.b16 %v3076
    %v4257 = vunpack.c.l.b16 %v3077
    %v4258 = vunpack.c.h.b16 %v3077
    %v4259 = vunpack.c.l.b16 %v3078
    %v4260 = vunpack.c.h.b16 %v3078
    %v4261 = vunpack.c.l.b16 %v3079
    %v4262 = vunpack.c.h.b16 %v3079
    %v4263 = vunpack.c.l.b16 %v3080
    %v4264 = vunpack.c.l.b16 %v3081
    %v4265 = vunpack.c.h.b16 %v3081
    %v4266 = vunpack.c.l.b16 %v3082
    %v4267 = vunpack.c.h.b16 %v3082
    %v4268 = vunpack.c.l.b16 %v3083
    %v4269 = vunpack.c.h.b16 %v3083
    %v4270 = vunpack.c.l.b16 %v3084
    %v4271 = vunpack.c.l.b16 %v3085
    %v4272 = vunpack.c.h.b16 %v3085
    %v4273 = vunpack.c.l.b16 %v3086
    %v4274 = vunpack.c.h.b16 %v3086
    %v4275 = vunpack.c.l.b16 %v3087
    %v4276 = vunpack.c.h.b16 %v3087
    %v4277 = vunpack.c.l.b16 %v3088
    %v4278 = vunpack.c.l.b16 %v3089
    %v4279 = vunpack.c.h.b16 %v3089
    %v4280 = vunpack.c.l.b16 %v3090
    %v4281 = vunpack.c.h.b16 %v3090
    %v4282 = vunpack.c.l.b16 %v3091
    %v4283 = vunpack.c.h.b16 %v3091
    %v4284 = vunpack.c.l.b16 %v3092
    %v4285 = vunpack.c.l.b16 %v3093
    %v4286 = vunpack.c.h.b16 %v3093
    %v4287 = vunpack.c.l.b16 %v3094
    %v4288 = vunpack.c.h.b16 %v3094
    %v4289 = vunpack.c.l.b16 %v3095
    %v4290 = vunpack.c.h.b16 %v3095
    %v4291 = vunpack.c.l.b16 %v3096
    %v4292 = vunpack.c.l.b16 %v3097
    %v4293 = vunpack.c.h.b16 %v3097
    %v4294 = vunpack.c.l.b16 %v3098
    %v4295 = vunpack.c.h.b16 %v3098
    %v4296 = vunpack.c.l.b16 %v3099
    %v4297 = vunpack.c.h.b16 %v3099
    %v4298 = vunpack.c.l.b16 %v3100
    %v4299 = vunpack.c.l.b16 %v3101
    %v4300 = vunpack.c.h.b16 %v3101
    %v4301 = vunpack.c.l.b16 %v3102
    %v4302 = vunpack.c.h.b16 %v3102
    %v4303 = vunpack.c.l.b16 %v3103
    %v4304 = vunpack.c.h.b16 %v3103
    %v4305 = vunpack.c.l.b16 %v3104
    %v4306 = vunpack.c.l.b16 %v3105
    %v4307 = vunpack.c.h.b16 %v3105
    %v4308 = vunpack.c.l.b16 %v3106
    %v4309 = vunpack.c.h.b16 %v3106
    %v4310 = vunpack.c.l.b16 %v3107
    %v4311 = vunpack.c.h.b16 %v3107
    %v4312 = vunpack.c.l.b16 %v3108
    %v4313 = vunpack.c.l.b16 %v3109
    %v4314 = vunpack.c.h.b16 %v3109
    %v4315 = vunpack.c.l.b16 %v3110
    %v4316 = vunpack.c.h.b16 %v3110
    %v4317 = vunpack.c.l.b16 %v3111
    %v4318 = vunpack.c.h.b16 %v3111
    %v4319 = vunpack.c.l.b16 %v3112
    %v4320 = vunpack.c.l.b16 %v3113
    %v4321 = vunpack.c.h.b16 %v3113
    %v4322 = vunpack.c.l.b16 %v3114
    %v4323 = vunpack.c.h.b16 %v3114
    %v4324 = vunpack.c.l.b16 %v3115
    %v4325 = vunpack.c.h.b16 %v3115
    %v4326 = vunpack.c.l.b16 %v3116
    %v4327 = vunpack.c.l.b16 %v3117
    %v4328 = vunpack.c.h.b16 %v3117
    %v4329 = vunpack.c.l.b16 %v3118
    %v4330 = vunpack.c.h.b16 %v3118
    %v4331 = vunpack.c.l.b16 %v3119
    %v4332 = vunpack.c.h.b16 %v3119
    %v4333 = vunpack.c.l.b16 %v3120
    %v4334 = vunpack.c.l.b16 %v3121
    %v4335 = vunpack.c.h.b16 %v3121
    %v4336 = vunpack.c.l.b16 %v3122
    %v4337 = vunpack.c.h.b16 %v3122
    %v4338 = vunpack.c.l.b16 %v3123
    %v4339 = vunpack.c.h.b16 %v3123
    %v4340 = vunpack.c.l.b16 %v3124
    %v4341 = vunpack.c.l.b16 %v3125
    %v4342 = vunpack.c.h.b16 %v3125
    %v4343 = vunpack.c.l.b16 %v3126
    %v4344 = vunpack.c.h.b16 %v3126
    %v4345 = vunpack.c.l.b16 %v3127
    %v4346 = vunpack.c.h.b16 %v3127
    %v4347 = vunpack.c.l.b16 %v3128
    %v4348 = vunpack.c.l.b16 %v3129
    %v4349 = vunpack.c.h.b16 %v3129
    %v4350 = vunpack.c.l.b16 %v3130
    %v4351 = vunpack.c.h.b16 %v3130
    %v4352 = vunpack.c.l.b16 %v3131
    %v4353 = vunpack.c.h.b16 %v3131
    %v4354 = vunpack.c.l.b16 %v3132
    %v4355 = vunpack.c.l.b16 %v3133
    %v4356 = vunpack.c.h.b16 %v3133
    %v4357 = vunpack.c.l.b16 %v3134
    %v4358 = vunpack.c.h.b16 %v3134
    %v4359 = vunpack.c.l.b16 %v3135
    %v4360 = vunpack.c.h.b16 %v3135
    %v4361 = vunpack.c.l.b16 %v3136
    %v4362 = vunpack.c.l.b16 %v3137
    %v4363 = vunpack.c.h.b16 %v3137
    %v4364 = vunpack.c.l.b16 %v3138
    %v4365 = vunpack.c.h.b16 %v3138
    %v4366 = vunpack.c.l.b16 %v3139
    %v4367 = vunpack.c.h.b16 %v3139
    %v4368 = vunpack.c.l.b16 %v3140
    %v4369 = vunpack.c.l.b16 %v3141
    %v4370 = vunpack.c.h.b16 %v3141
    %v4371 = vunpack.c.l.b16 %v3142
    %v4372 = vunpack.c.h.b16 %v3142
    %v4373 = vunpack.c.l.b16 %v3143
    %v4374 = vunpack.c.h.b16 %v3143
    %v4375 = vunpack.c.l.b16 %v3144
    %v4376 = vunpack.c.l.b16 %v3145
    %v4377 = vunpack.c.h.b16 %v3145
    %v4378 = vunpack.c.l.b16 %v3146
    %v4379 = vunpack.c.h.b16 %v3146
    %v4380 = vunpack.c.l.b16 %v3147
    %v4381 = vunpack.c.h.b16 %v3147
    %v4382 = vunpack.c.l.b16 %v3148
    %v4383 = vunpack.c.l.b16 %v3149
    %v4384 = vunpack.c.h.b16 %v3149
    %v4385 = vunpack.c.l.b16 %v3150
    %v4386 = vunpack.c.h.b16 %v3150
    %v4387 = vunpack.c.l.b16 %v3151
    %v4388 = vunpack.c.h.b16 %v3151
    %v4389 = vunpack.c.l.b16 %v3152
    %v4390 = vunpack.c.l.b16 %v3153
    %v4391 = vunpack.c.h.b16 %v3153
    %v4392 = vunpack.c.l.b16 %v3154
    %v4393 = vunpack.c.h.b16 %v3154
    %v4394 = vunpack.c.l.b16 %v3155
    %v4395 = vunpack.c.h.b16 %v3155
    %v4396 = vunpack.c.l.b16 %v3156
    %v4397 = vunpack.c.l.b16 %v3157
    %v4398 = vunpack.c.h.b16 %v3157
    %v4399 = vunpack.c.l.b16 %v3158
    %v4400 = vunpack.c.h.b16 %v3158
    %v4401 = vunpack.c.l.b16 %v3159
    %v4402 = vunpack.c.h.b16 %v3159
    %v4403 = vunpack.c.l.b16 %v3160
    %v4404 = vunpack.c.l.b16 %v3161
    %v4405 = vunpack.c.h.b16 %v3161
    %v4406 = vunpack.c.l.b16 %v3162
    %v4407 = vunpack.c.h.b16 %v3162
    %v4408 = vunpack.c.l.b16 %v3163
    %v4409 = vunpack.c.h.b16 %v3163
    %v4410 = vunpack.c.l.b16 %v3164
    %v4411 = vunpack.c.l.b16 %v3165
    %v4412 = vunpack.c.h.b16 %v3165
    %v4413 = vunpack.c.l.b16 %v3166
    %v4414 = vunpack.c.h.b16 %v3166
    %v4415 = vunpack.c.l.b16 %v3167
    %v4416 = vunpack.c.h.b16 %v3167
    %v4417 = vunpack.c.l.b16 %v3168
    %v4418 = vunpack.c.l.b16 %v3169
    %v4419 = vunpack.c.h.b16 %v3169
    %v4420 = vunpack.c.l.b16 %v3170
    %v4421 = vunpack.c.h.b16 %v3170
    %v4422 = vunpack.c.l.b16 %v3171
    %v4423 = vunpack.c.h.b16 %v3171
    %v4424 = vunpack.c.l.b16 %v3172
    %v4425 = vunpack.c.l.b16 %v3173
    %v4426 = vunpack.c.h.b16 %v3173
    %v4427 = vunpack.c.l.b16 %v3174
    %v4428 = vunpack.c.h.b16 %v3174
    %v4429 = vunpack.c.l.b16 %v3175
    %v4430 = vunpack.c.h.b16 %v3175
    %v4431 = vunpack.c.l.b16 %v3176
    %v4432 = vunpack.c.l.b16 %v3177
    %v4433 = vunpack.c.h.b16 %v3177
    %v4434 = vunpack.c.l.b16 %v3178
    %v4435 = vunpack.c.h.b16 %v3178
    %v4436 = vunpack.c.l.b16 %v3179
    %v4437 = vunpack.c.h.b16 %v3179
    %v4438 = vunpack.c.l.b16 %v3180
    %v4439 = vunpack.c.l.b16 %v3181
    %v4440 = vunpack.c.h.b16 %v3181
    %v4441 = vunpack.c.l.b16 %v3182
    %v4442 = vunpack.c.h.b16 %v3182
    %v4443 = vunpack.c.l.b16 %v3183
    %v4444 = vunpack.c.h.b16 %v3183
    %v4445 = vunpack.c.l.b16 %v3184
    %v4446 = vunpack.c.l.b16 %v3185
    %v4447 = vunpack.c.h.b16 %v3185
    %v4448 = vunpack.c.l.b16 %v3186
    %v4449 = vunpack.c.h.b16 %v3186
    %v4450 = vunpack.c.l.b16 %v3187
    %v4451 = vunpack.c.h.b16 %v3187
    %v4452 = vunpack.c.l.b16 %v3188
    %v4453 = vunpack.c.l.b16 %v3189
    %v4454 = vunpack.c.h.b16 %v3189
    %v4455 = vunpack.c.l.b16 %v3190
    %v4456 = vunpack.c.h.b16 %v3190
    %v4457 = vunpack.c.l.b16 %v3191
    %v4458 = vunpack.c.h.b16 %v3191
    %v4459 = vunpack.c.l.b16 %v3192
    %v4460 = vunpack.c.l.b16 %v3193
    %v4461 = vunpack.c.h.b16 %v3193
    %v4462 = vunpack.c.l.b16 %v3194
    %v4463 = vunpack.c.h.b16 %v3194
    %v4464 = vunpack.c.l.b16 %v3195
    %v4465 = vunpack.c.h.b16 %v3195
    %v4466 = vunpack.c.l.b16 %v3196
    %v4467 = vunpack.c.l.b16 %v3197
    %v4468 = vunpack.c.h.b16 %v3197
    %v4469 = vunpack.c.l.b16 %v3198
    %v4470 = vunpack.c.h.b16 %v3198
    %v4471 = vunpack.c.l.b16 %v3199
    %v4472 = vunpack.c.h.b16 %v3199
    %v4473 = vunpack.c.l.b16 %v3200
    %v4474 = vunpack.c.l.b16 %v3201
    %v4475 = vunpack.c.h.b16 %v3201
    %v4476 = vunpack.c.l.b16 %v3202
    %v4477 = vunpack.c.h.b16 %v3202
    %v4478 = vunpack.c.l.b16 %v3203
    %v4479 = vunpack.c.h.b16 %v3203
    %v4480 = vunpack.c.l.b16 %v3204
    %v4481 = vunpack.c.l.b16 %v3205
    %v4482 = vunpack.c.h.b16 %v3205
    %v4483 = vunpack.c.l.b16 %v3206
    %v4484 = vunpack.c.h.b16 %v3206
    %v4485 = vunpack.c.l.b16 %v3207
    %v4486 = vunpack.c.h.b16 %v3207
    %v4487 = vunpack.c.l.b16 %v3208
    %v4488 = vunpack.c.l.b16 %v3209
    %v4489 = vunpack.c.h.b16 %v3209
    %v4490 = vunpack.c.l.b16 %v3210
    %v4491 = vunpack.c.h.b16 %v3210
    %v4492 = vunpack.c.l.b16 %v3211
    %v4493 = vunpack.c.h.b16 %v3211
    %v4494 = vunpack.c.l.b16 %v3212
    %v4495 = vunpack.c.l.b16 %v3213
    %v4496 = vunpack.c.h.b16 %v3213
    %v4497 = vunpack.c.l.b16 %v3214
    %v4498 = vunpack.c.h.b16 %v3214
    %v4499 = vunpack.c.l.b16 %v3215
    %v4500 = vunpack.c.h.b16 %v3215
    %v4501 = vunpack.c.l.b16 %v3216
    %v4502 = vunpack.c.l.b16 %v3217
    %v4503 = vunpack.c.h.b16 %v3217
    %v4504 = vunpack.c.l.b16 %v3218
    %v4505 = vunpack.c.h.b16 %v3218
    %v4506 = vunpack.c.l.b16 %v3219
    %v4507 = vunpack.c.h.b16 %v3219
    %v4508 = vunpack.c.l.b16 %v3220
    %v4509 = vunpack.c.l.b16 %v3221
    %v4510 = vunpack.c.h.b16 %v3221
    %v4511 = vunpack.c.l.b16 %v3222
    %v4512 = vunpack.c.h.b16 %v3222
    %v4513 = vunpack.c.l.b16 %v3223
    %v4514 = vunpack.c.h.b16 %v3223
    %v4515 = vunpack.c.l.b16 %v3224
    %v4516 = vunpack.c.l.b16 %v3225
    %v4517 = vunpack.c.h.b16 %v3225
    %v4518 = vunpack.c.l.b16 %v3226
    %v4519 = vunpack.c.h.b16 %v3226
    %v4520 = vunpack.c.l.b16 %v3227
    %v4521 = vunpack.c.h.b16 %v3227
    %v4522 = vunpack.c.l.b16 %v3228
    %v4523 = vunpack.c.l.b16 %v3229
    %v4524 = vunpack.c.h.b16 %v3229
    %v4525 = vunpack.c.l.b16 %v3230
    %v4526 = vunpack.c.h.b16 %v3230
    %v4527 = vunpack.c.l.b16 %v3231
    %v4528 = vunpack.c.h.b16 %v3231
    %v4529 = vunpack.c.l.b16 %v3232
    %v4530 = vunpack.c.l.b16 %v3233
    %v4531 = vunpack.c.h.b16 %v3233
    %v4532 = vunpack.c.l.b16 %v3234
    %v4533 = vunpack.c.h.b16 %v3234
    %v4534 = vunpack.c.l.b16 %v3235
    %v4535 = vunpack.c.h.b16 %v3235
    %v4536 = vunpack.c.l.b16 %v3236
    %v4537 = vunpack.c.l.b16 %v3237
    %v4538 = vunpack.c.h.b16 %v3237
    %v4539 = vunpack.c.l.b16 %v3238
    %v4540 = vunpack.c.h.b16 %v3238
    %v4541 = vunpack.c.l.b16 %v3239
    %v4542 = vunpack.c.h.b16 %v3239
    %v4543 = vunpack.c.l.b16 %v3240
    %v4544 = vunpack.c.l.b16 %v3241
    %v4545 = vunpack.c.h.b16 %v3241
    %v4546 = vunpack.c.l.b16 %v3242
    %v4547 = vunpack.c.h.b16 %v3242
    %v4548 = vunpack.c.l.b16 %v3243
    %v4549 = vunpack.c.h.b16 %v3243
    %v4550 = vunpack.c.l.b16 %v3244
    %v4551 = vunpack.c.l.b16 %v3245
    %v4552 = vunpack.c.h.b16 %v3245
    %v4553 = vunpack.c.l.b16 %v3246
    %v4554 = vunpack.c.h.b16 %v3246
    %v4555 = vunpack.c.l.b16 %v3247
    %v4556 = vunpack.c.h.b16 %v3247
    %v4557 = vunpack.c.l.b16 %v3248
    %v4558 = vunpack.c.l.b16 %v3249
    %v4559 = vunpack.c.h.b16 %v3249
    %v4560 = vunpack.c.l.b16 %v3250
    %v4561 = vunpack.c.h.b16 %v3250
    %v4562 = vunpack.c.l.b16 %v3251
    %v4563 = vunpack.c.h.b16 %v3251
    %v4564 = vunpack.c.l.b16 %v3252
    %v4565 = vunpack.c.l.b16 %v3253
    %v4566 = vunpack.c.h.b16 %v3253
    %v4567 = vunpack.c.l.b16 %v3254
    %v4568 = vunpack.c.h.b16 %v3254
    %v4569 = vunpack.c.l.b16 %v3255
    %v4570 = vunpack.c.h.b16 %v3255
    %v4571 = vunpack.c.l.b16 %v3256
    %v4572 = vunpack.c.l.b16 %v3257
    %v4573 = vunpack.c.h.b16 %v3257
    %v4574 = vunpack.c.l.b16 %v3258
    %v4575 = vunpack.c.h.b16 %v3258
    %v4576 = vunpack.c.l.b16 %v3259
    %v4577 = vunpack.c.h.b16 %v3259
    %v4578 = vunpack.c.l.b16 %v3260
    %v4579 = vunpack.c.l.b16 %v3261
    %v4580 = vunpack.c.h.b16 %v3261
    %v4581 = vunpack.c.l.b16 %v3262
    %v4582 = vunpack.c.h.b16 %v3262
    %v4583 = vunpack.c.l.b16 %v3263
    %v4584 = vunpack.c.h.b16 %v3263
    %v4585 = vunpack.c.l.b16 %v3264
    %v4586 = vunpack.c.l.b16 %v3265
    %v4587 = vunpack.c.h.b16 %v3265
    %v4588 = vunpack.c.l.b16 %v3266
    %v4589 = vunpack.c.h.b16 %v3266
    %v4590 = vunpack.c.l.b16 %v3267
    %v4591 = vunpack.c.h.b16 %v3267
    %v4592 = vunpack.c.l.b16 %v3268
    %v4593 = vunpack.c.l.b16 %v3269
    %v4594 = vunpack.c.h.b16 %v3269
    %v4595 = vunpack.c.l.b16 %v3270
    %v4596 = vunpack.c.h.b16 %v3270
    %v4597 = vunpack.c.l.b16 %v3271
    %v4598 = vunpack.c.h.b16 %v3271
    %v4599 = vunpack.c.l.b16 %v3272
    %v4600 = vunpack.c.l.b16 %v3273
    %v4601 = vunpack.c.h.b16 %v3273
    %v4602 = vunpack.c.l.b16 %v3274
    %v4603 = vunpack.c.h.b16 %v3274
    %v4604 = vunpack.c.l.b16 %v3275
    %v4605 = vunpack.c.h.b16 %v3275
    %v4606 = vunpack.c.l.b16 %v3276
    %v4607 = vunpack.c.l.b16 %v3277
    %v4608 = vunpack.c.h.b16 %v3277
    %v4609 = vunpack.c.l.b16 %v3278
    %v4610 = vunpack.c.h.b16 %v3278
    %v4611 = vunpack.c.l.b16 %v3279
    %v4612 = vunpack.c.h.b16 %v3279
    %v4613 = vunpack.c.l.b16 %v3280
    %v4614 = vunpack.c.l.b16 %v3281
    %v4615 = vunpack.c.h.b16 %v3281
    %v4616 = vunpack.c.l.b16 %v3282
    %v4617 = vunpack.c.h.b16 %v3282
    %v4618 = vunpack.c.l.b16 %v3283
    %v4619 = vunpack.c.h.b16 %v3283
    %v4620 = vunpack.c.l.b16 %v3284
    %v4621 = vunpack.c.l.b16 %v3285
    %v4622 = vunpack.c.h.b16 %v3285
    %v4623 = vunpack.c.l.b16 %v3286
    %v4624 = vunpack.c.h.b16 %v3286
    %v4625 = vunpack.c.l.b16 %v3287
    %v4626 = vunpack.c.h.b16 %v3287
    %v4627 = vunpack.c.l.b16 %v3288
    %v4628 = vunpack.c.l.b16 %v3289
    %v4629 = vunpack.c.h.b16 %v3289
    %v4630 = vunpack.c.l.b16 %v3290
    %v4631 = vunpack.c.h.b16 %v3290
    %v4632 = vunpack.c.l.b16 %v3291
    %v4633 = vunpack.c.h.b16 %v3291
    %v4634 = vunpack.c.l.b16 %v3292
    %v4635 = vunpack.c.l.b16 %v3293
    %v4636 = vunpack.c.h.b16 %v3293
    %v4637 = vunpack.c.l.b16 %v3294
    %v4638 = vunpack.c.h.b16 %v3294
    %v4639 = vunpack.c.l.b16 %v3295
    %v4640 = vunpack.c.h.b16 %v3295
    %v4641 = vunpack.c.l.b16 %v3296
    %v4642 = vunpack.c.l.b16 %v3297
    %v4643 = vunpack.c.h.b16 %v3297
    %v4644 = vunpack.c.l.b16 %v3298
    %v4645 = vunpack.c.h.b16 %v3298
    %v4646 = vunpack.c.l.b16 %v3299
    %v4647 = vunpack.c.h.b16 %v3299
    %v4648 = vunpack.c.l.b16 %v3300
    %v4649 = vunpack.c.l.b16 %v3301
    %v4650 = vunpack.c.h.b16 %v3301
    %v4651 = vunpack.c.l.b16 %v3302
    %v4652 = vunpack.c.h.b16 %v3302
    %v4653 = vunpack.c.l.b16 %v3303
    %v4654 = vunpack.c.h.b16 %v3303
    %v4655 = vunpack.c.l.b16 %v3304
    %v4656 = vunpack.c.l.b16 %v3305
    %v4657 = vunpack.c.h.b16 %v3305
    %v4658 = vunpack.c.l.b16 %v3306
    %v4659 = vunpack.c.h.b16 %v3306
    %v4660 = vunpack.c.l.b16 %v3307
    %v4661 = vunpack.c.h.b16 %v3307
    %v4662 = vunpack.c.l.b16 %v3308
    %v4663 = vunpack.c.l.b16 %v3309
    %v4664 = vunpack.c.h.b16 %v3309
    %v4665 = vunpack.c.l.b16 %v3310
    %v4666 = vunpack.c.h.b16 %v3310
    %v4667 = vunpack.c.l.b16 %v3311
    %v4668 = vunpack.c.h.b16 %v3311
    %v4669 = vunpack.c.l.b16 %v3312
    %v4670 = vunpack.c.l.b16 %v3313
    %v4671 = vunpack.c.h.b16 %v3313
    %v4672 = vunpack.c.l.b16 %v3314
    %v4673 = vunpack.c.h.b16 %v3314
    %v4674 = vunpack.c.l.b16 %v3315
    %v4675 = vunpack.c.h.b16 %v3315
    %v4676 = vunpack.c.l.b16 %v3316
    %v4677 = vunpack.c.l.b16 %v3317
    %v4678 = vunpack.c.h.b16 %v3317
    %v4679 = vunpack.c.l.b16 %v3318
    %v4680 = vunpack.c.h.b16 %v3318
    %v4681 = vunpack.c.l.b16 %v3319
    %v4682 = vunpack.c.h.b16 %v3319
    %v4683 = vunpack.c.l.b16 %v3320
    %v4684 = vunpack.c.l.b16 %v3321
    %v4685 = vunpack.c.h.b16 %v3321
    %v4686 = vunpack.c.l.b16 %v3322
    %v4687 = vunpack.c.h.b16 %v3322
    %v4688 = vunpack.c.l.b16 %v3323
    %v4689 = vunpack.c.h.b16 %v3323
    %v4690 = vunpack.c.l.b16 %v3324
    %v4691 = vunpack.c.l.b16 %v3325
    %v4692 = vunpack.c.h.b16 %v3325
    %v4693 = vunpack.c.l.b16 %v3326
    %v4694 = vunpack.c.h.b16 %v3326
    %v4695 = vunpack.c.l.b16 %v3327
    %v4696 = vunpack.c.h.b16 %v3327
    %v4697 = vunpack.c.l.b16 %v3328
    %v4698 = vunpack.c.l.b16 %v3329
    %v4699 = vunpack.c.h.b16 %v3329
    %v4700 = vunpack.c.l.b16 %v3330
    %v4701 = vunpack.c.h.b16 %v3330
    %v4702 = vunpack.c.l.b16 %v3331
    %v4703 = vunpack.c.h.b16 %v3331
    %v4704 = vunpack.c.l.b16 %v3332
    %v4705 = vunpack.c.l.b16 %v3333
    %v4706 = vunpack.c.h.b16 %v3333
    %v4707 = vunpack.c.l.b16 %v3334
    %v4708 = vunpack.c.h.b16 %v3334
    %v4709 = vunpack.c.l.b16 %v3335
    %v4710 = vunpack.c.h.b16 %v3335
    %v4711 = vunpack.c.l.b16 %v3336
    %v4712 = vunpack.c.l.b16 %v3337
    %v4713 = vunpack.c.h.b16 %v3337
    %v4714 = vunpack.c.l.b16 %v3338
    %v4715 = vunpack.c.h.b16 %v3338
    %v4716 = vunpack.c.l.b16 %v3339
    %v4717 = vunpack.c.h.b16 %v3339
    %v4718 = vunpack.c.l.b16 %v3340
    %v4719 = vunpack.c.l.b16 %v3341
    %v4720 = vunpack.c.h.b16 %v3341
    %v4721 = vunpack.c.l.b16 %v3342
    %v4722 = vunpack.c.h.b16 %v3342
    %v4723 = vunpack.c.l.b16 %v3343
    %v4724 = vunpack.c.h.b16 %v3343
    %v4725 = vunpack.c.l.b16 %v3344
    %v4726 = vunpack.c.l.b16 %v3345
    %v4727 = vunpack.c.h.b16 %v3345
    %v4728 = vunpack.c.l.b16 %v3346
    %v4729 = vunpack.c.h.b16 %v3346
    %v4730 = vunpack.c.l.b16 %v3347
    %v4731 = vunpack.c.h.b16 %v3347
    %v4732 = vunpack.c.l.b16 %v3348
    %v4733 = vunpack.c.l.b16 %v3349
    %v4734 = vunpack.c.h.b16 %v3349
    %v4735 = vunpack.c.l.b16 %v3350
    %v4736 = vunpack.c.h.b16 %v3350
    %v4737 = vunpack.c.l.b16 %v3351
    %v4738 = vunpack.c.h.b16 %v3351
    %v4739 = vunpack.c.l.b16 %v3352
    %v4740 = vunpack.c.l.b16 %v3353
    %v4741 = vunpack.c.h.b16 %v3353
    %v4742 = vunpack.c.l.b16 %v3354
    %v4743 = vunpack.c.h.b16 %v3354
    %v4744 = vunpack.c.l.b16 %v3355
    %v4745 = vunpack.c.h.b16 %v3355
    %v4746 = vunpack.c.l.b16 %v3356
    %v4747 = vunpack.c.l.b16 %v3357
    %v4748 = vunpack.c.h.b16 %v3357
    %v4749 = vunpack.c.l.b16 %v3358
    %v4750 = vunpack.c.h.b16 %v3358
    %v4751 = vunpack.c.l.b16 %v3359
    %v4752 = vunpack.c.h.b16 %v3359
    %v4753 = vunpack.c.l.b16 %v3360
    %v4754 = vunpack.c.l.b16 %v3361
    %v4755 = vunpack.c.h.b16 %v3361
    %v4756 = vunpack.c.l.b16 %v3362
    %v4757 = vunpack.c.h.b16 %v3362
    %v4758 = vunpack.c.l.b16 %v3363
    %v4759 = vunpack.c.h.b16 %v3363
    %v4760 = vunpack.c.l.b16 %v3364
    %v4761 = vunpack.c.l.b16 %v3365
    %v4762 = vunpack.c.h.b16 %v3365
    %v4763 = vunpack.c.l.b16 %v3366
    %v4764 = vunpack.c.h.b16 %v3366
    %v4765 = vunpack.c.l.b16 %v3367
    %v4766 = vunpack.c.h.b16 %v3367
    %v4767 = vunpack.c.l.b16 %v3368
    %v4768 = vunpack.c.l.b16 %v3369
    %v4769 = vunpack.c.h.b16 %v3369
    %v4770 = vunpack.c.l.b16 %v3370
    %v4771 = vunpack.c.h.b16 %v3370
    %v4772 = vunpack.c.l.b16 %v3371
    %v4773 = vunpack.c.h.b16 %v3371
    %v4774 = vunpack.c.l.b16 %v3372
    %v4775 = vunpack.c.l.b16 %v3373
    %v4776 = vunpack.c.h.b16 %v3373
    %v4777 = vunpack.c.l.b16 %v3374
    %v4778 = vunpack.c.h.b16 %v3374
    %v4779 = vunpack.c.l.b16 %v3375
    %v4780 = vunpack.c.h.b16 %v3375
    %v4781 = vunpack.c.l.b16 %v3376
    %v4782 = vunpack.c.l.b16 %v3377
    %v4783 = vunpack.c.h.b16 %v3377
    %v4784 = vunpack.c.l.b16 %v3378
    %v4785 = vunpack.c.h.b16 %v3378
    %v4786 = vunpack.c.l.b16 %v3379
    %v4787 = vunpack.c.h.b16 %v3379
    %v4788 = vunpack.c.l.b16 %v3380
    %v4789 = vunpack.c.l.b16 %v3381
    %v4790 = vunpack.c.h.b16 %v3381
    %v4791 = vunpack.c.l.b16 %v3382
    %v4792 = vunpack.c.h.b16 %v3382
    %v4793 = vunpack.c.l.b16 %v3383
    %v4794 = vunpack.c.h.b16 %v3383
    %v4795 = vunpack.c.l.b16 %v3384
    %v4796 = vunpack.c.l.b16 %v3385
    %v4797 = vunpack.c.h.b16 %v3385
    %v4798 = vunpack.c.l.b16 %v3386
    %v4799 = vunpack.c.h.b16 %v3386
    %v4800 = vunpack.c.l.b16 %v3387
    %v4801 = vunpack.c.h.b16 %v3387
    %v4802 = vunpack.c.l.b16 %v3388
    %v4803 = vunpack.c.l.b16 %v3389
    %v4804 = vunpack.c.h.b16 %v3389
    %v4805 = vunpack.c.l.b16 %v3390
    %v4806 = vunpack.c.h.b16 %v3390
    %v4807 = vunpack.c.l.b16 %v3391
    %v4808 = vunpack.c.h.b16 %v3391
    %v4809 = vunpack.c.l.b16 %v3392
    %v4810 = vunpack.c.l.b16 %v3393
    %v4811 = vunpack.c.h.b16 %v3393
    %v4812 = vunpack.c.l.b16 %v3394
    %v4813 = vunpack.c.h.b16 %v3394
    %v4814 = vunpack.c.l.b16 %v3395
    %v4815 = vunpack.c.h.b16 %v3395
    %v4816 = vunpack.c.l.b16 %v3396
    %v4817 = vunpack.c.l.b16 %v3397
    %v4818 = vunpack.c.h.b16 %v3397
    %v4819 = vunpack.c.l.b16 %v3398
    %v4820 = vunpack.c.h.b16 %v3398
    %v4821 = vunpack.c.l.b16 %v3399
    %v4822 = vunpack.c.h.b16 %v3399
    %v4823 = vunpack.c.l.b16 %v3400
    %v4824 = vunpack.c.l.b16 %v3401
    %v4825 = vunpack.c.h.b16 %v3401
    %v4826 = vunpack.c.l.b16 %v3402
    %v4827 = vunpack.c.h.b16 %v3402
    %v4828 = vunpack.c.l.b16 %v3403
    %v4829 = vunpack.c.h.b16 %v3403
    %v4830 = vunpack.c.l.b16 %v3404
    %v4831 = vunpack.c.l.b16 %v3405
    %v4832 = vunpack.c.h.b16 %v3405
    %v4833 = vunpack.c.l.b16 %v3406
    %v4834 = vunpack.c.h.b16 %v3406
    %v4835 = vunpack.c.l.b16 %v3407
    %v4836 = vunpack.c.h.b16 %v3407
    %v4837 = vunpack.c.l.b16 %v3408
    %v4838 = vunpack.c.l.b16 %v3409
    %v4839 = vunpack.c.h.b16 %v3409
    %v4840 = vunpack.c.l.b16 %v3410
    %v4841 = vunpack.c.h.b16 %v3410
    %v4842 = vunpack.c.l.b16 %v3411
    %v4843 = vunpack.c.h.b16 %v3411
    %v4844 = vunpack.c.l.b16 %v3412
    %v4845 = vpack.c.b16 %v3956, %v3949
    %v4846 = vpack.c.b16 %v3957, %v3950
    %v4847 = vpack.c.b16 %v3958, %v3951
    %v4848 = vpack.c.b16 %v3959, %v3952
    %v4849 = vpack.c.b16 %v3960, %v3953
    %v4850 = vpack.c.b16 %v3961, %v3954
    %v4851 = vpack.c.b16 %v3962, %v3955
    %v4852 = vpack.c.b16 %v3970, %v3963
    %v4853 = vpack.c.b16 %v3971, %v3964
    %v4854 = vpack.c.b16 %v3972, %v3965
    %v4855 = vpack.c.b16 %v3973, %v3966
    %v4856 = vpack.c.b16 %v3974, %v3967
    %v4857 = vpack.c.b16 %v3975, %v3968
    %v4858 = vpack.c.b16 %v3976, %v3969
    %v4859 = vpack.c.b16 %v3984, %v3977
    %v4860 = vpack.c.b16 %v3985, %v3978
    %v4861 = vpack.c.b16 %v3986, %v3979
    %v4862 = vpack.c.b16 %v3987, %v3980
    %v4863 = vpack.c.b16 %v3988, %v3981
    %v4864 = vpack.c.b16 %v3989, %v3982
    %v4865 = vpack.c.b16 %v3990, %v3983
    %v4866 = vpack.c.b16 %v3998, %v3991
    %v4867 = vpack.c.b16 %v3999, %v3992
    %v4868 = vpack.c.b16 %v4000, %v3993
    %v4869 = vpack.c.b16 %v4001, %v3994
    %v4870 = vpack.c.b16 %v4002, %v3995
    %v4871 = vpack.c.b16 %v4003, %v3996
    %v4872 = vpack.c.b16 %v4004, %v3997
    %v4873 = vpack.c.b16 %v4012, %v4005
    %v4874 = vpack.c.b16 %v4013, %v4006
    %v4875 = vpack.c.b16 %v4014, %v4007
    %v4876 = vpack.c.b16 %v4015, %v4008
    %v4877 = vpack.c.b16 %v4016, %v4009
    %v4878 = vpack.c.b16 %v4017, %v4010
    %v4879 = vpack.c.b16 %v4018, %v4011
    %v4880 = vpack.c.b16 %v4026, %v4019
    %v4881 = vpack.c.b16 %v4027, %v4020
    %v4882 = vpack.c.b16 %v4028, %v4021
    %v4883 = vpack.c.b16 %v4029, %v4022
    %v4884 = vpack.c.b16 %v4030, %v4023
    %v4885 = vpack.c.b16 %v4031, %v4024
    %v4886 = vpack.c.b16 %v4032, %v4025
    %v4887 = vpack.c.b16 %v4040, %v4033
    %v4888 = vpack.c.b16 %v4041, %v4034
    %v4889 = vpack.c.b16 %v4042, %v4035
    %v4890 = vpack.c.b16 %v4043, %v4036
    %v4891 = vpack.c.b16 %v4044, %v4037
    %v4892 = vpack.c.b16 %v4045, %v4038
    %v4893 = vpack.c.b16 %v4046, %v4039
    %v4894 = vpack.c.b16 %v4054, %v4047
    %v4895 = vpack.c.b16 %v4055, %v4048
    %v4896 = vpack.c.b16 %v4056, %v4049
    %v4897 = vpack.c.b16 %v4057, %v4050
    %v4898 = vpack.c.b16 %v4058, %v4051
    %v4899 = vpack.c.b16 %v4059, %v4052
    %v4900 = vpack.c.b16 %v4060, %v4053
    %v4901 = vpack.c.b16 %v4068, %v4061
    %v4902 = vpack.c.b16 %v4069, %v4062
    %v4903 = vpack.c.b16 %v4070, %v4063
    %v4904 = vpack.c.b16 %v4071, %v4064
    %v4905 = vpack.c.b16 %v4072, %v4065
    %v4906 = vpack.c.b16 %v4073, %v4066
    %v4907 = vpack.c.b16 %v4074, %v4067
    %v4908 = vpack.c.b16 %v4082, %v4075
    %v4909 = vpack.c.b16 %v4083, %v4076
    %v4910 = vpack.c.b16 %v4084, %v4077
    %v4911 = vpack.c.b16 %v4085, %v4078
    %v4912 = vpack.c.b16 %v4086, %v4079
    %v4913 = vpack.c.b16 %v4087, %v4080
    %v4914 = vpack.c.b16 %v4088, %v4081
    %v4915 = vpack.c.b16 %v4096, %v4089
    %v4916 = vpack.c.b16 %v4097, %v4090
    %v4917 = vpack.c.b16 %v4098, %v4091
    %v4918 = vpack.c.b16 %v4099, %v4092
    %v4919 = vpack.c.b16 %v4100, %v4093
    %v4920 = vpack.c.b16 %v4101, %v4094
    %v4921 = vpack.c.b16 %v4102, %v4095
    %v4922 = vpack.c.b16 %v4110, %v4103
    %v4923 = vpack.c.b16 %v4111, %v4104
    %v4924 = vpack.c.b16 %v4112, %v4105
    %v4925 = vpack.c.b16 %v4113, %v4106
    %v4926 = vpack.c.b16 %v4114, %v4107
    %v4927 = vpack.c.b16 %v4115, %v4108
    %v4928 = vpack.c.b16 %v4116, %v4109
    %v4929 = vpack.c.b16 %v4124, %v4117
    %v4930 = vpack.c.b16 %v4125, %v4118
    %v4931 = vpack.c.b16 %v4126, %v4119
    %v4932 = vpack.c.b16 %v4127, %v4120
    %v4933 = vpack.c.b16 %v4128, %v4121
    %v4934 = vpack.c.b16 %v4129, %v4122
    %v4935 = vpack.c.b16 %v4130, %v4123
    %v4936 = vpack.c.b16 %v4138, %v4131
    %v4937 = vpack.c.b16 %v4139, %v4132
    %v4938 = vpack.c.b16 %v4140, %v4133
    %v4939 = vpack.c.b16 %v4141, %v4134
    %v4940 = vpack.c.b16 %v4142, %v4135
    %v4941 = vpack.c.b16 %v4143, %v4136
    %v4942 = vpack.c.b16 %v4144, %v4137
    %v4943 = vpack.c.b16 %v4152, %v4145
    %v4944 = vpack.c.b16 %v4153, %v4146
    %v4945 = vpack.c.b16 %v4154, %v4147
    %v4946 = vpack.c.b16 %v4155, %v4148
    %v4947 = vpack.c.b16 %v4156, %v4149
    %v4948 = vpack.c.b16 %v4157, %v4150
    %v4949 = vpack.c.b16 %v4158, %v4151
    %v4950 = vpack.c.b16 %v4166, %v4159
    %v4951 = vpack.c.b16 %v4167, %v4160
    %v4952 = vpack.c.b16 %v4168, %v4161
    %v4953 = vpack.c.b16 %v4169, %v4162
    %v4954 = vpack.c.b16 %v4170, %v4163
    %v4955 = vpack.c.b16 %v4171, %v4164
    %v4956 = vpack.c.b16 %v4172, %v4165
    %v4957 = vpack.c.b16 %v4180, %v4173
    %v4958 = vpack.c.b16 %v4181, %v4174
    %v4959 = vpack.c.b16 %v4182, %v4175
    %v4960 = vpack.c.b16 %v4183, %v4176
    %v4961 = vpack.c.b16 %v4184, %v4177
    %v4962 = vpack.c.b16 %v4185, %v4178
    %v4963 = vpack.c.b16 %v4186, %v4179
    %v4964 = vpack.c.b16 %v4194, %v4187
    %v4965 = vpack.c.b16 %v4195, %v4188
    %v4966 = vpack.c.b16 %v4196, %v4189
    %v4967 = vpack.c.b16 %v4197, %v4190
    %v4968 = vpack.c.b16 %v4198, %v4191
    %v4969 = vpack.c.b16 %v4199, %v4192
    %v4970 = vpack.c.b16 %v4200, %v4193
    %v4971 = vpack.c.b16 %v4208, %v4201
    %v4972 = vpack.c.b16 %v4209, %v4202
    %v4973 = vpack.c.b16 %v4210, %v4203
    %v4974 = vpack.c.b16 %v4211, %v4204
    %v4975 = vpack.c.b16 %v4212, %v4205
    %v4976 = vpack.c.b16 %v4213, %v4206
    %v4977 = vpack.c.b16 %v4214, %v4207
    %v4978 = vpack.c.b16 %v4222, %v4215
    %v4979 = vpack.c.b16 %v4223, %v4216
    %v4980 = vpack.c.b16 %v4224, %v4217
    %v4981 = vpack.c.b16 %v4225, %v4218
    %v4982 = vpack.c.b16 %v4226, %v4219
    %v4983 = vpack.c.b16 %v4227, %v4220
    %v4984 = vpack.c.b16 %v4228, %v4221
    %v4985 = vpack.c.b16 %v4236, %v4229
    %v4986 = vpack.c.b16 %v4237, %v4230
    %v4987 = vpack.c.b16 %v4238, %v4231
    %v4988 = vpack.c.b16 %v4239, %v4232
    %v4989 = vpack.c.b16 %v4240, %v4233
    %v4990 = vpack.c.b16 %v4241, %v4234
    %v4991 = vpack.c.b16 %v4242, %v4235
    %v4992 = vpack.c.b16 %v4250, %v4243
    %v4993 = vpack.c.b16 %v4251, %v4244
    %v4994 = vpack.c.b16 %v4252, %v4245
    %v4995 = vpack.c.b16 %v4253, %v4246
    %v4996 = vpack.c.b16 %v4254, %v4247
    %v4997 = vpack.c.b16 %v4255, %v4248
    %v4998 = vpack.c.b16 %v4256, %v4249
    %v4999 = vpack.c.b16 %v4264, %v4257
    %v5000 = vpack.c.b16 %v4265, %v4258
    %v5001 = vpack.c.b16 %v4266, %v4259
    %v5002 = vpack.c.b16 %v4267, %v4260
    %v5003 = vpack.c.b16 %v4268, %v4261
    %v5004 = vpack.c.b16 %v4269, %v4262
    %v5005 = vpack.c.b16 %v4270, %v4263
    %v5006 = vpack.c.b16 %v4278, %v4271
    %v5007 = vpack.c.b16 %v4279, %v4272
    %v5008 = vpack.c.b16 %v4280, %v4273
    %v5009 = vpack.c.b16 %v4281, %v4274
    %v5010 = vpack.c.b16 %v4282, %v4275
    %v5011 = vpack.c.b16 %v4283, %v4276
    %v5012 = vpack.c.b16 %v4284, %v4277
    %v5013 = vpack.c.b16 %v4292, %v4285
    %v5014 = vpack.c.b16 %v4293, %v4286
    %v5015 = vpack.c.b16 %v4294, %v4287
    %v5016 = vpack.c.b16 %v4295, %v4288
    %v5017 = vpack.c.b16 %v4296, %v4289
    %v5018 = vpack.c.b16 %v4297, %v4290
    %v5019 = vpack.c.b16 %v4298, %v4291
    %v5020 = vpack.c.b16 %v4306, %v4299
    %v5021 = vpack.c.b16 %v4307, %v4300
    %v5022 = vpack.c.b16 %v4308, %v4301
    %v5023 = vpack.c.b16 %v4309, %v4302
    %v5024 = vpack.c.b16 %v4310, %v4303
    %v5025 = vpack.c.b16 %v4311, %v4304
    %v5026 = vpack.c.b16 %v4312, %v4305
    %v5027 = vpack.c.b16 %v4320, %v4313
    %v5028 = vpack.c.b16 %v4321, %v4314
    %v5029 = vpack.c.b16 %v4322, %v4315
    %v5030 = vpack.c.b16 %v4323, %v4316
    %v5031 = vpack.c.b16 %v4324, %v4317
    %v5032 = vpack.c.b16 %v4325, %v4318
    %v5033 = vpack.c.b16 %v4326, %v4319
    %v5034 = vpack.c.b16 %v4334, %v4327
    %v5035 = vpack.c.b16 %v4335, %v4328
    %v5036 = vpack.c.b16 %v4336, %v4329
    %v5037 = vpack.c.b16 %v4337, %v4330
    %v5038 = vpack.c.b16 %v4338, %v4331
    %v5039 = vpack.c.b16 %v4339, %v4332
    %v5040 = vpack.c.b16 %v4340, %v4333
    %v5041 = vpack.c.b16 %v4348, %v4341
    %v5042 = vpack.c.b16 %v4349, %v4342
    %v5043 = vpack.c.b16 %v4350, %v4343
    %v5044 = vpack.c.b16 %v4351, %v4344
    %v5045 = vpack.c.b16 %v4352, %v4345
    %v5046 = vpack.c.b16 %v4353, %v4346
    %v5047 = vpack.c.b16 %v4354, %v4347
    %v5048 = vpack.c.b16 %v4362, %v4355
    %v5049 = vpack.c.b16 %v4363, %v4356
    %v5050 = vpack.c.b16 %v4364, %v4357
    %v5051 = vpack.c.b16 %v4365, %v4358
    %v5052 = vpack.c.b16 %v4366, %v4359
    %v5053 = vpack.c.b16 %v4367, %v4360
    %v5054 = vpack.c.b16 %v4368, %v4361
    %v5055 = vpack.c.b16 %v4376, %v4369
    %v5056 = vpack.c.b16 %v4377, %v4370
    %v5057 = vpack.c.b16 %v4378, %v4371
    %v5058 = vpack.c.b16 %v4379, %v4372
    %v5059 = vpack.c.b16 %v4380, %v4373
    %v5060 = vpack.c.b16 %v4381, %v4374
    %v5061 = vpack.c.b16 %v4382, %v4375
    %v5062 = vpack.c.b16 %v4390, %v4383
    %v5063 = vpack.c.b16 %v4391, %v4384
    %v5064 = vpack.c.b16 %v4392, %v4385
    %v5065 = vpack.c.b16 %v4393, %v4386
    %v5066 = vpack.c.b16 %v4394, %v4387
    %v5067 = vpack.c.b16 %v4395, %v4388
    %v5068 = vpack.c.b16 %v4396, %v4389
    %v5069 = vpack.c.b16 %v4404, %v4397
    %v5070 = vpack.c.b16 %v4405, %v4398
    %v5071 = vpack.c.b16 %v4406, %v4399
    %v5072 = vpack.c.b16 %v4407, %v4400
    %v5073 = vpack.c.b16 %v4408, %v4401
    %v5074 = vpack.c.b16 %v4409, %v4402
    %v5075 = vpack.c.b16 %v4410, %v4403
    %v5076 = vpack.c.b16 %v4418, %v4411
    %v5077 = vpack.c.b16 %v4419, %v4412
    %v5078 = vpack.c.b16 %v4420, %v4413
    %v5079 = vpack.c.b16 %v4421, %v4414
    %v5080 = vpack.c.b16 %v4422, %v4415
    %v5081 = vpack.c.b16 %v4423, %v4416
    %v5082 = vpack.c.b16 %v4424, %v4417
    %v5083 = vpack.c.b16 %v4432, %v4425
    %v5084 = vpack.c.b16 %v4433, %v4426
    %v5085 = vpack.c.b16 %v4434, %v4427
    %v5086 = vpack.c.b16 %v4435, %v4428
    %v5087 = vpack.c.b16 %v4436, %v4429
    %v5088 = vpack.c.b16 %v4437, %v4430
    %v5089 = vpack.c.b16 %v4438, %v4431
    %v5090 = vpack.c.b16 %v4446, %v4439
    %v5091 = vpack.c.b16 %v4447, %v4440
    %v5092 = vpack.c.b16 %v4448, %v4441
    %v5093 = vpack.c.b16 %v4449, %v4442
    %v5094 = vpack.c.b16 %v4450, %v4443
    %v5095 = vpack.c.b16 %v4451, %v4444
    %v5096 = vpack.c.b16 %v4452, %v4445
    %v5097 = vpack.c.b16 %v4460, %v4453
    %v5098 = vpack.c.b16 %v4461, %v4454
    %v5099 = vpack.c.b16 %v4462, %v4455
    %v5100 = vpack.c.b16 %v4463, %v4456
    %v5101 = vpack.c.b16 %v4464, %v4457
    %v5102 = vpack.c.b16 %v4465, %v4458
    %v5103 = vpack.c.b16 %v4466, %v4459
    %v5104 = vpack.c.b16 %v4474, %v4467
    %v5105 = vpack.c.b16 %v4475, %v4468
    %v5106 = vpack.c.b16 %v4476, %v4469
    %v5107 = vpack.c.b16 %v4477, %v4470
    %v5108 = vpack.c.b16 %v4478, %v4471
    %v5109 = vpack.c.b16 %v4479, %v4472
    %v5110 = vpack.c.b16 %v4480, %v4473
    %v5111 = vpack.c.b16 %v4488, %v4481
    %v5112 = vpack.c.b16 %v4489, %v4482
    %v5113 = vpack.c.b16 %v4490, %v4483
    %v5114 = vpack.c.b16 %v4491, %v4484
    %v5115 = vpack.c.b16 %v4492, %v4485
    %v5116 = vpack.c.b16 %v4493, %v4486
    %v5117 = vpack.c.b16 %v4494, %v4487
    %v5118 = vpack.c.b16 %v4502, %v4495
    %v5119 = vpack.c.b16 %v4503, %v4496
    %v5120 = vpack.c.b16 %v4504, %v4497
    %v5121 = vpack.c.b16 %v4505, %v4498
    %v5122 = vpack.c.b16 %v4506, %v4499
    %v5123 = vpack.c.b16 %v4507, %v4500
    %v5124 = vpack.c.b16 %v4508, %v4501
    %v5125 = vpack.c.b16 %v4516, %v4509
    %v5126 = vpack.c.b16 %v4517, %v4510
    %v5127 = vpack.c.b16 %v4518, %v4511
    %v5128 = vpack.c.b16 %v4519, %v4512
    %v5129 = vpack.c.b16 %v4520, %v4513
    %v5130 = vpack.c.b16 %v4521, %v4514
    %v5131 = vpack.c.b16 %v4522, %v4515
    %v5132 = vpack.c.b16 %v4530, %v4523
    %v5133 = vpack.c.b16 %v4531, %v4524
    %v5134 = vpack.c.b16 %v4532, %v4525
    %v5135 = vpack.c.b16 %v4533, %v4526
    %v5136 = vpack.c.b16 %v4534, %v4527
    %v5137 = vpack.c.b16 %v4535, %v4528
    %v5138 = vpack.c.b16 %v4536, %v4529
    %v5139 = vpack.c.b16 %v4544, %v4537
    %v5140 = vpack.c.b16 %v4545, %v4538
    %v5141 = vpack.c.b16 %v4546, %v4539
    %v5142 = vpack.c.b16 %v4547, %v4540
    %v5143 = vpack.c.b16 %v4548, %v4541
    %v5144 = vpack.c.b16 %v4549, %v4542
    %v5145 = vpack.c.b16 %v4550, %v4543
    %v5146 = vpack.c.b16 %v4558, %v4551
    %v5147 = vpack.c.b16 %v4559, %v4552
    %v5148 = vpack.c.b16 %v4560, %v4553
    %v5149 = vpack.c.b16 %v4561, %v4554
    %v5150 = vpack.c.b16 %v4562, %v4555
    %v5151 = vpack.c.b16 %v4563, %v4556
    %v5152 = vpack.c.b16 %v4564, %v4557
    %v5153 = vpack.c.b16 %v4572, %v4565
    %v5154 = vpack.c.b16 %v4573, %v4566
    %v5155 = vpack.c.b16 %v4574, %v4567
    %v5156 = vpack.c.b16 %v4575, %v4568
    %v5157 = vpack.c.b16 %v4576, %v4569
    %v5158 = vpack.c.b16 %v4577, %v4570
    %v5159 = vpack.c.b16 %v4578, %v4571
    %v5160 = vpack.c.b16 %v4586, %v4579
    %v5161 = vpack.c.b16 %v4587, %v4580
    %v5162 = vpack.c.b16 %v4588, %v4581
    %v5163 = vpack.c.b16 %v4589, %v4582
    %v5164 = vpack.c.b16 %v4590, %v4583
    %v5165 = vpack.c.b16 %v4591, %v4584
    %v5166 = vpack.c.b16 %v4592, %v4585
    %v5167 = vpack.c.b16 %v4600, %v4593
    %v5168 = vpack.c.b16 %v4601, %v4594
    %v5169 = vpack.c.b16 %v4602, %v4595
    %v5170 = vpack.c.b16 %v4603, %v4596
    %v5171 = vpack.c.b16 %v4604, %v4597
    %v5172 = vpack.c.b16 %v4605, %v4598
    %v5173 = vpack.c.b16 %v4606, %v4599
    %v5174 = vpack.c.b16 %v4614, %v4607
    %v5175 = vpack.c.b16 %v4615, %v4608
    %v5176 = vpack.c.b16 %v4616, %v4609
    %v5177 = vpack.c.b16 %v4617, %v4610
    %v5178 = vpack.c.b16 %v4618, %v4611
    %v5179 = vpack.c.b16 %v4619, %v4612
    %v5180 = vpack.c.b16 %v4620, %v4613
    %v5181 = vpack.c.b16 %v4628, %v4621
    %v5182 = vpack.c.b16 %v4629, %v4622
    %v5183 = vpack.c.b16 %v4630, %v4623
    %v5184 = vpack.c.b16 %v4631, %v4624
    %v5185 = vpack.c.b16 %v4632, %v4625
    %v5186 = vpack.c.b16 %v4633, %v4626
    %v5187 = vpack.c.b16 %v4634, %v4627
    %v5188 = vpack.c.b16 %v4642, %v4635
    %v5189 = vpack.c.b16 %v4643, %v4636
    %v5190 = vpack.c.b16 %v4644, %v4637
    %v5191 = vpack.c.b16 %v4645, %v4638
    %v5192 = vpack.c.b16 %v4646, %v4639
    %v5193 = vpack.c.b16 %v4647, %v4640
    %v5194 = vpack.c.b16 %v4648, %v4641
    %v5195 = vpack.c.b16 %v4656, %v4649
    %v5196 = vpack.c.b16 %v4657, %v4650
    %v5197 = vpack.c.b16 %v4658, %v4651
    %v5198 = vpack.c.b16 %v4659, %v4652
    %v5199 = vpack.c.b16 %v4660, %v4653
    %v5200 = vpack.c.b16 %v4661, %v4654
    %v5201 = vpack.c.b16 %v4662, %v4655
    %v5202 = vpack.c.b16 %v4670, %v4663
    %v5203 = vpack.c.b16 %v4671, %v4664
    %v5204 = vpack.c.b16 %v4672, %v4665
    %v5205 = vpack.c.b16 %v4673, %v4666
    %v5206 = vpack.c.b16 %v4674, %v4667
    %v5207 = vpack.c.b16 %v4675, %v4668
    %v5208 = vpack.c.b16 %v4676, %v4669
    %v5209 = vpack.c.b16 %v4684, %v4677
    %v5210 = vpack.c.b16 %v4685, %v4678
    %v5211 = vpack.c.b16 %v4686, %v4679
    %v5212 = vpack.c.b16 %v4687, %v4680
    %v5213 = vpack.c.b16 %v4688, %v4681
    %v5214 = vpack.c.b16 %v4689, %v4682
    %v5215 = vpack.c.b16 %v4690, %v4683
    %v5216 = vpack.c.b16 %v4698, %v4691
    %v5217 = vpack.c.b16 %v4699, %v4692
    %v5218 = vpack.c.b16 %v4700, %v4693
    %v5219 = vpack.c.b16 %v4701, %v4694
    %v5220 = vpack.c.b16 %v4702, %v4695
    %v5221 = vpack.c.b16 %v4703, %v4696
    %v5222 = vpack.c.b16 %v4704, %v4697
    %v5223 = vpack.c.b16 %v4712, %v4705
    %v5224 = vpack.c.b16 %v4713, %v4706
    %v5225 = vpack.c.b16 %v4714, %v4707
    %v5226 = vpack.c.b16 %v4715, %v4708
    %v5227 = vpack.c.b16 %v4716, %v4709
    %v5228 = vpack.c.b16 %v4717, %v4710
    %v5229 = vpack.c.b16 %v4718, %v4711
    %v5230 = vpack.c.b16 %v4726, %v4719
    %v5231 = vpack.c.b16 %v4727, %v4720
    %v5232 = vpack.c.b16 %v4728, %v4721
    %v5233 = vpack.c.b16 %v4729, %v4722
    %v5234 = vpack.c.b16 %v4730, %v4723
    %v5235 = vpack.c.b16 %v4731, %v4724
    %v5236 = vpack.c.b16 %v4732, %v4725
    %v5237 = vpack.c.b16 %v4740, %v4733
    %v5238 = vpack.c.b16 %v4741, %v4734
    %v5239 = vpack.c.b16 %v4742, %v4735
    %v5240 = vpack.c.b16 %v4743, %v4736
    %v5241 = vpack.c.b16 %v4744, %v4737
    %v5242 = vpack.c.b16 %v4745, %v4738
    %v5243 = vpack.c.b16 %v4746, %v4739
    %v5244 = vpack.c.b16 %v4754, %v4747
    %v5245 = vpack.c.b16 %v4755, %v4748
    %v5246 = vpack.c.b16 %v4756, %v4749
    %v5247 = vpack.c.b16 %v4757, %v4750
    %v5248 = vpack.c.b16 %v4758, %v4751
    %v5249 = vpack.c.b16 %v4759, %v4752
    %v5250 = vpack.c.b16 %v4760, %v4753
    %v5251 = vpack.c.b16 %v4768, %v4761
    %v5252 = vpack.c.b16 %v4769, %v4762
    %v5253 = vpack.c.b16 %v4770, %v4763
    %v5254 = vpack.c.b16 %v4771, %v4764
    %v5255 = vpack.c.b16 %v4772, %v4765
    %v5256 = vpack.c.b16 %v4773, %v4766
    %v5257 = vpack.c.b16 %v4774, %v4767
    %v5258 = vpack.c.b16 %v4782, %v4775
    %v5259 = vpack.c.b16 %v4783, %v4776
    %v5260 = vpack.c.b16 %v4784, %v4777
    %v5261 = vpack.c.b16 %v4785, %v4778
    %v5262 = vpack.c.b16 %v4786, %v4779
    %v5263 = vpack.c.b16 %v4787, %v4780
    %v5264 = vpack.c.b16 %v4788, %v4781
    %v5265 = vpack.c.b16 %v4796, %v4789
    %v5266 = vpack.c.b16 %v4797, %v4790
    %v5267 = vpack.c.b16 %v4798, %v4791
    %v5268 = vpack.c.b16 %v4799, %v4792
    %v5269 = vpack.c.b16 %v4800, %v4793
    %v5270 = vpack.c.b16 %v4801, %v4794
    %v5271 = vpack.c.b16 %v4802, %v4795
    %v5272 = vpack.c.b16 %v4810, %v4803
    %v5273 = vpack.c.b16 %v4811, %v4804
    %v5274 = vpack.c.b16 %v4812, %v4805
    %v5275 = vpack.c.b16 %v4813, %v4806
    %v5276 = vpack.c.b16 %v4814, %v4807
    %v5277 = vpack.c.b16 %v4815, %v4808
    %v5278 = vpack.c.b16 %v4816, %v4809
    %v5279 = vpack.c.b16 %v4824, %v4817
    %v5280 = vpack.c.b16 %v4825, %v4818
    %v5281 = vpack.c.b16 %v4826, %v4819
    %v5282 = vpack.c.b16 %v4827, %v4820
    %v5283 = vpack.c.b16 %v4828, %v4821
    %v5284 = vpack.c.b16 %v4829, %v4822
    %v5285 = vpack.c.b16 %v4830, %v4823
    %v5286 = vpack.c.b16 %v4838, %v4831
    %v5287 = vpack.c.b16 %v4839, %v4832
    %v5288 = vpack.c.b16 %v4840, %v4833
    %v5289 = vpack.c.b16 %v4841, %v4834
    %v5290 = vpack.c.b16 %v4842, %v4835
    %v5291 = vpack.c.b16 %v4843, %v4836
    %v5292 = vpack.c.b16 %v4844, %v4837
    %5741 = vmatpush.bf16.msra.mxu0 %v4894
    %5742 = vmatpush.bf16.msra.mxu0 %v4887
    %5743 = vmatpush.bf16.msra.mxu0 %v4880
    %5744 = vmatpush.bf16.msra.mxu0 %v4873
    %5745 = vmatpush.bf16.msra.mxu0 %v4866
    %5746 = vmatpush.bf16.msra.mxu0 %v4859
    %5747 = vmatpush.bf16.msra.mxu0 %v4852
    %5748 = vmatpush.bf16.msra.mxu0 %v4845
    %5749 = vmatmul.bf16.gmra.mxu0 %v3414
    %v5750 = vpop.f32.mrf.mxu0
    %v5751 = vadd.f32 %v3423, %v5750
    %v5752 = vpop.f32.mrf.mxu0
    %v5753 = vadd.f32 %v3423, %v5752
    %5754 = vdwg.mxu0
    %5755 = vmatpush.bf16.msra.mxu0 %v4950
    %5756 = vmatpush.bf16.msra.mxu0 %v4943
    %5757 = vmatpush.bf16.msra.mxu0 %v4936
    %5758 = vmatpush.bf16.msra.mxu0 %v4929
    %5759 = vmatpush.bf16.msra.mxu0 %v4922
    %5760 = vmatpush.bf16.msra.mxu0 %v4915
    %5761 = vmatpush.bf16.msra.mxu0 %v4908
    %5762 = vmatpush.bf16.msra.mxu0 %v4901
    %5763 = vmatmul.bf16.gmra.mxu0 %v3415
    %v5764 = vpop.f32.mrf.mxu0
    %v5765 = vadd.f32 %v5751, %v5764
    %v5766 = vpop.f32.mrf.mxu0
    %v5767 = vadd.f32 %v5753, %v5766
    %5768 = vdwg.mxu0
    %5769 = vmatpush.bf16.msra.mxu0 %v5006
    %5770 = vmatpush.bf16.msra.mxu0 %v4999
    %5771 = vmatpush.bf16.msra.mxu0 %v4992
    %5772 = vmatpush.bf16.msra.mxu0 %v4985
    %5773 = vmatpush.bf16.msra.mxu0 %v4978
    %5774 = vmatpush.bf16.msra.mxu0 %v4971
    %5775 = vmatpush.bf16.msra.mxu0 %v4964
    %5776 = vmatpush.bf16.msra.mxu0 %v4957
    %5777 = vmatmul.bf16.gmra.mxu0 %v3416
    %v5778 = vpop.f32.mrf.mxu0
    %v5779 = vadd.f32 %v5765, %v5778
    %v5780 = vpop.f32.mrf.mxu0
    %v5781 = vadd.f32 %v5767, %v5780
    %5782 = vdwg.mxu0
    %5783 = vmatpush.bf16.msra.mxu0 %v5062
    %5784 = vmatpush.bf16.msra.mxu0 %v5055
    %5785 = vmatpush.bf16.msra.mxu0 %v5048
    %5786 = vmatpush.bf16.msra.mxu0 %v5041
    %5787 = vmatpush.bf16.msra.mxu0 %v5034
    %5788 = vmatpush.bf16.msra.mxu0 %v5027
    %5789 = vmatpush.bf16.msra.mxu0 %v5020
    %5790 = vmatpush.bf16.msra.mxu0 %v5013
    %5791 = vmatmul.bf16.gmra.mxu0 %v3417
    %v5792 = vpop.f32.mrf.mxu0
    %v5793 = vadd.f32 %v5779, %v5792
    %v5794 = vpop.f32.mrf.mxu0
    %v5795 = vadd.f32 %v5781, %v5794
    %5796 = vdwg.mxu0
    %5797 = vmatpush.bf16.msra.mxu0 %v5118
    %5798 = vmatpush.bf16.msra.mxu0 %v5111
    %5799 = vmatpush.bf16.msra.mxu0 %v5104
    %5800 = vmatpush.bf16.msra.mxu0 %v5097
    %5801 = vmatpush.bf16.msra.mxu0 %v5090
    %5802 = vmatpush.bf16.msra.mxu0 %v5083
    %5803 = vmatpush.bf16.msra.mxu0 %v5076
    %5804 = vmatpush.bf16.msra.mxu0 %v5069
    %5805 = vmatmul.bf16.gmra.mxu0 %v3418
    %v5806 = vpop.f32.mrf.mxu0
    %v5807 = vadd.f32 %v5793, %v5806
    %v5808 = vpop.f32.mrf.mxu0
    %v5809 = vadd.f32 %v5795, %v5808
    %5810 = vdwg.mxu0
    %5811 = vmatpush.bf16.msra.mxu0 %v5174
    %5812 = vmatpush.bf16.msra.mxu0 %v5167
    %5813 = vmatpush.bf16.msra.mxu0 %v5160
    %5814 = vmatpush.bf16.msra.mxu0 %v5153
    %5815 = vmatpush.bf16.msra.mxu0 %v5146
    %5816 = vmatpush.bf16.msra.mxu0 %v5139
    %5817 = vmatpush.bf16.msra.mxu0 %v5132
    %5818 = vmatpush.bf16.msra.mxu0 %v5125
    %5819 = vmatmul.bf16.gmra.mxu0 %v3419
    %v5820 = vpop.f32.mrf.mxu0
    %v5821 = vadd.f32 %v5807, %v5820
    %v5822 = vpop.f32.mrf.mxu0
    %v5823 = vadd.f32 %v5809, %v5822
    %5824 = vdwg.mxu0
    %5825 = vmatpush.bf16.msra.mxu0 %v5230
    %5826 = vmatpush.bf16.msra.mxu0 %v5223
    %5827 = vmatpush.bf16.msra.mxu0 %v5216
    %5828 = vmatpush.bf16.msra.mxu0 %v5209
    %5829 = vmatpush.bf16.msra.mxu0 %v5202
    %5830 = vmatpush.bf16.msra.mxu0 %v5195
    %5831 = vmatpush.bf16.msra.mxu0 %v5188
    %5832 = vmatpush.bf16.msra.mxu0 %v5181
    %5833 = vmatmul.bf16.gmra.mxu0 %v3420
    %v5834 = vpop.f32.mrf.mxu0
    %v5835 = vadd.f32 %v5821, %v5834
    %v5836 = vpop.f32.mrf.mxu0
    %v5837 = vadd.f32 %v5823, %v5836
    %5838 = vdwg.mxu0
    %5839 = vmatpush.bf16.msra.mxu0 %v5286
    %5840 = vmatpush.bf16.msra.mxu0 %v5279
    %5841 = vmatpush.bf16.msra.mxu0 %v5272
    %5842 = vmatpush.bf16.msra.mxu0 %v5265
    %5843 = vmatpush.bf16.msra.mxu0 %v5258
    %5844 = vmatpush.bf16.msra.mxu0 %v5251
    %5845 = vmatpush.bf16.msra.mxu0 %v5244
    %5846 = vmatpush.bf16.msra.mxu0 %v5237
    %5847 = vmatmul.bf16.gmra.mxu0 %v3421
    %v5848 = vpop.f32.mrf.mxu0
    %v5849 = vadd.f32 %v5835, %v5848
    %v5850 = vpop.f32.mrf.mxu0
    %v5851 = vadd.f32 %v5837, %v5850
    %5852 = vdwg.mxu0
    %5853 = vmatpush.bf16.msra.mxu0 %v4895
    %5854 = vmatpush.bf16.msra.mxu0 %v4888
    %5855 = vmatpush.bf16.msra.mxu0 %v4881
    %5856 = vmatpush.bf16.msra.mxu0 %v4874
    %5857 = vmatpush.bf16.msra.mxu0 %v4867
    %5858 = vmatpush.bf16.msra.mxu0 %v4860
    %5859 = vmatpush.bf16.msra.mxu0 %v4853
    %5860 = vmatpush.bf16.msra.mxu0 %v4846
    %5861 = vmatmul.bf16.gmra.mxu0 %v3414
    %v5862 = vpop.f32.mrf.mxu0
    %v5863 = vadd.f32 %v3424, %v5862
    %v5864 = vpop.f32.mrf.mxu0
    %v5865 = vadd.f32 %v3424, %v5864
    %5866 = vdwg.mxu0
    %5867 = vmatpush.bf16.msra.mxu0 %v4951
    %5868 = vmatpush.bf16.msra.mxu0 %v4944
    %5869 = vmatpush.bf16.msra.mxu0 %v4937
    %5870 = vmatpush.bf16.msra.mxu0 %v4930
    %5871 = vmatpush.bf16.msra.mxu0 %v4923
    %5872 = vmatpush.bf16.msra.mxu0 %v4916
    %5873 = vmatpush.bf16.msra.mxu0 %v4909
    %5874 = vmatpush.bf16.msra.mxu0 %v4902
    %5875 = vmatmul.bf16.gmra.mxu0 %v3415
    %v5876 = vpop.f32.mrf.mxu0
    %v5877 = vadd.f32 %v5863, %v5876
    %v5878 = vpop.f32.mrf.mxu0
    %v5879 = vadd.f32 %v5865, %v5878
    %5880 = vdwg.mxu0
    %5881 = vmatpush.bf16.msra.mxu0 %v5007
    %5882 = vmatpush.bf16.msra.mxu0 %v5000
    %5883 = vmatpush.bf16.msra.mxu0 %v4993
    %5884 = vmatpush.bf16.msra.mxu0 %v4986
    %5885 = vmatpush.bf16.msra.mxu0 %v4979
    %5886 = vmatpush.bf16.msra.mxu0 %v4972
    %5887 = vmatpush.bf16.msra.mxu0 %v4965
    %5888 = vmatpush.bf16.msra.mxu0 %v4958
    %5889 = vmatmul.bf16.gmra.mxu0 %v3416
    %v5890 = vpop.f32.mrf.mxu0
    %v5891 = vadd.f32 %v5877, %v5890
    %v5892 = vpop.f32.mrf.mxu0
    %v5893 = vadd.f32 %v5879, %v5892
    %5894 = vdwg.mxu0
    %5895 = vmatpush.bf16.msra.mxu0 %v5063
    %5896 = vmatpush.bf16.msra.mxu0 %v5056
    %5897 = vmatpush.bf16.msra.mxu0 %v5049
    %5898 = vmatpush.bf16.msra.mxu0 %v5042
    %5899 = vmatpush.bf16.msra.mxu0 %v5035
    %5900 = vmatpush.bf16.msra.mxu0 %v5028
    %5901 = vmatpush.bf16.msra.mxu0 %v5021
    %5902 = vmatpush.bf16.msra.mxu0 %v5014
    %5903 = vmatmul.bf16.gmra.mxu0 %v3417
    %v5904 = vpop.f32.mrf.mxu0
    %v5905 = vadd.f32 %v5891, %v5904
    %v5906 = vpop.f32.mrf.mxu0
    %v5907 = vadd.f32 %v5893, %v5906
    %5908 = vdwg.mxu0
    %5909 = vmatpush.bf16.msra.mxu0 %v5119
    %5910 = vmatpush.bf16.msra.mxu0 %v5112
    %5911 = vmatpush.bf16.msra.mxu0 %v5105
    %5912 = vmatpush.bf16.msra.mxu0 %v5098
    %5913 = vmatpush.bf16.msra.mxu0 %v5091
    %5914 = vmatpush.bf16.msra.mxu0 %v5084
    %5915 = vmatpush.bf16.msra.mxu0 %v5077
    %5916 = vmatpush.bf16.msra.mxu0 %v5070
    %5917 = vmatmul.bf16.gmra.mxu0 %v3418
    %v5918 = vpop.f32.mrf.mxu0
    %v5919 = vadd.f32 %v5905, %v5918
    %v5920 = vpop.f32.mrf.mxu0
    %v5921 = vadd.f32 %v5907, %v5920
    %5922 = vdwg.mxu0
    %5923 = vmatpush.bf16.msra.mxu0 %v5175
    %5924 = vmatpush.bf16.msra.mxu0 %v5168
    %5925 = vmatpush.bf16.msra.mxu0 %v5161
    %5926 = vmatpush.bf16.msra.mxu0 %v5154
    %5927 = vmatpush.bf16.msra.mxu0 %v5147
    %5928 = vmatpush.bf16.msra.mxu0 %v5140
    %5929 = vmatpush.bf16.msra.mxu0 %v5133
    %5930 = vmatpush.bf16.msra.mxu0 %v5126
    %5931 = vmatmul.bf16.gmra.mxu0 %v3419
    %v5932 = vpop.f32.mrf.mxu0
    %v5933 = vadd.f32 %v5919, %v5932
    %v5934 = vpop.f32.mrf.mxu0
    %v5935 = vadd.f32 %v5921, %v5934
    %5936 = vdwg.mxu0
    %5937 = vmatpush.bf16.msra.mxu0 %v5231
    %5938 = vmatpush.bf16.msra.mxu0 %v5224
    %5939 = vmatpush.bf16.msra.mxu0 %v5217
    %5940 = vmatpush.bf16.msra.mxu0 %v5210
    %5941 = vmatpush.bf16.msra.mxu0 %v5203
    %5942 = vmatpush.bf16.msra.mxu0 %v5196
    %5943 = vmatpush.bf16.msra.mxu0 %v5189
    %5944 = vmatpush.bf16.msra.mxu0 %v5182
    %5945 = vmatmul.bf16.gmra.mxu0 %v3420
    %v5946 = vpop.f32.mrf.mxu0
    %v5947 = vadd.f32 %v5933, %v5946
    %v5948 = vpop.f32.mrf.mxu0
    %v5949 = vadd.f32 %v5935, %v5948
    %5950 = vdwg.mxu0
    %5951 = vmatpush.bf16.msra.mxu0 %v5287
    %5952 = vmatpush.bf16.msra.mxu0 %v5280
    %5953 = vmatpush.bf16.msra.mxu0 %v5273
    %5954 = vmatpush.bf16.msra.mxu0 %v5266
    %5955 = vmatpush.bf16.msra.mxu0 %v5259
    %5956 = vmatpush.bf16.msra.mxu0 %v5252
    %5957 = vmatpush.bf16.msra.mxu0 %v5245
    %5958 = vmatpush.bf16.msra.mxu0 %v5238
    %5959 = vmatmul.bf16.gmra.mxu0 %v3421
    %v5960 = vpop.f32.mrf.mxu0
    %v5961 = vadd.f32 %v5947, %v5960
    %v5962 = vpop.f32.mrf.mxu0
    %v5963 = vadd.f32 %v5949, %v5962
    %5964 = vdwg.mxu0
    %5965 = vmatpush.bf16.msra.mxu0 %v4896
    %5966 = vmatpush.bf16.msra.mxu0 %v4889
    %5967 = vmatpush.bf16.msra.mxu0 %v4882
    %5968 = vmatpush.bf16.msra.mxu0 %v4875
    %5969 = vmatpush.bf16.msra.mxu0 %v4868
    %5970 = vmatpush.bf16.msra.mxu0 %v4861
    %5971 = vmatpush.bf16.msra.mxu0 %v4854
    %5972 = vmatpush.bf16.msra.mxu0 %v4847
    %5973 = vmatmul.bf16.gmra.mxu0 %v3414
    %v5974 = vpop.f32.mrf.mxu0
    %v5975 = vadd.f32 %v3425, %v5974
    %v5976 = vpop.f32.mrf.mxu0
    %v5977 = vadd.f32 %v3425, %v5976
    %5978 = vdwg.mxu0
    %5979 = vmatpush.bf16.msra.mxu0 %v4952
    %5980 = vmatpush.bf16.msra.mxu0 %v4945
    %5981 = vmatpush.bf16.msra.mxu0 %v4938
    %5982 = vmatpush.bf16.msra.mxu0 %v4931
    %5983 = vmatpush.bf16.msra.mxu0 %v4924
    %5984 = vmatpush.bf16.msra.mxu0 %v4917
    %5985 = vmatpush.bf16.msra.mxu0 %v4910
    %5986 = vmatpush.bf16.msra.mxu0 %v4903
    %5987 = vmatmul.bf16.gmra.mxu0 %v3415
    %v5988 = vpop.f32.mrf.mxu0
    %v5989 = vadd.f32 %v5975, %v5988
    %v5990 = vpop.f32.mrf.mxu0
    %v5991 = vadd.f32 %v5977, %v5990
    %5992 = vdwg.mxu0
    %5993 = vmatpush.bf16.msra.mxu0 %v5008
    %5994 = vmatpush.bf16.msra.mxu0 %v5001
    %5995 = vmatpush.bf16.msra.mxu0 %v4994
    %5996 = vmatpush.bf16.msra.mxu0 %v4987
    %5997 = vmatpush.bf16.msra.mxu0 %v4980
    %5998 = vmatpush.bf16.msra.mxu0 %v4973
    %5999 = vmatpush.bf16.msra.mxu0 %v4966
    %6000 = vmatpush.bf16.msra.mxu0 %v4959
    %6001 = vmatmul.bf16.gmra.mxu0 %v3416
    %v6002 = vpop.f32.mrf.mxu0
    %v6003 = vadd.f32 %v5989, %v6002
    %v6004 = vpop.f32.mrf.mxu0
    %v6005 = vadd.f32 %v5991, %v6004
    %6006 = vdwg.mxu0
    %6007 = vmatpush.bf16.msra.mxu0 %v5064
    %6008 = vmatpush.bf16.msra.mxu0 %v5057
    %6009 = vmatpush.bf16.msra.mxu0 %v5050
    %6010 = vmatpush.bf16.msra.mxu0 %v5043
    %6011 = vmatpush.bf16.msra.mxu0 %v5036
    %6012 = vmatpush.bf16.msra.mxu0 %v5029
    %6013 = vmatpush.bf16.msra.mxu0 %v5022
    %6014 = vmatpush.bf16.msra.mxu0 %v5015
    %6015 = vmatmul.bf16.gmra.mxu0 %v3417
    %v6016 = vpop.f32.mrf.mxu0
    %v6017 = vadd.f32 %v6003, %v6016
    %v6018 = vpop.f32.mrf.mxu0
    %v6019 = vadd.f32 %v6005, %v6018
    %6020 = vdwg.mxu0
    %6021 = vmatpush.bf16.msra.mxu0 %v5120
    %6022 = vmatpush.bf16.msra.mxu0 %v5113
    %6023 = vmatpush.bf16.msra.mxu0 %v5106
    %6024 = vmatpush.bf16.msra.mxu0 %v5099
    %6025 = vmatpush.bf16.msra.mxu0 %v5092
    %6026 = vmatpush.bf16.msra.mxu0 %v5085
    %6027 = vmatpush.bf16.msra.mxu0 %v5078
    %6028 = vmatpush.bf16.msra.mxu0 %v5071
    %6029 = vmatmul.bf16.gmra.mxu0 %v3418
    %v6030 = vpop.f32.mrf.mxu0
    %v6031 = vadd.f32 %v6017, %v6030
    %v6032 = vpop.f32.mrf.mxu0
    %v6033 = vadd.f32 %v6019, %v6032
    %6034 = vdwg.mxu0
    %6035 = vmatpush.bf16.msra.mxu0 %v5176
    %6036 = vmatpush.bf16.msra.mxu0 %v5169
    %6037 = vmatpush.bf16.msra.mxu0 %v5162
    %6038 = vmatpush.bf16.msra.mxu0 %v5155
    %6039 = vmatpush.bf16.msra.mxu0 %v5148
    %6040 = vmatpush.bf16.msra.mxu0 %v5141
    %6041 = vmatpush.bf16.msra.mxu0 %v5134
    %6042 = vmatpush.bf16.msra.mxu0 %v5127
    %6043 = vmatmul.bf16.gmra.mxu0 %v3419
    %v6044 = vpop.f32.mrf.mxu0
    %v6045 = vadd.f32 %v6031, %v6044
    %v6046 = vpop.f32.mrf.mxu0
    %v6047 = vadd.f32 %v6033, %v6046
    %6048 = vdwg.mxu0
    %6049 = vmatpush.bf16.msra.mxu0 %v5232
    %6050 = vmatpush.bf16.msra.mxu0 %v5225
    %6051 = vmatpush.bf16.msra.mxu0 %v5218
    %6052 = vmatpush.bf16.msra.mxu0 %v5211
    %6053 = vmatpush.bf16.msra.mxu0 %v5204
    %6054 = vmatpush.bf16.msra.mxu0 %v5197
    %6055 = vmatpush.bf16.msra.mxu0 %v5190
    %6056 = vmatpush.bf16.msra.mxu0 %v5183
    %6057 = vmatmul.bf16.gmra.mxu0 %v3420
    %v6058 = vpop.f32.mrf.mxu0
    %v6059 = vadd.f32 %v6045, %v6058
    %v6060 = vpop.f32.mrf.mxu0
    %v6061 = vadd.f32 %v6047, %v6060
    %6062 = vdwg.mxu0
    %6063 = vmatpush.bf16.msra.mxu0 %v5288
    %6064 = vmatpush.bf16.msra.mxu0 %v5281
    %6065 = vmatpush.bf16.msra.mxu0 %v5274
    %6066 = vmatpush.bf16.msra.mxu0 %v5267
    %6067 = vmatpush.bf16.msra.mxu0 %v5260
    %6068 = vmatpush.bf16.msra.mxu0 %v5253
    %6069 = vmatpush.bf16.msra.mxu0 %v5246
    %6070 = vmatpush.bf16.msra.mxu0 %v5239
    %6071 = vmatmul.bf16.gmra.mxu0 %v3421
    %v6072 = vpop.f32.mrf.mxu0
    %v6073 = vadd.f32 %v6059, %v6072
    %v6074 = vpop.f32.mrf.mxu0
    %v6075 = vadd.f32 %v6061, %v6074
    %6076 = vdwg.mxu0
    %6077 = vmatpush.bf16.msra.mxu0 %v4897
    %6078 = vmatpush.bf16.msra.mxu0 %v4890
    %6079 = vmatpush.bf16.msra.mxu0 %v4883
    %6080 = vmatpush.bf16.msra.mxu0 %v4876
    %6081 = vmatpush.bf16.msra.mxu0 %v4869
    %6082 = vmatpush.bf16.msra.mxu0 %v4862
    %6083 = vmatpush.bf16.msra.mxu0 %v4855
    %6084 = vmatpush.bf16.msra.mxu0 %v4848
    %6085 = vmatmul.bf16.gmra.mxu0 %v3414
    %v6086 = vpop.f32.mrf.mxu0
    %v6087 = vadd.f32 %v3426, %v6086
    %v6088 = vpop.f32.mrf.mxu0
    %v6089 = vadd.f32 %v3426, %v6088
    %6090 = vdwg.mxu0
    %6091 = vmatpush.bf16.msra.mxu0 %v4953
    %6092 = vmatpush.bf16.msra.mxu0 %v4946
    %6093 = vmatpush.bf16.msra.mxu0 %v4939
    %6094 = vmatpush.bf16.msra.mxu0 %v4932
    %6095 = vmatpush.bf16.msra.mxu0 %v4925
    %6096 = vmatpush.bf16.msra.mxu0 %v4918
    %6097 = vmatpush.bf16.msra.mxu0 %v4911
    %6098 = vmatpush.bf16.msra.mxu0 %v4904
    %6099 = vmatmul.bf16.gmra.mxu0 %v3415
    %v6100 = vpop.f32.mrf.mxu0
    %v6101 = vadd.f32 %v6087, %v6100
    %v6102 = vpop.f32.mrf.mxu0
    %v6103 = vadd.f32 %v6089, %v6102
    %6104 = vdwg.mxu0
    %6105 = vmatpush.bf16.msra.mxu0 %v5009
    %6106 = vmatpush.bf16.msra.mxu0 %v5002
    %6107 = vmatpush.bf16.msra.mxu0 %v4995
    %6108 = vmatpush.bf16.msra.mxu0 %v4988
    %6109 = vmatpush.bf16.msra.mxu0 %v4981
    %6110 = vmatpush.bf16.msra.mxu0 %v4974
    %6111 = vmatpush.bf16.msra.mxu0 %v4967
    %6112 = vmatpush.bf16.msra.mxu0 %v4960
    %6113 = vmatmul.bf16.gmra.mxu0 %v3416
    %v6114 = vpop.f32.mrf.mxu0
    %v6115 = vadd.f32 %v6101, %v6114
    %v6116 = vpop.f32.mrf.mxu0
    %v6117 = vadd.f32 %v6103, %v6116
    %6118 = vdwg.mxu0
    %6119 = vmatpush.bf16.msra.mxu0 %v5065
    %6120 = vmatpush.bf16.msra.mxu0 %v5058
    %6121 = vmatpush.bf16.msra.mxu0 %v5051
    %6122 = vmatpush.bf16.msra.mxu0 %v5044
    %6123 = vmatpush.bf16.msra.mxu0 %v5037
    %6124 = vmatpush.bf16.msra.mxu0 %v5030
    %6125 = vmatpush.bf16.msra.mxu0 %v5023
    %6126 = vmatpush.bf16.msra.mxu0 %v5016
    %6127 = vmatmul.bf16.gmra.mxu0 %v3417
    %v6128 = vpop.f32.mrf.mxu0
    %v6129 = vadd.f32 %v6115, %v6128
    %v6130 = vpop.f32.mrf.mxu0
    %v6131 = vadd.f32 %v6117, %v6130
    %6132 = vdwg.mxu0
    %6133 = vmatpush.bf16.msra.mxu0 %v5121
    %6134 = vmatpush.bf16.msra.mxu0 %v5114
    %6135 = vmatpush.bf16.msra.mxu0 %v5107
    %6136 = vmatpush.bf16.msra.mxu0 %v5100
    %6137 = vmatpush.bf16.msra.mxu0 %v5093
    %6138 = vmatpush.bf16.msra.mxu0 %v5086
    %6139 = vmatpush.bf16.msra.mxu0 %v5079
    %6140 = vmatpush.bf16.msra.mxu0 %v5072
    %6141 = vmatmul.bf16.gmra.mxu0 %v3418
    %v6142 = vpop.f32.mrf.mxu0
    %v6143 = vadd.f32 %v6129, %v6142
    %v6144 = vpop.f32.mrf.mxu0
    %v6145 = vadd.f32 %v6131, %v6144
    %6146 = vdwg.mxu0
    %6147 = vmatpush.bf16.msra.mxu0 %v5177
    %6148 = vmatpush.bf16.msra.mxu0 %v5170
    %6149 = vmatpush.bf16.msra.mxu0 %v5163
    %6150 = vmatpush.bf16.msra.mxu0 %v5156
    %6151 = vmatpush.bf16.msra.mxu0 %v5149
    %6152 = vmatpush.bf16.msra.mxu0 %v5142
    %6153 = vmatpush.bf16.msra.mxu0 %v5135
    %6154 = vmatpush.bf16.msra.mxu0 %v5128
    %6155 = vmatmul.bf16.gmra.mxu0 %v3419
    %v6156 = vpop.f32.mrf.mxu0
    %v6157 = vadd.f32 %v6143, %v6156
    %v6158 = vpop.f32.mrf.mxu0
    %v6159 = vadd.f32 %v6145, %v6158
    %6160 = vdwg.mxu0
    %6161 = vmatpush.bf16.msra.mxu0 %v5233
    %6162 = vmatpush.bf16.msra.mxu0 %v5226
    %6163 = vmatpush.bf16.msra.mxu0 %v5219
    %6164 = vmatpush.bf16.msra.mxu0 %v5212
    %6165 = vmatpush.bf16.msra.mxu0 %v5205
    %6166 = vmatpush.bf16.msra.mxu0 %v5198
    %6167 = vmatpush.bf16.msra.mxu0 %v5191
    %6168 = vmatpush.bf16.msra.mxu0 %v5184
    %6169 = vmatmul.bf16.gmra.mxu0 %v3420
    %v6170 = vpop.f32.mrf.mxu0
    %v6171 = vadd.f32 %v6157, %v6170
    %v6172 = vpop.f32.mrf.mxu0
    %v6173 = vadd.f32 %v6159, %v6172
    %6174 = vdwg.mxu0
    %6175 = vmatpush.bf16.msra.mxu0 %v5289
    %6176 = vmatpush.bf16.msra.mxu0 %v5282
    %6177 = vmatpush.bf16.msra.mxu0 %v5275
    %6178 = vmatpush.bf16.msra.mxu0 %v5268
    %6179 = vmatpush.bf16.msra.mxu0 %v5261
    %6180 = vmatpush.bf16.msra.mxu0 %v5254
    %6181 = vmatpush.bf16.msra.mxu0 %v5247
    %6182 = vmatpush.bf16.msra.mxu0 %v5240
    %6183 = vmatmul.bf16.gmra.mxu0 %v3421
    %v6184 = vpop.f32.mrf.mxu0
    %v6185 = vadd.f32 %v6171, %v6184
    %v6186 = vpop.f32.mrf.mxu0
    %v6187 = vadd.f32 %v6173, %v6186
    %6188 = vdwg.mxu0
    %6189 = vmatpush.bf16.msra.mxu0 %v4898
    %6190 = vmatpush.bf16.msra.mxu0 %v4891
    %6191 = vmatpush.bf16.msra.mxu0 %v4884
    %6192 = vmatpush.bf16.msra.mxu0 %v4877
    %6193 = vmatpush.bf16.msra.mxu0 %v4870
    %6194 = vmatpush.bf16.msra.mxu0 %v4863
    %6195 = vmatpush.bf16.msra.mxu0 %v4856
    %6196 = vmatpush.bf16.msra.mxu0 %v4849
    %6197 = vmatmul.bf16.gmra.mxu0 %v3414
    %v6198 = vpop.f32.mrf.mxu0
    %v6199 = vadd.f32 %v3427, %v6198
    %v6200 = vpop.f32.mrf.mxu0
    %v6201 = vadd.f32 %v3427, %v6200
    %6202 = vdwg.mxu0
    %6203 = vmatpush.bf16.msra.mxu0 %v4954
    %6204 = vmatpush.bf16.msra.mxu0 %v4947
    %6205 = vmatpush.bf16.msra.mxu0 %v4940
    %6206 = vmatpush.bf16.msra.mxu0 %v4933
    %6207 = vmatpush.bf16.msra.mxu0 %v4926
    %6208 = vmatpush.bf16.msra.mxu0 %v4919
    %6209 = vmatpush.bf16.msra.mxu0 %v4912
    %6210 = vmatpush.bf16.msra.mxu0 %v4905
    %6211 = vmatmul.bf16.gmra.mxu0 %v3415
    %v6212 = vpop.f32.mrf.mxu0
    %v6213 = vadd.f32 %v6199, %v6212
    %v6214 = vpop.f32.mrf.mxu0
    %v6215 = vadd.f32 %v6201, %v6214
    %6216 = vdwg.mxu0
    %6217 = vmatpush.bf16.msra.mxu0 %v5010
    %6218 = vmatpush.bf16.msra.mxu0 %v5003
    %6219 = vmatpush.bf16.msra.mxu0 %v4996
    %6220 = vmatpush.bf16.msra.mxu0 %v4989
    %6221 = vmatpush.bf16.msra.mxu0 %v4982
    %6222 = vmatpush.bf16.msra.mxu0 %v4975
    %6223 = vmatpush.bf16.msra.mxu0 %v4968
    %6224 = vmatpush.bf16.msra.mxu0 %v4961
    %6225 = vmatmul.bf16.gmra.mxu0 %v3416
    %v6226 = vpop.f32.mrf.mxu0
    %v6227 = vadd.f32 %v6213, %v6226
    %v6228 = vpop.f32.mrf.mxu0
    %v6229 = vadd.f32 %v6215, %v6228
    %6230 = vdwg.mxu0
    %6231 = vmatpush.bf16.msra.mxu0 %v5066
    %6232 = vmatpush.bf16.msra.mxu0 %v5059
    %6233 = vmatpush.bf16.msra.mxu0 %v5052
    %6234 = vmatpush.bf16.msra.mxu0 %v5045
    %6235 = vmatpush.bf16.msra.mxu0 %v5038
    %6236 = vmatpush.bf16.msra.mxu0 %v5031
    %6237 = vmatpush.bf16.msra.mxu0 %v5024
    %6238 = vmatpush.bf16.msra.mxu0 %v5017
    %6239 = vmatmul.bf16.gmra.mxu0 %v3417
    %v6240 = vpop.f32.mrf.mxu0
    %v6241 = vadd.f32 %v6227, %v6240
    %v6242 = vpop.f32.mrf.mxu0
    %v6243 = vadd.f32 %v6229, %v6242
    %6244 = vdwg.mxu0
    %6245 = vmatpush.bf16.msra.mxu0 %v5122
    %6246 = vmatpush.bf16.msra.mxu0 %v5115
    %6247 = vmatpush.bf16.msra.mxu0 %v5108
    %6248 = vmatpush.bf16.msra.mxu0 %v5101
    %6249 = vmatpush.bf16.msra.mxu0 %v5094
    %6250 = vmatpush.bf16.msra.mxu0 %v5087
    %6251 = vmatpush.bf16.msra.mxu0 %v5080
    %6252 = vmatpush.bf16.msra.mxu0 %v5073
    %6253 = vmatmul.bf16.gmra.mxu0 %v3418
    %v6254 = vpop.f32.mrf.mxu0
    %v6255 = vadd.f32 %v6241, %v6254
    %v6256 = vpop.f32.mrf.mxu0
    %v6257 = vadd.f32 %v6243, %v6256
    %6258 = vdwg.mxu0
    %6259 = vmatpush.bf16.msra.mxu0 %v5178
    %6260 = vmatpush.bf16.msra.mxu0 %v5171
    %6261 = vmatpush.bf16.msra.mxu0 %v5164
    %6262 = vmatpush.bf16.msra.mxu0 %v5157
    %6263 = vmatpush.bf16.msra.mxu0 %v5150
    %6264 = vmatpush.bf16.msra.mxu0 %v5143
    %6265 = vmatpush.bf16.msra.mxu0 %v5136
    %6266 = vmatpush.bf16.msra.mxu0 %v5129
    %6267 = vmatmul.bf16.gmra.mxu0 %v3419
    %v6268 = vpop.f32.mrf.mxu0
    %v6269 = vadd.f32 %v6255, %v6268
    %v6270 = vpop.f32.mrf.mxu0
    %v6271 = vadd.f32 %v6257, %v6270
    %6272 = vdwg.mxu0
    %6273 = vmatpush.bf16.msra.mxu0 %v5234
    %6274 = vmatpush.bf16.msra.mxu0 %v5227
    %6275 = vmatpush.bf16.msra.mxu0 %v5220
    %6276 = vmatpush.bf16.msra.mxu0 %v5213
    %6277 = vmatpush.bf16.msra.mxu0 %v5206
    %6278 = vmatpush.bf16.msra.mxu0 %v5199
    %6279 = vmatpush.bf16.msra.mxu0 %v5192
    %6280 = vmatpush.bf16.msra.mxu0 %v5185
    %6281 = vmatmul.bf16.gmra.mxu0 %v3420
    %v6282 = vpop.f32.mrf.mxu0
    %v6283 = vadd.f32 %v6269, %v6282
    %v6284 = vpop.f32.mrf.mxu0
    %v6285 = vadd.f32 %v6271, %v6284
    %6286 = vdwg.mxu0
    %6287 = vmatpush.bf16.msra.mxu0 %v5290
    %6288 = vmatpush.bf16.msra.mxu0 %v5283
    %6289 = vmatpush.bf16.msra.mxu0 %v5276
    %6290 = vmatpush.bf16.msra.mxu0 %v5269
    %6291 = vmatpush.bf16.msra.mxu0 %v5262
    %6292 = vmatpush.bf16.msra.mxu0 %v5255
    %6293 = vmatpush.bf16.msra.mxu0 %v5248
    %6294 = vmatpush.bf16.msra.mxu0 %v5241
    %6295 = vmatmul.bf16.gmra.mxu0 %v3421
    %v6296 = vpop.f32.mrf.mxu0
    %v6297 = vadd.f32 %v6283, %v6296
    %v6298 = vpop.f32.mrf.mxu0
    %v6299 = vadd.f32 %v6285, %v6298
    %6300 = vdwg.mxu0
    %6301 = vmatpush.bf16.msra.mxu0 %v4899
    %6302 = vmatpush.bf16.msra.mxu0 %v4892
    %6303 = vmatpush.bf16.msra.mxu0 %v4885
    %6304 = vmatpush.bf16.msra.mxu0 %v4878
    %6305 = vmatpush.bf16.msra.mxu0 %v4871
    %6306 = vmatpush.bf16.msra.mxu0 %v4864
    %6307 = vmatpush.bf16.msra.mxu0 %v4857
    %6308 = vmatpush.bf16.msra.mxu0 %v4850
    %6309 = vmatmul.bf16.gmra.mxu0 %v3414
    %v6310 = vpop.f32.mrf.mxu0
    %v6311 = vadd.f32 %v3428, %v6310
    %v6312 = vpop.f32.mrf.mxu0
    %v6313 = vadd.f32 %v3428, %v6312
    %6314 = vdwg.mxu0
    %6315 = vmatpush.bf16.msra.mxu0 %v4955
    %6316 = vmatpush.bf16.msra.mxu0 %v4948
    %6317 = vmatpush.bf16.msra.mxu0 %v4941
    %6318 = vmatpush.bf16.msra.mxu0 %v4934
    %6319 = vmatpush.bf16.msra.mxu0 %v4927
    %6320 = vmatpush.bf16.msra.mxu0 %v4920
    %6321 = vmatpush.bf16.msra.mxu0 %v4913
    %6322 = vmatpush.bf16.msra.mxu0 %v4906
    %6323 = vmatmul.bf16.gmra.mxu0 %v3415
    %v6324 = vpop.f32.mrf.mxu0
    %v6325 = vadd.f32 %v6311, %v6324
    %v6326 = vpop.f32.mrf.mxu0
    %v6327 = vadd.f32 %v6313, %v6326
    %6328 = vdwg.mxu0
    %6329 = vmatpush.bf16.msra.mxu0 %v5011
    %6330 = vmatpush.bf16.msra.mxu0 %v5004
    %6331 = vmatpush.bf16.msra.mxu0 %v4997
    %6332 = vmatpush.bf16.msra.mxu0 %v4990
    %6333 = vmatpush.bf16.msra.mxu0 %v4983
    %6334 = vmatpush.bf16.msra.mxu0 %v4976
    %6335 = vmatpush.bf16.msra.mxu0 %v4969
    %6336 = vmatpush.bf16.msra.mxu0 %v4962
    %6337 = vmatmul.bf16.gmra.mxu0 %v3416
    %v6338 = vpop.f32.mrf.mxu0
    %v6339 = vadd.f32 %v6325, %v6338
    %v6340 = vpop.f32.mrf.mxu0
    %v6341 = vadd.f32 %v6327, %v6340
    %6342 = vdwg.mxu0
    %6343 = vmatpush.bf16.msra.mxu0 %v5067
    %6344 = vmatpush.bf16.msra.mxu0 %v5060
    %6345 = vmatpush.bf16.msra.mxu0 %v5053
    %6346 = vmatpush.bf16.msra.mxu0 %v5046
    %6347 = vmatpush.bf16.msra.mxu0 %v5039
    %6348 = vmatpush.bf16.msra.mxu0 %v5032
    %6349 = vmatpush.bf16.msra.mxu0 %v5025
    %6350 = vmatpush.bf16.msra.mxu0 %v5018
    %6351 = vmatmul.bf16.gmra.mxu0 %v3417
    %v6352 = vpop.f32.mrf.mxu0
    %v6353 = vadd.f32 %v6339, %v6352
    %v6354 = vpop.f32.mrf.mxu0
    %v6355 = vadd.f32 %v6341, %v6354
    %6356 = vdwg.mxu0
    %6357 = vmatpush.bf16.msra.mxu0 %v5123
    %6358 = vmatpush.bf16.msra.mxu0 %v5116
    %6359 = vmatpush.bf16.msra.mxu0 %v5109
    %6360 = vmatpush.bf16.msra.mxu0 %v5102
    %6361 = vmatpush.bf16.msra.mxu0 %v5095
    %6362 = vmatpush.bf16.msra.mxu0 %v5088
    %6363 = vmatpush.bf16.msra.mxu0 %v5081
    %6364 = vmatpush.bf16.msra.mxu0 %v5074
    %6365 = vmatmul.bf16.gmra.mxu0 %v3418
    %v6366 = vpop.f32.mrf.mxu0
    %v6367 = vadd.f32 %v6353, %v6366
    %v6368 = vpop.f32.mrf.mxu0
    %v6369 = vadd.f32 %v6355, %v6368
    %6370 = vdwg.mxu0
    %6371 = vmatpush.bf16.msra.mxu0 %v5179
    %6372 = vmatpush.bf16.msra.mxu0 %v5172
    %6373 = vmatpush.bf16.msra.mxu0 %v5165
    %6374 = vmatpush.bf16.msra.mxu0 %v5158
    %6375 = vmatpush.bf16.msra.mxu0 %v5151
    %6376 = vmatpush.bf16.msra.mxu0 %v5144
    %6377 = vmatpush.bf16.msra.mxu0 %v5137
    %6378 = vmatpush.bf16.msra.mxu0 %v5130
    %6379 = vmatmul.bf16.gmra.mxu0 %v3419
    %v6380 = vpop.f32.mrf.mxu0
    %v6381 = vadd.f32 %v6367, %v6380
    %v6382 = vpop.f32.mrf.mxu0
    %v6383 = vadd.f32 %v6369, %v6382
    %6384 = vdwg.mxu0
    %6385 = vmatpush.bf16.msra.mxu0 %v5235
    %6386 = vmatpush.bf16.msra.mxu0 %v5228
    %6387 = vmatpush.bf16.msra.mxu0 %v5221
    %6388 = vmatpush.bf16.msra.mxu0 %v5214
    %6389 = vmatpush.bf16.msra.mxu0 %v5207
    %6390 = vmatpush.bf16.msra.mxu0 %v5200
    %6391 = vmatpush.bf16.msra.mxu0 %v5193
    %6392 = vmatpush.bf16.msra.mxu0 %v5186
    %6393 = vmatmul.bf16.gmra.mxu0 %v3420
    %v6394 = vpop.f32.mrf.mxu0
    %v6395 = vadd.f32 %v6381, %v6394
    %v6396 = vpop.f32.mrf.mxu0
    %v6397 = vadd.f32 %v6383, %v6396
    %6398 = vdwg.mxu0
    %6399 = vmatpush.bf16.msra.mxu0 %v5291
    %6400 = vmatpush.bf16.msra.mxu0 %v5284
    %6401 = vmatpush.bf16.msra.mxu0 %v5277
    %6402 = vmatpush.bf16.msra.mxu0 %v5270
    %6403 = vmatpush.bf16.msra.mxu0 %v5263
    %6404 = vmatpush.bf16.msra.mxu0 %v5256
    %6405 = vmatpush.bf16.msra.mxu0 %v5249
    %6406 = vmatpush.bf16.msra.mxu0 %v5242
    %6407 = vmatmul.bf16.gmra.mxu0 %v3421
    %v6408 = vpop.f32.mrf.mxu0
    %v6409 = vadd.f32 %v6395, %v6408
    %v6410 = vpop.f32.mrf.mxu0
    %v6411 = vadd.f32 %v6397, %v6410
    %6412 = vdwg.mxu0
    %6413 = vmatpush.bf16.msra.mxu0 %v4900
    %6414 = vmatpush.bf16.msra.mxu0 %v4893
    %6415 = vmatpush.bf16.msra.mxu0 %v4886
    %6416 = vmatpush.bf16.msra.mxu0 %v4879
    %6417 = vmatpush.bf16.msra.mxu0 %v4872
    %6418 = vmatpush.bf16.msra.mxu0 %v4865
    %6419 = vmatpush.bf16.msra.mxu0 %v4858
    %6420 = vmatpush.bf16.msra.mxu0 %v4851
    %6421 = vmatmul.bf16.gmra.mxu0 %v3414
    %v6422 = vpop.f32.mrf.mxu0
    %v6423 = vadd.f32 %v3429, %v6422
    %v6424 = vpop.f32.mrf.mxu0
    %v6425 = vadd.f32 %v3429, %v6424
    %6426 = vdwg.mxu0
    %6427 = vmatpush.bf16.msra.mxu0 %v4956
    %6428 = vmatpush.bf16.msra.mxu0 %v4949
    %6429 = vmatpush.bf16.msra.mxu0 %v4942
    %6430 = vmatpush.bf16.msra.mxu0 %v4935
    %6431 = vmatpush.bf16.msra.mxu0 %v4928
    %6432 = vmatpush.bf16.msra.mxu0 %v4921
    %6433 = vmatpush.bf16.msra.mxu0 %v4914
    %6434 = vmatpush.bf16.msra.mxu0 %v4907
    %6435 = vmatmul.bf16.gmra.mxu0 %v3415
    %v6436 = vpop.f32.mrf.mxu0
    %v6437 = vadd.f32 %v6423, %v6436
    %v6438 = vpop.f32.mrf.mxu0
    %v6439 = vadd.f32 %v6425, %v6438
    %6440 = vdwg.mxu0
    %6441 = vmatpush.bf16.msra.mxu0 %v5012
    %6442 = vmatpush.bf16.msra.mxu0 %v5005
    %6443 = vmatpush.bf16.msra.mxu0 %v4998
    %6444 = vmatpush.bf16.msra.mxu0 %v4991
    %6445 = vmatpush.bf16.msra.mxu0 %v4984
    %6446 = vmatpush.bf16.msra.mxu0 %v4977
    %6447 = vmatpush.bf16.msra.mxu0 %v4970
    %6448 = vmatpush.bf16.msra.mxu0 %v4963
    %6449 = vmatmul.bf16.gmra.mxu0 %v3416
    %v6450 = vpop.f32.mrf.mxu0
    %v6451 = vadd.f32 %v6437, %v6450
    %v6452 = vpop.f32.mrf.mxu0
    %v6453 = vadd.f32 %v6439, %v6452
    %6454 = vdwg.mxu0
    %6455 = vmatpush.bf16.msra.mxu0 %v5068
    %6456 = vmatpush.bf16.msra.mxu0 %v5061
    %6457 = vmatpush.bf16.msra.mxu0 %v5054
    %6458 = vmatpush.bf16.msra.mxu0 %v5047
    %6459 = vmatpush.bf16.msra.mxu0 %v5040
    %6460 = vmatpush.bf16.msra.mxu0 %v5033
    %6461 = vmatpush.bf16.msra.mxu0 %v5026
    %6462 = vmatpush.bf16.msra.mxu0 %v5019
    %6463 = vmatmul.bf16.gmra.mxu0 %v3417
    %v6464 = vpop.f32.mrf.mxu0
    %v6465 = vadd.f32 %v6451, %v6464
    %v6466 = vpop.f32.mrf.mxu0
    %v6467 = vadd.f32 %v6453, %v6466
    %6468 = vdwg.mxu0
    %6469 = vmatpush.bf16.msra.mxu0 %v5124
    %6470 = vmatpush.bf16.msra.mxu0 %v5117
    %6471 = vmatpush.bf16.msra.mxu0 %v5110
    %6472 = vmatpush.bf16.msra.mxu0 %v5103
    %6473 = vmatpush.bf16.msra.mxu0 %v5096
    %6474 = vmatpush.bf16.msra.mxu0 %v5089
    %6475 = vmatpush.bf16.msra.mxu0 %v5082
    %6476 = vmatpush.bf16.msra.mxu0 %v5075
    %6477 = vmatmul.bf16.gmra.mxu0 %v3418
    %v6478 = vpop.f32.mrf.mxu0
    %v6479 = vadd.f32 %v6465, %v6478
    %v6480 = vpop.f32.mrf.mxu0
    %v6481 = vadd.f32 %v6467, %v6480
    %6482 = vdwg.mxu0
    %6483 = vmatpush.bf16.msra.mxu0 %v5180
    %6484 = vmatpush.bf16.msra.mxu0 %v5173
    %6485 = vmatpush.bf16.msra.mxu0 %v5166
    %6486 = vmatpush.bf16.msra.mxu0 %v5159
    %6487 = vmatpush.bf16.msra.mxu0 %v5152
    %6488 = vmatpush.bf16.msra.mxu0 %v5145
    %6489 = vmatpush.bf16.msra.mxu0 %v5138
    %6490 = vmatpush.bf16.msra.mxu0 %v5131
    %6491 = vmatmul.bf16.gmra.mxu0 %v3419
    %v6492 = vpop.f32.mrf.mxu0
    %v6493 = vadd.f32 %v6479, %v6492
    %v6494 = vpop.f32.mrf.mxu0
    %v6495 = vadd.f32 %v6481, %v6494
    %6496 = vdwg.mxu0
    %6497 = vmatpush.bf16.msra.mxu0 %v5236
    %6498 = vmatpush.bf16.msra.mxu0 %v5229
    %6499 = vmatpush.bf16.msra.mxu0 %v5222
    %6500 = vmatpush.bf16.msra.mxu0 %v5215
    %6501 = vmatpush.bf16.msra.mxu0 %v5208
    %6502 = vmatpush.bf16.msra.mxu0 %v5201
    %6503 = vmatpush.bf16.msra.mxu0 %v5194
    %6504 = vmatpush.bf16.msra.mxu0 %v5187
    %6505 = vmatmul.bf16.gmra.mxu0 %v3420
    %v6506 = vpop.f32.mrf.mxu0
    %v6507 = vadd.f32 %v6493, %v6506
    %v6508 = vpop.f32.mrf.mxu0
    %v6509 = vadd.f32 %v6495, %v6508
    %6510 = vdwg.mxu0
    %6511 = vmatpush.bf16.msra.mxu0 %v5292
    %6512 = vmatpush.bf16.msra.mxu0 %v5285
    %6513 = vmatpush.bf16.msra.mxu0 %v5278
    %6514 = vmatpush.bf16.msra.mxu0 %v5271
    %6515 = vmatpush.bf16.msra.mxu0 %v5264
    %6516 = vmatpush.bf16.msra.mxu0 %v5257
    %6517 = vmatpush.bf16.msra.mxu0 %v5250
    %6518 = vmatpush.bf16.msra.mxu0 %v5243
    %6519 = vmatmul.bf16.gmra.mxu0 %v3421
    %v6520 = vpop.f32.mrf.mxu0
    %v6521 = vadd.f32 %v6507, %v6520
    %v6522 = vpop.f32.mrf.mxu0
    %v6523 = vadd.f32 %v6509, %v6522
    %6524 = vdwg.mxu0
    %v6525 = vtanh.pop %v5849
    %v6526 = vtanh.pop %v5961
    %v6527 = vtanh.pop %v6073
    %v6528 = vtanh.pop %v6185
    %v6529 = vtanh.pop %v6297
    %v6530 = vtanh.pop %v6409
    %v6531 = vtanh.pop %v6521
    %v6532 = vtanh.pop %v5851
    %v6533 = vtanh.pop %v5963
    %v6534 = vtanh.pop %v6075
    %v6535 = vtanh.pop %v6187
    %v6536 = vtanh.pop %v6299
    %v6537 = vtanh.pop %v6411
    %v6538 = vtanh.pop %v6523
    %6539 = vst [vmem:[#allocation17] sm:$0xff] %v6525
    %6540 = vst [vmem:[#allocation17 + $0x8] sm:$0xff] %v6526
    %6541 = vst [vmem:[#allocation17 + $0x10] sm:$0xff] %v6527
    %6542 = vst [vmem:[#allocation17 + $0x18] sm:$0xff] %v6528
    %6543 = vst [vmem:[#allocation17 + $0x20] sm:$0xff] %v6529
    %6544 = vst [vmem:[#allocation17 + $0x28] sm:$0xff] %v6530
    %6545 = vst [vmem:[#allocation17 + $0x30] sm:$0xff] %v6531
    %6546 = vst [vmem:[#allocation17 + $0x38] sm:$0xff] %v6532
    %6547 = vst [vmem:[#allocation17 + $0x40] sm:$0xff] %v6533
    %6548 = vst [vmem:[#allocation17 + $0x48] sm:$0xff] %v6534
    %6549 = vst [vmem:[#allocation17 + $0x50] sm:$0xff] %v6535
    %6550 = vst [vmem:[#allocation17 + $0x58] sm:$0xff] %v6536
    %6551 = vst [vmem:[#allocation17 + $0x60] sm:$0xff] %v6537
    %6552 = vst [vmem:[#allocation17 + $0x68] sm:$0xff] %v6538
    // Predicated region
    $region66: #{tpu_custom_call.1} parent=1 // pred_check
      _
    $region67: #{tpu_custom_call.1} parent=1 // pred_check_branch
      %6554 = sbr.rel (0) target = $region69
    $region68: #{tpu_custom_call.1} parent=1 // pred_region
      %6556 = vsyncadd [#allocation7], 0
      %s6557 = sshll.u32 [#allocation17], 4
      %s6558 = int_to_ptr.vmem [resolvable:$true] %s6557
      %s6559 = sshll.u32 %s9, 4
      %s6560 = int_to_ptr.hbm [resolvable:$true] %s6559
      %6565 = dma.vmem_to_hbm [thread:$0]  %s6558, 1792, %s6560, [#allocation7], 896, 896, 56
    $region69: #{tpu_custom_call.1} parent=1 // pred_fallthru
      _
    // Predicated region
    $region70: #{tpu_custom_call.1} parent=1 // pred_check
      _
    $region71: #{tpu_custom_call.1} parent=1 // pred_check_branch
      %6567 = sbr.rel (0) target = $region73
    $region72: #{tpu_custom_call.1} parent=1 // pred_region
      %6569 = dma.done [#allocation7], 1792
    $region73: #{tpu_custom_call.1} parent=1 // pred_fallthru
      _
    %6570 = vsyncpa [#allocation6], 1
    %6571 = vsyncpa [#allocation9], 1
    %6572 = vsyncpa [#allocation12], 1
    %6573 = vsyncpa [#allocation15], 1
    %6574 = vsyncpa [#allocation7], 1
  %6575 = vsyncmov [#allocation4]
  %s6576 = vpop.sfrf %6575
  %p6577 = scmp.eq.s32.totalorder %s6576, 0
  %p6578 = pneg %p6577
  %6580 = shalt.err (%p6578)
  %s6581 = scalar_lea.sflag [#allocation4], 1
  %6582 = vsyncmov %s6581
  %s6583 = vpop.sfrf %6582
  %p6584 = scmp.eq.s32.totalorder %s6583, 0
  %p6585 = pneg %p6584
  %6587 = shalt.err (%p6585)

// kernel: tpu_custom_call.1
$region0: #{tpu_custom_call.1}
  #allocation0 [shape = 'u32[]', space=smem, size = 0x4, offset = 0x4, fixed_abs, tag = 'smem constant byte address 0x4 - core index']
  #allocation1 [shape = 'u32[72,128]{1,0:T(1,128)}', space=vmem, size = 0x9000, scoped, tag = 'internal scratch']
  #allocation2 [shape = 'bf16[512,1024]{1,0:T(8,128)(2,1)}', space=vmem, size = 0x100000, scoped, tag = 'scratch operand']
  #allocation3 [shape = 'bf16[1024,896]{1,0:T(8,128)(2,1)}', space=vmem, size = 0x1c0000, scoped, tag = 'scratch operand']
  #allocation4 [shape = 's32[2]{0}', space=sflag, size = 0x8, scoped, tag = 'scratch operand']
  #allocation18 [shape = 's32[]', space=sflag, size = 0x4, offset = 0, fixed_abs, tag = 'sflag constant byte address 0x0 - dummy sync flag']
  #allocation19 [shape = 's32[]', space=sflag, size = 0x4, offset = 0, fixed_abs, tag = 'sflag constant byte address 0x0 - dummy sync flag']
  #allocation20 [shape = 'u32[]', space=smem, size = 0x4, offset = 0x44, fixed_abs, tag = 'smem constant byte address 0x44 - assertion arg 0']
  #allocation21 [shape = 'u32[]', space=smem, size = 0x4, offset = 0x48, fixed_abs, tag = 'smem constant byte address 0x48 - assertion arg 1']
  #allocation22 [shape = 's32[]', space=sflag, size = 0x4, offset = 0, fixed_abs, tag = 'sflag constant byte address 0x0 - dummy sync flag']
  #allocation23 [shape = 's32[]', space=sflag, size = 0x4, offset = 0, fixed_abs, tag = 'sflag constant byte address 0x0 - dummy sync flag']
  %s0 = inlined_call_operand.hbm [shape: bf16[16,128], index: 0, kind: input, shape index: {}]
  %s1 = inlined_call_operand.hbm [shape: bf16[128,256], index: 1, kind: input, shape index: {}]
  %s2 = inlined_call_operand.hbm [shape: f32[1,256], index: 2, kind: input, shape index: {}]
  %s3 = inlined_call_operand.hbm [shape: bf16[256,512], index: 3, kind: input, shape index: {}]
  %s4 = inlined_call_operand.hbm [shape: f32[1,512], index: 4, kind: input, shape index: {}]
  %s5 = inlined_call_operand.hbm [shape: bf16[512,1024], index: 5, kind: input, shape index: {}]
  %s6 = inlined_call_operand.hbm [shape: f32[1,1024], index: 6, kind: input, shape index: {}]
  %s7 = inlined_call_operand.hbm [shape: bf16[1024,896], index: 7, kind: input, shape index: {}]
  %s8 = inlined_call_operand.hbm [shape: f32[1,896], index: 8, kind: input, shape index: {}]
  %s9 = inlined_call_operand.hbm [shape: f32[16,896], index: 9, kind: output, shape index: {}]
  %s10 = sld [smem:[#allocation0]]
  $region74: #{tpu_custom_call.1} parent=0
    _
  %s12 = ssub.s32 1, %s10
  %s13 = scalar_select 0, %s12, %s10
  $region1: #{tpu_custom_call.1} parent=0
    #allocation5 [shape = 'u8[4096]{0}', space=vmem, size = 0x1000, scoped, tag = 'input window, operand 0, single buffered']
    #allocation6 [shape = 's32[1]{0}', space=sflag, size = 0x4, scoped, tag = 'scoped memory for tpu_custom_call.1']
    #allocation7 [shape = 's32[1]{0}', space=sflag, size = 0x4, scoped, tag = 'scoped memory for tpu_custom_call.1']
    #allocation8 [shape = 'u8[65536]{0}', space=vmem, size = 0x10000, scoped, tag = 'input window, operand 1, single buffered']
    #allocation9 [shape = 's32[1]{0}', space=sflag, size = 0x4, scoped, tag = 'scoped memory for tpu_custom_call.1']
    #allocation10 [shape = 'u8[1024]{0}', space=vmem, size = 0x400, scoped, tag = 'input window, operand 2, single buffered']
    #allocation11 [shape = 'u8[262144]{0}', space=vmem, size = 0x40000, scoped, tag = 'input window, operand 3, single buffered']
    #allocation12 [shape = 's32[1]{0}', space=sflag, size = 0x4, scoped, tag = 'scoped memory for tpu_custom_call.1']
    #allocation13 [shape = 'u8[2048]{0}', space=vmem, size = 0x800, scoped, tag = 'input window, operand 4, single buffered']
    #allocation14 [shape = 'u8[4096]{0}', space=vmem, size = 0x1000, scoped, tag = 'input window, operand 6, single buffered']
    #allocation15 [shape = 's32[1]{0}', space=sflag, size = 0x4, scoped, tag = 'scoped memory for tpu_custom_call.1']
    #allocation16 [shape = 'u8[3584]{0}', space=vmem, size = 0x1000, scoped, tag = 'input window, operand 8, single buffered']
    #allocation17 [shape = 'u8[57344]{0}', space=vmem, size = 0xe000, scoped, tag = 'output window, operand 0, single buffered']
    %14 = vsyncpa [#allocation6], 0
    %15 = vsyncpa [#allocation9], 0
    %16 = vsyncpa [#allocation12], 0
    %17 = vsyncpa [#allocation15], 0
    %18 = vsyncpa [#allocation7], 0
    // Predicated region
    $region2: #{tpu_custom_call.1} parent=1 // pred_check
      _
    $region3: #{tpu_custom_call.1} parent=1 // pred_check_branch
      %20 = sbr.rel (0) target = $region5
    $region4: #{tpu_custom_call.1} parent=1 // pred_region
      %22 = vsyncadd [#allocation6], 0
      %s23 = sshll.u32 %s0, 4
      %s24 = int_to_ptr.hbm [resolvable:$true] %s23
      %s25 = sshll.u32 [#allocation5], 4
      %s26 = int_to_ptr.vmem [resolvable:$true] %s25
      %31 = dma.hbm_to_vmem [thread:$0]  %s24, 128, %s26, [#allocation6], 64, 64, 4
    $region5: #{tpu_custom_call.1} parent=1 // pred_fallthru
      _
    // Predicated region
    $region6: #{tpu_custom_call.1} parent=1 // pred_check
      _
    $region7: #{tpu_custom_call.1} parent=1 // pred_check_branch
      %33 = sbr.rel (0) target = $region9
    $region8: #{tpu_custom_call.1} parent=1 // pred_region
      %35 = vsyncadd [#allocation9], 0
      %s36 = sshll.u32 %s1, 4
      %s37 = int_to_ptr.hbm [resolvable:$true] %s36
      %s38 = sshll.u32 [#allocation8], 4
      %s39 = int_to_ptr.vmem [resolvable:$true] %s38
      %44 = dma.hbm_to_vmem [thread:$0]  %s37, 2048, %s39, [#allocation9], 128, 128, 8
    $region9: #{tpu_custom_call.1} parent=1 // pred_fallthru
      _
    // Predicated region
    $region10: #{tpu_custom_call.1} parent=1 // pred_check
      _
    $region11: #{tpu_custom_call.1} parent=1 // pred_check_branch
      %46 = sbr.rel (0) target = $region13
    $region12: #{tpu_custom_call.1} parent=1 // pred_region
      %48 = vsyncadd [#allocation9], 0
      %s50 = sshll.u32 %s2, 4
      %s51 = int_to_ptr.hbm [resolvable:$true] %s50
      %s52 = sshll.u32 [#allocation10], 4
      %s53 = int_to_ptr.vmem [resolvable:$true] %s52
      %55 = dma.hbm_to_vmem [thread:$0]  %s51, 32, %s53, [#allocation9]
    $region13: #{tpu_custom_call.1} parent=1 // pred_fallthru
      _
    // Predicated region
    $region14: #{tpu_custom_call.1} parent=1 // pred_check
      _
    $region15: #{tpu_custom_call.1} parent=1 // pred_check_branch
      %57 = sbr.rel (0) target = $region17
    $region16: #{tpu_custom_call.1} parent=1 // pred_region
      %59 = vsyncadd [#allocation12], 0
      %s60 = sshll.u32 %s3, 4
      %s61 = int_to_ptr.hbm [resolvable:$true] %s60
      %s62 = sshll.u32 [#allocation11], 4
      %s63 = int_to_ptr.vmem [resolvable:$true] %s62
      %68 = dma.hbm_to_vmem [thread:$0]  %s61, 8192, %s63, [#allocation12], 256, 256, 16
    $region17: #{tpu_custom_call.1} parent=1 // pred_fallthru
      _
    // Predicated region
    $region18: #{tpu_custom_call.1} parent=1 // pred_check
      _
    $region19: #{tpu_custom_call.1} parent=1 // pred_check_branch
      %70 = sbr.rel (0) target = $region21
    $region20: #{tpu_custom_call.1} parent=1 // pred_region
      %72 = vsyncadd [#allocation12], 0
      %s74 = sshll.u32 %s4, 4
      %s75 = int_to_ptr.hbm [resolvable:$true] %s74
      %s76 = sshll.u32 [#allocation13], 4
      %s77 = int_to_ptr.vmem [resolvable:$true] %s76
      %79 = dma.hbm_to_vmem [thread:$0]  %s75, 64, %s77, [#allocation12]
    $region21: #{tpu_custom_call.1} parent=1 // pred_fallthru
      _
    // Predicated region
    $region22: #{tpu_custom_call.1} parent=1 // pred_check
      _
    $region23: #{tpu_custom_call.1} parent=1 // pred_check_branch
      %81 = sbr.rel (0) target = $region25
    $region24: #{tpu_custom_call.1} parent=1 // pred_region
      %83 = vsyncadd [#allocation15], 0
      %s85 = sshll.u32 %s6, 4
      %s86 = int_to_ptr.hbm [resolvable:$true] %s85
      %s87 = sshll.u32 [#allocation14], 4
      %s88 = int_to_ptr.vmem [resolvable:$true] %s87
      %90 = dma.hbm_to_vmem [thread:$0]  %s86, 128, %s88, [#allocation15]
    $region25: #{tpu_custom_call.1} parent=1 // pred_fallthru
      _
    // Predicated region
    $region26: #{tpu_custom_call.1} parent=1 // pred_check
      _
    $region27: #{tpu_custom_call.1} parent=1 // pred_check_branch
      %92 = sbr.rel (0) target = $region29
    $region28: #{tpu_custom_call.1} parent=1 // pred_region
      %94 = vsyncadd [#allocation15], 0
      %s96 = sshll.u32 %s8, 4
      %s97 = int_to_ptr.hbm [resolvable:$true] %s96
      %s98 = sshll.u32 [#allocation16], 4
      %s99 = int_to_ptr.vmem [resolvable:$true] %s98
      %101 = dma.hbm_to_vmem [thread:$0]  %s97, 112, %s99, [#allocation15]
    $region29: #{tpu_custom_call.1} parent=1 // pred_fallthru
      _
    // Predicated region
    $region30: #{tpu_custom_call.1} parent=1 // pred_check
      _
    $region31: #{tpu_custom_call.1} parent=1 // pred_check_branch
      %103 = sbr.rel (0) target = $region33
    $region32: #{tpu_custom_call.1} parent=1 // pred_region
      %105 = dma.done [#allocation6], 128
    $region33: #{tpu_custom_call.1} parent=1 // pred_fallthru
      _
    // Predicated region
    $region34: #{tpu_custom_call.1} parent=1 // pred_check
      _
    $region35: #{tpu_custom_call.1} parent=1 // pred_check_branch
      %107 = sbr.rel (0) target = $region37
    $region36: #{tpu_custom_call.1} parent=1 // pred_region
      %109 = dma.done [#allocation9], 2048
    $region37: #{tpu_custom_call.1} parent=1 // pred_fallthru
      _
    // Predicated region
    $region38: #{tpu_custom_call.1} parent=1 // pred_check
      _
    $region39: #{tpu_custom_call.1} parent=1 // pred_check_branch
      %111 = sbr.rel (0) target = $region41
    $region40: #{tpu_custom_call.1} parent=1 // pred_region
      %113 = dma.done [#allocation9], 32
    $region41: #{tpu_custom_call.1} parent=1 // pred_fallthru
      _
    // Predicated region
    $region42: #{tpu_custom_call.1} parent=1 // pred_check
      _
    $region43: #{tpu_custom_call.1} parent=1 // pred_check_branch
      %115 = sbr.rel (0) target = $region45
    $region44: #{tpu_custom_call.1} parent=1 // pred_region
      %117 = dma.done [#allocation12], 8192
    $region45: #{tpu_custom_call.1} parent=1 // pred_fallthru
      _
    // Predicated region
    $region46: #{tpu_custom_call.1} parent=1 // pred_check
      _
    $region47: #{tpu_custom_call.1} parent=1 // pred_check_branch
      %119 = sbr.rel (0) target = $region49
    $region48: #{tpu_custom_call.1} parent=1 // pred_region
      %121 = dma.done [#allocation12], 64
    $region49: #{tpu_custom_call.1} parent=1 // pred_fallthru
      _
    // Predicated region
    $region50: #{tpu_custom_call.1} parent=1 // pred_check
      _
    $region51: #{tpu_custom_call.1} parent=1 // pred_check_branch
      %123 = sbr.rel (0) target = $region53
    $region52: #{tpu_custom_call.1} parent=1 // pred_region
      %125 = dma.done [#allocation15], 128
    $region53: #{tpu_custom_call.1} parent=1 // pred_fallthru
      _
    // Predicated region
    $region54: #{tpu_custom_call.1} parent=1 // pred_check
      _
    $region55: #{tpu_custom_call.1} parent=1 // pred_check_branch
      %127 = sbr.rel (0) target = $region57
    $region56: #{tpu_custom_call.1} parent=1 // pred_region
      %129 = dma.done [#allocation15], 112
    $region57: #{tpu_custom_call.1} parent=1 // pred_fallthru
      _
    // Predicated region
    $region58: #{tpu_custom_call.1} parent=1 // pred_check
      _
    $region59: #{tpu_custom_call.1} parent=1 // pred_check_branch
      %131 = sbr.rel target = $region61
    $region60: #{tpu_custom_call.1} parent=1 // pred_region
      %132 = sst [smem:[#allocation20]] [#allocation19]
      %133 = sst [smem:[#allocation21]] [#allocation18]
    $region61: #{tpu_custom_call.1} parent=1 // pred_fallthru
      _
    %135 = shalt.err (0)
    %s137 = sshll.u32 %s5, 4
    %s138 = int_to_ptr.hbm [resolvable:$true] %s137
    %s139 = sshll.u32 [#allocation2], 4
    %s140 = int_to_ptr.vmem [resolvable:$true] %s139
    %142 = dma.hbm_to_vmem [thread:$0]  %s138, 32768, %s140, [#allocation4]
    %s143 = scalar_lea.sflag [#allocation4], 1
    // Predicated region
    $region62: #{tpu_custom_call.1} parent=1 // pred_check
      _
    $region63: #{tpu_custom_call.1} parent=1 // pred_check_branch
      %145 = sbr.rel target = $region65
    $region64: #{tpu_custom_call.1} parent=1 // pred_region
      %146 = sst [smem:[#allocation20]] [#allocation23]
      %147 = sst [smem:[#allocation21]] [#allocation22]
    $region65: #{tpu_custom_call.1} parent=1 // pred_fallthru
      _
    %149 = shalt.err (0)
    %s151 = sshll.u32 %s7, 4
    %s152 = int_to_ptr.hbm [resolvable:$true] %s151
    %s153 = sshll.u32 [#allocation3], 4
    %s154 = int_to_ptr.vmem [resolvable:$true] %s153
    %156 = dma.hbm_to_vmem [thread:$0]  %s152, 57344, %s154, %s143
    %v157 = vld [vmem:[#allocation5] sm:$0xf]
    %v158 = vld [vmem:[#allocation5 + $0x4] sm:$0xf]
    %v159 = vld [vmem:[#allocation8] sm:$0xff]
    %v160 = vld [vmem:[#allocation8 + $0x8] sm:$0xff]
    %v161 = vld [vmem:[#allocation8 + $0x10] sm:$0xff]
    %v162 = vld [vmem:[#allocation8 + $0x18] sm:$0xff]
    %v163 = vld [vmem:[#allocation8 + $0x20] sm:$0xff]
    %v164 = vld [vmem:[#allocation8 + $0x28] sm:$0xff]
    %v165 = vld [vmem:[#allocation8 + $0x30] sm:$0xff]
    %v166 = vld [vmem:[#allocation8 + $0x38] sm:$0xff]
    %v167 = vld [vmem:[#allocation8 + $0x40] sm:$0xff]
    %v168 = vld [vmem:[#allocation8 + $0x48] sm:$0xff]
    %v169 = vld [vmem:[#allocation8 + $0x50] sm:$0xff]
    %v170 = vld [vmem:[#allocation8 + $0x58] sm:$0xff]
    %v171 = vld [vmem:[#allocation8 + $0x60] sm:$0xff]
    %v172 = vld [vmem:[#allocation8 + $0x68] sm:$0xff]
    %v173 = vld [vmem:[#allocation8 + $0x70] sm:$0xff]
    %v174 = vld [vmem:[#allocation8 + $0x78] sm:$0xff]
    %v175 = vld [vmem:[#allocation10] sm:$0x3]
    %v177 = vperm.slane %v175, 0
    %v178 = vperm.slane %v175, 1
    %v183 = vunpack.c.l.b16 %v157
    %v184 = vunpack.c.l.b16 %v158
    %v185 = vpack.c.b16 %v184, %v183
    %v203 = vunpack.c.l.b16 %v159
    %v204 = vunpack.c.h.b16 %v159
    %v205 = vunpack.c.l.b16 %v160
    %v206 = vunpack.c.h.b16 %v160
    %v207 = vunpack.c.l.b16 %v161
    %v208 = vunpack.c.h.b16 %v161
    %v209 = vunpack.c.l.b16 %v162
    %v210 = vunpack.c.h.b16 %v162
    %v211 = vunpack.c.l.b16 %v163
    %v212 = vunpack.c.h.b16 %v163
    %v213 = vunpack.c.l.b16 %v164
    %v214 = vunpack.c.h.b16 %v164
    %v215 = vunpack.c.l.b16 %v165
    %v216 = vunpack.c.h.b16 %v165
    %v217 = vunpack.c.l.b16 %v166
    %v218 = vunpack.c.h.b16 %v166
    %v219 = vunpack.c.l.b16 %v167
    %v220 = vunpack.c.h.b16 %v167
    %v221 = vunpack.c.l.b16 %v168
    %v222 = vunpack.c.h.b16 %v168
    %v223 = vunpack.c.l.b16 %v169
    %v224 = vunpack.c.h.b16 %v169
    %v225 = vunpack.c.l.b16 %v170
    %v226 = vunpack.c.h.b16 %v170
    %v227 = vunpack.c.l.b16 %v171
    %v228 = vunpack.c.h.b16 %v171
    %v229 = vunpack.c.l.b16 %v172
    %v230 = vunpack.c.h.b16 %v172
    %v231 = vunpack.c.l.b16 %v173
    %v232 = vunpack.c.h.b16 %v173
    %v233 = vunpack.c.l.b16 %v174
    %v234 = vunpack.c.h.b16 %v174
    %v235 = vpack.c.b16 %v205, %v203
    %v236 = vpack.c.b16 %v206, %v204
    %v237 = vpack.c.b16 %v209, %v207
    %v238 = vpack.c.b16 %v210, %v208
    %v239 = vpack.c.b16 %v213, %v211
    %v240 = vpack.c.b16 %v214, %v212
    %v241 = vpack.c.b16 %v217, %v215
    %v242 = vpack.c.b16 %v218, %v216
    %v243 = vpack.c.b16 %v221, %v219
    %v244 = vpack.c.b16 %v222, %v220
    %v245 = vpack.c.b16 %v225, %v223
    %v246 = vpack.c.b16 %v226, %v224
    %v247 = vpack.c.b16 %v229, %v227
    %v248 = vpack.c.b16 %v230, %v228
    %v249 = vpack.c.b16 %v233, %v231
    %v250 = vpack.c.b16 %v234, %v232
    %267 = vmatpush.bf16.msra.mxu0 %v249
    %268 = vmatpush.bf16.msra.mxu0 %v247
    %269 = vmatpush.bf16.msra.mxu0 %v245
    %270 = vmatpush.bf16.msra.mxu0 %v243
    %271 = vmatpush.bf16.msra.mxu0 %v241
    %272 = vmatpush.bf16.msra.mxu0 %v239
    %273 = vmatpush.bf16.msra.mxu0 %v237
    %274 = vmatpush.bf16.msra.mxu0 %v235
    %275 = vmatmul.bf16.gmra.mxu0 %v185
    %v276 = vpop.f32.mrf.mxu0
    %v277 = vadd.f32 %v177, %v276
    %v278 = vpop.f32.mrf.mxu0
    %v279 = vadd.f32 %v177, %v278
    %280 = vdwg.mxu0
    %281 = vmatpush.bf16.msra.mxu0 %v250
    %282 = vmatpush.bf16.msra.mxu0 %v248
    %283 = vmatpush.bf16.msra.mxu0 %v246
    %284 = vmatpush.bf16.msra.mxu0 %v244
    %285 = vmatpush.bf16.msra.mxu0 %v242
    %286 = vmatpush.bf16.msra.mxu0 %v240
    %287 = vmatpush.bf16.msra.mxu0 %v238
    %288 = vmatpush.bf16.msra.mxu0 %v236
    %289 = vmatmul.bf16.gmra.mxu0 %v185
    %v290 = vpop.f32.mrf.mxu0
    %v291 = vadd.f32 %v178, %v290
    %v292 = vpop.f32.mrf.mxu0
    %v293 = vadd.f32 %v178, %v292
    %294 = vdwg.mxu0
    %vm295 = vcmp.gt.f32.partialorder %v277, 0.0
    %vm296 = vcmp.gt.f32.partialorder %v291, 0.0
    %vm297 = vcmp.gt.f32.partialorder %v279, 0.0
    %vm298 = vcmp.gt.f32.partialorder %v293, 0.0
    %v299 = vmul.f32 %v277, 0.2
    %v300 = vmul.f32 %v291, 0.2
    %v301 = vmul.f32 %v279, 0.2
    %v302 = vmul.f32 %v293, 0.2
    %v303 = vsel %vm295, %v277, %v299
    %v304 = vsel %vm296, %v291, %v300
    %v305 = vsel %vm297, %v279, %v301
    %v306 = vsel %vm298, %v293, %v302
    %v307 = vld [vmem:[#allocation11] sm:$0xff]
    %v308 = vld [vmem:[#allocation11 + $0x8] sm:$0xff]
    %v309 = vld [vmem:[#allocation11 + $0x10] sm:$0xff]
    %v310 = vld [vmem:[#allocation11 + $0x18] sm:$0xff]
    %v311 = vld [vmem:[#allocation11 + $0x20] sm:$0xff]
    %v312 = vld [vmem:[#allocation11 + $0x28] sm:$0xff]
    %v313 = vld [vmem:[#allocation11 + $0x30] sm:$0xff]
    %v314 = vld [vmem:[#allocation11 + $0x38] sm:$0xff]
    %v315 = vld [vmem:[#allocation11 + $0x40] sm:$0xff]
    %v316 = vld [vmem:[#allocation11 + $0x48] sm:$0xff]
    %v317 = vld [vmem:[#allocation11 + $0x50] sm:$0xff]
    %v318 = vld [vmem:[#allocation11 + $0x58] sm:$0xff]
    %v319 = vld [vmem:[#allocation11 + $0x60] sm:$0xff]
    %v320 = vld [vmem:[#allocation11 + $0x68] sm:$0xff]
    %v321 = vld [vmem:[#allocation11 + $0x70] sm:$0xff]
    %v322 = vld [vmem:[#allocation11 + $0x78] sm:$0xff]
    %v323 = vld [vmem:[#allocation11 + $0x80] sm:$0xff]
    %v324 = vld [vmem:[#allocation11 + $0x88] sm:$0xff]
    %v325 = vld [vmem:[#allocation11 + $0x90] sm:$0xff]
    %v326 = vld [vmem:[#allocation11 + $0x98] sm:$0xff]
    %v327 = vld [vmem:[#allocation11 + $0xa0] sm:$0xff]
    %v328 = vld [vmem:[#allocation11 + $0xa8] sm:$0xff]
    %v329 = vld [vmem:[#allocation11 + $0xb0] sm:$0xff]
    %v330 = vld [vmem:[#allocation11 + $0xb8] sm:$0xff]
    %v331 = vld [vmem:[#allocation11 + $0xc0] sm:$0xff]
    %v332 = vld [vmem:[#allocation11 + $0xc8] sm:$0xff]
    %v333 = vld [vmem:[#allocation11 + $0xd0] sm:$0xff]
    %v334 = vld [vmem:[#allocation11 + $0xd8] sm:$0xff]
    %v335 = vld [vmem:[#allocation11 + $0xe0] sm:$0xff]
    %v336 = vld [vmem:[#allocation11 + $0xe8] sm:$0xff]
    %v337 = vld [vmem:[#allocation11 + $0xf0] sm:$0xff]
    %v338 = vld [vmem:[#allocation11 + $0xf8] sm:$0xff]
    %v339 = vld [vmem:[#allocation11 + $0x100] sm:$0xff]
    %v340 = vld [vmem:[#allocation11 + $0x108] sm:$0xff]
    %v341 = vld [vmem:[#allocation11 + $0x110] sm:$0xff]
    %v342 = vld [vmem:[#allocation11 + $0x118] sm:$0xff]
    %v343 = vld [vmem:[#allocation11 + $0x120] sm:$0xff]
    %v344 = vld [vmem:[#allocation11 + $0x128] sm:$0xff]
    %v345 = vld [vmem:[#allocation11 + $0x130] sm:$0xff]
    %v346 = vld [vmem:[#allocation11 + $0x138] sm:$0xff]
    %v347 = vld [vmem:[#allocation11 + $0x140] sm:$0xff]
    %v348 = vld [vmem:[#allocation11 + $0x148] sm:$0xff]
    %v349 = vld [vmem:[#allocation11 + $0x150] sm:$0xff]
    %v350 = vld [vmem:[#allocation11 + $0x158] sm:$0xff]
    %v351 = vld [vmem:[#allocation11 + $0x160] sm:$0xff]
    %v352 = vld [vmem:[#allocation11 + $0x168] sm:$0xff]
    %v353 = vld [vmem:[#allocation11 + $0x170] sm:$0xff]
    %v354 = vld [vmem:[#allocation11 + $0x178] sm:$0xff]
    %v355 = vld [vmem:[#allocation11 + $0x180] sm:$0xff]
    %v356 = vld [vmem:[#allocation11 + $0x188] sm:$0xff]
    %v357 = vld [vmem:[#allocation11 + $0x190] sm:$0xff]
    %v358 = vld [vmem:[#allocation11 + $0x198] sm:$0xff]
    %v359 = vld [vmem:[#allocation11 + $0x1a0] sm:$0xff]
    %v360 = vld [vmem:[#allocation11 + $0x1a8] sm:$0xff]
    %v361 = vld [vmem:[#allocation11 + $0x1b0] sm:$0xff]
    %v362 = vld [vmem:[#allocation11 + $0x1b8] sm:$0xff]
    %v363 = vld [vmem:[#allocation11 + $0x1c0] sm:$0xff]
    %v364 = vld [vmem:[#allocation11 + $0x1c8] sm:$0xff]
    %v365 = vld [vmem:[#allocation11 + $0x1d0] sm:$0xff]
    %v366 = vld [vmem:[#allocation11 + $0x1d8] sm:$0xff]
    %v367 = vld [vmem:[#allocation11 + $0x1e0] sm:$0xff]
    %v368 = vld [vmem:[#allocation11 + $0x1e8] sm:$0xff]
    %v369 = vld [vmem:[#allocation11 + $0x1f0] sm:$0xff]
    %v370 = vld [vmem:[#allocation11 + $0x1f8] sm:$0xff]
    %v371 = vld [vmem:[#allocation13] sm:$0xf]
    %v372 = vpack.c.bf16 %v305, %v303
    %v373 = vpack.c.bf16 %v306, %v304
    %v375 = vperm.slane %v371, 0
    %v376 = vperm.slane %v371, 1
    %v377 = vperm.slane %v371, 2
    %v378 = vperm.slane %v371, 3
    %v447 = vunpack.c.l.b16 %v307
    %v448 = vunpack.c.h.b16 %v307
    %v449 = vunpack.c.l.b16 %v308
    %v450 = vunpack.c.h.b16 %v308
    %v451 = vunpack.c.l.b16 %v309
    %v452 = vunpack.c.h.b16 %v309
    %v453 = vunpack.c.l.b16 %v310
    %v454 = vunpack.c.h.b16 %v310
    %v455 = vunpack.c.l.b16 %v311
    %v456 = vunpack.c.h.b16 %v311
    %v457 = vunpack.c.l.b16 %v312
    %v458 = vunpack.c.h.b16 %v312
    %v459 = vunpack.c.l.b16 %v313
    %v460 = vunpack.c.h.b16 %v313
    %v461 = vunpack.c.l.b16 %v314
    %v462 = vunpack.c.h.b16 %v314
    %v463 = vunpack.c.l.b16 %v315
    %v464 = vunpack.c.h.b16 %v315
    %v465 = vunpack.c.l.b16 %v316
    %v466 = vunpack.c.h.b16 %v316
    %v467 = vunpack.c.l.b16 %v317
    %v468 = vunpack.c.h.b16 %v317
    %v469 = vunpack.c.l.b16 %v318
    %v470 = vunpack.c.h.b16 %v318
    %v471 = vunpack.c.l.b16 %v319
    %v472 = vunpack.c.h.b16 %v319
    %v473 = vunpack.c.l.b16 %v320
    %v474 = vunpack.c.h.b16 %v320
    %v475 = vunpack.c.l.b16 %v321
    %v476 = vunpack.c.h.b16 %v321
    %v477 = vunpack.c.l.b16 %v322
    %v478 = vunpack.c.h.b16 %v322
    %v479 = vunpack.c.l.b16 %v323
    %v480 = vunpack.c.h.b16 %v323
    %v481 = vunpack.c.l.b16 %v324
    %v482 = vunpack.c.h.b16 %v324
    %v483 = vunpack.c.l.b16 %v325
    %v484 = vunpack.c.h.b16 %v325
    %v485 = vunpack.c.l.b16 %v326
    %v486 = vunpack.c.h.b16 %v326
    %v487 = vunpack.c.l.b16 %v327
    %v488 = vunpack.c.h.b16 %v327
    %v489 = vunpack.c.l.b16 %v328
    %v490 = vunpack.c.h.b16 %v328
    %v491 = vunpack.c.l.b16 %v329
    %v492 = vunpack.c.h.b16 %v329
    %v493 = vunpack.c.l.b16 %v330
    %v494 = vunpack.c.h.b16 %v330
    %v495 = vunpack.c.l.b16 %v331
    %v496 = vunpack.c.h.b16 %v331
    %v497 = vunpack.c.l.b16 %v332
    %v498 = vunpack.c.h.b16 %v332
    %v499 = vunpack.c.l.b16 %v333
    %v500 = vunpack.c.h.b16 %v333
    %v501 = vunpack.c.l.b16 %v334
    %v502 = vunpack.c.h.b16 %v334
    %v503 = vunpack.c.l.b16 %v335
    %v504 = vunpack.c.h.b16 %v335
    %v505 = vunpack.c.l.b16 %v336
    %v506 = vunpack.c.h.b16 %v336
    %v507 = vunpack.c.l.b16 %v337
    %v508 = vunpack.c.h.b16 %v337
    %v509 = vunpack.c.l.b16 %v338
    %v510 = vunpack.c.h.b16 %v338
    %v511 = vunpack.c.l.b16 %v339
    %v512 = vunpack.c.h.b16 %v339
    %v513 = vunpack.c.l.b16 %v340
    %v514 = vunpack.c.h.b16 %v340
    %v515 = vunpack.c.l.b16 %v341
    %v516 = vunpack.c.h.b16 %v341
    %v517 = vunpack.c.l.b16 %v342
    %v518 = vunpack.c.h.b16 %v342
    %v519 = vunpack.c.l.b16 %v343
    %v520 = vunpack.c.h.b16 %v343
    %v521 = vunpack.c.l.b16 %v344
    %v522 = vunpack.c.h.b16 %v344
    %v523 = vunpack.c.l.b16 %v345
    %v524 = vunpack.c.h.b16 %v345
    %v525 = vunpack.c.l.b16 %v346
    %v526 = vunpack.c.h.b16 %v346
    %v527 = vunpack.c.l.b16 %v347
    %v528 = vunpack.c.h.b16 %v347
    %v529 = vunpack.c.l.b16 %v348
    %v530 = vunpack.c.h.b16 %v348
    %v531 = vunpack.c.l.b16 %v349
    %v532 = vunpack.c.h.b16 %v349
    %v533 = vunpack.c.l.b16 %v350
    %v534 = vunpack.c.h.b16 %v350
    %v535 = vunpack.c.l.b16 %v351
    %v536 = vunpack.c.h.b16 %v351
    %v537 = vunpack.c.l.b16 %v352
    %v538 = vunpack.c.h.b16 %v352
    %v539 = vunpack.c.l.b16 %v353
    %v540 = vunpack.c.h.b16 %v353
    %v541 = vunpack.c.l.b16 %v354
    %v542 = vunpack.c.h.b16 %v354
    %v543 = vunpack.c.l.b16 %v355
    %v544 = vunpack.c.h.b16 %v355
    %v545 = vunpack.c.l.b16 %v356
    %v546 = vunpack.c.h.b16 %v356
    %v547 = vunpack.c.l.b16 %v357
    %v548 = vunpack.c.h.b16 %v357
    %v549 = vunpack.c.l.b16 %v358
    %v550 = vunpack.c.h.b16 %v358
    %v551 = vunpack.c.l.b16 %v359
    %v552 = vunpack.c.h.b16 %v359
    %v553 = vunpack.c.l.b16 %v360
    %v554 = vunpack.c.h.b16 %v360
    %v555 = vunpack.c.l.b16 %v361
    %v556 = vunpack.c.h.b16 %v361
    %v557 = vunpack.c.l.b16 %v362
    %v558 = vunpack.c.h.b16 %v362
    %v559 = vunpack.c.l.b16 %v363
    %v560 = vunpack.c.h.b16 %v363
    %v561 = vunpack.c.l.b16 %v364
    %v562 = vunpack.c.h.b16 %v364
    %v563 = vunpack.c.l.b16 %v365
    %v564 = vunpack.c.h.b16 %v365
    %v565 = vunpack.c.l.b16 %v366
    %v566 = vunpack.c.h.b16 %v366
    %v567 = vunpack.c.l.b16 %v367
    %v568 = vunpack.c.h.b16 %v367
    %v569 = vunpack.c.l.b16 %v368
    %v570 = vunpack.c.h.b16 %v368
    %v571 = vunpack.c.l.b16 %v369
    %v572 = vunpack.c.h.b16 %v369
    %v573 = vunpack.c.l.b16 %v370
    %v574 = vunpack.c.h.b16 %v370
    %v575 = vpack.c.b16 %v451, %v447
    %v576 = vpack.c.b16 %v452, %v448
    %v577 = vpack.c.b16 %v453, %v449
    %v578 = vpack.c.b16 %v454, %v450
    %v579 = vpack.c.b16 %v459, %v455
    %v580 = vpack.c.b16 %v460, %v456
    %v581 = vpack.c.b16 %v461, %v457
    %v582 = vpack.c.b16 %v462, %v458
    %v583 = vpack.c.b16 %v467, %v463
    %v584 = vpack.c.b16 %v468, %v464
    %v585 = vpack.c.b16 %v469, %v465
    %v586 = vpack.c.b16 %v470, %v466
    %v587 = vpack.c.b16 %v475, %v471
    %v588 = vpack.c.b16 %v476, %v472
    %v589 = vpack.c.b16 %v477, %v473
    %v590 = vpack.c.b16 %v478, %v474
    %v591 = vpack.c.b16 %v483, %v479
    %v592 = vpack.c.b16 %v484, %v480
    %v593 = vpack.c.b16 %v485, %v481
    %v594 = vpack.c.b16 %v486, %v482
    %v595 = vpack.c.b16 %v491, %v487
    %v596 = vpack.c.b16 %v492, %v488
    %v597 = vpack.c.b16 %v493, %v489
    %v598 = vpack.c.b16 %v494, %v490
    %v599 = vpack.c.b16 %v499, %v495
    %v600 = vpack.c.b16 %v500, %v496
    %v601 = vpack.c.b16 %v501, %v497
    %v602 = vpack.c.b16 %v502, %v498
    %v603 = vpack.c.b16 %v507, %v503
    %v604 = vpack.c.b16 %v508, %v504
    %v605 = vpack.c.b16 %v509, %v505
    %v606 = vpack.c.b16 %v510, %v506
    %v607 = vpack.c.b16 %v515, %v511
    %v608 = vpack.c.b16 %v516, %v512
    %v609 = vpack.c.b16 %v517, %v513
    %v610 = vpack.c.b16 %v518, %v514
    %v611 = vpack.c.b16 %v523, %v519
    %v612 = vpack.c.b16 %v524, %v520
    %v613 = vpack.c.b16 %v525, %v521
    %v614 = vpack.c.b16 %v526, %v522
    %v615 = vpack.c.b16 %v531, %v527
    %v616 = vpack.c.b16 %v532, %v528
    %v617 = vpack.c.b16 %v533, %v529
    %v618 = vpack.c.b16 %v534, %v530
    %v619 = vpack.c.b16 %v539, %v535
    %v620 = vpack.c.b16 %v540, %v536
    %v621 = vpack.c.b16 %v541, %v537
    %v622 = vpack.c.b16 %v542, %v538
    %v623 = vpack.c.b16 %v547, %v543
    %v624 = vpack.c.b16 %v548, %v544
    %v625 = vpack.c.b16 %v549, %v545
    %v626 = vpack.c.b16 %v550, %v546
    %v627 = vpack.c.b16 %v555, %v551
    %v628 = vpack.c.b16 %v556, %v552
    %v629 = vpack.c.b16 %v557, %v553
    %v630 = vpack.c.b16 %v558, %v554
    %v631 = vpack.c.b16 %v563, %v559
    %v632 = vpack.c.b16 %v564, %v560
    %v633 = vpack.c.b16 %v565, %v561
    %v634 = vpack.c.b16 %v566, %v562
    %v635 = vpack.c.b16 %v571, %v567
    %v636 = vpack.c.b16 %v572, %v568
    %v637 = vpack.c.b16 %v573, %v569
    %v638 = vpack.c.b16 %v574, %v570
    %703 = vmatpush.bf16.msra.mxu0 %v603
    %704 = vmatpush.bf16.msra.mxu0 %v599
    %705 = vmatpush.bf16.msra.mxu0 %v595
    %706 = vmatpush.bf16.msra.mxu0 %v591
    %707 = vmatpush.bf16.msra.mxu0 %v587
    %708 = vmatpush.bf16.msra.mxu0 %v583
    %709 = vmatpush.bf16.msra.mxu0 %v579
    %710 = vmatpush.bf16.msra.mxu0 %v575
    %711 = vmatmul.bf16.gmra.mxu0 %v372
    %v712 = vpop.f32.mrf.mxu0
    %v713 = vadd.f32 %v375, %v712
    %v714 = vpop.f32.mrf.mxu0
    %v715 = vadd.f32 %v375, %v714
    %716 = vdwg.mxu0
    %717 = vmatpush.bf16.msra.mxu0 %v635
    %718 = vmatpush.bf16.msra.mxu0 %v631
    %719 = vmatpush.bf16.msra.mxu0 %v627
    %720 = vmatpush.bf16.msra.mxu0 %v623
    %721 = vmatpush.bf16.msra.mxu0 %v619
    %722 = vmatpush.bf16.msra.mxu0 %v615
    %723 = vmatpush.bf16.msra.mxu0 %v611
    %724 = vmatpush.bf16.msra.mxu0 %v607
    %725 = vmatmul.bf16.gmra.mxu0 %v373
    %v726 = vpop.f32.mrf.mxu0
    %v727 = vadd.f32 %v713, %v726
    %v728 = vpop.f32.mrf.mxu0
    %v729 = vadd.f32 %v715, %v728
    %730 = vdwg.mxu0
    %731 = vmatpush.bf16.msra.mxu0 %v604
    %732 = vmatpush.bf16.msra.mxu0 %v600
    %733 = vmatpush.bf16.msra.mxu0 %v596
    %734 = vmatpush.bf16.msra.mxu0 %v592
    %735 = vmatpush.bf16.msra.mxu0 %v588
    %736 = vmatpush.bf16.msra.mxu0 %v584
    %737 = vmatpush.bf16.msra.mxu0 %v580
    %738 = vmatpush.bf16.msra.mxu0 %v576
    %739 = vmatmul.bf16.gmra.mxu0 %v372
    %v740 = vpop.f32.mrf.mxu0
    %v741 = vadd.f32 %v376, %v740
    %v742 = vpop.f32.mrf.mxu0
    %v743 = vadd.f32 %v376, %v742
    %744 = vdwg.mxu0
    %745 = vmatpush.bf16.msra.mxu0 %v636
    %746 = vmatpush.bf16.msra.mxu0 %v632
    %747 = vmatpush.bf16.msra.mxu0 %v628
    %748 = vmatpush.bf16.msra.mxu0 %v624
    %749 = vmatpush.bf16.msra.mxu0 %v620
    %750 = vmatpush.bf16.msra.mxu0 %v616
    %751 = vmatpush.bf16.msra.mxu0 %v612
    %752 = vmatpush.bf16.msra.mxu0 %v608
    %753 = vmatmul.bf16.gmra.mxu0 %v373
    %v754 = vpop.f32.mrf.mxu0
    %v755 = vadd.f32 %v741, %v754
    %v756 = vpop.f32.mrf.mxu0
    %v757 = vadd.f32 %v743, %v756
    %758 = vdwg.mxu0
    %759 = vmatpush.bf16.msra.mxu0 %v605
    %760 = vmatpush.bf16.msra.mxu0 %v601
    %761 = vmatpush.bf16.msra.mxu0 %v597
    %762 = vmatpush.bf16.msra.mxu0 %v593
    %763 = vmatpush.bf16.msra.mxu0 %v589
    %764 = vmatpush.bf16.msra.mxu0 %v585
    %765 = vmatpush.bf16.msra.mxu0 %v581
    %766 = vmatpush.bf16.msra.mxu0 %v577
    %767 = vmatmul.bf16.gmra.mxu0 %v372
    %v768 = vpop.f32.mrf.mxu0
    %v769 = vadd.f32 %v377, %v768
    %v770 = vpop.f32.mrf.mxu0
    %v771 = vadd.f32 %v377, %v770
    %772 = vdwg.mxu0
    %773 = vmatpush.bf16.msra.mxu0 %v637
    %774 = vmatpush.bf16.msra.mxu0 %v633
    %775 = vmatpush.bf16.msra.mxu0 %v629
    %776 = vmatpush.bf16.msra.mxu0 %v625
    %777 = vmatpush.bf16.msra.mxu0 %v621
    %778 = vmatpush.bf16.msra.mxu0 %v617
    %779 = vmatpush.bf16.msra.mxu0 %v613
    %780 = vmatpush.bf16.msra.mxu0 %v609
    %781 = vmatmul.bf16.gmra.mxu0 %v373
    %v782 = vpop.f32.mrf.mxu0
    %v783 = vadd.f32 %v769, %v782
    %v784 = vpop.f32.mrf.mxu0
    %v785 = vadd.f32 %v771, %v784
    %786 = vdwg.mxu0
    %787 = vmatpush.bf16.msra.mxu0 %v606
    %788 = vmatpush.bf16.msra.mxu0 %v602
    %789 = vmatpush.bf16.msra.mxu0 %v598
    %790 = vmatpush.bf16.msra.mxu0 %v594
    %791 = vmatpush.bf16.msra.mxu0 %v590
    %792 = vmatpush.bf16.msra.mxu0 %v586
    %793 = vmatpush.bf16.msra.mxu0 %v582
    %794 = vmatpush.bf16.msra.mxu0 %v578
    %795 = vmatmul.bf16.gmra.mxu0 %v372
    %v796 = vpop.f32.mrf.mxu0
    %v797 = vadd.f32 %v378, %v796
    %v798 = vpop.f32.mrf.mxu0
    %v799 = vadd.f32 %v378, %v798
    %800 = vdwg.mxu0
    %801 = vmatpush.bf16.msra.mxu0 %v638
    %802 = vmatpush.bf16.msra.mxu0 %v634
    %803 = vmatpush.bf16.msra.mxu0 %v630
    %804 = vmatpush.bf16.msra.mxu0 %v626
    %805 = vmatpush.bf16.msra.mxu0 %v622
    %806 = vmatpush.bf16.msra.mxu0 %v618
    %807 = vmatpush.bf16.msra.mxu0 %v614
    %808 = vmatpush.bf16.msra.mxu0 %v610
    %809 = vmatmul.bf16.gmra.mxu0 %v373
    %v810 = vpop.f32.mrf.mxu0
    %v811 = vadd.f32 %v797, %v810
    %v812 = vpop.f32.mrf.mxu0
    %v813 = vadd.f32 %v799, %v812
    %814 = vdwg.mxu0
    %vm815 = vcmp.gt.f32.partialorder %v727, 0.0
    %vm816 = vcmp.gt.f32.partialorder %v755, 0.0
    %vm817 = vcmp.gt.f32.partialorder %v783, 0.0
    %vm818 = vcmp.gt.f32.partialorder %v811, 0.0
    %vm819 = vcmp.gt.f32.partialorder %v729, 0.0
    %vm820 = vcmp.gt.f32.partialorder %v757, 0.0
    %vm821 = vcmp.gt.f32.partialorder %v785, 0.0
    %vm822 = vcmp.gt.f32.partialorder %v813, 0.0
    %v823 = vmul.f32 %v727, 0.2
    %v824 = vmul.f32 %v755, 0.2
    %v825 = vmul.f32 %v783, 0.2
    %v826 = vmul.f32 %v811, 0.2
    %v827 = vmul.f32 %v729, 0.2
    %v828 = vmul.f32 %v757, 0.2
    %v829 = vmul.f32 %v785, 0.2
    %v830 = vmul.f32 %v813, 0.2
    %v831 = vsel %vm815, %v727, %v823
    %v832 = vsel %vm816, %v755, %v824
    %v833 = vsel %vm817, %v783, %v825
    %v834 = vsel %vm818, %v811, %v826
    %v835 = vsel %vm819, %v729, %v827
    %v836 = vsel %vm820, %v757, %v828
    %v837 = vsel %vm821, %v785, %v829
    %v838 = vsel %vm822, %v813, %v830
    %s839 = smul.u32 4, 64
    %s840 = smul.u32 %s839, 8
    %s841 = sshll.u32 %s840, 4
    %842 = dma.done [#allocation4], %s841
    %v843 = vld [vmem:[#allocation2] sm:$0xff]
    %v844 = vld [vmem:[#allocation2 + $0x8] sm:$0xff]
    %v845 = vld [vmem:[#allocation2 + $0x10] sm:$0xff]
    %v846 = vld [vmem:[#allocation2 + $0x18] sm:$0xff]
    %v847 = vld [vmem:[#allocation2 + $0x20] sm:$0xff]
    %v848 = vld [vmem:[#allocation2 + $0x28] sm:$0xff]
    %v849 = vld [vmem:[#allocation2 + $0x30] sm:$0xff]
    %v850 = vld [vmem:[#allocation2 + $0x38] sm:$0xff]
    %v851 = vld [vmem:[#allocation2 + $0x40] sm:$0xff]
    %v852 = vld [vmem:[#allocation2 + $0x48] sm:$0xff]
    %v853 = vld [vmem:[#allocation2 + $0x50] sm:$0xff]
    %v854 = vld [vmem:[#allocation2 + $0x58] sm:$0xff]
    %v855 = vld [vmem:[#allocation2 + $0x60] sm:$0xff]
    %v856 = vld [vmem:[#allocation2 + $0x68] sm:$0xff]
    %v857 = vld [vmem:[#allocation2 + $0x70] sm:$0xff]
    %v858 = vld [vmem:[#allocation2 + $0x78] sm:$0xff]
    %v859 = vld [vmem:[#allocation2 + $0x80] sm:$0xff]
    %v860 = vld [vmem:[#allocation2 + $0x88] sm:$0xff]
    %v861 = vld [vmem:[#allocation2 + $0x90] sm:$0xff]
    %v862 = vld [vmem:[#allocation2 + $0x98] sm:$0xff]
    %v863 = vld [vmem:[#allocation2 + $0xa0] sm:$0xff]
    %v864 = vld [vmem:[#allocation2 + $0xa8] sm:$0xff]
    %v865 = vld [vmem:[#allocation2 + $0xb0] sm:$0xff]
    %v866 = vld [vmem:[#allocation2 + $0xb8] sm:$0xff]
    %v867 = vld [vmem:[#allocation2 + $0xc0] sm:$0xff]
    %v868 = vld [vmem:[#allocation2 + $0xc8] sm:$0xff]
    %v869 = vld [vmem:[#allocation2 + $0xd0] sm:$0xff]
    %v870 = vld [vmem:[#allocation2 + $0xd8] sm:$0xff]
    %v871 = vld [vmem:[#allocation2 + $0xe0] sm:$0xff]
    %v872 = vld [vmem:[#allocation2 + $0xe8] sm:$0xff]
    %v873 = vld [vmem:[#allocation2 + $0xf0] sm:$0xff]
    %v874 = vld [vmem:[#allocation2 + $0xf8] sm:$0xff]
    %v875 = vld [vmem:[#allocation2 + $0x100] sm:$0xff]
    %v876 = vld [vmem:[#allocation2 + $0x108] sm:$0xff]
    %v877 = vld [vmem:[#allocation2 + $0x110] sm:$0xff]
    %v878 = vld [vmem:[#allocation2 + $0x118] sm:$0xff]
    %v879 = vld [vmem:[#allocation2 + $0x120] sm:$0xff]
    %v880 = vld [vmem:[#allocation2 + $0x128] sm:$0xff]
    %v881 = vld [vmem:[#allocation2 + $0x130] sm:$0xff]
    %v882 = vld [vmem:[#allocation2 + $0x138] sm:$0xff]
    %v883 = vld [vmem:[#allocation2 + $0x140] sm:$0xff]
    %v884 = vld [vmem:[#allocation2 + $0x148] sm:$0xff]
    %v885 = vld [vmem:[#allocation2 + $0x150] sm:$0xff]
    %v886 = vld [vmem:[#allocation2 + $0x158] sm:$0xff]
    %v887 = vld [vmem:[#allocation2 + $0x160] sm:$0xff]
    %v888 = vld [vmem:[#allocation2 + $0x168] sm:$0xff]
    %v889 = vld [vmem:[#allocation2 + $0x170] sm:$0xff]
    %v890 = vld [vmem:[#allocation2 + $0x178] sm:$0xff]
    %v891 = vld [vmem:[#allocation2 + $0x180] sm:$0xff]
    %v892 = vld [vmem:[#allocation2 + $0x188] sm:$0xff]
    %v893 = vld [vmem:[#allocation2 + $0x190] sm:$0xff]
    %v894 = vld [vmem:[#allocation2 + $0x198] sm:$0xff]
    %v895 = vld [vmem:[#allocation2 + $0x1a0] sm:$0xff]
    %v896 = vld [vmem:[#allocation2 + $0x1a8] sm:$0xff]
    %v897 = vld [vmem:[#allocation2 + $0x1b0] sm:$0xff]
    %v898 = vld [vmem:[#allocation2 + $0x1b8] sm:$0xff]
    %v899 = vld [vmem:[#allocation2 + $0x1c0] sm:$0xff]
    %v900 = vld [vmem:[#allocation2 + $0x1c8] sm:$0xff]
    %v901 = vld [vmem:[#allocation2 + $0x1d0] sm:$0xff]
    %v902 = vld [vmem:[#allocation2 + $0x1d8] sm:$0xff]
    %v903 = vld [vmem:[#allocation2 + $0x1e0] sm:$0xff]
    %v904 = vld [vmem:[#allocation2 + $0x1e8] sm:$0xff]
    %v905 = vld [vmem:[#allocation2 + $0x1f0] sm:$0xff]
    %v906 = vld [vmem:[#allocation2 + $0x1f8] sm:$0xff]
    %v907 = vld [vmem:[#allocation2 + $0x200] sm:$0xff]
    %v908 = vld [vmem:[#allocation2 + $0x208] sm:$0xff]
    %v909 = vld [vmem:[#allocation2 + $0x210] sm:$0xff]
    %v910 = vld [vmem:[#allocation2 + $0x218] sm:$0xff]
    %v911 = vld [vmem:[#allocation2 + $0x220] sm:$0xff]
    %v912 = vld [vmem:[#allocation2 + $0x228] sm:$0xff]
    %v913 = vld [vmem:[#allocation2 + $0x230] sm:$0xff]
    %v914 = vld [vmem:[#allocation2 + $0x238] sm:$0xff]
    %v915 = vld [vmem:[#allocation2 + $0x240] sm:$0xff]
    %v916 = vld [vmem:[#allocation2 + $0x248] sm:$0xff]
    %v917 = vld [vmem:[#allocation2 + $0x250] sm:$0xff]
    %v918 = vld [vmem:[#allocation2 + $0x258] sm:$0xff]
    %v919 = vld [vmem:[#allocation2 + $0x260] sm:$0xff]
    %v920 = vld [vmem:[#allocation2 + $0x268] sm:$0xff]
    %v921 = vld [vmem:[#allocation2 + $0x270] sm:$0xff]
    %v922 = vld [vmem:[#allocation2 + $0x278] sm:$0xff]
    %v923 = vld [vmem:[#allocation2 + $0x280] sm:$0xff]
    %v924 = vld [vmem:[#allocation2 + $0x288] sm:$0xff]
    %v925 = vld [vmem:[#allocation2 + $0x290] sm:$0xff]
    %v926 = vld [vmem:[#allocation2 + $0x298] sm:$0xff]
    %v927 = vld [vmem:[#allocation2 + $0x2a0] sm:$0xff]
    %v928 = vld [vmem:[#allocation2 + $0x2a8] sm:$0xff]
    %v929 = vld [vmem:[#allocation2 + $0x2b0] sm:$0xff]
    %v930 = vld [vmem:[#allocation2 + $0x2b8] sm:$0xff]
    %v931 = vld [vmem:[#allocation2 + $0x2c0] sm:$0xff]
    %v932 = vld [vmem:[#allocation2 + $0x2c8] sm:$0xff]
    %v933 = vld [vmem:[#allocation2 + $0x2d0] sm:$0xff]
    %v934 = vld [vmem:[#allocation2 + $0x2d8] sm:$0xff]
    %v935 = vld [vmem:[#allocation2 + $0x2e0] sm:$0xff]
    %v936 = vld [vmem:[#allocation2 + $0x2e8] sm:$0xff]
    %v937 = vld [vmem:[#allocation2 + $0x2f0] sm:$0xff]
    %v938 = vld [vmem:[#allocation2 + $0x2f8] sm:$0xff]
    %v939 = vld [vmem:[#allocation2 + $0x300] sm:$0xff]
    %v940 = vld [vmem:[#allocation2 + $0x308] sm:$0xff]
    %v941 = vld [vmem:[#allocation2 + $0x310] sm:$0xff]
    %v942 = vld [vmem:[#allocation2 + $0x318] sm:$0xff]
    %v943 = vld [vmem:[#allocation2 + $0x320] sm:$0xff]
    %v944 = vld [vmem:[#allocation2 + $0x328] sm:$0xff]
    %v945 = vld [vmem:[#allocation2 + $0x330] sm:$0xff]
    %v946 = vld [vmem:[#allocation2 + $0x338] sm:$0xff]
    %v947 = vld [vmem:[#allocation2 + $0x340] sm:$0xff]
    %v948 = vld [vmem:[#allocation2 + $0x348] sm:$0xff]
    %v949 = vld [vmem:[#allocation2 + $0x350] sm:$0xff]
    %v950 = vld [vmem:[#allocation2 + $0x358] sm:$0xff]
    %v951 = vld [vmem:[#allocation2 + $0x360] sm:$0xff]
    %v952 = vld [vmem:[#allocation2 + $0x368] sm:$0xff]
    %v953 = vld [vmem:[#allocation2 + $0x370] sm:$0xff]
    %v954 = vld [vmem:[#allocation2 + $0x378] sm:$0xff]
    %v955 = vld [vmem:[#allocation2 + $0x380] sm:$0xff]
    %v956 = vld [vmem:[#allocation2 + $0x388] sm:$0xff]
    %v957 = vld [vmem:[#allocation2 + $0x390] sm:$0xff]
    %v958 = vld [vmem:[#allocation2 + $0x398] sm:$0xff]
    %v959 = vld [vmem:[#allocation2 + $0x3a0] sm:$0xff]
    %v960 = vld [vmem:[#allocation2 + $0x3a8] sm:$0xff]
    %v961 = vld [vmem:[#allocation2 + $0x3b0] sm:$0xff]
    %v962 = vld [vmem:[#allocation2 + $0x3b8] sm:$0xff]
    %v963 = vld [vmem:[#allocation2 + $0x3c0] sm:$0xff]
    %v964 = vld [vmem:[#allocation2 + $0x3c8] sm:$0xff]
    %v965 = vld [vmem:[#allocation2 + $0x3d0] sm:$0xff]
    %v966 = vld [vmem:[#allocation2 + $0x3d8] sm:$0xff]
    %v967 = vld [vmem:[#allocation2 + $0x3e0] sm:$0xff]
    %v968 = vld [vmem:[#allocation2 + $0x3e8] sm:$0xff]
    %v969 = vld [vmem:[#allocation2 + $0x3f0] sm:$0xff]
    %v970 = vld [vmem:[#allocation2 + $0x3f8] sm:$0xff]
    %v971 = vld [vmem:[#allocation2 + $0x400] sm:$0xff]
    %v972 = vld [vmem:[#allocation2 + $0x408] sm:$0xff]
    %v973 = vld [vmem:[#allocation2 + $0x410] sm:$0xff]
    %v974 = vld [vmem:[#allocation2 + $0x418] sm:$0xff]
    %v975 = vld [vmem:[#allocation2 + $0x420] sm:$0xff]
    %v976 = vld [vmem:[#allocation2 + $0x428] sm:$0xff]
    %v977 = vld [vmem:[#allocation2 + $0x430] sm:$0xff]
    %v978 = vld [vmem:[#allocation2 + $0x438] sm:$0xff]
    %v979 = vld [vmem:[#allocation2 + $0x440] sm:$0xff]
    %v980 = vld [vmem:[#allocation2 + $0x448] sm:$0xff]
    %v981 = vld [vmem:[#allocation2 + $0x450] sm:$0xff]
    %v982 = vld [vmem:[#allocation2 + $0x458] sm:$0xff]
    %v983 = vld [vmem:[#allocation2 + $0x460] sm:$0xff]
    %v984 = vld [vmem:[#allocation2 + $0x468] sm:$0xff]
    %v985 = vld [vmem:[#allocation2 + $0x470] sm:$0xff]
    %v986 = vld [vmem:[#allocation2 + $0x478] sm:$0xff]
    %v987 = vld [vmem:[#allocation2 + $0x480] sm:$0xff]
    %v988 = vld [vmem:[#allocation2 + $0x488] sm:$0xff]
    %v989 = vld [vmem:[#allocation2 + $0x490] sm:$0xff]
    %v990 = vld [vmem:[#allocation2 + $0x498] sm:$0xff]
    %v991 = vld [vmem:[#allocation2 + $0x4a0] sm:$0xff]
    %v992 = vld [vmem:[#allocation2 + $0x4a8] sm:$0xff]
    %v993 = vld [vmem:[#allocation2 + $0x4b0] sm:$0xff]
    %v994 = vld [vmem:[#allocation2 + $0x4b8] sm:$0xff]
    %v995 = vld [vmem:[#allocation2 + $0x4c0] sm:$0xff]
    %v996 = vld [vmem:[#allocation2 + $0x4c8] sm:$0xff]
    %v997 = vld [vmem:[#allocation2 + $0x4d0] sm:$0xff]
    %v998 = vld [vmem:[#allocation2 + $0x4d8] sm:$0xff]
    %v999 = vld [vmem:[#allocation2 + $0x4e0] sm:$0xff]
    %v1000 = vld [vmem:[#allocation2 + $0x4e8] sm:$0xff]
    %v1001 = vld [vmem:[#allocation2 + $0x4f0] sm:$0xff]
    %v1002 = vld [vmem:[#allocation2 + $0x4f8] sm:$0xff]
    %v1003 = vld [vmem:[#allocation2 + $0x500] sm:$0xff]
    %v1004 = vld [vmem:[#allocation2 + $0x508] sm:$0xff]
    %v1005 = vld [vmem:[#allocation2 + $0x510] sm:$0xff]
    %v1006 = vld [vmem:[#allocation2 + $0x518] sm:$0xff]
    %v1007 = vld [vmem:[#allocation2 + $0x520] sm:$0xff]
    %v1008 = vld [vmem:[#allocation2 + $0x528] sm:$0xff]
    %v1009 = vld [vmem:[#allocation2 + $0x530] sm:$0xff]
    %v1010 = vld [vmem:[#allocation2 + $0x538] sm:$0xff]
    %v1011 = vld [vmem:[#allocation2 + $0x540] sm:$0xff]
    %v1012 = vld [vmem:[#allocation2 + $0x548] sm:$0xff]
    %v1013 = vld [vmem:[#allocation2 + $0x550] sm:$0xff]
    %v1014 = vld [vmem:[#allocation2 + $0x558] sm:$0xff]
    %v1015 = vld [vmem:[#allocation2 + $0x560] sm:$0xff]
    %v1016 = vld [vmem:[#allocation2 + $0x568] sm:$0xff]
    %v1017 = vld [vmem:[#allocation2 + $0x570] sm:$0xff]
    %v1018 = vld [vmem:[#allocation2 + $0x578] sm:$0xff]
    %v1019 = vld [vmem:[#allocation2 + $0x580] sm:$0xff]
    %v1020 = vld [vmem:[#allocation2 + $0x588] sm:$0xff]
    %v1021 = vld [vmem:[#allocation2 + $0x590] sm:$0xff]
    %v1022 = vld [vmem:[#allocation2 + $0x598] sm:$0xff]
    %v1023 = vld [vmem:[#allocation2 + $0x5a0] sm:$0xff]
    %v1024 = vld [vmem:[#allocation2 + $0x5a8] sm:$0xff]
    %v1025 = vld [vmem:[#allocation2 + $0x5b0] sm:$0xff]
    %v1026 = vld [vmem:[#allocation2 + $0x5b8] sm:$0xff]
    %v1027 = vld [vmem:[#allocation2 + $0x5c0] sm:$0xff]
    %v1028 = vld [vmem:[#allocation2 + $0x5c8] sm:$0xff]
    %v1029 = vld [vmem:[#allocation2 + $0x5d0] sm:$0xff]
    %v1030 = vld [vmem:[#allocation2 + $0x5d8] sm:$0xff]
    %v1031 = vld [vmem:[#allocation2 + $0x5e0] sm:$0xff]
    %v1032 = vld [vmem:[#allocation2 + $0x5e8] sm:$0xff]
    %v1033 = vld [vmem:[#allocation2 + $0x5f0] sm:$0xff]
    %v1034 = vld [vmem:[#allocation2 + $0x5f8] sm:$0xff]
    %v1035 = vld [vmem:[#allocation2 + $0x600] sm:$0xff]
    %v1036 = vld [vmem:[#allocation2 + $0x608] sm:$0xff]
    %v1037 = vld [vmem:[#allocation2 + $0x610] sm:$0xff]
    %v1038 = vld [vmem:[#allocation2 + $0x618] sm:$0xff]
    %v1039 = vld [vmem:[#allocation2 + $0x620] sm:$0xff]
    %v1040 = vld [vmem:[#allocation2 + $0x628] sm:$0xff]
    %v1041 = vld [vmem:[#allocation2 + $0x630] sm:$0xff]
    %v1042 = vld [vmem:[#allocation2 + $0x638] sm:$0xff]
    %v1043 = vld [vmem:[#allocation2 + $0x640] sm:$0xff]
    %v1044 = vld [vmem:[#allocation2 + $0x648] sm:$0xff]
    %v1045 = vld [vmem:[#allocation2 + $0x650] sm:$0xff]
    %v1046 = vld [vmem:[#allocation2 + $0x658] sm:$0xff]
    %v1047 = vld [vmem:[#allocation2 + $0x660] sm:$0xff]
    %v1048 = vld [vmem:[#allocation2 + $0x668] sm:$0xff]
    %v1049 = vld [vmem:[#allocation2 + $0x670] sm:$0xff]
    %v1050 = vld [vmem:[#allocation2 + $0x678] sm:$0xff]
    %v1051 = vld [vmem:[#allocation2 + $0x680] sm:$0xff]
    %v1052 = vld [vmem:[#allocation2 + $0x688] sm:$0xff]
    %v1053 = vld [vmem:[#allocation2 + $0x690] sm:$0xff]
    %v1054 = vld [vmem:[#allocation2 + $0x698] sm:$0xff]
    %v1055 = vld [vmem:[#allocation2 + $0x6a0] sm:$0xff]
    %v1056 = vld [vmem:[#allocation2 + $0x6a8] sm:$0xff]
    %v1057 = vld [vmem:[#allocation2 + $0x6b0] sm:$0xff]
    %v1058 = vld [vmem:[#allocation2 + $0x6b8] sm:$0xff]
    %v1059 = vld [vmem:[#allocation2 + $0x6c0] sm:$0xff]
    %v1060 = vld [vmem:[#allocation2 + $0x6c8] sm:$0xff]
    %v1061 = vld [vmem:[#allocation2 + $0x6d0] sm:$0xff]
    %v1062 = vld [vmem:[#allocation2 + $0x6d8] sm:$0xff]
    %v1063 = vld [vmem:[#allocation2 + $0x6e0] sm:$0xff]
    %v1064 = vld [vmem:[#allocation2 + $0x6e8] sm:$0xff]
    %v1065 = vld [vmem:[#allocation2 + $0x6f0] sm:$0xff]
    %v1066 = vld [vmem:[#allocation2 + $0x6f8] sm:$0xff]
    %v1067 = vld [vmem:[#allocation2 + $0x700] sm:$0xff]
    %v1068 = vld [vmem:[#allocation2 + $0x708] sm:$0xff]
    %v1069 = vld [vmem:[#allocation2 + $0x710] sm:$0xff]
    %v1070 = vld [vmem:[#allocation2 + $0x718] sm:$0xff]
    %v1071 = vld [vmem:[#allocation2 + $0x720] sm:$0xff]
    %v1072 = vld [vmem:[#allocation2 + $0x728] sm:$0xff]
    %v1073 = vld [vmem:[#allocation2 + $0x730] sm:$0xff]
    %v1074 = vld [vmem:[#allocation2 + $0x738] sm:$0xff]
    %v1075 = vld [vmem:[#allocation2 + $0x740] sm:$0xff]
    %v1076 = vld [vmem:[#allocation2 + $0x748] sm:$0xff]
    %v1077 = vld [vmem:[#allocation2 + $0x750] sm:$0xff]
    %v1078 = vld [vmem:[#allocation2 + $0x758] sm:$0xff]
    %v1079 = vld [vmem:[#allocation2 + $0x760] sm:$0xff]
    %v1080 = vld [vmem:[#allocation2 + $0x768] sm:$0xff]
    %v1081 = vld [vmem:[#allocation2 + $0x770] sm:$0xff]
    %v1082 = vld [vmem:[#allocation2 + $0x778] sm:$0xff]
    %v1083 = vld [vmem:[#allocation2 + $0x780] sm:$0xff]
    %v1084 = vld [vmem:[#allocation2 + $0x788] sm:$0xff]
    %v1085 = vld [vmem:[#allocation2 + $0x790] sm:$0xff]
    %v1086 = vld [vmem:[#allocation2 + $0x798] sm:$0xff]
    %v1087 = vld [vmem:[#allocation2 + $0x7a0] sm:$0xff]
    %v1088 = vld [vmem:[#allocation2 + $0x7a8] sm:$0xff]
    %v1089 = vld [vmem:[#allocation2 + $0x7b0] sm:$0xff]
    %v1090 = vld [vmem:[#allocation2 + $0x7b8] sm:$0xff]
    %v1091 = vld [vmem:[#allocation2 + $0x7c0] sm:$0xff]
    %v1092 = vld [vmem:[#allocation2 + $0x7c8] sm:$0xff]
    %v1093 = vld [vmem:[#allocation2 + $0x7d0] sm:$0xff]
    %v1094 = vld [vmem:[#allocation2 + $0x7d8] sm:$0xff]
    %v1095 = vld [vmem:[#allocation2 + $0x7e0] sm:$0xff]
    %v1096 = vld [vmem:[#allocation2 + $0x7e8] sm:$0xff]
    %v1097 = vld [vmem:[#allocation2 + $0x7f0] sm:$0xff]
    %v1098 = vld [vmem:[#allocation2 + $0x7f8] sm:$0xff]
    %v1099 = vld [vmem:[#allocation14] sm:$0xff]
    %v1100 = vpack.c.bf16 %v835, %v831
    %v1101 = vpack.c.bf16 %v836, %v832
    %v1102 = vpack.c.bf16 %v837, %v833
    %v1103 = vpack.c.bf16 %v838, %v834
    %v1105 = vperm.slane %v1099, 0
    %v1106 = vperm.slane %v1099, 1
    %v1107 = vperm.slane %v1099, 2
    %v1108 = vperm.slane %v1099, 3
    %v1109 = vperm.slane %v1099, 4
    %v1110 = vperm.slane %v1099, 5
    %v1111 = vperm.slane %v1099, 6
    %v1112 = vperm.slane %v1099, 7
    %v1377 = vunpack.c.l.b16 %v843
    %v1378 = vunpack.c.h.b16 %v843
    %v1379 = vunpack.c.l.b16 %v844
    %v1380 = vunpack.c.h.b16 %v844
    %v1381 = vunpack.c.l.b16 %v845
    %v1382 = vunpack.c.h.b16 %v845
    %v1383 = vunpack.c.l.b16 %v846
    %v1384 = vunpack.c.h.b16 %v846
    %v1385 = vunpack.c.l.b16 %v847
    %v1386 = vunpack.c.h.b16 %v847
    %v1387 = vunpack.c.l.b16 %v848
    %v1388 = vunpack.c.h.b16 %v848
    %v1389 = vunpack.c.l.b16 %v849
    %v1390 = vunpack.c.h.b16 %v849
    %v1391 = vunpack.c.l.b16 %v850
    %v1392 = vunpack.c.h.b16 %v850
    %v1393 = vunpack.c.l.b16 %v851
    %v1394 = vunpack.c.h.b16 %v851
    %v1395 = vunpack.c.l.b16 %v852
    %v1396 = vunpack.c.h.b16 %v852
    %v1397 = vunpack.c.l.b16 %v853
    %v1398 = vunpack.c.h.b16 %v853
    %v1399 = vunpack.c.l.b16 %v854
    %v1400 = vunpack.c.h.b16 %v854
    %v1401 = vunpack.c.l.b16 %v855
    %v1402 = vunpack.c.h.b16 %v855
    %v1403 = vunpack.c.l.b16 %v856
    %v1404 = vunpack.c.h.b16 %v856
    %v1405 = vunpack.c.l.b16 %v857
    %v1406 = vunpack.c.h.b16 %v857
    %v1407 = vunpack.c.l.b16 %v858
    %v1408 = vunpack.c.h.b16 %v858
    %v1409 = vunpack.c.l.b16 %v859
    %v1410 = vunpack.c.h.b16 %v859
    %v1411 = vunpack.c.l.b16 %v860
    %v1412 = vunpack.c.h.b16 %v860
    %v1413 = vunpack.c.l.b16 %v861
    %v1414 = vunpack.c.h.b16 %v861
    %v1415 = vunpack.c.l.b16 %v862
    %v1416 = vunpack.c.h.b16 %v862
    %v1417 = vunpack.c.l.b16 %v863
    %v1418 = vunpack.c.h.b16 %v863
    %v1419 = vunpack.c.l.b16 %v864
    %v1420 = vunpack.c.h.b16 %v864
    %v1421 = vunpack.c.l.b16 %v865
    %v1422 = vunpack.c.h.b16 %v865
    %v1423 = vunpack.c.l.b16 %v866
    %v1424 = vunpack.c.h.b16 %v866
    %v1425 = vunpack.c.l.b16 %v867
    %v1426 = vunpack.c.h.b16 %v867
    %v1427 = vunpack.c.l.b16 %v868
    %v1428 = vunpack.c.h.b16 %v868
    %v1429 = vunpack.c.l.b16 %v869
    %v1430 = vunpack.c.h.b16 %v869
    %v1431 = vunpack.c.l.b16 %v870
    %v1432 = vunpack.c.h.b16 %v870
    %v1433 = vunpack.c.l.b16 %v871
    %v1434 = vunpack.c.h.b16 %v871
    %v1435 = vunpack.c.l.b16 %v872
    %v1436 = vunpack.c.h.b16 %v872
    %v1437 = vunpack.c.l.b16 %v873
    %v1438 = vunpack.c.h.b16 %v873
    %v1439 = vunpack.c.l.b16 %v874
    %v1440 = vunpack.c.h.b16 %v874
    %v1441 = vunpack.c.l.b16 %v875
    %v1442 = vunpack.c.h.b16 %v875
    %v1443 = vunpack.c.l.b16 %v876
    %v1444 = vunpack.c.h.b16 %v876
    %v1445 = vunpack.c.l.b16 %v877
    %v1446 = vunpack.c.h.b16 %v877
    %v1447 = vunpack.c.l.b16 %v878
    %v1448 = vunpack.c.h.b16 %v878
    %v1449 = vunpack.c.l.b16 %v879
    %v1450 = vunpack.c.h.b16 %v879
    %v1451 = vunpack.c.l.b16 %v880
    %v1452 = vunpack.c.h.b16 %v880
    %v1453 = vunpack.c.l.b16 %v881
    %v1454 = vunpack.c.h.b16 %v881
    %v1455 = vunpack.c.l.b16 %v882
    %v1456 = vunpack.c.h.b16 %v882
    %v1457 = vunpack.c.l.b16 %v883
    %v1458 = vunpack.c.h.b16 %v883
    %v1459 = vunpack.c.l.b16 %v884
    %v1460 = vunpack.c.h.b16 %v884
    %v1461 = vunpack.c.l.b16 %v885
    %v1462 = vunpack.c.h.b16 %v885
    %v1463 = vunpack.c.l.b16 %v886
    %v1464 = vunpack.c.h.b16 %v886
    %v1465 = vunpack.c.l.b16 %v887
    %v1466 = vunpack.c.h.b16 %v887
    %v1467 = vunpack.c.l.b16 %v888
    %v1468 = vunpack.c.h.b16 %v888
    %v1469 = vunpack.c.l.b16 %v889
    %v1470 = vunpack.c.h.b16 %v889
    %v1471 = vunpack.c.l.b16 %v890
    %v1472 = vunpack.c.h.b16 %v890
    %v1473 = vunpack.c.l.b16 %v891
    %v1474 = vunpack.c.h.b16 %v891
    %v1475 = vunpack.c.l.b16 %v892
    %v1476 = vunpack.c.h.b16 %v892
    %v1477 = vunpack.c.l.b16 %v893
    %v1478 = vunpack.c.h.b16 %v893
    %v1479 = vunpack.c.l.b16 %v894
    %v1480 = vunpack.c.h.b16 %v894
    %v1481 = vunpack.c.l.b16 %v895
    %v1482 = vunpack.c.h.b16 %v895
    %v1483 = vunpack.c.l.b16 %v896
    %v1484 = vunpack.c.h.b16 %v896
    %v1485 = vunpack.c.l.b16 %v897
    %v1486 = vunpack.c.h.b16 %v897
    %v1487 = vunpack.c.l.b16 %v898
    %v1488 = vunpack.c.h.b16 %v898
    %v1489 = vunpack.c.l.b16 %v899
    %v1490 = vunpack.c.h.b16 %v899
    %v1491 = vunpack.c.l.b16 %v900
    %v1492 = vunpack.c.h.b16 %v900
    %v1493 = vunpack.c.l.b16 %v901
    %v1494 = vunpack.c.h.b16 %v901
    %v1495 = vunpack.c.l.b16 %v902
    %v1496 = vunpack.c.h.b16 %v902
    %v1497 = vunpack.c.l.b16 %v903
    %v1498 = vunpack.c.h.b16 %v903
    %v1499 = vunpack.c.l.b16 %v904
    %v1500 = vunpack.c.h.b16 %v904
    %v1501 = vunpack.c.l.b16 %v905
    %v1502 = vunpack.c.h.b16 %v905
    %v1503 = vunpack.c.l.b16 %v906
    %v1504 = vunpack.c.h.b16 %v906
    %v1505 = vunpack.c.l.b16 %v907
    %v1506 = vunpack.c.h.b16 %v907
    %v1507 = vunpack.c.l.b16 %v908
    %v1508 = vunpack.c.h.b16 %v908
    %v1509 = vunpack.c.l.b16 %v909
    %v1510 = vunpack.c.h.b16 %v909
    %v1511 = vunpack.c.l.b16 %v910
    %v1512 = vunpack.c.h.b16 %v910
    %v1513 = vunpack.c.l.b16 %v911
    %v1514 = vunpack.c.h.b16 %v911
    %v1515 = vunpack.c.l.b16 %v912
    %v1516 = vunpack.c.h.b16 %v912
    %v1517 = vunpack.c.l.b16 %v913
    %v1518 = vunpack.c.h.b16 %v913
    %v1519 = vunpack.c.l.b16 %v914
    %v1520 = vunpack.c.h.b16 %v914
    %v1521 = vunpack.c.l.b16 %v915
    %v1522 = vunpack.c.h.b16 %v915
    %v1523 = vunpack.c.l.b16 %v916
    %v1524 = vunpack.c.h.b16 %v916
    %v1525 = vunpack.c.l.b16 %v917
    %v1526 = vunpack.c.h.b16 %v917
    %v1527 = vunpack.c.l.b16 %v918
    %v1528 = vunpack.c.h.b16 %v918
    %v1529 = vunpack.c.l.b16 %v919
    %v1530 = vunpack.c.h.b16 %v919
    %v1531 = vunpack.c.l.b16 %v920
    %v1532 = vunpack.c.h.b16 %v920
    %v1533 = vunpack.c.l.b16 %v921
    %v1534 = vunpack.c.h.b16 %v921
    %v1535 = vunpack.c.l.b16 %v922
    %v1536 = vunpack.c.h.b16 %v922
    %v1537 = vunpack.c.l.b16 %v923
    %v1538 = vunpack.c.h.b16 %v923
    %v1539 = vunpack.c.l.b16 %v924
    %v1540 = vunpack.c.h.b16 %v924
    %v1541 = vunpack.c.l.b16 %v925
    %v1542 = vunpack.c.h.b16 %v925
    %v1543 = vunpack.c.l.b16 %v926
    %v1544 = vunpack.c.h.b16 %v926
    %v1545 = vunpack.c.l.b16 %v927
    %v1546 = vunpack.c.h.b16 %v927
    %v1547 = vunpack.c.l.b16 %v928
    %v1548 = vunpack.c.h.b16 %v928
    %v1549 = vunpack.c.l.b16 %v929
    %v1550 = vunpack.c.h.b16 %v929
    %v1551 = vunpack.c.l.b16 %v930
    %v1552 = vunpack.c.h.b16 %v930
    %v1553 = vunpack.c.l.b16 %v931
    %v1554 = vunpack.c.h.b16 %v931
    %v1555 = vunpack.c.l.b16 %v932
    %v1556 = vunpack.c.h.b16 %v932
    %v1557 = vunpack.c.l.b16 %v933
    %v1558 = vunpack.c.h.b16 %v933
    %v1559 = vunpack.c.l.b16 %v934
    %v1560 = vunpack.c.h.b16 %v934
    %v1561 = vunpack.c.l.b16 %v935
    %v1562 = vunpack.c.h.b16 %v935
    %v1563 = vunpack.c.l.b16 %v936
    %v1564 = vunpack.c.h.b16 %v936
    %v1565 = vunpack.c.l.b16 %v937
    %v1566 = vunpack.c.h.b16 %v937
    %v1567 = vunpack.c.l.b16 %v938
    %v1568 = vunpack.c.h.b16 %v938
    %v1569 = vunpack.c.l.b16 %v939
    %v1570 = vunpack.c.h.b16 %v939
    %v1571 = vunpack.c.l.b16 %v940
    %v1572 = vunpack.c.h.b16 %v940
    %v1573 = vunpack.c.l.b16 %v941
    %v1574 = vunpack.c.h.b16 %v941
    %v1575 = vunpack.c.l.b16 %v942
    %v1576 = vunpack.c.h.b16 %v942
    %v1577 = vunpack.c.l.b16 %v943
    %v1578 = vunpack.c.h.b16 %v943
    %v1579 = vunpack.c.l.b16 %v944
    %v1580 = vunpack.c.h.b16 %v944
    %v1581 = vunpack.c.l.b16 %v945
    %v1582 = vunpack.c.h.b16 %v945
    %v1583 = vunpack.c.l.b16 %v946
    %v1584 = vunpack.c.h.b16 %v946
    %v1585 = vunpack.c.l.b16 %v947
    %v1586 = vunpack.c.h.b16 %v947
    %v1587 = vunpack.c.l.b16 %v948
    %v1588 = vunpack.c.h.b16 %v948
    %v1589 = vunpack.c.l.b16 %v949
    %v1590 = vunpack.c.h.b16 %v949
    %v1591 = vunpack.c.l.b16 %v950
    %v1592 = vunpack.c.h.b16 %v950
    %v1593 = vunpack.c.l.b16 %v951
    %v1594 = vunpack.c.h.b16 %v951
    %v1595 = vunpack.c.l.b16 %v952
    %v1596 = vunpack.c.h.b16 %v952
    %v1597 = vunpack.c.l.b16 %v953
    %v1598 = vunpack.c.h.b16 %v953
    %v1599 = vunpack.c.l.b16 %v954
    %v1600 = vunpack.c.h.b16 %v954
    %v1601 = vunpack.c.l.b16 %v955
    %v1602 = vunpack.c.h.b16 %v955
    %v1603 = vunpack.c.l.b16 %v956
    %v1604 = vunpack.c.h.b16 %v956
    %v1605 = vunpack.c.l.b16 %v957
    %v1606 = vunpack.c.h.b16 %v957
    %v1607 = vunpack.c.l.b16 %v958
    %v1608 = vunpack.c.h.b16 %v958
    %v1609 = vunpack.c.l.b16 %v959
    %v1610 = vunpack.c.h.b16 %v959
    %v1611 = vunpack.c.l.b16 %v960
    %v1612 = vunpack.c.h.b16 %v960
    %v1613 = vunpack.c.l.b16 %v961
    %v1614 = vunpack.c.h.b16 %v961
    %v1615 = vunpack.c.l.b16 %v962
    %v1616 = vunpack.c.h.b16 %v962
    %v1617 = vunpack.c.l.b16 %v963
    %v1618 = vunpack.c.h.b16 %v963
    %v1619 = vunpack.c.l.b16 %v964
    %v1620 = vunpack.c.h.b16 %v964
    %v1621 = vunpack.c.l.b16 %v965
    %v1622 = vunpack.c.h.b16 %v965
    %v1623 = vunpack.c.l.b16 %v966
    %v1624 = vunpack.c.h.b16 %v966
    %v1625 = vunpack.c.l.b16 %v967
    %v1626 = vunpack.c.h.b16 %v967
    %v1627 = vunpack.c.l.b16 %v968
    %v1628 = vunpack.c.h.b16 %v968
    %v1629 = vunpack.c.l.b16 %v969
    %v1630 = vunpack.c.h.b16 %v969
    %v1631 = vunpack.c.l.b16 %v970
    %v1632 = vunpack.c.h.b16 %v970
    %v1633 = vunpack.c.l.b16 %v971
    %v1634 = vunpack.c.h.b16 %v971
    %v1635 = vunpack.c.l.b16 %v972
    %v1636 = vunpack.c.h.b16 %v972
    %v1637 = vunpack.c.l.b16 %v973
    %v1638 = vunpack.c.h.b16 %v973
    %v1639 = vunpack.c.l.b16 %v974
    %v1640 = vunpack.c.h.b16 %v974
    %v1641 = vunpack.c.l.b16 %v975
    %v1642 = vunpack.c.h.b16 %v975
    %v1643 = vunpack.c.l.b16 %v976
    %v1644 = vunpack.c.h.b16 %v976
    %v1645 = vunpack.c.l.b16 %v977
    %v1646 = vunpack.c.h.b16 %v977
    %v1647 = vunpack.c.l.b16 %v978
    %v1648 = vunpack.c.h.b16 %v978
    %v1649 = vunpack.c.l.b16 %v979
    %v1650 = vunpack.c.h.b16 %v979
    %v1651 = vunpack.c.l.b16 %v980
    %v1652 = vunpack.c.h.b16 %v980
    %v1653 = vunpack.c.l.b16 %v981
    %v1654 = vunpack.c.h.b16 %v981
    %v1655 = vunpack.c.l.b16 %v982
    %v1656 = vunpack.c.h.b16 %v982
    %v1657 = vunpack.c.l.b16 %v983
    %v1658 = vunpack.c.h.b16 %v983
    %v1659 = vunpack.c.l.b16 %v984
    %v1660 = vunpack.c.h.b16 %v984
    %v1661 = vunpack.c.l.b16 %v985
    %v1662 = vunpack.c.h.b16 %v985
    %v1663 = vunpack.c.l.b16 %v986
    %v1664 = vunpack.c.h.b16 %v986
    %v1665 = vunpack.c.l.b16 %v987
    %v1666 = vunpack.c.h.b16 %v987
    %v1667 = vunpack.c.l.b16 %v988
    %v1668 = vunpack.c.h.b16 %v988
    %v1669 = vunpack.c.l.b16 %v989
    %v1670 = vunpack.c.h.b16 %v989
    %v1671 = vunpack.c.l.b16 %v990
    %v1672 = vunpack.c.h.b16 %v990
    %v1673 = vunpack.c.l.b16 %v991
    %v1674 = vunpack.c.h.b16 %v991
    %v1675 = vunpack.c.l.b16 %v992
    %v1676 = vunpack.c.h.b16 %v992
    %v1677 = vunpack.c.l.b16 %v993
    %v1678 = vunpack.c.h.b16 %v993
    %v1679 = vunpack.c.l.b16 %v994
    %v1680 = vunpack.c.h.b16 %v994
    %v1681 = vunpack.c.l.b16 %v995
    %v1682 = vunpack.c.h.b16 %v995
    %v1683 = vunpack.c.l.b16 %v996
    %v1684 = vunpack.c.h.b16 %v996
    %v1685 = vunpack.c.l.b16 %v997
    %v1686 = vunpack.c.h.b16 %v997
    %v1687 = vunpack.c.l.b16 %v998
    %v1688 = vunpack.c.h.b16 %v998
    %v1689 = vunpack.c.l.b16 %v999
    %v1690 = vunpack.c.h.b16 %v999
    %v1691 = vunpack.c.l.b16 %v1000
    %v1692 = vunpack.c.h.b16 %v1000
    %v1693 = vunpack.c.l.b16 %v1001
    %v1694 = vunpack.c.h.b16 %v1001
    %v1695 = vunpack.c.l.b16 %v1002
    %v1696 = vunpack.c.h.b16 %v1002
    %v1697 = vunpack.c.l.b16 %v1003
    %v1698 = vunpack.c.h.b16 %v1003
    %v1699 = vunpack.c.l.b16 %v1004
    %v1700 = vunpack.c.h.b16 %v1004
    %v1701 = vunpack.c.l.b16 %v1005
    %v1702 = vunpack.c.h.b16 %v1005
    %v1703 = vunpack.c.l.b16 %v1006
    %v1704 = vunpack.c.h.b16 %v1006
    %v1705 = vunpack.c.l.b16 %v1007
    %v1706 = vunpack.c.h.b16 %v1007
    %v1707 = vunpack.c.l.b16 %v1008
    %v1708 = vunpack.c.h.b16 %v1008
    %v1709 = vunpack.c.l.b16 %v1009
    %v1710 = vunpack.c.h.b16 %v1009
    %v1711 = vunpack.c.l.b16 %v1010
    %v1712 = vunpack.c.h.b16 %v1010
    %v1713 = vunpack.c.l.b16 %v1011
    %v1714 = vunpack.c.h.b16 %v1011
    %v1715 = vunpack.c.l.b16 %v1012
    %v1716 = vunpack.c.h.b16 %v1012
    %v1717 = vunpack.c.l.b16 %v1013
    %v1718 = vunpack.c.h.b16 %v1013
    %v1719 = vunpack.c.l.b16 %v1014
    %v1720 = vunpack.c.h.b16 %v1014
    %v1721 = vunpack.c.l.b16 %v1015
    %v1722 = vunpack.c.h.b16 %v1015
    %v1723 = vunpack.c.l.b16 %v1016
    %v1724 = vunpack.c.h.b16 %v1016
    %v1725 = vunpack.c.l.b16 %v1017
    %v1726 = vunpack.c.h.b16 %v1017
    %v1727 = vunpack.c.l.b16 %v1018
    %v1728 = vunpack.c.h.b16 %v1018
    %v1729 = vunpack.c.l.b16 %v1019
    %v1730 = vunpack.c.h.b16 %v1019
    %v1731 = vunpack.c.l.b16 %v1020
    %v1732 = vunpack.c.h.b16 %v1020
    %v1733 = vunpack.c.l.b16 %v1021
    %v1734 = vunpack.c.h.b16 %v1021
    %v1735 = vunpack.c.l.b16 %v1022
    %v1736 = vunpack.c.h.b16 %v1022
    %v1737 = vunpack.c.l.b16 %v1023
    %v1738 = vunpack.c.h.b16 %v1023
    %v1739 = vunpack.c.l.b16 %v1024
    %v1740 = vunpack.c.h.b16 %v1024
    %v1741 = vunpack.c.l.b16 %v1025
    %v1742 = vunpack.c.h.b16 %v1025
    %v1743 = vunpack.c.l.b16 %v1026
    %v1744 = vunpack.c.h.b16 %v1026
    %v1745 = vunpack.c.l.b16 %v1027
    %v1746 = vunpack.c.h.b16 %v1027
    %v1747 = vunpack.c.l.b16 %v1028
    %v1748 = vunpack.c.h.b16 %v1028
    %v1749 = vunpack.c.l.b16 %v1029
    %v1750 = vunpack.c.h.b16 %v1029
    %v1751 = vunpack.c.l.b16 %v1030
    %v1752 = vunpack.c.h.b16 %v1030
    %v1753 = vunpack.c.l.b16 %v1031
    %v1754 = vunpack.c.h.b16 %v1031
    %v1755 = vunpack.c.l.b16 %v1032
    %v1756 = vunpack.c.h.b16 %v1032
    %v1757 = vunpack.c.l.b16 %v1033
    %v1758 = vunpack.c.h.b16 %v1033
    %v1759 = vunpack.c.l.b16 %v1034
    %v1760 = vunpack.c.h.b16 %v1034
    %v1761 = vunpack.c.l.b16 %v1035
    %v1762 = vunpack.c.h.b16 %v1035
    %v1763 = vunpack.c.l.b16 %v1036
    %v1764 = vunpack.c.h.b16 %v1036
    %v1765 = vunpack.c.l.b16 %v1037
    %v1766 = vunpack.c.h.b16 %v1037
    %v1767 = vunpack.c.l.b16 %v1038
    %v1768 = vunpack.c.h.b16 %v1038
    %v1769 = vunpack.c.l.b16 %v1039
    %v1770 = vunpack.c.h.b16 %v1039
    %v1771 = vunpack.c.l.b16 %v1040
    %v1772 = vunpack.c.h.b16 %v1040
    %v1773 = vunpack.c.l.b16 %v1041
    %v1774 = vunpack.c.h.b16 %v1041
    %v1775 = vunpack.c.l.b16 %v1042
    %v1776 = vunpack.c.h.b16 %v1042
    %v1777 = vunpack.c.l.b16 %v1043
    %v1778 = vunpack.c.h.b16 %v1043
    %v1779 = vunpack.c.l.b16 %v1044
    %v1780 = vunpack.c.h.b16 %v1044
    %v1781 = vunpack.c.l.b16 %v1045
    %v1782 = vunpack.c.h.b16 %v1045
    %v1783 = vunpack.c.l.b16 %v1046
    %v1784 = vunpack.c.h.b16 %v1046
    %v1785 = vunpack.c.l.b16 %v1047
    %v1786 = vunpack.c.h.b16 %v1047
    %v1787 = vunpack.c.l.b16 %v1048
    %v1788 = vunpack.c.h.b16 %v1048
    %v1789 = vunpack.c.l.b16 %v1049
    %v1790 = vunpack.c.h.b16 %v1049
    %v1791 = vunpack.c.l.b16 %v1050
    %v1792 = vunpack.c.h.b16 %v1050
    %v1793 = vunpack.c.l.b16 %v1051
    %v1794 = vunpack.c.h.b16 %v1051
    %v1795 = vunpack.c.l.b16 %v1052
    %v1796 = vunpack.c.h.b16 %v1052
    %v1797 = vunpack.c.l.b16 %v1053
    %v1798 = vunpack.c.h.b16 %v1053
    %v1799 = vunpack.c.l.b16 %v1054
    %v1800 = vunpack.c.h.b16 %v1054
    %v1801 = vunpack.c.l.b16 %v1055
    %v1802 = vunpack.c.h.b16 %v1055
    %v1803 = vunpack.c.l.b16 %v1056
    %v1804 = vunpack.c.h.b16 %v1056
    %v1805 = vunpack.c.l.b16 %v1057
    %v1806 = vunpack.c.h.b16 %v1057
    %v1807 = vunpack.c.l.b16 %v1058
    %v1808 = vunpack.c.h.b16 %v1058
    %v1809 = vunpack.c.l.b16 %v1059
    %v1810 = vunpack.c.h.b16 %v1059
    %v1811 = vunpack.c.l.b16 %v1060
    %v1812 = vunpack.c.h.b16 %v1060
    %v1813 = vunpack.c.l.b16 %v1061
    %v1814 = vunpack.c.h.b16 %v1061
    %v1815 = vunpack.c.l.b16 %v1062
    %v1816 = vunpack.c.h.b16 %v1062
    %v1817 = vunpack.c.l.b16 %v1063
    %v1818 = vunpack.c.h.b16 %v1063
    %v1819 = vunpack.c.l.b16 %v1064
    %v1820 = vunpack.c.h.b16 %v1064
    %v1821 = vunpack.c.l.b16 %v1065
    %v1822 = vunpack.c.h.b16 %v1065
    %v1823 = vunpack.c.l.b16 %v1066
    %v1824 = vunpack.c.h.b16 %v1066
    %v1825 = vunpack.c.l.b16 %v1067
    %v1826 = vunpack.c.h.b16 %v1067
    %v1827 = vunpack.c.l.b16 %v1068
    %v1828 = vunpack.c.h.b16 %v1068
    %v1829 = vunpack.c.l.b16 %v1069
    %v1830 = vunpack.c.h.b16 %v1069
    %v1831 = vunpack.c.l.b16 %v1070
    %v1832 = vunpack.c.h.b16 %v1070
    %v1833 = vunpack.c.l.b16 %v1071
    %v1834 = vunpack.c.h.b16 %v1071
    %v1835 = vunpack.c.l.b16 %v1072
    %v1836 = vunpack.c.h.b16 %v1072
    %v1837 = vunpack.c.l.b16 %v1073
    %v1838 = vunpack.c.h.b16 %v1073
    %v1839 = vunpack.c.l.b16 %v1074
    %v1840 = vunpack.c.h.b16 %v1074
    %v1841 = vunpack.c.l.b16 %v1075
    %v1842 = vunpack.c.h.b16 %v1075
    %v1843 = vunpack.c.l.b16 %v1076
    %v1844 = vunpack.c.h.b16 %v1076
    %v1845 = vunpack.c.l.b16 %v1077
    %v1846 = vunpack.c.h.b16 %v1077
    %v1847 = vunpack.c.l.b16 %v1078
    %v1848 = vunpack.c.h.b16 %v1078
    %v1849 = vunpack.c.l.b16 %v1079
    %v1850 = vunpack.c.h.b16 %v1079
    %v1851 = vunpack.c.l.b16 %v1080
    %v1852 = vunpack.c.h.b16 %v1080
    %v1853 = vunpack.c.l.b16 %v1081
    %v1854 = vunpack.c.h.b16 %v1081
    %v1855 = vunpack.c.l.b16 %v1082
    %v1856 = vunpack.c.h.b16 %v1082
    %v1857 = vunpack.c.l.b16 %v1083
    %v1858 = vunpack.c.h.b16 %v1083
    %v1859 = vunpack.c.l.b16 %v1084
    %v1860 = vunpack.c.h.b16 %v1084
    %v1861 = vunpack.c.l.b16 %v1085
    %v1862 = vunpack.c.h.b16 %v1085
    %v1863 = vunpack.c.l.b16 %v1086
    %v1864 = vunpack.c.h.b16 %v1086
    %v1865 = vunpack.c.l.b16 %v1087
    %v1866 = vunpack.c.h.b16 %v1087
    %v1867 = vunpack.c.l.b16 %v1088
    %v1868 = vunpack.c.h.b16 %v1088
    %v1869 = vunpack.c.l.b16 %v1089
    %v1870 = vunpack.c.h.b16 %v1089
    %v1871 = vunpack.c.l.b16 %v1090
    %v1872 = vunpack.c.h.b16 %v1090
    %v1873 = vunpack.c.l.b16 %v1091
    %v1874 = vunpack.c.h.b16 %v1091
    %v1875 = vunpack.c.l.b16 %v1092
    %v1876 = vunpack.c.h.b16 %v1092
    %v1877 = vunpack.c.l.b16 %v1093
    %v1878 = vunpack.c.h.b16 %v1093
    %v1879 = vunpack.c.l.b16 %v1094
    %v1880 = vunpack.c.h.b16 %v1094
    %v1881 = vunpack.c.l.b16 %v1095
    %v1882 = vunpack.c.h.b16 %v1095
    %v1883 = vunpack.c.l.b16 %v1096
    %v1884 = vunpack.c.h.b16 %v1096
    %v1885 = vunpack.c.l.b16 %v1097
    %v1886 = vunpack.c.h.b16 %v1097
    %v1887 = vunpack.c.l.b16 %v1098
    %v1888 = vunpack.c.h.b16 %v1098
    %v1889 = vpack.c.b16 %v1385, %v1377
    %v1890 = vpack.c.b16 %v1386, %v1378
    %v1891 = vpack.c.b16 %v1387, %v1379
    %v1892 = vpack.c.b16 %v1388, %v1380
    %v1893 = vpack.c.b16 %v1389, %v1381
    %v1894 = vpack.c.b16 %v1390, %v1382
    %v1895 = vpack.c.b16 %v1391, %v1383
    %v1896 = vpack.c.b16 %v1392, %v1384
    %v1897 = vpack.c.b16 %v1401, %v1393
    %v1898 = vpack.c.b16 %v1402, %v1394
    %v1899 = vpack.c.b16 %v1403, %v1395
    %v1900 = vpack.c.b16 %v1404, %v1396
    %v1901 = vpack.c.b16 %v1405, %v1397
    %v1902 = vpack.c.b16 %v1406, %v1398
    %v1903 = vpack.c.b16 %v1407, %v1399
    %v1904 = vpack.c.b16 %v1408, %v1400
    %v1905 = vpack.c.b16 %v1417, %v1409
    %v1906 = vpack.c.b16 %v1418, %v1410
    %v1907 = vpack.c.b16 %v1419, %v1411
    %v1908 = vpack.c.b16 %v1420, %v1412
    %v1909 = vpack.c.b16 %v1421, %v1413
    %v1910 = vpack.c.b16 %v1422, %v1414
    %v1911 = vpack.c.b16 %v1423, %v1415
    %v1912 = vpack.c.b16 %v1424, %v1416
    %v1913 = vpack.c.b16 %v1433, %v1425
    %v1914 = vpack.c.b16 %v1434, %v1426
    %v1915 = vpack.c.b16 %v1435, %v1427
    %v1916 = vpack.c.b16 %v1436, %v1428
    %v1917 = vpack.c.b16 %v1437, %v1429
    %v1918 = vpack.c.b16 %v1438, %v1430
    %v1919 = vpack.c.b16 %v1439, %v1431
    %v1920 = vpack.c.b16 %v1440, %v1432
    %v1921 = vpack.c.b16 %v1449, %v1441
    %v1922 = vpack.c.b16 %v1450, %v1442
    %v1923 = vpack.c.b16 %v1451, %v1443
    %v1924 = vpack.c.b16 %v1452, %v1444
    %v1925 = vpack.c.b16 %v1453, %v1445
    %v1926 = vpack.c.b16 %v1454, %v1446
    %v1927 = vpack.c.b16 %v1455, %v1447
    %v1928 = vpack.c.b16 %v1456, %v1448
    %v1929 = vpack.c.b16 %v1465, %v1457
    %v1930 = vpack.c.b16 %v1466, %v1458
    %v1931 = vpack.c.b16 %v1467, %v1459
    %v1932 = vpack.c.b16 %v1468, %v1460
    %v1933 = vpack.c.b16 %v1469, %v1461
    %v1934 = vpack.c.b16 %v1470, %v1462
    %v1935 = vpack.c.b16 %v1471, %v1463
    %v1936 = vpack.c.b16 %v1472, %v1464
    %v1937 = vpack.c.b16 %v1481, %v1473
    %v1938 = vpack.c.b16 %v1482, %v1474
    %v1939 = vpack.c.b16 %v1483, %v1475
    %v1940 = vpack.c.b16 %v1484, %v1476
    %v1941 = vpack.c.b16 %v1485, %v1477
    %v1942 = vpack.c.b16 %v1486, %v1478
    %v1943 = vpack.c.b16 %v1487, %v1479
    %v1944 = vpack.c.b16 %v1488, %v1480
    %v1945 = vpack.c.b16 %v1497, %v1489
    %v1946 = vpack.c.b16 %v1498, %v1490
    %v1947 = vpack.c.b16 %v1499, %v1491
    %v1948 = vpack.c.b16 %v1500, %v1492
    %v1949 = vpack.c.b16 %v1501, %v1493
    %v1950 = vpack.c.b16 %v1502, %v1494
    %v1951 = vpack.c.b16 %v1503, %v1495
    %v1952 = vpack.c.b16 %v1504, %v1496
    %v1953 = vpack.c.b16 %v1513, %v1505
    %v1954 = vpack.c.b16 %v1514, %v1506
    %v1955 = vpack.c.b16 %v1515, %v1507
    %v1956 = vpack.c.b16 %v1516, %v1508
    %v1957 = vpack.c.b16 %v1517, %v1509
    %v1958 = vpack.c.b16 %v1518, %v1510
    %v1959 = vpack.c.b16 %v1519, %v1511
    %v1960 = vpack.c.b16 %v1520, %v1512
    %v1961 = vpack.c.b16 %v1529, %v1521
    %v1962 = vpack.c.b16 %v1530, %v1522
    %v1963 = vpack.c.b16 %v1531, %v1523
    %v1964 = vpack.c.b16 %v1532, %v1524
    %v1965 = vpack.c.b16 %v1533, %v1525
    %v1966 = vpack.c.b16 %v1534, %v1526
    %v1967 = vpack.c.b16 %v1535, %v1527
    %v1968 = vpack.c.b16 %v1536, %v1528
    %v1969 = vpack.c.b16 %v1545, %v1537
    %v1970 = vpack.c.b16 %v1546, %v1538
    %v1971 = vpack.c.b16 %v1547, %v1539
    %v1972 = vpack.c.b16 %v1548, %v1540
    %v1973 = vpack.c.b16 %v1549, %v1541
    %v1974 = vpack.c.b16 %v1550, %v1542
    %v1975 = vpack.c.b16 %v1551, %v1543
    %v1976 = vpack.c.b16 %v1552, %v1544
    %v1977 = vpack.c.b16 %v1561, %v1553
    %v1978 = vpack.c.b16 %v1562, %v1554
    %v1979 = vpack.c.b16 %v1563, %v1555
    %v1980 = vpack.c.b16 %v1564, %v1556
    %v1981 = vpack.c.b16 %v1565, %v1557
    %v1982 = vpack.c.b16 %v1566, %v1558
    %v1983 = vpack.c.b16 %v1567, %v1559
    %v1984 = vpack.c.b16 %v1568, %v1560
    %v1985 = vpack.c.b16 %v1577, %v1569
    %v1986 = vpack.c.b16 %v1578, %v1570
    %v1987 = vpack.c.b16 %v1579, %v1571
    %v1988 = vpack.c.b16 %v1580, %v1572
    %v1989 = vpack.c.b16 %v1581, %v1573
    %v1990 = vpack.c.b16 %v1582, %v1574
    %v1991 = vpack.c.b16 %v1583, %v1575
    %v1992 = vpack.c.b16 %v1584, %v1576
    %v1993 = vpack.c.b16 %v1593, %v1585
    %v1994 = vpack.c.b16 %v1594, %v1586
    %v1995 = vpack.c.b16 %v1595, %v1587
    %v1996 = vpack.c.b16 %v1596, %v1588
    %v1997 = vpack.c.b16 %v1597, %v1589
    %v1998 = vpack.c.b16 %v1598, %v1590
    %v1999 = vpack.c.b16 %v1599, %v1591
    %v2000 = vpack.c.b16 %v1600, %v1592
    %v2001 = vpack.c.b16 %v1609, %v1601
    %v2002 = vpack.c.b16 %v1610, %v1602
    %v2003 = vpack.c.b16 %v1611, %v1603
    %v2004 = vpack.c.b16 %v1612, %v1604
    %v2005 = vpack.c.b16 %v1613, %v1605
    %v2006 = vpack.c.b16 %v1614, %v1606
    %v2007 = vpack.c.b16 %v1615, %v1607
    %v2008 = vpack.c.b16 %v1616, %v1608
    %v2009 = vpack.c.b16 %v1625, %v1617
    %v2010 = vpack.c.b16 %v1626, %v1618
    %v2011 = vpack.c.b16 %v1627, %v1619
    %v2012 = vpack.c.b16 %v1628, %v1620
    %v2013 = vpack.c.b16 %v1629, %v1621
    %v2014 = vpack.c.b16 %v1630, %v1622
    %v2015 = vpack.c.b16 %v1631, %v1623
    %v2016 = vpack.c.b16 %v1632, %v1624
    %v2017 = vpack.c.b16 %v1641, %v1633
    %v2018 = vpack.c.b16 %v1642, %v1634
    %v2019 = vpack.c.b16 %v1643, %v1635
    %v2020 = vpack.c.b16 %v1644, %v1636
    %v2021 = vpack.c.b16 %v1645, %v1637
    %v2022 = vpack.c.b16 %v1646, %v1638
    %v2023 = vpack.c.b16 %v1647, %v1639
    %v2024 = vpack.c.b16 %v1648, %v1640
    %v2025 = vpack.c.b16 %v1657, %v1649
    %v2026 = vpack.c.b16 %v1658, %v1650
    %v2027 = vpack.c.b16 %v1659, %v1651
    %v2028 = vpack.c.b16 %v1660, %v1652
    %v2029 = vpack.c.b16 %v1661, %v1653
    %v2030 = vpack.c.b16 %v1662, %v1654
    %v2031 = vpack.c.b16 %v1663, %v1655
    %v2032 = vpack.c.b16 %v1664, %v1656
    %v2033 = vpack.c.b16 %v1673, %v1665
    %v2034 = vpack.c.b16 %v1674, %v1666
    %v2035 = vpack.c.b16 %v1675, %v1667
    %v2036 = vpack.c.b16 %v1676, %v1668
    %v2037 = vpack.c.b16 %v1677, %v1669
    %v2038 = vpack.c.b16 %v1678, %v1670
    %v2039 = vpack.c.b16 %v1679, %v1671
    %v2040 = vpack.c.b16 %v1680, %v1672
    %v2041 = vpack.c.b16 %v1689, %v1681
    %v2042 = vpack.c.b16 %v1690, %v1682
    %v2043 = vpack.c.b16 %v1691, %v1683
    %v2044 = vpack.c.b16 %v1692, %v1684
    %v2045 = vpack.c.b16 %v1693, %v1685
    %v2046 = vpack.c.b16 %v1694, %v1686
    %v2047 = vpack.c.b16 %v1695, %v1687
    %v2048 = vpack.c.b16 %v1696, %v1688
    %v2049 = vpack.c.b16 %v1705, %v1697
    %v2050 = vpack.c.b16 %v1706, %v1698
    %v2051 = vpack.c.b16 %v1707, %v1699
    %v2052 = vpack.c.b16 %v1708, %v1700
    %v2053 = vpack.c.b16 %v1709, %v1701
    %v2054 = vpack.c.b16 %v1710, %v1702
    %v2055 = vpack.c.b16 %v1711, %v1703
    %v2056 = vpack.c.b16 %v1712, %v1704
    %v2057 = vpack.c.b16 %v1721, %v1713
    %v2058 = vpack.c.b16 %v1722, %v1714
    %v2059 = vpack.c.b16 %v1723, %v1715
    %v2060 = vpack.c.b16 %v1724, %v1716
    %v2061 = vpack.c.b16 %v1725, %v1717
    %v2062 = vpack.c.b16 %v1726, %v1718
    %v2063 = vpack.c.b16 %v1727, %v1719
    %v2064 = vpack.c.b16 %v1728, %v1720
    %v2065 = vpack.c.b16 %v1737, %v1729
    %v2066 = vpack.c.b16 %v1738, %v1730
    %v2067 = vpack.c.b16 %v1739, %v1731
    %v2068 = vpack.c.b16 %v1740, %v1732
    %v2069 = vpack.c.b16 %v1741, %v1733
    %v2070 = vpack.c.b16 %v1742, %v1734
    %v2071 = vpack.c.b16 %v1743, %v1735
    %v2072 = vpack.c.b16 %v1744, %v1736
    %v2073 = vpack.c.b16 %v1753, %v1745
    %v2074 = vpack.c.b16 %v1754, %v1746
    %v2075 = vpack.c.b16 %v1755, %v1747
    %v2076 = vpack.c.b16 %v1756, %v1748
    %v2077 = vpack.c.b16 %v1757, %v1749
    %v2078 = vpack.c.b16 %v1758, %v1750
    %v2079 = vpack.c.b16 %v1759, %v1751
    %v2080 = vpack.c.b16 %v1760, %v1752
    %v2081 = vpack.c.b16 %v1769, %v1761
    %v2082 = vpack.c.b16 %v1770, %v1762
    %v2083 = vpack.c.b16 %v1771, %v1763
    %v2084 = vpack.c.b16 %v1772, %v1764
    %v2085 = vpack.c.b16 %v1773, %v1765
    %v2086 = vpack.c.b16 %v1774, %v1766
    %v2087 = vpack.c.b16 %v1775, %v1767
    %v2088 = vpack.c.b16 %v1776, %v1768
    %v2089 = vpack.c.b16 %v1785, %v1777
    %v2090 = vpack.c.b16 %v1786, %v1778
    %v2091 = vpack.c.b16 %v1787, %v1779
    %v2092 = vpack.c.b16 %v1788, %v1780
    %v2093 = vpack.c.b16 %v1789, %v1781
    %v2094 = vpack.c.b16 %v1790, %v1782
    %v2095 = vpack.c.b16 %v1791, %v1783
    %v2096 = vpack.c.b16 %v1792, %v1784
    %v2097 = vpack.c.b16 %v1801, %v1793
    %v2098 = vpack.c.b16 %v1802, %v1794
    %v2099 = vpack.c.b16 %v1803, %v1795
    %v2100 = vpack.c.b16 %v1804, %v1796
    %v2101 = vpack.c.b16 %v1805, %v1797
    %v2102 = vpack.c.b16 %v1806, %v1798
    %v2103 = vpack.c.b16 %v1807, %v1799
    %v2104 = vpack.c.b16 %v1808, %v1800
    %v2105 = vpack.c.b16 %v1817, %v1809
    %v2106 = vpack.c.b16 %v1818, %v1810
    %v2107 = vpack.c.b16 %v1819, %v1811
    %v2108 = vpack.c.b16 %v1820, %v1812
    %v2109 = vpack.c.b16 %v1821, %v1813
    %v2110 = vpack.c.b16 %v1822, %v1814
    %v2111 = vpack.c.b16 %v1823, %v1815
    %v2112 = vpack.c.b16 %v1824, %v1816
    %v2113 = vpack.c.b16 %v1833, %v1825
    %v2114 = vpack.c.b16 %v1834, %v1826
    %v2115 = vpack.c.b16 %v1835, %v1827
    %v2116 = vpack.c.b16 %v1836, %v1828
    %v2117 = vpack.c.b16 %v1837, %v1829
    %v2118 = vpack.c.b16 %v1838, %v1830
    %v2119 = vpack.c.b16 %v1839, %v1831
    %v2120 = vpack.c.b16 %v1840, %v1832
    %v2121 = vpack.c.b16 %v1849, %v1841
    %v2122 = vpack.c.b16 %v1850, %v1842
    %v2123 = vpack.c.b16 %v1851, %v1843
    %v2124 = vpack.c.b16 %v1852, %v1844
    %v2125 = vpack.c.b16 %v1853, %v1845
    %v2126 = vpack.c.b16 %v1854, %v1846
    %v2127 = vpack.c.b16 %v1855, %v1847
    %v2128 = vpack.c.b16 %v1856, %v1848
    %v2129 = vpack.c.b16 %v1865, %v1857
    %v2130 = vpack.c.b16 %v1866, %v1858
    %v2131 = vpack.c.b16 %v1867, %v1859
    %v2132 = vpack.c.b16 %v1868, %v1860
    %v2133 = vpack.c.b16 %v1869, %v1861
    %v2134 = vpack.c.b16 %v1870, %v1862
    %v2135 = vpack.c.b16 %v1871, %v1863
    %v2136 = vpack.c.b16 %v1872, %v1864
    %v2137 = vpack.c.b16 %v1881, %v1873
    %v2138 = vpack.c.b16 %v1882, %v1874
    %v2139 = vpack.c.b16 %v1883, %v1875
    %v2140 = vpack.c.b16 %v1884, %v1876
    %v2141 = vpack.c.b16 %v1885, %v1877
    %v2142 = vpack.c.b16 %v1886, %v1878
    %v2143 = vpack.c.b16 %v1887, %v1879
    %v2144 = vpack.c.b16 %v1888, %v1880
    %2401 = vmatpush.bf16.msra.mxu0 %v1945
    %2402 = vmatpush.bf16.msra.mxu0 %v1937
    %2403 = vmatpush.bf16.msra.mxu0 %v1929
    %2404 = vmatpush.bf16.msra.mxu0 %v1921
    %2405 = vmatpush.bf16.msra.mxu0 %v1913
    %2406 = vmatpush.bf16.msra.mxu0 %v1905
    %2407 = vmatpush.bf16.msra.mxu0 %v1897
    %2408 = vmatpush.bf16.msra.mxu0 %v1889
    %2409 = vmatmul.bf16.gmra.mxu0 %v1100
    %v2410 = vpop.f32.mrf.mxu0
    %v2411 = vadd.f32 %v1105, %v2410
    %v2412 = vpop.f32.mrf.mxu0
    %v2413 = vadd.f32 %v1105, %v2412
    %2414 = vdwg.mxu0
    %2415 = vmatpush.bf16.msra.mxu0 %v2009
    %2416 = vmatpush.bf16.msra.mxu0 %v2001
    %2417 = vmatpush.bf16.msra.mxu0 %v1993
    %2418 = vmatpush.bf16.msra.mxu0 %v1985
    %2419 = vmatpush.bf16.msra.mxu0 %v1977
    %2420 = vmatpush.bf16.msra.mxu0 %v1969
    %2421 = vmatpush.bf16.msra.mxu0 %v1961
    %2422 = vmatpush.bf16.msra.mxu0 %v1953
    %2423 = vmatmul.bf16.gmra.mxu0 %v1101
    %v2424 = vpop.f32.mrf.mxu0
    %v2425 = vadd.f32 %v2411, %v2424
    %v2426 = vpop.f32.mrf.mxu0
    %v2427 = vadd.f32 %v2413, %v2426
    %2428 = vdwg.mxu0
    %2429 = vmatpush.bf16.msra.mxu0 %v2073
    %2430 = vmatpush.bf16.msra.mxu0 %v2065
    %2431 = vmatpush.bf16.msra.mxu0 %v2057
    %2432 = vmatpush.bf16.msra.mxu0 %v2049
    %2433 = vmatpush.bf16.msra.mxu0 %v2041
    %2434 = vmatpush.bf16.msra.mxu0 %v2033
    %2435 = vmatpush.bf16.msra.mxu0 %v2025
    %2436 = vmatpush.bf16.msra.mxu0 %v2017
    %2437 = vmatmul.bf16.gmra.mxu0 %v1102
    %v2438 = vpop.f32.mrf.mxu0
    %v2439 = vadd.f32 %v2425, %v2438
    %v2440 = vpop.f32.mrf.mxu0
    %v2441 = vadd.f32 %v2427, %v2440
    %2442 = vdwg.mxu0
    %2443 = vmatpush.bf16.msra.mxu0 %v2137
    %2444 = vmatpush.bf16.msra.mxu0 %v2129
    %2445 = vmatpush.bf16.msra.mxu0 %v2121
    %2446 = vmatpush.bf16.msra.mxu0 %v2113
    %2447 = vmatpush.bf16.msra.mxu0 %v2105
    %2448 = vmatpush.bf16.msra.mxu0 %v2097
    %2449 = vmatpush.bf16.msra.mxu0 %v2089
    %2450 = vmatpush.bf16.msra.mxu0 %v2081
    %2451 = vmatmul.bf16.gmra.mxu0 %v1103
    %v2452 = vpop.f32.mrf.mxu0
    %v2453 = vadd.f32 %v2439, %v2452
    %v2454 = vpop.f32.mrf.mxu0
    %v2455 = vadd.f32 %v2441, %v2454
    %2456 = vdwg.mxu0
    %2457 = vmatpush.bf16.msra.mxu0 %v1946
    %2458 = vmatpush.bf16.msra.mxu0 %v1938
    %2459 = vmatpush.bf16.msra.mxu0 %v1930
    %2460 = vmatpush.bf16.msra.mxu0 %v1922
    %2461 = vmatpush.bf16.msra.mxu0 %v1914
    %2462 = vmatpush.bf16.msra.mxu0 %v1906
    %2463 = vmatpush.bf16.msra.mxu0 %v1898
    %2464 = vmatpush.bf16.msra.mxu0 %v1890
    %2465 = vmatmul.bf16.gmra.mxu0 %v1100
    %v2466 = vpop.f32.mrf.mxu0
    %v2467 = vadd.f32 %v1106, %v2466
    %v2468 = vpop.f32.mrf.mxu0
    %v2469 = vadd.f32 %v1106, %v2468
    %2470 = vdwg.mxu0
    %2471 = vmatpush.bf16.msra.mxu0 %v2010
    %2472 = vmatpush.bf16.msra.mxu0 %v2002
    %2473 = vmatpush.bf16.msra.mxu0 %v1994
    %2474 = vmatpush.bf16.msra.mxu0 %v1986
    %2475 = vmatpush.bf16.msra.mxu0 %v1978
    %2476 = vmatpush.bf16.msra.mxu0 %v1970
    %2477 = vmatpush.bf16.msra.mxu0 %v1962
    %2478 = vmatpush.bf16.msra.mxu0 %v1954
    %2479 = vmatmul.bf16.gmra.mxu0 %v1101
    %v2480 = vpop.f32.mrf.mxu0
    %v2481 = vadd.f32 %v2467, %v2480
    %v2482 = vpop.f32.mrf.mxu0
    %v2483 = vadd.f32 %v2469, %v2482
    %2484 = vdwg.mxu0
    %2485 = vmatpush.bf16.msra.mxu0 %v2074
    %2486 = vmatpush.bf16.msra.mxu0 %v2066
    %2487 = vmatpush.bf16.msra.mxu0 %v2058
    %2488 = vmatpush.bf16.msra.mxu0 %v2050
    %2489 = vmatpush.bf16.msra.mxu0 %v2042
    %2490 = vmatpush.bf16.msra.mxu0 %v2034
    %2491 = vmatpush.bf16.msra.mxu0 %v2026
    %2492 = vmatpush.bf16.msra.mxu0 %v2018
    %2493 = vmatmul.bf16.gmra.mxu0 %v1102
    %v2494 = vpop.f32.mrf.mxu0
    %v2495 = vadd.f32 %v2481, %v2494
    %v2496 = vpop.f32.mrf.mxu0
    %v2497 = vadd.f32 %v2483, %v2496
    %2498 = vdwg.mxu0
    %2499 = vmatpush.bf16.msra.mxu0 %v2138
    %2500 = vmatpush.bf16.msra.mxu0 %v2130
    %2501 = vmatpush.bf16.msra.mxu0 %v2122
    %2502 = vmatpush.bf16.msra.mxu0 %v2114
    %2503 = vmatpush.bf16.msra.mxu0 %v2106
    %2504 = vmatpush.bf16.msra.mxu0 %v2098
    %2505 = vmatpush.bf16.msra.mxu0 %v2090
    %2506 = vmatpush.bf16.msra.mxu0 %v2082
    %2507 = vmatmul.bf16.gmra.mxu0 %v1103
    %v2508 = vpop.f32.mrf.mxu0
    %v2509 = vadd.f32 %v2495, %v2508
    %v2510 = vpop.f32.mrf.mxu0
    %v2511 = vadd.f32 %v2497, %v2510
    %2512 = vdwg.mxu0
    %2513 = vmatpush.bf16.msra.mxu0 %v1947
    %2514 = vmatpush.bf16.msra.mxu0 %v1939
    %2515 = vmatpush.bf16.msra.mxu0 %v1931
    %2516 = vmatpush.bf16.msra.mxu0 %v1923
    %2517 = vmatpush.bf16.msra.mxu0 %v1915
    %2518 = vmatpush.bf16.msra.mxu0 %v1907
    %2519 = vmatpush.bf16.msra.mxu0 %v1899
    %2520 = vmatpush.bf16.msra.mxu0 %v1891
    %2521 = vmatmul.bf16.gmra.mxu0 %v1100
    %v2522 = vpop.f32.mrf.mxu0
    %v2523 = vadd.f32 %v1107, %v2522
    %v2524 = vpop.f32.mrf.mxu0
    %v2525 = vadd.f32 %v1107, %v2524
    %2526 = vdwg.mxu0
    %2527 = vmatpush.bf16.msra.mxu0 %v2011
    %2528 = vmatpush.bf16.msra.mxu0 %v2003
    %2529 = vmatpush.bf16.msra.mxu0 %v1995
    %2530 = vmatpush.bf16.msra.mxu0 %v1987
    %2531 = vmatpush.bf16.msra.mxu0 %v1979
    %2532 = vmatpush.bf16.msra.mxu0 %v1971
    %2533 = vmatpush.bf16.msra.mxu0 %v1963
    %2534 = vmatpush.bf16.msra.mxu0 %v1955
    %2535 = vmatmul.bf16.gmra.mxu0 %v1101
    %v2536 = vpop.f32.mrf.mxu0
    %v2537 = vadd.f32 %v2523, %v2536
    %v2538 = vpop.f32.mrf.mxu0
    %v2539 = vadd.f32 %v2525, %v2538
    %2540 = vdwg.mxu0
    %2541 = vmatpush.bf16.msra.mxu0 %v2075
    %2542 = vmatpush.bf16.msra.mxu0 %v2067
    %2543 = vmatpush.bf16.msra.mxu0 %v2059
    %2544 = vmatpush.bf16.msra.mxu0 %v2051
    %2545 = vmatpush.bf16.msra.mxu0 %v2043
    %2546 = vmatpush.bf16.msra.mxu0 %v2035
    %2547 = vmatpush.bf16.msra.mxu0 %v2027
    %2548 = vmatpush.bf16.msra.mxu0 %v2019
    %2549 = vmatmul.bf16.gmra.mxu0 %v1102
    %v2550 = vpop.f32.mrf.mxu0
    %v2551 = vadd.f32 %v2537, %v2550
    %v2552 = vpop.f32.mrf.mxu0
    %v2553 = vadd.f32 %v2539, %v2552
    %2554 = vdwg.mxu0
    %2555 = vmatpush.bf16.msra.mxu0 %v2139
    %2556 = vmatpush.bf16.msra.mxu0 %v2131
    %2557 = vmatpush.bf16.msra.mxu0 %v2123
    %2558 = vmatpush.bf16.msra.mxu0 %v2115
    %2559 = vmatpush.bf16.msra.mxu0 %v2107
    %2560 = vmatpush.bf16.msra.mxu0 %v2099
    %2561 = vmatpush.bf16.msra.mxu0 %v2091
    %2562 = vmatpush.bf16.msra.mxu0 %v2083
    %2563 = vmatmul.bf16.gmra.mxu0 %v1103
    %v2564 = vpop.f32.mrf.mxu0
    %v2565 = vadd.f32 %v2551, %v2564
    %v2566 = vpop.f32.mrf.mxu0
    %v2567 = vadd.f32 %v2553, %v2566
    %2568 = vdwg.mxu0
    %2569 = vmatpush.bf16.msra.mxu0 %v1948
    %2570 = vmatpush.bf16.msra.mxu0 %v1940
    %2571 = vmatpush.bf16.msra.mxu0 %v1932
    %2572 = vmatpush.bf16.msra.mxu0 %v1924
    %2573 = vmatpush.bf16.msra.mxu0 %v1916
    %2574 = vmatpush.bf16.msra.mxu0 %v1908
    %2575 = vmatpush.bf16.msra.mxu0 %v1900
    %2576 = vmatpush.bf16.msra.mxu0 %v1892
    %2577 = vmatmul.bf16.gmra.mxu0 %v1100
    %v2578 = vpop.f32.mrf.mxu0
    %v2579 = vadd.f32 %v1108, %v2578
    %v2580 = vpop.f32.mrf.mxu0
    %v2581 = vadd.f32 %v1108, %v2580
    %2582 = vdwg.mxu0
    %2583 = vmatpush.bf16.msra.mxu0 %v2012
    %2584 = vmatpush.bf16.msra.mxu0 %v2004
    %2585 = vmatpush.bf16.msra.mxu0 %v1996
    %2586 = vmatpush.bf16.msra.mxu0 %v1988
    %2587 = vmatpush.bf16.msra.mxu0 %v1980
    %2588 = vmatpush.bf16.msra.mxu0 %v1972
    %2589 = vmatpush.bf16.msra.mxu0 %v1964
    %2590 = vmatpush.bf16.msra.mxu0 %v1956
    %2591 = vmatmul.bf16.gmra.mxu0 %v1101
    %v2592 = vpop.f32.mrf.mxu0
    %v2593 = vadd.f32 %v2579, %v2592
    %v2594 = vpop.f32.mrf.mxu0
    %v2595 = vadd.f32 %v2581, %v2594
    %2596 = vdwg.mxu0
    %2597 = vmatpush.bf16.msra.mxu0 %v2076
    %2598 = vmatpush.bf16.msra.mxu0 %v2068
    %2599 = vmatpush.bf16.msra.mxu0 %v2060
    %2600 = vmatpush.bf16.msra.mxu0 %v2052
    %2601 = vmatpush.bf16.msra.mxu0 %v2044
    %2602 = vmatpush.bf16.msra.mxu0 %v2036
    %2603 = vmatpush.bf16.msra.mxu0 %v2028
    %2604 = vmatpush.bf16.msra.mxu0 %v2020
    %2605 = vmatmul.bf16.gmra.mxu0 %v1102
    %v2606 = vpop.f32.mrf.mxu0
    %v2607 = vadd.f32 %v2593, %v2606
    %v2608 = vpop.f32.mrf.mxu0
    %v2609 = vadd.f32 %v2595, %v2608
    %2610 = vdwg.mxu0
    %2611 = vmatpush.bf16.msra.mxu0 %v2140
    %2612 = vmatpush.bf16.msra.mxu0 %v2132
    %2613 = vmatpush.bf16.msra.mxu0 %v2124
    %2614 = vmatpush.bf16.msra.mxu0 %v2116
    %2615 = vmatpush.bf16.msra.mxu0 %v2108
    %2616 = vmatpush.bf16.msra.mxu0 %v2100
    %2617 = vmatpush.bf16.msra.mxu0 %v2092
    %2618 = vmatpush.bf16.msra.mxu0 %v2084
    %2619 = vmatmul.bf16.gmra.mxu0 %v1103
    %v2620 = vpop.f32.mrf.mxu0
    %v2621 = vadd.f32 %v2607, %v2620
    %v2622 = vpop.f32.mrf.mxu0
    %v2623 = vadd.f32 %v2609, %v2622
    %2624 = vdwg.mxu0
    %2625 = vmatpush.bf16.msra.mxu0 %v1949
    %2626 = vmatpush.bf16.msra.mxu0 %v1941
    %2627 = vmatpush.bf16.msra.mxu0 %v1933
    %2628 = vmatpush.bf16.msra.mxu0 %v1925
    %2629 = vmatpush.bf16.msra.mxu0 %v1917
    %2630 = vmatpush.bf16.msra.mxu0 %v1909
    %2631 = vmatpush.bf16.msra.mxu0 %v1901
    %2632 = vmatpush.bf16.msra.mxu0 %v1893
    %2633 = vmatmul.bf16.gmra.mxu0 %v1100
    %v2634 = vpop.f32.mrf.mxu0
    %v2635 = vadd.f32 %v1109, %v2634
    %v2636 = vpop.f32.mrf.mxu0
    %v2637 = vadd.f32 %v1109, %v2636
    %2638 = vdwg.mxu0
    %2639 = vmatpush.bf16.msra.mxu0 %v2013
    %2640 = vmatpush.bf16.msra.mxu0 %v2005
    %2641 = vmatpush.bf16.msra.mxu0 %v1997
    %2642 = vmatpush.bf16.msra.mxu0 %v1989
    %2643 = vmatpush.bf16.msra.mxu0 %v1981
    %2644 = vmatpush.bf16.msra.mxu0 %v1973
    %2645 = vmatpush.bf16.msra.mxu0 %v1965
    %2646 = vmatpush.bf16.msra.mxu0 %v1957
    %2647 = vmatmul.bf16.gmra.mxu0 %v1101
    %v2648 = vpop.f32.mrf.mxu0
    %v2649 = vadd.f32 %v2635, %v2648
    %v2650 = vpop.f32.mrf.mxu0
    %v2651 = vadd.f32 %v2637, %v2650
    %2652 = vdwg.mxu0
    %2653 = vmatpush.bf16.msra.mxu0 %v2077
    %2654 = vmatpush.bf16.msra.mxu0 %v2069
    %2655 = vmatpush.bf16.msra.mxu0 %v2061
    %2656 = vmatpush.bf16.msra.mxu0 %v2053
    %2657 = vmatpush.bf16.msra.mxu0 %v2045
    %2658 = vmatpush.bf16.msra.mxu0 %v2037
    %2659 = vmatpush.bf16.msra.mxu0 %v2029
    %2660 = vmatpush.bf16.msra.mxu0 %v2021
    %2661 = vmatmul.bf16.gmra.mxu0 %v1102
    %v2662 = vpop.f32.mrf.mxu0
    %v2663 = vadd.f32 %v2649, %v2662
    %v2664 = vpop.f32.mrf.mxu0
    %v2665 = vadd.f32 %v2651, %v2664
    %2666 = vdwg.mxu0
    %2667 = vmatpush.bf16.msra.mxu0 %v2141
    %2668 = vmatpush.bf16.msra.mxu0 %v2133
    %2669 = vmatpush.bf16.msra.mxu0 %v2125
    %2670 = vmatpush.bf16.msra.mxu0 %v2117
    %2671 = vmatpush.bf16.msra.mxu0 %v2109
    %2672 = vmatpush.bf16.msra.mxu0 %v2101
    %2673 = vmatpush.bf16.msra.mxu0 %v2093
    %2674 = vmatpush.bf16.msra.mxu0 %v2085
    %2675 = vmatmul.bf16.gmra.mxu0 %v1103
    %v2676 = vpop.f32.mrf.mxu0
    %v2677 = vadd.f32 %v2663, %v2676
    %v2678 = vpop.f32.mrf.mxu0
    %v2679 = vadd.f32 %v2665, %v2678
    %2680 = vdwg.mxu0
    %2681 = vmatpush.bf16.msra.mxu0 %v1950
    %2682 = vmatpush.bf16.msra.mxu0 %v1942
    %2683 = vmatpush.bf16.msra.mxu0 %v1934
    %2684 = vmatpush.bf16.msra.mxu0 %v1926
    %2685 = vmatpush.bf16.msra.mxu0 %v1918
    %2686 = vmatpush.bf16.msra.mxu0 %v1910
    %2687 = vmatpush.bf16.msra.mxu0 %v1902
    %2688 = vmatpush.bf16.msra.mxu0 %v1894
    %2689 = vmatmul.bf16.gmra.mxu0 %v1100
    %v2690 = vpop.f32.mrf.mxu0
    %v2691 = vadd.f32 %v1110, %v2690
    %v2692 = vpop.f32.mrf.mxu0
    %v2693 = vadd.f32 %v1110, %v2692
    %2694 = vdwg.mxu0
    %2695 = vmatpush.bf16.msra.mxu0 %v2014
    %2696 = vmatpush.bf16.msra.mxu0 %v2006
    %2697 = vmatpush.bf16.msra.mxu0 %v1998
    %2698 = vmatpush.bf16.msra.mxu0 %v1990
    %2699 = vmatpush.bf16.msra.mxu0 %v1982
    %2700 = vmatpush.bf16.msra.mxu0 %v1974
    %2701 = vmatpush.bf16.msra.mxu0 %v1966
    %2702 = vmatpush.bf16.msra.mxu0 %v1958
    %2703 = vmatmul.bf16.gmra.mxu0 %v1101
    %v2704 = vpop.f32.mrf.mxu0
    %v2705 = vadd.f32 %v2691, %v2704
    %v2706 = vpop.f32.mrf.mxu0
    %v2707 = vadd.f32 %v2693, %v2706
    %2708 = vdwg.mxu0
    %2709 = vmatpush.bf16.msra.mxu0 %v2078
    %2710 = vmatpush.bf16.msra.mxu0 %v2070
    %2711 = vmatpush.bf16.msra.mxu0 %v2062
    %2712 = vmatpush.bf16.msra.mxu0 %v2054
    %2713 = vmatpush.bf16.msra.mxu0 %v2046
    %2714 = vmatpush.bf16.msra.mxu0 %v2038
    %2715 = vmatpush.bf16.msra.mxu0 %v2030
    %2716 = vmatpush.bf16.msra.mxu0 %v2022
    %2717 = vmatmul.bf16.gmra.mxu0 %v1102
    %v2718 = vpop.f32.mrf.mxu0
    %v2719 = vadd.f32 %v2705, %v2718
    %v2720 = vpop.f32.mrf.mxu0
    %v2721 = vadd.f32 %v2707, %v2720
    %2722 = vdwg.mxu0
    %2723 = vmatpush.bf16.msra.mxu0 %v2142
    %2724 = vmatpush.bf16.msra.mxu0 %v2134
    %2725 = vmatpush.bf16.msra.mxu0 %v2126
    %2726 = vmatpush.bf16.msra.mxu0 %v2118
    %2727 = vmatpush.bf16.msra.mxu0 %v2110
    %2728 = vmatpush.bf16.msra.mxu0 %v2102
    %2729 = vmatpush.bf16.msra.mxu0 %v2094
    %2730 = vmatpush.bf16.msra.mxu0 %v2086
    %2731 = vmatmul.bf16.gmra.mxu0 %v1103
    %v2732 = vpop.f32.mrf.mxu0
    %v2733 = vadd.f32 %v2719, %v2732
    %v2734 = vpop.f32.mrf.mxu0
    %v2735 = vadd.f32 %v2721, %v2734
    %2736 = vdwg.mxu0
    %2737 = vmatpush.bf16.msra.mxu0 %v1951
    %2738 = vmatpush.bf16.msra.mxu0 %v1943
    %2739 = vmatpush.bf16.msra.mxu0 %v1935
    %2740 = vmatpush.bf16.msra.mxu0 %v1927
    %2741 = vmatpush.bf16.msra.mxu0 %v1919
    %2742 = vmatpush.bf16.msra.mxu0 %v1911
    %2743 = vmatpush.bf16.msra.mxu0 %v1903
    %2744 = vmatpush.bf16.msra.mxu0 %v1895
    %2745 = vmatmul.bf16.gmra.mxu0 %v1100
    %v2746 = vpop.f32.mrf.mxu0
    %v2747 = vadd.f32 %v1111, %v2746
    %v2748 = vpop.f32.mrf.mxu0
    %v2749 = vadd.f32 %v1111, %v2748
    %2750 = vdwg.mxu0
    %2751 = vmatpush.bf16.msra.mxu0 %v2015
    %2752 = vmatpush.bf16.msra.mxu0 %v2007
    %2753 = vmatpush.bf16.msra.mxu0 %v1999
    %2754 = vmatpush.bf16.msra.mxu0 %v1991
    %2755 = vmatpush.bf16.msra.mxu0 %v1983
    %2756 = vmatpush.bf16.msra.mxu0 %v1975
    %2757 = vmatpush.bf16.msra.mxu0 %v1967
    %2758 = vmatpush.bf16.msra.mxu0 %v1959
    %2759 = vmatmul.bf16.gmra.mxu0 %v1101
    %v2760 = vpop.f32.mrf.mxu0
    %v2761 = vadd.f32 %v2747, %v2760
    %v2762 = vpop.f32.mrf.mxu0
    %v2763 = vadd.f32 %v2749, %v2762
    %2764 = vdwg.mxu0
    %2765 = vmatpush.bf16.msra.mxu0 %v2079
    %2766 = vmatpush.bf16.msra.mxu0 %v2071
    %2767 = vmatpush.bf16.msra.mxu0 %v2063
    %2768 = vmatpush.bf16.msra.mxu0 %v2055
    %2769 = vmatpush.bf16.msra.mxu0 %v2047
    %2770 = vmatpush.bf16.msra.mxu0 %v2039
    %2771 = vmatpush.bf16.msra.mxu0 %v2031
    %2772 = vmatpush.bf16.msra.mxu0 %v2023
    %2773 = vmatmul.bf16.gmra.mxu0 %v1102
    %v2774 = vpop.f32.mrf.mxu0
    %v2775 = vadd.f32 %v2761, %v2774
    %v2776 = vpop.f32.mrf.mxu0
    %v2777 = vadd.f32 %v2763, %v2776
    %2778 = vdwg.mxu0
    %2779 = vmatpush.bf16.msra.mxu0 %v2143
    %2780 = vmatpush.bf16.msra.mxu0 %v2135
    %2781 = vmatpush.bf16.msra.mxu0 %v2127
    %2782 = vmatpush.bf16.msra.mxu0 %v2119
    %2783 = vmatpush.bf16.msra.mxu0 %v2111
    %2784 = vmatpush.bf16.msra.mxu0 %v2103
    %2785 = vmatpush.bf16.msra.mxu0 %v2095
    %2786 = vmatpush.bf16.msra.mxu0 %v2087
    %2787 = vmatmul.bf16.gmra.mxu0 %v1103
    %v2788 = vpop.f32.mrf.mxu0
    %v2789 = vadd.f32 %v2775, %v2788
    %v2790 = vpop.f32.mrf.mxu0
    %v2791 = vadd.f32 %v2777, %v2790
    %2792 = vdwg.mxu0
    %2793 = vmatpush.bf16.msra.mxu0 %v1952
    %2794 = vmatpush.bf16.msra.mxu0 %v1944
    %2795 = vmatpush.bf16.msra.mxu0 %v1936
    %2796 = vmatpush.bf16.msra.mxu0 %v1928
    %2797 = vmatpush.bf16.msra.mxu0 %v1920
    %2798 = vmatpush.bf16.msra.mxu0 %v1912
    %2799 = vmatpush.bf16.msra.mxu0 %v1904
    %2800 = vmatpush.bf16.msra.mxu0 %v1896
    %2801 = vmatmul.bf16.gmra.mxu0 %v1100
    %v2802 = vpop.f32.mrf.mxu0
    %v2803 = vadd.f32 %v1112, %v2802
    %v2804 = vpop.f32.mrf.mxu0
    %v2805 = vadd.f32 %v1112, %v2804
    %2806 = vdwg.mxu0
    %2807 = vmatpush.bf16.msra.mxu0 %v2016
    %2808 = vmatpush.bf16.msra.mxu0 %v2008
    %2809 = vmatpush.bf16.msra.mxu0 %v2000
    %2810 = vmatpush.bf16.msra.mxu0 %v1992
    %2811 = vmatpush.bf16.msra.mxu0 %v1984
    %2812 = vmatpush.bf16.msra.mxu0 %v1976
    %2813 = vmatpush.bf16.msra.mxu0 %v1968
    %2814 = vmatpush.bf16.msra.mxu0 %v1960
    %2815 = vmatmul.bf16.gmra.mxu0 %v1101
    %v2816 = vpop.f32.mrf.mxu0
    %v2817 = vadd.f32 %v2803, %v2816
    %v2818 = vpop.f32.mrf.mxu0
    %v2819 = vadd.f32 %v2805, %v2818
    %2820 = vdwg.mxu0
    %2821 = vmatpush.bf16.msra.mxu0 %v2080
    %2822 = vmatpush.bf16.msra.mxu0 %v2072
    %2823 = vmatpush.bf16.msra.mxu0 %v2064
    %2824 = vmatpush.bf16.msra.mxu0 %v2056
    %2825 = vmatpush.bf16.msra.mxu0 %v2048
    %2826 = vmatpush.bf16.msra.mxu0 %v2040
    %2827 = vmatpush.bf16.msra.mxu0 %v2032
    %2828 = vmatpush.bf16.msra.mxu0 %v2024
    %2829 = vmatmul.bf16.gmra.mxu0 %v1102
    %v2830 = vpop.f32.mrf.mxu0
    %v2831 = vadd.f32 %v2817, %v2830
    %v2832 = vpop.f32.mrf.mxu0
    %v2833 = vadd.f32 %v2819, %v2832
    %2834 = vdwg.mxu0
    %2835 = vmatpush.bf16.msra.mxu0 %v2144
    %2836 = vmatpush.bf16.msra.mxu0 %v2136
    %2837 = vmatpush.bf16.msra.mxu0 %v2128
    %2838 = vmatpush.bf16.msra.mxu0 %v2120
    %2839 = vmatpush.bf16.msra.mxu0 %v2112
    %2840 = vmatpush.bf16.msra.mxu0 %v2104
    %2841 = vmatpush.bf16.msra.mxu0 %v2096
    %2842 = vmatpush.bf16.msra.mxu0 %v2088
    %2843 = vmatmul.bf16.gmra.mxu0 %v1103
    %v2844 = vpop.f32.mrf.mxu0
    %v2845 = vadd.f32 %v2831, %v2844
    %v2846 = vpop.f32.mrf.mxu0
    %v2847 = vadd.f32 %v2833, %v2846
    %2848 = vdwg.mxu0
    %vm2849 = vcmp.gt.f32.partialorder %v2453, 0.0
    %vm2850 = vcmp.gt.f32.partialorder %v2509, 0.0
    %vm2851 = vcmp.gt.f32.partialorder %v2565, 0.0
    %vm2852 = vcmp.gt.f32.partialorder %v2621, 0.0
    %vm2853 = vcmp.gt.f32.partialorder %v2677, 0.0
    %vm2854 = vcmp.gt.f32.partialorder %v2733, 0.0
    %vm2855 = vcmp.gt.f32.partialorder %v2789, 0.0
    %vm2856 = vcmp.gt.f32.partialorder %v2845, 0.0
    %vm2857 = vcmp.gt.f32.partialorder %v2455, 0.0
    %vm2858 = vcmp.gt.f32.partialorder %v2511, 0.0
    %vm2859 = vcmp.gt.f32.partialorder %v2567, 0.0
    %vm2860 = vcmp.gt.f32.partialorder %v2623, 0.0
    %vm2861 = vcmp.gt.f32.partialorder %v2679, 0.0
    %vm2862 = vcmp.gt.f32.partialorder %v2735, 0.0
    %vm2863 = vcmp.gt.f32.partialorder %v2791, 0.0
    %vm2864 = vcmp.gt.f32.partialorder %v2847, 0.0
    %v2865 = vmul.f32 %v2453, 0.2
    %v2866 = vmul.f32 %v2509, 0.2
    %v2867 = vmul.f32 %v2565, 0.2
    %v2868 = vmul.f32 %v2621, 0.2
    %v2869 = vmul.f32 %v2677, 0.2
    %v2870 = vmul.f32 %v2733, 0.2
    %v2871 = vmul.f32 %v2789, 0.2
    %v2872 = vmul.f32 %v2845, 0.2
    %v2873 = vmul.f32 %v2455, 0.2
    %v2874 = vmul.f32 %v2511, 0.2
    %v2875 = vmul.f32 %v2567, 0.2
    %v2876 = vmul.f32 %v2623, 0.2
    %v2877 = vmul.f32 %v2679, 0.2
    %v2878 = vmul.f32 %v2735, 0.2
    %v2879 = vmul.f32 %v2791, 0.2
    %v2880 = vmul.f32 %v2847, 0.2
    %v2881 = vsel %vm2849, %v2453, %v2865
    %v2882 = vsel %vm2850, %v2509, %v2866
    %v2883 = vsel %vm2851, %v2565, %v2867
    %v2884 = vsel %vm2852, %v2621, %v2868
    %v2885 = vsel %vm2853, %v2677, %v2869
    %v2886 = vsel %vm2854, %v2733, %v2870
    %v2887 = vsel %vm2855, %v2789, %v2871
    %v2888 = vsel %vm2856, %v2845, %v2872
    %v2889 = vsel %vm2857, %v2455, %v2873
    %v2890 = vsel %vm2858, %v2511, %v2874
    %v2891 = vsel %vm2859, %v2567, %v2875
    %v2892 = vsel %vm2860, %v2623, %v2876
    %v2893 = vsel %vm2861, %v2679, %v2877
    %v2894 = vsel %vm2862, %v2735, %v2878
    %v2895 = vsel %vm2863, %v2791, %v2879
    %v2896 = vsel %vm2864, %v2847, %v2880
    %s2897 = smul.u32 4, 128
    %s2898 = smul.u32 %s2897, 7
    %s2899 = sshll.u32 %s2898, 4
    %2900 = dma.done %s143, %s2899
    %v2901 = vld [vmem:[#allocation3] sm:$0xff]
    %v2902 = vld [vmem:[#allocation3 + $0x8] sm:$0xff]
    %v2903 = vld [vmem:[#allocation3 + $0x10] sm:$0xff]
    %v2904 = vld [vmem:[#allocation3 + $0x18] sm:$0xf]
    %v2905 = vld [vmem:[#allocation3 + $0x1c] sm:$0xff]
    %v2906 = vld [vmem:[#allocation3 + $0x24] sm:$0xff]
    %v2907 = vld [vmem:[#allocation3 + $0x2c] sm:$0xff]
    %v2908 = vld [vmem:[#allocation3 + $0x34] sm:$0xf]
    %v2909 = vld [vmem:[#allocation3 + $0x38] sm:$0xff]
    %v2910 = vld [vmem:[#allocation3 + $0x40] sm:$0xff]
    %v2911 = vld [vmem:[#allocation3 + $0x48] sm:$0xff]
    %v2912 = vld [vmem:[#allocation3 + $0x50] sm:$0xf]
    %v2913 = vld [vmem:[#allocation3 + $0x54] sm:$0xff]
    %v2914 = vld [vmem:[#allocation3 + $0x5c] sm:$0xff]
    %v2915 = vld [vmem:[#allocation3 + $0x64] sm:$0xff]
    %v2916 = vld [vmem:[#allocation3 + $0x6c] sm:$0xf]
    %v2917 = vld [vmem:[#allocation3 + $0x70] sm:$0xff]
    %v2918 = vld [vmem:[#allocation3 + $0x78] sm:$0xff]
    %v2919 = vld [vmem:[#allocation3 + $0x80] sm:$0xff]
    %v2920 = vld [vmem:[#allocation3 + $0x88] sm:$0xf]
    %v2921 = vld [vmem:[#allocation3 + $0x8c] sm:$0xff]
    %v2922 = vld [vmem:[#allocation3 + $0x94] sm:$0xff]
    %v2923 = vld [vmem:[#allocation3 + $0x9c] sm:$0xff]
    %v2924 = vld [vmem:[#allocation3 + $0xa4] sm:$0xf]
    %v2925 = vld [vmem:[#allocation3 + $0xa8] sm:$0xff]
    %v2926 = vld [vmem:[#allocation3 + $0xb0] sm:$0xff]
    %v2927 = vld [vmem:[#allocation3 + $0xb8] sm:$0xff]
    %v2928 = vld [vmem:[#allocation3 + $0xc0] sm:$0xf]
    %v2929 = vld [vmem:[#allocation3 + $0xc4] sm:$0xff]
    %v2930 = vld [vmem:[#allocation3 + $0xcc] sm:$0xff]
    %v2931 = vld [vmem:[#allocation3 + $0xd4] sm:$0xff]
    %v2932 = vld [vmem:[#allocation3 + $0xdc] sm:$0xf]
    %v2933 = vld [vmem:[#allocation3 + $0xe0] sm:$0xff]
    %v2934 = vld [vmem:[#allocation3 + $0xe8] sm:$0xff]
    %v2935 = vld [vmem:[#allocation3 + $0xf0] sm:$0xff]
    %v2936 = vld [vmem:[#allocation3 + $0xf8] sm:$0xf]
    %v2937 = vld [vmem:[#allocation3 + $0xfc] sm:$0xff]
    %v2938 = vld [vmem:[#allocation3 + $0x104] sm:$0xff]
    %v2939 = vld [vmem:[#allocation3 + $0x10c] sm:$0xff]
    %v2940 = vld [vmem:[#allocation3 + $0x114] sm:$0xf]
    %v2941 = vld [vmem:[#allocation3 + $0x118] sm:$0xff]
    %v2942 = vld [vmem:[#allocation3 + $0x120] sm:$0xff]
    %v2943 = vld [vmem:[#allocation3 + $0x128] sm:$0xff]
    %v2944 = vld [vmem:[#allocation3 + $0x130] sm:$0xf]
    %v2945 = vld [vmem:[#allocation3 + $0x134] sm:$0xff]
    %v2946 = vld [vmem:[#allocation3 + $0x13c] sm:$0xff]
    %v2947 = vld [vmem:[#allocation3 + $0x144] sm:$0xff]
    %v2948 = vld [vmem:[#allocation3 + $0x14c] sm:$0xf]
    %v2949 = vld [vmem:[#allocation3 + $0x150] sm:$0xff]
    %v2950 = vld [vmem:[#allocation3 + $0x158] sm:$0xff]
    %v2951 = vld [vmem:[#allocation3 + $0x160] sm:$0xff]
    %v2952 = vld [vmem:[#allocation3 + $0x168] sm:$0xf]
    %v2953 = vld [vmem:[#allocation3 + $0x16c] sm:$0xff]
    %v2954 = vld [vmem:[#allocation3 + $0x174] sm:$0xff]
    %v2955 = vld [vmem:[#allocation3 + $0x17c] sm:$0xff]
    %v2956 = vld [vmem:[#allocation3 + $0x184] sm:$0xf]
    %v2957 = vld [vmem:[#allocation3 + $0x188] sm:$0xff]
    %v2958 = vld [vmem:[#allocation3 + $0x190] sm:$0xff]
    %v2959 = vld [vmem:[#allocation3 + $0x198] sm:$0xff]
    %v2960 = vld [vmem:[#allocation3 + $0x1a0] sm:$0xf]
    %v2961 = vld [vmem:[#allocation3 + $0x1a4] sm:$0xff]
    %v2962 = vld [vmem:[#allocation3 + $0x1ac] sm:$0xff]
    %v2963 = vld [vmem:[#allocation3 + $0x1b4] sm:$0xff]
    %v2964 = vld [vmem:[#allocation3 + $0x1bc] sm:$0xf]
    %v2965 = vld [vmem:[#allocation3 + $0x1c0] sm:$0xff]
    %v2966 = vld [vmem:[#allocation3 + $0x1c8] sm:$0xff]
    %v2967 = vld [vmem:[#allocation3 + $0x1d0] sm:$0xff]
    %v2968 = vld [vmem:[#allocation3 + $0x1d8] sm:$0xf]
    %v2969 = vld [vmem:[#allocation3 + $0x1dc] sm:$0xff]
    %v2970 = vld [vmem:[#allocation3 + $0x1e4] sm:$0xff]
    %v2971 = vld [vmem:[#allocation3 + $0x1ec] sm:$0xff]
    %v2972 = vld [vmem:[#allocation3 + $0x1f4] sm:$0xf]
    %v2973 = vld [vmem:[#allocation3 + $0x1f8] sm:$0xff]
    %v2974 = vld [vmem:[#allocation3 + $0x200] sm:$0xff]
    %v2975 = vld [vmem:[#allocation3 + $0x208] sm:$0xff]
    %v2976 = vld [vmem:[#allocation3 + $0x210] sm:$0xf]
    %v2977 = vld [vmem:[#allocation3 + $0x214] sm:$0xff]
    %v2978 = vld [vmem:[#allocation3 + $0x21c] sm:$0xff]
    %v2979 = vld [vmem:[#allocation3 + $0x224] sm:$0xff]
    %v2980 = vld [vmem:[#allocation3 + $0x22c] sm:$0xf]
    %v2981 = vld [vmem:[#allocation3 + $0x230] sm:$0xff]
    %v2982 = vld [vmem:[#allocation3 + $0x238] sm:$0xff]
    %v2983 = vld [vmem:[#allocation3 + $0x240] sm:$0xff]
    %v2984 = vld [vmem:[#allocation3 + $0x248] sm:$0xf]
    %v2985 = vld [vmem:[#allocation3 + $0x24c] sm:$0xff]
    %v2986 = vld [vmem:[#allocation3 + $0x254] sm:$0xff]
    %v2987 = vld [vmem:[#allocation3 + $0x25c] sm:$0xff]
    %v2988 = vld [vmem:[#allocation3 + $0x264] sm:$0xf]
    %v2989 = vld [vmem:[#allocation3 + $0x268] sm:$0xff]
    %v2990 = vld [vmem:[#allocation3 + $0x270] sm:$0xff]
    %v2991 = vld [vmem:[#allocation3 + $0x278] sm:$0xff]
    %v2992 = vld [vmem:[#allocation3 + $0x280] sm:$0xf]
    %v2993 = vld [vmem:[#allocation3 + $0x284] sm:$0xff]
    %v2994 = vld [vmem:[#allocation3 + $0x28c] sm:$0xff]
    %v2995 = vld [vmem:[#allocation3 + $0x294] sm:$0xff]
    %v2996 = vld [vmem:[#allocation3 + $0x29c] sm:$0xf]
    %v2997 = vld [vmem:[#allocation3 + $0x2a0] sm:$0xff]
    %v2998 = vld [vmem:[#allocation3 + $0x2a8] sm:$0xff]
    %v2999 = vld [vmem:[#allocation3 + $0x2b0] sm:$0xff]
    %v3000 = vld [vmem:[#allocation3 + $0x2b8] sm:$0xf]
    %v3001 = vld [vmem:[#allocation3 + $0x2bc] sm:$0xff]
    %v3002 = vld [vmem:[#allocation3 + $0x2c4] sm:$0xff]
    %v3003 = vld [vmem:[#allocation3 + $0x2cc] sm:$0xff]
    %v3004 = vld [vmem:[#allocation3 + $0x2d4] sm:$0xf]
    %v3005 = vld [vmem:[#allocation3 + $0x2d8] sm:$0xff]
    %v3006 = vld [vmem:[#allocation3 + $0x2e0] sm:$0xff]
    %v3007 = vld [vmem:[#allocation3 + $0x2e8] sm:$0xff]
    %v3008 = vld [vmem:[#allocation3 + $0x2f0] sm:$0xf]
    %v3009 = vld [vmem:[#allocation3 + $0x2f4] sm:$0xff]
    %v3010 = vld [vmem:[#allocation3 + $0x2fc] sm:$0xff]
    %v3011 = vld [vmem:[#allocation3 + $0x304] sm:$0xff]
    %v3012 = vld [vmem:[#allocation3 + $0x30c] sm:$0xf]
    %v3013 = vld [vmem:[#allocation3 + $0x310] sm:$0xff]
    %v3014 = vld [vmem:[#allocation3 + $0x318] sm:$0xff]
    %v3015 = vld [vmem:[#allocation3 + $0x320] sm:$0xff]
    %v3016 = vld [vmem:[#allocation3 + $0x328] sm:$0xf]
    %v3017 = vld [vmem:[#allocation3 + $0x32c] sm:$0xff]
    %v3018 = vld [vmem:[#allocation3 + $0x334] sm:$0xff]
    %v3019 = vld [vmem:[#allocation3 + $0x33c] sm:$0xff]
    %v3020 = vld [vmem:[#allocation3 + $0x344] sm:$0xf]
    %v3021 = vld [vmem:[#allocation3 + $0x348] sm:$0xff]
    %v3022 = vld [vmem:[#allocation3 + $0x350] sm:$0xff]
    %v3023 = vld [vmem:[#allocation3 + $0x358] sm:$0xff]
    %v3024 = vld [vmem:[#allocation3 + $0x360] sm:$0xf]
    %v3025 = vld [vmem:[#allocation3 + $0x364] sm:$0xff]
    %v3026 = vld [vmem:[#allocation3 + $0x36c] sm:$0xff]
    %v3027 = vld [vmem:[#allocation3 + $0x374] sm:$0xff]
    %v3028 = vld [vmem:[#allocation3 + $0x37c] sm:$0xf]
    %v3029 = vld [vmem:[#allocation3 + $0x380] sm:$0xff]
    %v3030 = vld [vmem:[#allocation3 + $0x388] sm:$0xff]
    %v3031 = vld [vmem:[#allocation3 + $0x390] sm:$0xff]
    %v3032 = vld [vmem:[#allocation3 + $0x398] sm:$0xf]
    %v3033 = vld [vmem:[#allocation3 + $0x39c] sm:$0xff]
    %v3034 = vld [vmem:[#allocation3 + $0x3a4] sm:$0xff]
    %v3035 = vld [vmem:[#allocation3 + $0x3ac] sm:$0xff]
    %v3036 = vld [vmem:[#allocation3 + $0x3b4] sm:$0xf]
    %v3037 = vld [vmem:[#allocation3 + $0x3b8] sm:$0xff]
    %v3038 = vld [vmem:[#allocation3 + $0x3c0] sm:$0xff]
    %v3039 = vld [vmem:[#allocation3 + $0x3c8] sm:$0xff]
    %v3040 = vld [vmem:[#allocation3 + $0x3d0] sm:$0xf]
    %v3041 = vld [vmem:[#allocation3 + $0x3d4] sm:$0xff]
    %v3042 = vld [vmem:[#allocation3 + $0x3dc] sm:$0xff]
    %v3043 = vld [vmem:[#allocation3 + $0x3e4] sm:$0xff]
    %v3044 = vld [vmem:[#allocation3 + $0x3ec] sm:$0xf]
    %v3045 = vld [vmem:[#allocation3 + $0x3f0] sm:$0xff]
    %v3046 = vld [vmem:[#allocation3 + $0x3f8] sm:$0xff]
    %v3047 = vld [vmem:[#allocation3 + $0x400] sm:$0xff]
    %v3048 = vld [vmem:[#allocation3 + $0x408] sm:$0xf]
    %v3049 = vld [vmem:[#allocation3 + $0x40c] sm:$0xff]
    %v3050 = vld [vmem:[#allocation3 + $0x414] sm:$0xff]
    %v3051 = vld [vmem:[#allocation3 + $0x41c] sm:$0xff]
    %v3052 = vld [vmem:[#allocation3 + $0x424] sm:$0xf]
    %v3053 = vld [vmem:[#allocation3 + $0x428] sm:$0xff]
    %v3054 = vld [vmem:[#allocation3 + $0x430] sm:$0xff]
    %v3055 = vld [vmem:[#allocation3 + $0x438] sm:$0xff]
    %v3056 = vld [vmem:[#allocation3 + $0x440] sm:$0xf]
    %v3057 = vld [vmem:[#allocation3 + $0x444] sm:$0xff]
    %v3058 = vld [vmem:[#allocation3 + $0x44c] sm:$0xff]
    %v3059 = vld [vmem:[#allocation3 + $0x454] sm:$0xff]
    %v3060 = vld [vmem:[#allocation3 + $0x45c] sm:$0xf]
    %v3061 = vld [vmem:[#allocation3 + $0x460] sm:$0xff]
    %v3062 = vld [vmem:[#allocation3 + $0x468] sm:$0xff]
    %v3063 = vld [vmem:[#allocation3 + $0x470] sm:$0xff]
    %v3064 = vld [vmem:[#allocation3 + $0x478] sm:$0xf]
    %v3065 = vld [vmem:[#allocation3 + $0x47c] sm:$0xff]
    %v3066 = vld [vmem:[#allocation3 + $0x484] sm:$0xff]
    %v3067 = vld [vmem:[#allocation3 + $0x48c] sm:$0xff]
    %v3068 = vld [vmem:[#allocation3 + $0x494] sm:$0xf]
    %v3069 = vld [vmem:[#allocation3 + $0x498] sm:$0xff]
    %v3070 = vld [vmem:[#allocation3 + $0x4a0] sm:$0xff]
    %v3071 = vld [vmem:[#allocation3 + $0x4a8] sm:$0xff]
    %v3072 = vld [vmem:[#allocation3 + $0x4b0] sm:$0xf]
    %v3073 = vld [vmem:[#allocation3 + $0x4b4] sm:$0xff]
    %v3074 = vld [vmem:[#allocation3 + $0x4bc] sm:$0xff]
    %v3075 = vld [vmem:[#allocation3 + $0x4c4] sm:$0xff]
    %v3076 = vld [vmem:[#allocation3 + $0x4cc] sm:$0xf]
    %v3077 = vld [vmem:[#allocation3 + $0x4d0] sm:$0xff]
    %v3078 = vld [vmem:[#allocation3 + $0x4d8] sm:$0xff]
    %v3079 = vld [vmem:[#allocation3 + $0x4e0] sm:$0xff]
    %v3080 = vld [vmem:[#allocation3 + $0x4e8] sm:$0xf]
    %v3081 = vld [vmem:[#allocation3 + $0x4ec] sm:$0xff]
    %v3082 = vld [vmem:[#allocation3 + $0x4f4] sm:$0xff]
    %v3083 = vld [vmem:[#allocation3 + $0x4fc] sm:$0xff]
    %v3084 = vld [vmem:[#allocation3 + $0x504] sm:$0xf]
    %v3085 = vld [vmem:[#allocation3 + $0x508] sm:$0xff]
    %v3086 = vld [vmem:[#allocation3 + $0x510] sm:$0xff]
    %v3087 = vld [vmem:[#allocation3 + $0x518] sm:$0xff]
    %v3088 = vld [vmem:[#allocation3 + $0x520] sm:$0xf]
    %v3089 = vld [vmem:[#allocation3 + $0x524] sm:$0xff]
    %v3090 = vld [vmem:[#allocation3 + $0x52c] sm:$0xff]
    %v3091 = vld [vmem:[#allocation3 + $0x534] sm:$0xff]
    %v3092 = vld [vmem:[#allocation3 + $0x53c] sm:$0xf]
    %v3093 = vld [vmem:[#allocation3 + $0x540] sm:$0xff]
    %v3094 = vld [vmem:[#allocation3 + $0x548] sm:$0xff]
    %v3095 = vld [vmem:[#allocation3 + $0x550] sm:$0xff]
    %v3096 = vld [vmem:[#allocation3 + $0x558] sm:$0xf]
    %v3097 = vld [vmem:[#allocation3 + $0x55c] sm:$0xff]
    %v3098 = vld [vmem:[#allocation3 + $0x564] sm:$0xff]
    %v3099 = vld [vmem:[#allocation3 + $0x56c] sm:$0xff]
    %v3100 = vld [vmem:[#allocation3 + $0x574] sm:$0xf]
    %v3101 = vld [vmem:[#allocation3 + $0x578] sm:$0xff]
    %v3102 = vld [vmem:[#allocation3 + $0x580] sm:$0xff]
    %v3103 = vld [vmem:[#allocation3 + $0x588] sm:$0xff]
    %v3104 = vld [vmem:[#allocation3 + $0x590] sm:$0xf]
    %v3105 = vld [vmem:[#allocation3 + $0x594] sm:$0xff]
    %v3106 = vld [vmem:[#allocation3 + $0x59c] sm:$0xff]
    %v3107 = vld [vmem:[#allocation3 + $0x5a4] sm:$0xff]
    %v3108 = vld [vmem:[#allocation3 + $0x5ac] sm:$0xf]
    %v3109 = vld [vmem:[#allocation3 + $0x5b0] sm:$0xff]
    %v3110 = vld [vmem:[#allocation3 + $0x5b8] sm:$0xff]
    %v3111 = vld [vmem:[#allocation3 + $0x5c0] sm:$0xff]
    %v3112 = vld [vmem:[#allocation3 + $0x5c8] sm:$0xf]
    %v3113 = vld [vmem:[#allocation3 + $0x5cc] sm:$0xff]
    %v3114 = vld [vmem:[#allocation3 + $0x5d4] sm:$0xff]
    %v3115 = vld [vmem:[#allocation3 + $0x5dc] sm:$0xff]
    %v3116 = vld [vmem:[#allocation3 + $0x5e4] sm:$0xf]
    %v3117 = vld [vmem:[#allocation3 + $0x5e8] sm:$0xff]
    %v3118 = vld [vmem:[#allocation3 + $0x5f0] sm:$0xff]
    %v3119 = vld [vmem:[#allocation3 + $0x5f8] sm:$0xff]
    %v3120 = vld [vmem:[#allocation3 + $0x600] sm:$0xf]
    %v3121 = vld [vmem:[#allocation3 + $0x604] sm:$0xff]
    %v3122 = vld [vmem:[#allocation3 + $0x60c] sm:$0xff]
    %v3123 = vld [vmem:[#allocation3 + $0x614] sm:$0xff]
    %v3124 = vld [vmem:[#allocation3 + $0x61c] sm:$0xf]
    %v3125 = vld [vmem:[#allocation3 + $0x620] sm:$0xff]
    %v3126 = vld [vmem:[#allocation3 + $0x628] sm:$0xff]
    %v3127 = vld [vmem:[#allocation3 + $0x630] sm:$0xff]
    %v3128 = vld [vmem:[#allocation3 + $0x638] sm:$0xf]
    %v3129 = vld [vmem:[#allocation3 + $0x63c] sm:$0xff]
    %v3130 = vld [vmem:[#allocation3 + $0x644] sm:$0xff]
    %v3131 = vld [vmem:[#allocation3 + $0x64c] sm:$0xff]
    %v3132 = vld [vmem:[#allocation3 + $0x654] sm:$0xf]
    %v3133 = vld [vmem:[#allocation3 + $0x658] sm:$0xff]
    %v3134 = vld [vmem:[#allocation3 + $0x660] sm:$0xff]
    %v3135 = vld [vmem:[#allocation3 + $0x668] sm:$0xff]
    %v3136 = vld [vmem:[#allocation3 + $0x670] sm:$0xf]
    %v3137 = vld [vmem:[#allocation3 + $0x674] sm:$0xff]
    %v3138 = vld [vmem:[#allocation3 + $0x67c] sm:$0xff]
    %v3139 = vld [vmem:[#allocation3 + $0x684] sm:$0xff]
    %v3140 = vld [vmem:[#allocation3 + $0x68c] sm:$0xf]
    %v3141 = vld [vmem:[#allocation3 + $0x690] sm:$0xff]
    %v3142 = vld [vmem:[#allocation3 + $0x698] sm:$0xff]
    %v3143 = vld [vmem:[#allocation3 + $0x6a0] sm:$0xff]
    %v3144 = vld [vmem:[#allocation3 + $0x6a8] sm:$0xf]
    %v3145 = vld [vmem:[#allocation3 + $0x6ac] sm:$0xff]
    %v3146 = vld [vmem:[#allocation3 + $0x6b4] sm:$0xff]
    %v3147 = vld [vmem:[#allocation3 + $0x6bc] sm:$0xff]
    %v3148 = vld [vmem:[#allocation3 + $0x6c4] sm:$0xf]
    %v3149 = vld [vmem:[#allocation3 + $0x6c8] sm:$0xff]
    %v3150 = vld [vmem:[#allocation3 + $0x6d0] sm:$0xff]
    %v3151 = vld [vmem:[#allocation3 + $0x6d8] sm:$0xff]
    %v3152 = vld [vmem:[#allocation3 + $0x6e0] sm:$0xf]
    %v3153 = vld [vmem:[#allocation3 + $0x6e4] sm:$0xff]
    %v3154 = vld [vmem:[#allocation3 + $0x6ec] sm:$0xff]
    %v3155 = vld [vmem:[#allocation3 + $0x6f4] sm:$0xff]
    %v3156 = vld [vmem:[#allocation3 + $0x6fc] sm:$0xf]
    %v3157 = vld [vmem:[#allocation3 + $0x700] sm:$0xff]
    %v3158 = vld [vmem:[#allocation3 + $0x708] sm:$0xff]
    %v3159 = vld [vmem:[#allocation3 + $0x710] sm:$0xff]
    %v3160 = vld [vmem:[#allocation3 + $0x718] sm:$0xf]
    %v3161 = vld [vmem:[#allocation3 + $0x71c] sm:$0xff]
    %v3162 = vld [vmem:[#allocation3 + $0x724] sm:$0xff]
    %v3163 = vld [vmem:[#allocation3 + $0x72c] sm:$0xff]
    %v3164 = vld [vmem:[#allocation3 + $0x734] sm:$0xf]
    %v3165 = vld [vmem:[#allocation3 + $0x738] sm:$0xff]
    %v3166 = vld [vmem:[#allocation3 + $0x740] sm:$0xff]
    %v3167 = vld [vmem:[#allocation3 + $0x748] sm:$0xff]
    %v3168 = vld [vmem:[#allocation3 + $0x750] sm:$0xf]
    %v3169 = vld [vmem:[#allocation3 + $0x754] sm:$0xff]
    %v3170 = vld [vmem:[#allocation3 + $0x75c] sm:$0xff]
    %v3171 = vld [vmem:[#allocation3 + $0x764] sm:$0xff]
    %v3172 = vld [vmem:[#allocation3 + $0x76c] sm:$0xf]
    %v3173 = vld [vmem:[#allocation3 + $0x770] sm:$0xff]
    %v3174 = vld [vmem:[#allocation3 + $0x778] sm:$0xff]
    %v3175 = vld [vmem:[#allocation3 + $0x780] sm:$0xff]
    %v3176 = vld [vmem:[#allocation3 + $0x788] sm:$0xf]
    %v3177 = vld [vmem:[#allocation3 + $0x78c] sm:$0xff]
    %v3178 = vld [vmem:[#allocation3 + $0x794] sm:$0xff]
    %v3179 = vld [vmem:[#allocation3 + $0x79c] sm:$0xff]
    %v3180 = vld [vmem:[#allocation3 + $0x7a4] sm:$0xf]
    %v3181 = vld [vmem:[#allocation3 + $0x7a8] sm:$0xff]
    %v3182 = vld [vmem:[#allocation3 + $0x7b0] sm:$0xff]
    %v3183 = vld [vmem:[#allocation3 + $0x7b8] sm:$0xff]
    %v3184 = vld [vmem:[#allocation3 + $0x7c0] sm:$0xf]
    %v3185 = vld [vmem:[#allocation3 + $0x7c4] sm:$0xff]
    %v3186 = vld [vmem:[#allocation3 + $0x7cc] sm:$0xff]
    %v3187 = vld [vmem:[#allocation3 + $0x7d4] sm:$0xff]
    %v3188 = vld [vmem:[#allocation3 + $0x7dc] sm:$0xf]
    %v3189 = vld [vmem:[#allocation3 + $0x7e0] sm:$0xff]
    %v3190 = vld [vmem:[#allocation3 + $0x7e8] sm:$0xff]
    %v3191 = vld [vmem:[#allocation3 + $0x7f0] sm:$0xff]
    %v3192 = vld [vmem:[#allocation3 + $0x7f8] sm:$0xf]
    %v3193 = vld [vmem:[#allocation3 + $0x7fc] sm:$0xff]
    %v3194 = vld [vmem:[#allocation3 + $0x804] sm:$0xff]
    %v3195 = vld [vmem:[#allocation3 + $0x80c] sm:$0xff]
    %v3196 = vld [vmem:[#allocation3 + $0x814] sm:$0xf]
    %v3197 = vld [vmem:[#allocation3 + $0x818] sm:$0xff]
    %v3198 = vld [vmem:[#allocation3 + $0x820] sm:$0xff]
    %v3199 = vld [vmem:[#allocation3 + $0x828] sm:$0xff]
    %v3200 = vld [vmem:[#allocation3 + $0x830] sm:$0xf]
    %v3201 = vld [vmem:[#allocation3 + $0x834] sm:$0xff]
    %v3202 = vld [vmem:[#allocation3 + $0x83c] sm:$0xff]
    %v3203 = vld [vmem:[#allocation3 + $0x844] sm:$0xff]
    %v3204 = vld [vmem:[#allocation3 + $0x84c] sm:$0xf]
    %v3205 = vld [vmem:[#allocation3 + $0x850] sm:$0xff]
    %v3206 = vld [vmem:[#allocation3 + $0x858] sm:$0xff]
    %v3207 = vld [vmem:[#allocation3 + $0x860] sm:$0xff]
    %v3208 = vld [vmem:[#allocation3 + $0x868] sm:$0xf]
    %v3209 = vld [vmem:[#allocation3 + $0x86c] sm:$0xff]
    %v3210 = vld [vmem:[#allocation3 + $0x874] sm:$0xff]
    %v3211 = vld [vmem:[#allocation3 + $0x87c] sm:$0xff]
    %v3212 = vld [vmem:[#allocation3 + $0x884] sm:$0xf]
    %v3213 = vld [vmem:[#allocation3 + $0x888] sm:$0xff]
    %v3214 = vld [vmem:[#allocation3 + $0x890] sm:$0xff]
    %v3215 = vld [vmem:[#allocation3 + $0x898] sm:$0xff]
    %v3216 = vld [vmem:[#allocation3 + $0x8a0] sm:$0xf]
    %v3217 = vld [vmem:[#allocation3 + $0x8a4] sm:$0xff]
    %v3218 = vld [vmem:[#allocation3 + $0x8ac] sm:$0xff]
    %v3219 = vld [vmem:[#allocation3 + $0x8b4] sm:$0xff]
    %v3220 = vld [vmem:[#allocation3 + $0x8bc] sm:$0xf]
    %v3221 = vld [vmem:[#allocation3 + $0x8c0] sm:$0xff]
    %v3222 = vld [vmem:[#allocation3 + $0x8c8] sm:$0xff]
    %v3223 = vld [vmem:[#allocation3 + $0x8d0] sm:$0xff]
    %v3224 = vld [vmem:[#allocation3 + $0x8d8] sm:$0xf]
    %v3225 = vld [vmem:[#allocation3 + $0x8dc] sm:$0xff]
    %v3226 = vld [vmem:[#allocation3 + $0x8e4] sm:$0xff]
    %v3227 = vld [vmem:[#allocation3 + $0x8ec] sm:$0xff]
    %v3228 = vld [vmem:[#allocation3 + $0x8f4] sm:$0xf]
    %v3229 = vld [vmem:[#allocation3 + $0x8f8] sm:$0xff]
    %v3230 = vld [vmem:[#allocation3 + $0x900] sm:$0xff]
    %v3231 = vld [vmem:[#allocation3 + $0x908] sm:$0xff]
    %v3232 = vld [vmem:[#allocation3 + $0x910] sm:$0xf]
    %v3233 = vld [vmem:[#allocation3 + $0x914] sm:$0xff]
    %v3234 = vld [vmem:[#allocation3 + $0x91c] sm:$0xff]
    %v3235 = vld [vmem:[#allocation3 + $0x924] sm:$0xff]
    %v3236 = vld [vmem:[#allocation3 + $0x92c] sm:$0xf]
    %v3237 = vld [vmem:[#allocation3 + $0x930] sm:$0xff]
    %v3238 = vld [vmem:[#allocation3 + $0x938] sm:$0xff]
    %v3239 = vld [vmem:[#allocation3 + $0x940] sm:$0xff]
    %v3240 = vld [vmem:[#allocation3 + $0x948] sm:$0xf]
    %v3241 = vld [vmem:[#allocation3 + $0x94c] sm:$0xff]
    %v3242 = vld [vmem:[#allocation3 + $0x954] sm:$0xff]
    %v3243 = vld [vmem:[#allocation3 + $0x95c] sm:$0xff]
    %v3244 = vld [vmem:[#allocation3 + $0x964] sm:$0xf]
    %v3245 = vld [vmem:[#allocation3 + $0x968] sm:$0xff]
    %v3246 = vld [vmem:[#allocation3 + $0x970] sm:$0xff]
    %v3247 = vld [vmem:[#allocation3 + $0x978] sm:$0xff]
    %v3248 = vld [vmem:[#allocation3 + $0x980] sm:$0xf]
    %v3249 = vld [vmem:[#allocation3 + $0x984] sm:$0xff]
    %v3250 = vld [vmem:[#allocation3 + $0x98c] sm:$0xff]
    %v3251 = vld [vmem:[#allocation3 + $0x994] sm:$0xff]
    %v3252 = vld [vmem:[#allocation3 + $0x99c] sm:$0xf]
    %v3253 = vld [vmem:[#allocation3 + $0x9a0] sm:$0xff]
    %v3254 = vld [vmem:[#allocation3 + $0x9a8] sm:$0xff]
    %v3255 = vld [vmem:[#allocation3 + $0x9b0] sm:$0xff]
    %v3256 = vld [vmem:[#allocation3 + $0x9b8] sm:$0xf]
    %v3257 = vld [vmem:[#allocation3 + $0x9bc] sm:$0xff]
    %v3258 = vld [vmem:[#allocation3 + $0x9c4] sm:$0xff]
    %v3259 = vld [vmem:[#allocation3 + $0x9cc] sm:$0xff]
    %v3260 = vld [vmem:[#allocation3 + $0x9d4] sm:$0xf]
    %v3261 = vld [vmem:[#allocation3 + $0x9d8] sm:$0xff]
    %v3262 = vld [vmem:[#allocation3 + $0x9e0] sm:$0xff]
    %v3263 = vld [vmem:[#allocation3 + $0x9e8] sm:$0xff]
    %v3264 = vld [vmem:[#allocation3 + $0x9f0] sm:$0xf]
    %v3265 = vld [vmem:[#allocation3 + $0x9f4] sm:$0xff]
    %v3266 = vld [vmem:[#allocation3 + $0x9fc] sm:$0xff]
    %v3267 = vld [vmem:[#allocation3 + $0xa04] sm:$0xff]
    %v3268 = vld [vmem:[#allocation3 + $0xa0c] sm:$0xf]
    %v3269 = vld [vmem:[#allocation3 + $0xa10] sm:$0xff]
    %v3270 = vld [vmem:[#allocation3 + $0xa18] sm:$0xff]
    %v3271 = vld [vmem:[#allocation3 + $0xa20] sm:$0xff]
    %v3272 = vld [vmem:[#allocation3 + $0xa28] sm:$0xf]
    %v3273 = vld [vmem:[#allocation3 + $0xa2c] sm:$0xff]
    %v3274 = vld [vmem:[#allocation3 + $0xa34] sm:$0xff]
    %v3275 = vld [vmem:[#allocation3 + $0xa3c] sm:$0xff]
    %v3276 = vld [vmem:[#allocation3 + $0xa44] sm:$0xf]
    %v3277 = vld [vmem:[#allocation3 + $0xa48] sm:$0xff]
    %v3278 = vld [vmem:[#allocation3 + $0xa50] sm:$0xff]
    %v3279 = vld [vmem:[#allocation3 + $0xa58] sm:$0xff]
    %v3280 = vld [vmem:[#allocation3 + $0xa60] sm:$0xf]
    %v3281 = vld [vmem:[#allocation3 + $0xa64] sm:$0xff]
    %v3282 = vld [vmem:[#allocation3 + $0xa6c] sm:$0xff]
    %v3283 = vld [vmem:[#allocation3 + $0xa74] sm:$0xff]
    %v3284 = vld [vmem:[#allocation3 + $0xa7c] sm:$0xf]
    %v3285 = vld [vmem:[#allocation3 + $0xa80] sm:$0xff]
    %v3286 = vld [vmem:[#allocation3 + $0xa88] sm:$0xff]
    %v3287 = vld [vmem:[#allocation3 + $0xa90] sm:$0xff]
    %v3288 = vld [vmem:[#allocation3 + $0xa98] sm:$0xf]
    %v3289 = vld [vmem:[#allocation3 + $0xa9c] sm:$0xff]
    %v3290 = vld [vmem:[#allocation3 + $0xaa4] sm:$0xff]
    %v3291 = vld [vmem:[#allocation3 + $0xaac] sm:$0xff]
    %v3292 = vld [vmem:[#allocation3 + $0xab4] sm:$0xf]
    %v3293 = vld [vmem:[#allocation3 + $0xab8] sm:$0xff]
    %v3294 = vld [vmem:[#allocation3 + $0xac0] sm:$0xff]
    %v3295 = vld [vmem:[#allocation3 + $0xac8] sm:$0xff]
    %v3296 = vld [vmem:[#allocation3 + $0xad0] sm:$0xf]
    %v3297 = vld [vmem:[#allocation3 + $0xad4] sm:$0xff]
    %v3298 = vld [vmem:[#allocation3 + $0xadc] sm:$0xff]
    %v3299 = vld [vmem:[#allocation3 + $0xae4] sm:$0xff]
    %v3300 = vld [vmem:[#allocation3 + $0xaec] sm:$0xf]
    %v3301 = vld [vmem:[#allocation3 + $0xaf0] sm:$0xff]
    %v3302 = vld [vmem:[#allocation3 + $0xaf8] sm:$0xff]
    %v3303 = vld [vmem:[#allocation3 + $0xb00] sm:$0xff]
    %v3304 = vld [vmem:[#allocation3 + $0xb08] sm:$0xf]
    %v3305 = vld [vmem:[#allocation3 + $0xb0c] sm:$0xff]
    %v3306 = vld [vmem:[#allocation3 + $0xb14] sm:$0xff]
    %v3307 = vld [vmem:[#allocation3 + $0xb1c] sm:$0xff]
    %v3308 = vld [vmem:[#allocation3 + $0xb24] sm:$0xf]
    %v3309 = vld [vmem:[#allocation3 + $0xb28] sm:$0xff]
    %v3310 = vld [vmem:[#allocation3 + $0xb30] sm:$0xff]
    %v3311 = vld [vmem:[#allocation3 + $0xb38] sm:$0xff]
    %v3312 = vld [vmem:[#allocation3 + $0xb40] sm:$0xf]
    %v3313 = vld [vmem:[#allocation3 + $0xb44] sm:$0xff]
    %v3314 = vld [vmem:[#allocation3 + $0xb4c] sm:$0xff]
    %v3315 = vld [vmem:[#allocation3 + $0xb54] sm:$0xff]
    %v3316 = vld [vmem:[#allocation3 + $0xb5c] sm:$0xf]
    %v3317 = vld [vmem:[#allocation3 + $0xb60] sm:$0xff]
    %v3318 = vld [vmem:[#allocation3 + $0xb68] sm:$0xff]
    %v3319 = vld [vmem:[#allocation3 + $0xb70] sm:$0xff]
    %v3320 = vld [vmem:[#allocation3 + $0xb78] sm:$0xf]
    %v3321 = vld [vmem:[#allocation3 + $0xb7c] sm:$0xff]
    %v3322 = vld [vmem:[#allocation3 + $0xb84] sm:$0xff]
    %v3323 = vld [vmem:[#allocation3 + $0xb8c] sm:$0xff]
    %v3324 = vld [vmem:[#allocation3 + $0xb94] sm:$0xf]
    %v3325 = vld [vmem:[#allocation3 + $0xb98] sm:$0xff]
    %v3326 = vld [vmem:[#allocation3 + $0xba0] sm:$0xff]
    %v3327 = vld [vmem:[#allocation3 + $0xba8] sm:$0xff]
    %v3328 = vld [vmem:[#allocation3 + $0xbb0] sm:$0xf]
    %v3329 = vld [vmem:[#allocation3 + $0xbb4] sm:$0xff]
    %v3330 = vld [vmem:[#allocation3 + $0xbbc] sm:$0xff]
    %v3331 = vld [vmem:[#allocation3 + $0xbc4] sm:$0xff]
    %v3332 = vld [vmem:[#allocation3 + $0xbcc] sm:$0xf]
    %v3333 = vld [vmem:[#allocation3 + $0xbd0] sm:$0xff]
    %v3334 = vld [vmem:[#allocation3 + $0xbd8] sm:$0xff]
    %v3335 = vld [vmem:[#allocation3 + $0xbe0] sm:$0xff]
    %v3336 = vld [vmem:[#allocation3 + $0xbe8] sm:$0xf]
    %v3337 = vld [vmem:[#allocation3 + $0xbec] sm:$0xff]
    %v3338 = vld [vmem:[#allocation3 + $0xbf4] sm:$0xff]
    %v3339 = vld [vmem:[#allocation3 + $0xbfc] sm:$0xff]
    %v3340 = vld [vmem:[#allocation3 + $0xc04] sm:$0xf]
    %v3341 = vld [vmem:[#allocation3 + $0xc08] sm:$0xff]
    %v3342 = vld [vmem:[#allocation3 + $0xc10] sm:$0xff]
    %v3343 = vld [vmem:[#allocation3 + $0xc18] sm:$0xff]
    %v3344 = vld [vmem:[#allocation3 + $0xc20] sm:$0xf]
    %v3345 = vld [vmem:[#allocation3 + $0xc24] sm:$0xff]
    %v3346 = vld [vmem:[#allocation3 + $0xc2c] sm:$0xff]
    %v3347 = vld [vmem:[#allocation3 + $0xc34] sm:$0xff]
    %v3348 = vld [vmem:[#allocation3 + $0xc3c] sm:$0xf]
    %v3349 = vld [vmem:[#allocation3 + $0xc40] sm:$0xff]
    %v3350 = vld [vmem:[#allocation3 + $0xc48] sm:$0xff]
    %v3351 = vld [vmem:[#allocation3 + $0xc50] sm:$0xff]
    %v3352 = vld [vmem:[#allocation3 + $0xc58] sm:$0xf]
    %v3353 = vld [vmem:[#allocation3 + $0xc5c] sm:$0xff]
    %v3354 = vld [vmem:[#allocation3 + $0xc64] sm:$0xff]
    %v3355 = vld [vmem:[#allocation3 + $0xc6c] sm:$0xff]
    %v3356 = vld [vmem:[#allocation3 + $0xc74] sm:$0xf]
    %v3357 = vld [vmem:[#allocation3 + $0xc78] sm:$0xff]
    %v3358 = vld [vmem:[#allocation3 + $0xc80] sm:$0xff]
    %v3359 = vld [vmem:[#allocation3 + $0xc88] sm:$0xff]
    %v3360 = vld [vmem:[#allocation3 + $0xc90] sm:$0xf]
    %v3361 = vld [vmem:[#allocation3 + $0xc94] sm:$0xff]
    %v3362 = vld [vmem:[#allocation3 + $0xc9c] sm:$0xff]
    %v3363 = vld [vmem:[#allocation3 + $0xca4] sm:$0xff]
    %v3364 = vld [vmem:[#allocation3 + $0xcac] sm:$0xf]
    %v3365 = vld [vmem:[#allocation3 + $0xcb0] sm:$0xff]
    %v3366 = vld [vmem:[#allocation3 + $0xcb8] sm:$0xff]
    %v3367 = vld [vmem:[#allocation3 + $0xcc0] sm:$0xff]
    %v3368 = vld [vmem:[#allocation3 + $0xcc8] sm:$0xf]
    %v3369 = vld [vmem:[#allocation3 + $0xccc] sm:$0xff]
    %v3370 = vld [vmem:[#allocation3 + $0xcd4] sm:$0xff]
    %v3371 = vld [vmem:[#allocation3 + $0xcdc] sm:$0xff]
    %v3372 = vld [vmem:[#allocation3 + $0xce4] sm:$0xf]
    %v3373 = vld [vmem:[#allocation3 + $0xce8] sm:$0xff]
    %v3374 = vld [vmem:[#allocation3 + $0xcf0] sm:$0xff]
    %v3375 = vld [vmem:[#allocation3 + $0xcf8] sm:$0xff]
    %v3376 = vld [vmem:[#allocation3 + $0xd00] sm:$0xf]
    %v3377 = vld [vmem:[#allocation3 + $0xd04] sm:$0xff]
    %v3378 = vld [vmem:[#allocation3 + $0xd0c] sm:$0xff]
    %v3379 = vld [vmem:[#allocation3 + $0xd14] sm:$0xff]
    %v3380 = vld [vmem:[#allocation3 + $0xd1c] sm:$0xf]
    %v3381 = vld [vmem:[#allocation3 + $0xd20] sm:$0xff]
    %v3382 = vld [vmem:[#allocation3 + $0xd28] sm:$0xff]
    %v3383 = vld [vmem:[#allocation3 + $0xd30] sm:$0xff]
    %v3384 = vld [vmem:[#allocation3 + $0xd38] sm:$0xf]
    %v3385 = vld [vmem:[#allocation3 + $0xd3c] sm:$0xff]
    %v3386 = vld [vmem:[#allocation3 + $0xd44] sm:$0xff]
    %v3387 = vld [vmem:[#allocation3 + $0xd4c] sm:$0xff]
    %v3388 = vld [vmem:[#allocation3 + $0xd54] sm:$0xf]
    %v3389 = vld [vmem:[#allocation3 + $0xd58] sm:$0xff]
    %v3390 = vld [vmem:[#allocation3 + $0xd60] sm:$0xff]
    %v3391 = vld [vmem:[#allocation3 + $0xd68] sm:$0xff]
    %v3392 = vld [vmem:[#allocation3 + $0xd70] sm:$0xf]
    %v3393 = vld [vmem:[#allocation3 + $0xd74] sm:$0xff]
    %v3394 = vld [vmem:[#allocation3 + $0xd7c] sm:$0xff]
    %v3395 = vld [vmem:[#allocation3 + $0xd84] sm:$0xff]
    %v3396 = vld [vmem:[#allocation3 + $0xd8c] sm:$0xf]
    %v3397 = vld [vmem:[#allocation3 + $0xd90] sm:$0xff]
    %v3398 = vld [vmem:[#allocation3 + $0xd98] sm:$0xff]
    %v3399 = vld [vmem:[#allocation3 + $0xda0] sm:$0xff]
    %v3400 = vld [vmem:[#allocation3 + $0xda8] sm:$0xf]
    %v3401 = vld [vmem:[#allocation3 + $0xdac] sm:$0xff]
    %v3402 = vld [vmem:[#allocation3 + $0xdb4] sm:$0xff]
    %v3403 = vld [vmem:[#allocation3 + $0xdbc] sm:$0xff]
    %v3404 = vld [vmem:[#allocation3 + $0xdc4] sm:$0xf]
    %v3405 = vld [vmem:[#allocation3 + $0xdc8] sm:$0xff]
    %v3406 = vld [vmem:[#allocation3 + $0xdd0] sm:$0xff]
    %v3407 = vld [vmem:[#allocation3 + $0xdd8] sm:$0xff]
    %v3408 = vld [vmem:[#allocation3 + $0xde0] sm:$0xf]
    %v3409 = vld [vmem:[#allocation3 + $0xde4] sm:$0xff]
    %v3410 = vld [vmem:[#allocation3 + $0xdec] sm:$0xff]
    %v3411 = vld [vmem:[#allocation3 + $0xdf4] sm:$0xff]
    %v3412 = vld [vmem:[#allocation3 + $0xdfc] sm:$0xf]
    %v3413 = vld [vmem:[#allocation16] sm:$0xff]
    %v3414 = vpack.c.bf16 %v2889, %v2881
    %v3415 = vpack.c.bf16 %v2890, %v2882
    %v3416 = vpack.c.bf16 %v2891, %v2883
    %v3417 = vpack.c.bf16 %v2892, %v2884
    %v3418 = vpack.c.bf16 %v2893, %v2885
    %v3419 = vpack.c.bf16 %v2894, %v2886
    %v3420 = vpack.c.bf16 %v2895, %v2887
    %v3421 = vpack.c.bf16 %v2896, %v2888
    %v3423 = vperm.slane %v3413, 0
    %v3424 = vperm.slane %v3413, 1
    %v3425 = vperm.slane %v3413, 2
    %v3426 = vperm.slane %v3413, 3
    %v3427 = vperm.slane %v3413, 4
    %v3428 = vperm.slane %v3413, 5
    %v3429 = vperm.slane %v3413, 6
    %v3949 = vunpack.c.l.b16 %v2901
    %v3950 = vunpack.c.h.b16 %v2901
    %v3951 = vunpack.c.l.b16 %v2902
    %v3952 = vunpack.c.h.b16 %v2902
    %v3953 = vunpack.c.l.b16 %v2903
    %v3954 = vunpack.c.h.b16 %v2903
    %v3955 = vunpack.c.l.b16 %v2904
    %v3956 = vunpack.c.l.b16 %v2905
    %v3957 = vunpack.c.h.b16 %v2905
    %v3958 = vunpack.c.l.b16 %v2906
    %v3959 = vunpack.c.h.b16 %v2906
    %v3960 = vunpack.c.l.b16 %v2907
    %v3961 = vunpack.c.h.b16 %v2907
    %v3962 = vunpack.c.l.b16 %v2908
    %v3963 = vunpack.c.l.b16 %v2909
    %v3964 = vunpack.c.h.b16 %v2909
    %v3965 = vunpack.c.l.b16 %v2910
    %v3966 = vunpack.c.h.b16 %v2910
    %v3967 = vunpack.c.l.b16 %v2911
    %v3968 = vunpack.c.h.b16 %v2911
    %v3969 = vunpack.c.l.b16 %v2912
    %v3970 = vunpack.c.l.b16 %v2913
    %v3971 = vunpack.c.h.b16 %v2913
    %v3972 = vunpack.c.l.b16 %v2914
    %v3973 = vunpack.c.h.b16 %v2914
    %v3974 = vunpack.c.l.b16 %v2915
    %v3975 = vunpack.c.h.b16 %v2915
    %v3976 = vunpack.c.l.b16 %v2916
    %v3977 = vunpack.c.l.b16 %v2917
    %v3978 = vunpack.c.h.b16 %v2917
    %v3979 = vunpack.c.l.b16 %v2918
    %v3980 = vunpack.c.h.b16 %v2918
    %v3981 = vunpack.c.l.b16 %v2919
    %v3982 = vunpack.c.h.b16 %v2919
    %v3983 = vunpack.c.l.b16 %v2920
    %v3984 = vunpack.c.l.b16 %v2921
    %v3985 = vunpack.c.h.b16 %v2921
    %v3986 = vunpack.c.l.b16 %v2922
    %v3987 = vunpack.c.h.b16 %v2922
    %v3988 = vunpack.c.l.b16 %v2923
    %v3989 = vunpack.c.h.b16 %v2923
    %v3990 = vunpack.c.l.b16 %v2924
    %v3991 = vunpack.c.l.b16 %v2925
    %v3992 = vunpack.c.h.b16 %v2925
    %v3993 = vunpack.c.l.b16 %v2926
    %v3994 = vunpack.c.h.b16 %v2926
    %v3995 = vunpack.c.l.b16 %v2927
    %v3996 = vunpack.c.h.b16 %v2927
    %v3997 = vunpack.c.l.b16 %v2928
    %v3998 = vunpack.c.l.b16 %v2929
    %v3999 = vunpack.c.h.b16 %v2929
    %v4000 = vunpack.c.l.b16 %v2930
    %v4001 = vunpack.c.h.b16 %v2930
    %v4002 = vunpack.c.l.b16 %v2931
    %v4003 = vunpack.c.h.b16 %v2931
    %v4004 = vunpack.c.l.b16 %v2932
    %v4005 = vunpack.c.l.b16 %v2933
    %v4006 = vunpack.c.h.b16 %v2933
    %v4007 = vunpack.c.l.b16 %v2934
    %v4008 = vunpack.c.h.b16 %v2934
    %v4009 = vunpack.c.l.b16 %v2935
    %v4010 = vunpack.c.h.b16 %v2935
    %v4011 = vunpack.c.l.b16 %v2936
    %v4012 = vunpack.c.l.b16 %v2937
    %v4013 = vunpack.c.h.b16 %v2937
    %v4014 = vunpack.c.l.b16 %v2938
    %v4015 = vunpack.c.h.b16 %v2938
    %v4016 = vunpack.c.l.b16 %v2939
    %v4017 = vunpack.c.h.b16 %v2939
    %v4018 = vunpack.c.l.b16 %v2940
    %v4019 = vunpack.c.l.b16 %v2941
    %v4020 = vunpack.c.h.b16 %v2941
    %v4021 = vunpack.c.l.b16 %v2942
    %v4022 = vunpack.c.h.b16 %v2942
    %v4023 = vunpack.c.l.b16 %v2943
    %v4024 = vunpack.c.h.b16 %v2943
    %v4025 = vunpack.c.l.b16 %v2944
    %v4026 = vunpack.c.l.b16 %v2945
    %v4027 = vunpack.c.h.b16 %v2945
    %v4028 = vunpack.c.l.b16 %v2946
    %v4029 = vunpack.c.h.b16 %v2946
    %v4030 = vunpack.c.l.b16 %v2947
    %v4031 = vunpack.c.h.b16 %v2947
    %v4032 = vunpack.c.l.b16 %v2948
    %v4033 = vunpack.c.l.b16 %v2949
    %v4034 = vunpack.c.h.b16 %v2949
    %v4035 = vunpack.c.l.b16 %v2950
    %v4036 = vunpack.c.h.b16 %v2950
    %v4037 = vunpack.c.l.b16 %v2951
    %v4038 = vunpack.c.h.b16 %v2951
    %v4039 = vunpack.c.l.b16 %v2952
    %v4040 = vunpack.c.l.b16 %v2953
    %v4041 = vunpack.c.h.b16 %v2953
    %v4042 = vunpack.c.l.b16 %v2954
    %v4043 = vunpack.c.h.b16 %v2954
    %v4044 = vunpack.c.l.b16 %v2955
    %v4045 = vunpack.c.h.b16 %v2955
    %v4046 = vunpack.c.l.b16 %v2956
    %v4047 = vunpack.c.l.b16 %v2957
    %v4048 = vunpack.c.h.b16 %v2957
    %v4049 = vunpack.c.l.b16 %v2958
    %v4050 = vunpack.c.h.b16 %v2958
    %v4051 = vunpack.c.l.b16 %v2959
    %v4052 = vunpack.c.h.b16 %v2959
    %v4053 = vunpack.c.l.b16 %v2960
    %v4054 = vunpack.c.l.b16 %v2961
    %v4055 = vunpack.c.h.b16 %v2961
    %v4056 = vunpack.c.l.b16 %v2962
    %v4057 = vunpack.c.h.b16 %v2962
    %v4058 = vunpack.c.l.b16 %v2963
    %v4059 = vunpack.c.h.b16 %v2963
    %v4060 = vunpack.c.l.b16 %v2964
    %v4061 = vunpack.c.l.b16 %v2965
    %v4062 = vunpack.c.h.b16 %v2965
    %v4063 = vunpack.c.l.b16 %v2966
    %v4064 = vunpack.c.h.b16 %v2966
    %v4065 = vunpack.c.l.b16 %v2967
    %v4066 = vunpack.c.h.b16 %v2967
    %v4067 = vunpack.c.l.b16 %v2968
    %v4068 = vunpack.c.l.b16 %v2969
    %v4069 = vunpack.c.h.b16 %v2969
    %v4070 = vunpack.c.l.b16 %v2970
    %v4071 = vunpack.c.h.b16 %v2970
    %v4072 = vunpack.c.l.b16 %v2971
    %v4073 = vunpack.c.h.b16 %v2971
    %v4074 = vunpack.c.l.b16 %v2972
    %v4075 = vunpack.c.l.b16 %v2973
    %v4076 = vunpack.c.h.b16 %v2973
    %v4077 = vunpack.c.l.b16 %v2974
    %v4078 = vunpack.c.h.b16 %v2974
    %v4079 = vunpack.c.l.b16 %v2975
    %v4080 = vunpack.c.h.b16 %v2975
    %v4081 = vunpack.c.l.b16 %v2976
    %v4082 = vunpack.c.l.b16 %v2977
    %v4083 = vunpack.c.h.b16 %v2977
    %v4084 = vunpack.c.l.b16 %v2978
    %v4085 = vunpack.c.h.b16 %v2978
    %v4086 = vunpack.c.l.b16 %v2979
    %v4087 = vunpack.c.h.b16 %v2979
    %v4088 = vunpack.c.l.b16 %v2980
    %v4089 = vunpack.c.l.b16 %v2981
    %v4090 = vunpack.c.h.b16 %v2981
    %v4091 = vunpack.c.l.b16 %v2982
    %v4092 = vunpack.c.h.b16 %v2982
    %v4093 = vunpack.c.l.b16 %v2983
    %v4094 = vunpack.c.h.b16 %v2983
    %v4095 = vunpack.c.l.b16 %v2984
    %v4096 = vunpack.c.l.b16 %v2985
    %v4097 = vunpack.c.h.b16 %v2985
    %v4098 = vunpack.c.l.b16 %v2986
    %v4099 = vunpack.c.h.b16 %v2986
    %v4100 = vunpack.c.l.b16 %v2987
    %v4101 = vunpack.c.h.b16 %v2987
    %v4102 = vunpack.c.l.b16 %v2988
    %v4103 = vunpack.c.l.b16 %v2989
    %v4104 = vunpack.c.h.b16 %v2989
    %v4105 = vunpack.c.l.b16 %v2990
    %v4106 = vunpack.c.h.b16 %v2990
    %v4107 = vunpack.c.l.b16 %v2991
    %v4108 = vunpack.c.h.b16 %v2991
    %v4109 = vunpack.c.l.b16 %v2992
    %v4110 = vunpack.c.l.b16 %v2993
    %v4111 = vunpack.c.h.b16 %v2993
    %v4112 = vunpack.c.l.b16 %v2994
    %v4113 = vunpack.c.h.b16 %v2994
    %v4114 = vunpack.c.l.b16 %v2995
    %v4115 = vunpack.c.h.b16 %v2995
    %v4116 = vunpack.c.l.b16 %v2996
    %v4117 = vunpack.c.l.b16 %v2997
    %v4118 = vunpack.c.h.b16 %v2997
    %v4119 = vunpack.c.l.b16 %v2998
    %v4120 = vunpack.c.h.b16 %v2998
    %v4121 = vunpack.c.l.b16 %v2999
    %v4122 = vunpack.c.h.b16 %v2999
    %v4123 = vunpack.c.l.b16 %v3000
    %v4124 = vunpack.c.l.b16 %v3001
    %v4125 = vunpack.c.h.b16 %v3001
    %v4126 = vunpack.c.l.b16 %v3002
    %v4127 = vunpack.c.h.b16 %v3002
    %v4128 = vunpack.c.l.b16 %v3003
    %v4129 = vunpack.c.h.b16 %v3003
    %v4130 = vunpack.c.l.b16 %v3004
    %v4131 = vunpack.c.l.b16 %v3005
    %v4132 = vunpack.c.h.b16 %v3005
    %v4133 = vunpack.c.l.b16 %v3006
    %v4134 = vunpack.c.h.b16 %v3006
    %v4135 = vunpack.c.l.b16 %v3007
    %v4136 = vunpack.c.h.b16 %v3007
    %v4137 = vunpack.c.l.b16 %v3008
    %v4138 = vunpack.c.l.b16 %v3009
    %v4139 = vunpack.c.h.b16 %v3009
    %v4140 = vunpack.c.l.b16 %v3010
    %v4141 = vunpack.c.h.b16 %v3010
    %v4142 = vunpack.c.l.b16 %v3011
    %v4143 = vunpack.c.h.b16 %v3011
    %v4144 = vunpack.c.l.b16 %v3012
    %v4145 = vunpack.c.l.b16 %v3013
    %v4146 = vunpack.c.h.b16 %v3013
    %v4147 = vunpack.c.l.b16 %v3014
    %v4148 = vunpack.c.h.b16 %v3014
    %v4149 = vunpack.c.l.b16 %v3015
    %v4150 = vunpack.c.h.b16 %v3015
    %v4151 = vunpack.c.l.b16 %v3016
    %v4152 = vunpack.c.l.b16 %v3017
    %v4153 = vunpack.c.h.b16 %v3017
    %v4154 = vunpack.c.l.b16 %v3018
    %v4155 = vunpack.c.h.b16 %v3018
    %v4156 = vunpack.c.l.b16 %v3019
    %v4157 = vunpack.c.h.b16 %v3019
    %v4158 = vunpack.c.l.b16 %v3020
    %v4159 = vunpack.c.l.b16 %v3021
    %v4160 = vunpack.c.h.b16 %v3021
    %v4161 = vunpack.c.l.b16 %v3022
    %v4162 = vunpack.c.h.b16 %v3022
    %v4163 = vunpack.c.l.b16 %v3023
    %v4164 = vunpack.c.h.b16 %v3023
    %v4165 = vunpack.c.l.b16 %v3024
    %v4166 = vunpack.c.l.b16 %v3025
    %v4167 = vunpack.c.h.b16 %v3025
    %v4168 = vunpack.c.l.b16 %v3026
    %v4169 = vunpack.c.h.b16 %v3026
    %v4170 = vunpack.c.l.b16 %v3027
    %v4171 = vunpack.c.h.b16 %v3027
    %v4172 = vunpack.c.l.b16 %v3028
    %v4173 = vunpack.c.l.b16 %v3029
    %v4174 = vunpack.c.h.b16 %v3029
    %v4175 = vunpack.c.l.b16 %v3030
    %v4176 = vunpack.c.h.b16 %v3030
    %v4177 = vunpack.c.l.b16 %v3031
    %v4178 = vunpack.c.h.b16 %v3031
    %v4179 = vunpack.c.l.b16 %v3032
    %v4180 = vunpack.c.l.b16 %v3033
    %v4181 = vunpack.c.h.b16 %v3033
    %v4182 = vunpack.c.l.b16 %v3034
    %v4183 = vunpack.c.h.b16 %v3034
    %v4184 = vunpack.c.l.b16 %v3035
    %v4185 = vunpack.c.h.b16 %v3035
    %v4186 = vunpack.c.l.b16 %v3036
    %v4187 = vunpack.c.l.b16 %v3037
    %v4188 = vunpack.c.h.b16 %v3037
    %v4189 = vunpack.c.l.b16 %v3038
    %v4190 = vunpack.c.h.b16 %v3038
    %v4191 = vunpack.c.l.b16 %v3039
    %v4192 = vunpack.c.h.b16 %v3039
    %v4193 = vunpack.c.l.b16 %v3040
    %v4194 = vunpack.c.l.b16 %v3041
    %v4195 = vunpack.c.h.b16 %v3041
    %v4196 = vunpack.c.l.b16 %v3042
    %v4197 = vunpack.c.h.b16 %v3042
    %v4198 = vunpack.c.l.b16 %v3043
    %v4199 = vunpack.c.h.b16 %v3043
    %v4200 = vunpack.c.l.b16 %v3044
    %v4201 = vunpack.c.l.b16 %v3045
    %v4202 = vunpack.c.h.b16 %v3045
    %v4203 = vunpack.c.l.b16 %v3046
    %v4204 = vunpack.c.h.b16 %v3046
    %v4205 = vunpack.c.l.b16 %v3047
    %v4206 = vunpack.c.h.b16 %v3047
    %v4207 = vunpack.c.l.b16 %v3048
    %v4208 = vunpack.c.l.b16 %v3049
    %v4209 = vunpack.c.h.b16 %v3049
    %v4210 = vunpack.c.l.b16 %v3050
    %v4211 = vunpack.c.h.b16 %v3050
    %v4212 = vunpack.c.l.b16 %v3051
    %v4213 = vunpack.c.h.b16 %v3051
    %v4214 = vunpack.c.l.b16 %v3052
    %v4215 = vunpack.c.l.b16 %v3053
    %v4216 = vunpack.c.h.b16 %v3053
    %v4217 = vunpack.c.l.b16 %v3054
    %v4218 = vunpack.c.h.b16 %v3054
    %v4219 = vunpack.c.l.b16 %v3055
    %v4220 = vunpack.c.h.b16 %v3055
    %v4221 = vunpack.c.l.b16 %v3056
    %v4222 = vunpack.c.l.b16 %v3057
    %v4223 = vunpack.c.h.b16 %v3057
    %v4224 = vunpack.c.l.b16 %v3058
    %v4225 = vunpack.c.h.b16 %v3058
    %v4226 = vunpack.c.l.b16 %v3059
    %v4227 = vunpack.c.h.b16 %v3059
    %v4228 = vunpack.c.l.b16 %v3060
    %v4229 = vunpack.c.l.b16 %v3061
    %v4230 = vunpack.c.h.b16 %v3061
    %v4231 = vunpack.c.l.b16 %v3062
    %v4232 = vunpack.c.h.b16 %v3062
    %v4233 = vunpack.c.l.b16 %v3063
    %v4234 = vunpack.c.h.b16 %v3063
    %v4235 = vunpack.c.l.b16 %v3064
    %v4236 = vunpack.c.l.b16 %v3065
    %v4237 = vunpack.c.h.b16 %v3065
    %v4238 = vunpack.c.l.b16 %v3066
    %v4239 = vunpack.c.h.b16 %v3066
    %v4240 = vunpack.c.l.b16 %v3067
    %v4241 = vunpack.c.h.b16 %v3067
    %v4242 = vunpack.c.l.b16 %v3068
    %v4243 = vunpack.c.l.b16 %v3069
    %v4244 = vunpack.c.h.b16 %v3069
    %v4245 = vunpack.c.l.b16 %v3070
    %v4246 = vunpack.c.h.b16 %v3070
    %v4247 = vunpack.c.l.b16 %v3071
    %v4248 = vunpack.c.h.b16 %v3071
    %v4249 = vunpack.c.l.b16 %v3072
    %v4250 = vunpack.c.l.b16 %v3073
    %v4251 = vunpack.c.h.b16 %v3073
    %v4252 = vunpack.c.l.b16 %v3074
    %v4253 = vunpack.c.h.b16 %v3074
    %v4254 = vunpack.c.l.b16 %v3075
    %v4255 = vunpack.c.h.b16 %v3075
    %v4256 = vunpack.c.l.b16 %v3076
    %v4257 = vunpack.c.l.b16 %v3077
    %v4258 = vunpack.c.h.b16 %v3077
    %v4259 = vunpack.c.l.b16 %v3078
    %v4260 = vunpack.c.h.b16 %v3078
    %v4261 = vunpack.c.l.b16 %v3079
    %v4262 = vunpack.c.h.b16 %v3079
    %v4263 = vunpack.c.l.b16 %v3080
    %v4264 = vunpack.c.l.b16 %v3081
    %v4265 = vunpack.c.h.b16 %v3081
    %v4266 = vunpack.c.l.b16 %v3082
    %v4267 = vunpack.c.h.b16 %v3082
    %v4268 = vunpack.c.l.b16 %v3083
    %v4269 = vunpack.c.h.b16 %v3083
    %v4270 = vunpack.c.l.b16 %v3084
    %v4271 = vunpack.c.l.b16 %v3085
    %v4272 = vunpack.c.h.b16 %v3085
    %v4273 = vunpack.c.l.b16 %v3086
    %v4274 = vunpack.c.h.b16 %v3086
    %v4275 = vunpack.c.l.b16 %v3087
    %v4276 = vunpack.c.h.b16 %v3087
    %v4277 = vunpack.c.l.b16 %v3088
    %v4278 = vunpack.c.l.b16 %v3089
    %v4279 = vunpack.c.h.b16 %v3089
    %v4280 = vunpack.c.l.b16 %v3090
    %v4281 = vunpack.c.h.b16 %v3090
    %v4282 = vunpack.c.l.b16 %v3091
    %v4283 = vunpack.c.h.b16 %v3091
    %v4284 = vunpack.c.l.b16 %v3092
    %v4285 = vunpack.c.l.b16 %v3093
    %v4286 = vunpack.c.h.b16 %v3093
    %v4287 = vunpack.c.l.b16 %v3094
    %v4288 = vunpack.c.h.b16 %v3094
    %v4289 = vunpack.c.l.b16 %v3095
    %v4290 = vunpack.c.h.b16 %v3095
    %v4291 = vunpack.c.l.b16 %v3096
    %v4292 = vunpack.c.l.b16 %v3097
    %v4293 = vunpack.c.h.b16 %v3097
    %v4294 = vunpack.c.l.b16 %v3098
    %v4295 = vunpack.c.h.b16 %v3098
    %v4296 = vunpack.c.l.b16 %v3099
    %v4297 = vunpack.c.h.b16 %v3099
    %v4298 = vunpack.c.l.b16 %v3100
    %v4299 = vunpack.c.l.b16 %v3101
    %v4300 = vunpack.c.h.b16 %v3101
    %v4301 = vunpack.c.l.b16 %v3102
    %v4302 = vunpack.c.h.b16 %v3102
    %v4303 = vunpack.c.l.b16 %v3103
    %v4304 = vunpack.c.h.b16 %v3103
    %v4305 = vunpack.c.l.b16 %v3104
    %v4306 = vunpack.c.l.b16 %v3105
    %v4307 = vunpack.c.h.b16 %v3105
    %v4308 = vunpack.c.l.b16 %v3106
    %v4309 = vunpack.c.h.b16 %v3106
    %v4310 = vunpack.c.l.b16 %v3107
    %v4311 = vunpack.c.h.b16 %v3107
    %v4312 = vunpack.c.l.b16 %v3108
    %v4313 = vunpack.c.l.b16 %v3109
    %v4314 = vunpack.c.h.b16 %v3109
    %v4315 = vunpack.c.l.b16 %v3110
    %v4316 = vunpack.c.h.b16 %v3110
    %v4317 = vunpack.c.l.b16 %v3111
    %v4318 = vunpack.c.h.b16 %v3111
    %v4319 = vunpack.c.l.b16 %v3112
    %v4320 = vunpack.c.l.b16 %v3113
    %v4321 = vunpack.c.h.b16 %v3113
    %v4322 = vunpack.c.l.b16 %v3114
    %v4323 = vunpack.c.h.b16 %v3114
    %v4324 = vunpack.c.l.b16 %v3115
    %v4325 = vunpack.c.h.b16 %v3115
    %v4326 = vunpack.c.l.b16 %v3116
    %v4327 = vunpack.c.l.b16 %v3117
    %v4328 = vunpack.c.h.b16 %v3117
    %v4329 = vunpack.c.l.b16 %v3118
    %v4330 = vunpack.c.h.b16 %v3118
    %v4331 = vunpack.c.l.b16 %v3119
    %v4332 = vunpack.c.h.b16 %v3119
    %v4333 = vunpack.c.l.b16 %v3120
    %v4334 = vunpack.c.l.b16 %v3121
    %v4335 = vunpack.c.h.b16 %v3121
    %v4336 = vunpack.c.l.b16 %v3122
    %v4337 = vunpack.c.h.b16 %v3122
    %v4338 = vunpack.c.l.b16 %v3123
    %v4339 = vunpack.c.h.b16 %v3123
    %v4340 = vunpack.c.l.b16 %v3124
    %v4341 = vunpack.c.l.b16 %v3125
    %v4342 = vunpack.c.h.b16 %v3125
    %v4343 = vunpack.c.l.b16 %v3126
    %v4344 = vunpack.c.h.b16 %v3126
    %v4345 = vunpack.c.l.b16 %v3127
    %v4346 = vunpack.c.h.b16 %v3127
    %v4347 = vunpack.c.l.b16 %v3128
    %v4348 = vunpack.c.l.b16 %v3129
    %v4349 = vunpack.c.h.b16 %v3129
    %v4350 = vunpack.c.l.b16 %v3130
    %v4351 = vunpack.c.h.b16 %v3130
    %v4352 = vunpack.c.l.b16 %v3131
    %v4353 = vunpack.c.h.b16 %v3131
    %v4354 = vunpack.c.l.b16 %v3132
    %v4355 = vunpack.c.l.b16 %v3133
    %v4356 = vunpack.c.h.b16 %v3133
    %v4357 = vunpack.c.l.b16 %v3134
    %v4358 = vunpack.c.h.b16 %v3134
    %v4359 = vunpack.c.l.b16 %v3135
    %v4360 = vunpack.c.h.b16 %v3135
    %v4361 = vunpack.c.l.b16 %v3136
    %v4362 = vunpack.c.l.b16 %v3137
    %v4363 = vunpack.c.h.b16 %v3137
    %v4364 = vunpack.c.l.b16 %v3138
    %v4365 = vunpack.c.h.b16 %v3138
    %v4366 = vunpack.c.l.b16 %v3139
    %v4367 = vunpack.c.h.b16 %v3139
    %v4368 = vunpack.c.l.b16 %v3140
    %v4369 = vunpack.c.l.b16 %v3141
    %v4370 = vunpack.c.h.b16 %v3141
    %v4371 = vunpack.c.l.b16 %v3142
    %v4372 = vunpack.c.h.b16 %v3142
    %v4373 = vunpack.c.l.b16 %v3143
    %v4374 = vunpack.c.h.b16 %v3143
    %v4375 = vunpack.c.l.b16 %v3144
    %v4376 = vunpack.c.l.b16 %v3145
    %v4377 = vunpack.c.h.b16 %v3145
    %v4378 = vunpack.c.l.b16 %v3146
    %v4379 = vunpack.c.h.b16 %v3146
    %v4380 = vunpack.c.l.b16 %v3147
    %v4381 = vunpack.c.h.b16 %v3147
    %v4382 = vunpack.c.l.b16 %v3148
    %v4383 = vunpack.c.l.b16 %v3149
    %v4384 = vunpack.c.h.b16 %v3149
    %v4385 = vunpack.c.l.b16 %v3150
    %v4386 = vunpack.c.h.b16 %v3150
    %v4387 = vunpack.c.l.b16 %v3151
    %v4388 = vunpack.c.h.b16 %v3151
    %v4389 = vunpack.c.l.b16 %v3152
    %v4390 = vunpack.c.l.b16 %v3153
    %v4391 = vunpack.c.h.b16 %v3153
    %v4392 = vunpack.c.l.b16 %v3154
    %v4393 = vunpack.c.h.b16 %v3154
    %v4394 = vunpack.c.l.b16 %v3155
    %v4395 = vunpack.c.h.b16 %v3155
    %v4396 = vunpack.c.l.b16 %v3156
    %v4397 = vunpack.c.l.b16 %v3157
    %v4398 = vunpack.c.h.b16 %v3157
    %v4399 = vunpack.c.l.b16 %v3158
    %v4400 = vunpack.c.h.b16 %v3158
    %v4401 = vunpack.c.l.b16 %v3159
    %v4402 = vunpack.c.h.b16 %v3159
    %v4403 = vunpack.c.l.b16 %v3160
    %v4404 = vunpack.c.l.b16 %v3161
    %v4405 = vunpack.c.h.b16 %v3161
    %v4406 = vunpack.c.l.b16 %v3162
    %v4407 = vunpack.c.h.b16 %v3162
    %v4408 = vunpack.c.l.b16 %v3163
    %v4409 = vunpack.c.h.b16 %v3163
    %v4410 = vunpack.c.l.b16 %v3164
    %v4411 = vunpack.c.l.b16 %v3165
    %v4412 = vunpack.c.h.b16 %v3165
    %v4413 = vunpack.c.l.b16 %v3166
    %v4414 = vunpack.c.h.b16 %v3166
    %v4415 = vunpack.c.l.b16 %v3167
    %v4416 = vunpack.c.h.b16 %v3167
    %v4417 = vunpack.c.l.b16 %v3168
    %v4418 = vunpack.c.l.b16 %v3169
    %v4419 = vunpack.c.h.b16 %v3169
    %v4420 = vunpack.c.l.b16 %v3170
    %v4421 = vunpack.c.h.b16 %v3170
    %v4422 = vunpack.c.l.b16 %v3171
    %v4423 = vunpack.c.h.b16 %v3171
    %v4424 = vunpack.c.l.b16 %v3172
    %v4425 = vunpack.c.l.b16 %v3173
    %v4426 = vunpack.c.h.b16 %v3173
    %v4427 = vunpack.c.l.b16 %v3174
    %v4428 = vunpack.c.h.b16 %v3174
    %v4429 = vunpack.c.l.b16 %v3175
    %v4430 = vunpack.c.h.b16 %v3175
    %v4431 = vunpack.c.l.b16 %v3176
    %v4432 = vunpack.c.l.b16 %v3177
    %v4433 = vunpack.c.h.b16 %v3177
    %v4434 = vunpack.c.l.b16 %v3178
    %v4435 = vunpack.c.h.b16 %v3178
    %v4436 = vunpack.c.l.b16 %v3179
    %v4437 = vunpack.c.h.b16 %v3179
    %v4438 = vunpack.c.l.b16 %v3180
    %v4439 = vunpack.c.l.b16 %v3181
    %v4440 = vunpack.c.h.b16 %v3181
    %v4441 = vunpack.c.l.b16 %v3182
    %v4442 = vunpack.c.h.b16 %v3182
    %v4443 = vunpack.c.l.b16 %v3183
    %v4444 = vunpack.c.h.b16 %v3183
    %v4445 = vunpack.c.l.b16 %v3184
    %v4446 = vunpack.c.l.b16 %v3185
    %v4447 = vunpack.c.h.b16 %v3185
    %v4448 = vunpack.c.l.b16 %v3186
    %v4449 = vunpack.c.h.b16 %v3186
    %v4450 = vunpack.c.l.b16 %v3187
    %v4451 = vunpack.c.h.b16 %v3187
    %v4452 = vunpack.c.l.b16 %v3188
    %v4453 = vunpack.c.l.b16 %v3189
    %v4454 = vunpack.c.h.b16 %v3189
    %v4455 = vunpack.c.l.b16 %v3190
    %v4456 = vunpack.c.h.b16 %v3190
    %v4457 = vunpack.c.l.b16 %v3191
    %v4458 = vunpack.c.h.b16 %v3191
    %v4459 = vunpack.c.l.b16 %v3192
    %v4460 = vunpack.c.l.b16 %v3193
    %v4461 = vunpack.c.h.b16 %v3193
    %v4462 = vunpack.c.l.b16 %v3194
    %v4463 = vunpack.c.h.b16 %v3194
    %v4464 = vunpack.c.l.b16 %v3195
    %v4465 = vunpack.c.h.b16 %v3195
    %v4466 = vunpack.c.l.b16 %v3196
    %v4467 = vunpack.c.l.b16 %v3197
    %v4468 = vunpack.c.h.b16 %v3197
    %v4469 = vunpack.c.l.b16 %v3198
    %v4470 = vunpack.c.h.b16 %v3198
    %v4471 = vunpack.c.l.b16 %v3199
    %v4472 = vunpack.c.h.b16 %v3199
    %v4473 = vunpack.c.l.b16 %v3200
    %v4474 = vunpack.c.l.b16 %v3201
    %v4475 = vunpack.c.h.b16 %v3201
    %v4476 = vunpack.c.l.b16 %v3202
    %v4477 = vunpack.c.h.b16 %v3202
    %v4478 = vunpack.c.l.b16 %v3203
    %v4479 = vunpack.c.h.b16 %v3203
    %v4480 = vunpack.c.l.b16 %v3204
    %v4481 = vunpack.c.l.b16 %v3205
    %v4482 = vunpack.c.h.b16 %v3205
    %v4483 = vunpack.c.l.b16 %v3206
    %v4484 = vunpack.c.h.b16 %v3206
    %v4485 = vunpack.c.l.b16 %v3207
    %v4486 = vunpack.c.h.b16 %v3207
    %v4487 = vunpack.c.l.b16 %v3208
    %v4488 = vunpack.c.l.b16 %v3209
    %v4489 = vunpack.c.h.b16 %v3209
    %v4490 = vunpack.c.l.b16 %v3210
    %v4491 = vunpack.c.h.b16 %v3210
    %v4492 = vunpack.c.l.b16 %v3211
    %v4493 = vunpack.c.h.b16 %v3211
    %v4494 = vunpack.c.l.b16 %v3212
    %v4495 = vunpack.c.l.b16 %v3213
    %v4496 = vunpack.c.h.b16 %v3213
    %v4497 = vunpack.c.l.b16 %v3214
    %v4498 = vunpack.c.h.b16 %v3214
    %v4499 = vunpack.c.l.b16 %v3215
    %v4500 = vunpack.c.h.b16 %v3215
    %v4501 = vunpack.c.l.b16 %v3216
    %v4502 = vunpack.c.l.b16 %v3217
    %v4503 = vunpack.c.h.b16 %v3217
    %v4504 = vunpack.c.l.b16 %v3218
    %v4505 = vunpack.c.h.b16 %v3218
    %v4506 = vunpack.c.l.b16 %v3219
    %v4507 = vunpack.c.h.b16 %v3219
    %v4508 = vunpack.c.l.b16 %v3220
    %v4509 = vunpack.c.l.b16 %v3221
    %v4510 = vunpack.c.h.b16 %v3221
    %v4511 = vunpack.c.l.b16 %v3222
    %v4512 = vunpack.c.h.b16 %v3222
    %v4513 = vunpack.c.l.b16 %v3223
    %v4514 = vunpack.c.h.b16 %v3223
    %v4515 = vunpack.c.l.b16 %v3224
    %v4516 = vunpack.c.l.b16 %v3225
    %v4517 = vunpack.c.h.b16 %v3225
    %v4518 = vunpack.c.l.b16 %v3226
    %v4519 = vunpack.c.h.b16 %v3226
    %v4520 = vunpack.c.l.b16 %v3227
    %v4521 = vunpack.c.h.b16 %v3227
    %v4522 = vunpack.c.l.b16 %v3228
    %v4523 = vunpack.c.l.b16 %v3229
    %v4524 = vunpack.c.h.b16 %v3229
    %v4525 = vunpack.c.l.b16 %v3230
    %v4526 = vunpack.c.h.b16 %v3230
    %v4527 = vunpack.c.l.b16 %v3231
    %v4528 = vunpack.c.h.b16 %v3231
    %v4529 = vunpack.c.l.b16 %v3232
    %v4530 = vunpack.c.l.b16 %v3233
    %v4531 = vunpack.c.h.b16 %v3233
    %v4532 = vunpack.c.l.b16 %v3234
    %v4533 = vunpack.c.h.b16 %v3234
    %v4534 = vunpack.c.l.b16 %v3235
    %v4535 = vunpack.c.h.b16 %v3235
    %v4536 = vunpack.c.l.b16 %v3236
    %v4537 = vunpack.c.l.b16 %v3237
    %v4538 = vunpack.c.h.b16 %v3237
    %v4539 = vunpack.c.l.b16 %v3238
    %v4540 = vunpack.c.h.b16 %v3238
    %v4541 = vunpack.c.l.b16 %v3239
    %v4542 = vunpack.c.h.b16 %v3239
    %v4543 = vunpack.c.l.b16 %v3240
    %v4544 = vunpack.c.l.b16 %v3241
    %v4545 = vunpack.c.h.b16 %v3241
    %v4546 = vunpack.c.l.b16 %v3242
    %v4547 = vunpack.c.h.b16 %v3242
    %v4548 = vunpack.c.l.b16 %v3243
    %v4549 = vunpack.c.h.b16 %v3243
    %v4550 = vunpack.c.l.b16 %v3244
    %v4551 = vunpack.c.l.b16 %v3245
    %v4552 = vunpack.c.h.b16 %v3245
    %v4553 = vunpack.c.l.b16 %v3246
    %v4554 = vunpack.c.h.b16 %v3246
    %v4555 = vunpack.c.l.b16 %v3247
    %v4556 = vunpack.c.h.b16 %v3247
    %v4557 = vunpack.c.l.b16 %v3248
    %v4558 = vunpack.c.l.b16 %v3249
    %v4559 = vunpack.c.h.b16 %v3249
    %v4560 = vunpack.c.l.b16 %v3250
    %v4561 = vunpack.c.h.b16 %v3250
    %v4562 = vunpack.c.l.b16 %v3251
    %v4563 = vunpack.c.h.b16 %v3251
    %v4564 = vunpack.c.l.b16 %v3252
    %v4565 = vunpack.c.l.b16 %v3253
    %v4566 = vunpack.c.h.b16 %v3253
    %v4567 = vunpack.c.l.b16 %v3254
    %v4568 = vunpack.c.h.b16 %v3254
    %v4569 = vunpack.c.l.b16 %v3255
    %v4570 = vunpack.c.h.b16 %v3255
    %v4571 = vunpack.c.l.b16 %v3256
    %v4572 = vunpack.c.l.b16 %v3257
    %v4573 = vunpack.c.h.b16 %v3257
    %v4574 = vunpack.c.l.b16 %v3258
    %v4575 = vunpack.c.h.b16 %v3258
    %v4576 = vunpack.c.l.b16 %v3259
    %v4577 = vunpack.c.h.b16 %v3259
    %v4578 = vunpack.c.l.b16 %v3260
    %v4579 = vunpack.c.l.b16 %v3261
    %v4580 = vunpack.c.h.b16 %v3261
    %v4581 = vunpack.c.l.b16 %v3262
    %v4582 = vunpack.c.h.b16 %v3262
    %v4583 = vunpack.c.l.b16 %v3263
    %v4584 = vunpack.c.h.b16 %v3263
    %v4585 = vunpack.c.l.b16 %v3264
    %v4586 = vunpack.c.l.b16 %v3265
    %v4587 = vunpack.c.h.b16 %v3265
    %v4588 = vunpack.c.l.b16 %v3266
    %v4589 = vunpack.c.h.b16 %v3266
    %v4590 = vunpack.c.l.b16 %v3267
    %v4591 = vunpack.c.h.b16 %v3267
    %v4592 = vunpack.c.l.b16 %v3268
    %v4593 = vunpack.c.l.b16 %v3269
    %v4594 = vunpack.c.h.b16 %v3269
    %v4595 = vunpack.c.l.b16 %v3270
    %v4596 = vunpack.c.h.b16 %v3270
    %v4597 = vunpack.c.l.b16 %v3271
    %v4598 = vunpack.c.h.b16 %v3271
    %v4599 = vunpack.c.l.b16 %v3272
    %v4600 = vunpack.c.l.b16 %v3273
    %v4601 = vunpack.c.h.b16 %v3273
    %v4602 = vunpack.c.l.b16 %v3274
    %v4603 = vunpack.c.h.b16 %v3274
    %v4604 = vunpack.c.l.b16 %v3275
    %v4605 = vunpack.c.h.b16 %v3275
    %v4606 = vunpack.c.l.b16 %v3276
    %v4607 = vunpack.c.l.b16 %v3277
    %v4608 = vunpack.c.h.b16 %v3277
    %v4609 = vunpack.c.l.b16 %v3278
    %v4610 = vunpack.c.h.b16 %v3278
    %v4611 = vunpack.c.l.b16 %v3279
    %v4612 = vunpack.c.h.b16 %v3279
    %v4613 = vunpack.c.l.b16 %v3280
    %v4614 = vunpack.c.l.b16 %v3281
    %v4615 = vunpack.c.h.b16 %v3281
    %v4616 = vunpack.c.l.b16 %v3282
    %v4617 = vunpack.c.h.b16 %v3282
    %v4618 = vunpack.c.l.b16 %v3283
    %v4619 = vunpack.c.h.b16 %v3283
    %v4620 = vunpack.c.l.b16 %v3284
    %v4621 = vunpack.c.l.b16 %v3285
    %v4622 = vunpack.c.h.b16 %v3285
    %v4623 = vunpack.c.l.b16 %v3286
    %v4624 = vunpack.c.h.b16 %v3286
    %v4625 = vunpack.c.l.b16 %v3287
    %v4626 = vunpack.c.h.b16 %v3287
    %v4627 = vunpack.c.l.b16 %v3288
    %v4628 = vunpack.c.l.b16 %v3289
    %v4629 = vunpack.c.h.b16 %v3289
    %v4630 = vunpack.c.l.b16 %v3290
    %v4631 = vunpack.c.h.b16 %v3290
    %v4632 = vunpack.c.l.b16 %v3291
    %v4633 = vunpack.c.h.b16 %v3291
    %v4634 = vunpack.c.l.b16 %v3292
    %v4635 = vunpack.c.l.b16 %v3293
    %v4636 = vunpack.c.h.b16 %v3293
    %v4637 = vunpack.c.l.b16 %v3294
    %v4638 = vunpack.c.h.b16 %v3294
    %v4639 = vunpack.c.l.b16 %v3295
    %v4640 = vunpack.c.h.b16 %v3295
    %v4641 = vunpack.c.l.b16 %v3296
    %v4642 = vunpack.c.l.b16 %v3297
    %v4643 = vunpack.c.h.b16 %v3297
    %v4644 = vunpack.c.l.b16 %v3298
    %v4645 = vunpack.c.h.b16 %v3298
    %v4646 = vunpack.c.l.b16 %v3299
    %v4647 = vunpack.c.h.b16 %v3299
    %v4648 = vunpack.c.l.b16 %v3300
    %v4649 = vunpack.c.l.b16 %v3301
    %v4650 = vunpack.c.h.b16 %v3301
    %v4651 = vunpack.c.l.b16 %v3302
    %v4652 = vunpack.c.h.b16 %v3302
    %v4653 = vunpack.c.l.b16 %v3303
    %v4654 = vunpack.c.h.b16 %v3303
    %v4655 = vunpack.c.l.b16 %v3304
    %v4656 = vunpack.c.l.b16 %v3305
    %v4657 = vunpack.c.h.b16 %v3305
    %v4658 = vunpack.c.l.b16 %v3306
    %v4659 = vunpack.c.h.b16 %v3306
    %v4660 = vunpack.c.l.b16 %v3307
    %v4661 = vunpack.c.h.b16 %v3307
    %v4662 = vunpack.c.l.b16 %v3308
    %v4663 = vunpack.c.l.b16 %v3309
    %v4664 = vunpack.c.h.b16 %v3309
    %v4665 = vunpack.c.l.b16 %v3310
    %v4666 = vunpack.c.h.b16 %v3310
    %v4667 = vunpack.c.l.b16 %v3311
    %v4668 = vunpack.c.h.b16 %v3311
    %v4669 = vunpack.c.l.b16 %v3312
    %v4670 = vunpack.c.l.b16 %v3313
    %v4671 = vunpack.c.h.b16 %v3313
    %v4672 = vunpack.c.l.b16 %v3314
    %v4673 = vunpack.c.h.b16 %v3314
    %v4674 = vunpack.c.l.b16 %v3315
    %v4675 = vunpack.c.h.b16 %v3315
    %v4676 = vunpack.c.l.b16 %v3316
    %v4677 = vunpack.c.l.b16 %v3317
    %v4678 = vunpack.c.h.b16 %v3317
    %v4679 = vunpack.c.l.b16 %v3318
    %v4680 = vunpack.c.h.b16 %v3318
    %v4681 = vunpack.c.l.b16 %v3319
    %v4682 = vunpack.c.h.b16 %v3319
    %v4683 = vunpack.c.l.b16 %v3320
    %v4684 = vunpack.c.l.b16 %v3321
    %v4685 = vunpack.c.h.b16 %v3321
    %v4686 = vunpack.c.l.b16 %v3322
    %v4687 = vunpack.c.h.b16 %v3322
    %v4688 = vunpack.c.l.b16 %v3323
    %v4689 = vunpack.c.h.b16 %v3323
    %v4690 = vunpack.c.l.b16 %v3324
    %v4691 = vunpack.c.l.b16 %v3325
    %v4692 = vunpack.c.h.b16 %v3325
    %v4693 = vunpack.c.l.b16 %v3326
    %v4694 = vunpack.c.h.b16 %v3326
    %v4695 = vunpack.c.l.b16 %v3327
    %v4696 = vunpack.c.h.b16 %v3327
    %v4697 = vunpack.c.l.b16 %v3328
    %v4698 = vunpack.c.l.b16 %v3329
    %v4699 = vunpack.c.h.b16 %v3329
    %v4700 = vunpack.c.l.b16 %v3330
    %v4701 = vunpack.c.h.b16 %v3330
    %v4702 = vunpack.c.l.b16 %v3331
    %v4703 = vunpack.c.h.b16 %v3331
    %v4704 = vunpack.c.l.b16 %v3332
    %v4705 = vunpack.c.l.b16 %v3333
    %v4706 = vunpack.c.h.b16 %v3333
    %v4707 = vunpack.c.l.b16 %v3334
    %v4708 = vunpack.c.h.b16 %v3334
    %v4709 = vunpack.c.l.b16 %v3335
    %v4710 = vunpack.c.h.b16 %v3335
    %v4711 = vunpack.c.l.b16 %v3336
    %v4712 = vunpack.c.l.b16 %v3337
    %v4713 = vunpack.c.h.b16 %v3337
    %v4714 = vunpack.c.l.b16 %v3338
    %v4715 = vunpack.c.h.b16 %v3338
    %v4716 = vunpack.c.l.b16 %v3339
    %v4717 = vunpack.c.h.b16 %v3339
    %v4718 = vunpack.c.l.b16 %v3340
    %v4719 = vunpack.c.l.b16 %v3341
    %v4720 = vunpack.c.h.b16 %v3341
    %v4721 = vunpack.c.l.b16 %v3342
    %v4722 = vunpack.c.h.b16 %v3342
    %v4723 = vunpack.c.l.b16 %v3343
    %v4724 = vunpack.c.h.b16 %v3343
    %v4725 = vunpack.c.l.b16 %v3344
    %v4726 = vunpack.c.l.b16 %v3345
    %v4727 = vunpack.c.h.b16 %v3345
    %v4728 = vunpack.c.l.b16 %v3346
    %v4729 = vunpack.c.h.b16 %v3346
    %v4730 = vunpack.c.l.b16 %v3347
    %v4731 = vunpack.c.h.b16 %v3347
    %v4732 = vunpack.c.l.b16 %v3348
    %v4733 = vunpack.c.l.b16 %v3349
    %v4734 = vunpack.c.h.b16 %v3349
    %v4735 = vunpack.c.l.b16 %v3350
    %v4736 = vunpack.c.h.b16 %v3350
    %v4737 = vunpack.c.l.b16 %v3351
    %v4738 = vunpack.c.h.b16 %v3351
    %v4739 = vunpack.c.l.b16 %v3352
    %v4740 = vunpack.c.l.b16 %v3353
    %v4741 = vunpack.c.h.b16 %v3353
    %v4742 = vunpack.c.l.b16 %v3354
    %v4743 = vunpack.c.h.b16 %v3354
    %v4744 = vunpack.c.l.b16 %v3355
    %v4745 = vunpack.c.h.b16 %v3355
    %v4746 = vunpack.c.l.b16 %v3356
    %v4747 = vunpack.c.l.b16 %v3357
    %v4748 = vunpack.c.h.b16 %v3357
    %v4749 = vunpack.c.l.b16 %v3358
    %v4750 = vunpack.c.h.b16 %v3358
    %v4751 = vunpack.c.l.b16 %v3359
    %v4752 = vunpack.c.h.b16 %v3359
    %v4753 = vunpack.c.l.b16 %v3360
    %v4754 = vunpack.c.l.b16 %v3361
    %v4755 = vunpack.c.h.b16 %v3361
    %v4756 = vunpack.c.l.b16 %v3362
    %v4757 = vunpack.c.h.b16 %v3362
    %v4758 = vunpack.c.l.b16 %v3363
    %v4759 = vunpack.c.h.b16 %v3363
    %v4760 = vunpack.c.l.b16 %v3364
    %v4761 = vunpack.c.l.b16 %v3365
    %v4762 = vunpack.c.h.b16 %v3365
    %v4763 = vunpack.c.l.b16 %v3366
    %v4764 = vunpack.c.h.b16 %v3366
    %v4765 = vunpack.c.l.b16 %v3367
    %v4766 = vunpack.c.h.b16 %v3367
    %v4767 = vunpack.c.l.b16 %v3368
    %v4768 = vunpack.c.l.b16 %v3369
    %v4769 = vunpack.c.h.b16 %v3369
    %v4770 = vunpack.c.l.b16 %v3370
    %v4771 = vunpack.c.h.b16 %v3370
    %v4772 = vunpack.c.l.b16 %v3371
    %v4773 = vunpack.c.h.b16 %v3371
    %v4774 = vunpack.c.l.b16 %v3372
    %v4775 = vunpack.c.l.b16 %v3373
    %v4776 = vunpack.c.h.b16 %v3373
    %v4777 = vunpack.c.l.b16 %v3374
    %v4778 = vunpack.c.h.b16 %v3374
    %v4779 = vunpack.c.l.b16 %v3375
    %v4780 = vunpack.c.h.b16 %v3375
    %v4781 = vunpack.c.l.b16 %v3376
    %v4782 = vunpack.c.l.b16 %v3377
    %v4783 = vunpack.c.h.b16 %v3377
    %v4784 = vunpack.c.l.b16 %v3378
    %v4785 = vunpack.c.h.b16 %v3378
    %v4786 = vunpack.c.l.b16 %v3379
    %v4787 = vunpack.c.h.b16 %v3379
    %v4788 = vunpack.c.l.b16 %v3380
    %v4789 = vunpack.c.l.b16 %v3381
    %v4790 = vunpack.c.h.b16 %v3381
    %v4791 = vunpack.c.l.b16 %v3382
    %v4792 = vunpack.c.h.b16 %v3382
    %v4793 = vunpack.c.l.b16 %v3383
    %v4794 = vunpack.c.h.b16 %v3383
    %v4795 = vunpack.c.l.b16 %v3384
    %v4796 = vunpack.c.l.b16 %v3385
    %v4797 = vunpack.c.h.b16 %v3385
    %v4798 = vunpack.c.l.b16 %v3386
    %v4799 = vunpack.c.h.b16 %v3386
    %v4800 = vunpack.c.l.b16 %v3387
    %v4801 = vunpack.c.h.b16 %v3387
    %v4802 = vunpack.c.l.b16 %v3388
    %v4803 = vunpack.c.l.b16 %v3389
    %v4804 = vunpack.c.h.b16 %v3389
    %v4805 = vunpack.c.l.b16 %v3390
    %v4806 = vunpack.c.h.b16 %v3390
    %v4807 = vunpack.c.l.b16 %v3391
    %v4808 = vunpack.c.h.b16 %v3391
    %v4809 = vunpack.c.l.b16 %v3392
    %v4810 = vunpack.c.l.b16 %v3393
    %v4811 = vunpack.c.h.b16 %v3393
    %v4812 = vunpack.c.l.b16 %v3394
    %v4813 = vunpack.c.h.b16 %v3394
    %v4814 = vunpack.c.l.b16 %v3395
    %v4815 = vunpack.c.h.b16 %v3395
    %v4816 = vunpack.c.l.b16 %v3396
    %v4817 = vunpack.c.l.b16 %v3397
    %v4818 = vunpack.c.h.b16 %v3397
    %v4819 = vunpack.c.l.b16 %v3398
    %v4820 = vunpack.c.h.b16 %v3398
    %v4821 = vunpack.c.l.b16 %v3399
    %v4822 = vunpack.c.h.b16 %v3399
    %v4823 = vunpack.c.l.b16 %v3400
    %v4824 = vunpack.c.l.b16 %v3401
    %v4825 = vunpack.c.h.b16 %v3401
    %v4826 = vunpack.c.l.b16 %v3402
    %v4827 = vunpack.c.h.b16 %v3402
    %v4828 = vunpack.c.l.b16 %v3403
    %v4829 = vunpack.c.h.b16 %v3403
    %v4830 = vunpack.c.l.b16 %v3404
    %v4831 = vunpack.c.l.b16 %v3405
    %v4832 = vunpack.c.h.b16 %v3405
    %v4833 = vunpack.c.l.b16 %v3406
    %v4834 = vunpack.c.h.b16 %v3406
    %v4835 = vunpack.c.l.b16 %v3407
    %v4836 = vunpack.c.h.b16 %v3407
    %v4837 = vunpack.c.l.b16 %v3408
    %v4838 = vunpack.c.l.b16 %v3409
    %v4839 = vunpack.c.h.b16 %v3409
    %v4840 = vunpack.c.l.b16 %v3410
    %v4841 = vunpack.c.h.b16 %v3410
    %v4842 = vunpack.c.l.b16 %v3411
    %v4843 = vunpack.c.h.b16 %v3411
    %v4844 = vunpack.c.l.b16 %v3412
    %v4845 = vpack.c.b16 %v3956, %v3949
    %v4846 = vpack.c.b16 %v3957, %v3950
    %v4847 = vpack.c.b16 %v3958, %v3951
    %v4848 = vpack.c.b16 %v3959, %v3952
    %v4849 = vpack.c.b16 %v3960, %v3953
    %v4850 = vpack.c.b16 %v3961, %v3954
    %v4851 = vpack.c.b16 %v3962, %v3955
    %v4852 = vpack.c.b16 %v3970, %v3963
    %v4853 = vpack.c.b16 %v3971, %v3964
    %v4854 = vpack.c.b16 %v3972, %v3965
    %v4855 = vpack.c.b16 %v3973, %v3966
    %v4856 = vpack.c.b16 %v3974, %v3967
    %v4857 = vpack.c.b16 %v3975, %v3968
    %v4858 = vpack.c.b16 %v3976, %v3969
    %v4859 = vpack.c.b16 %v3984, %v3977
    %v4860 = vpack.c.b16 %v3985, %v3978
    %v4861 = vpack.c.b16 %v3986, %v3979
    %v4862 = vpack.c.b16 %v3987, %v3980
    %v4863 = vpack.c.b16 %v3988, %v3981
    %v4864 = vpack.c.b16 %v3989, %v3982
    %v4865 = vpack.c.b16 %v3990, %v3983
    %v4866 = vpack.c.b16 %v3998, %v3991
    %v4867 = vpack.c.b16 %v3999, %v3992
    %v4868 = vpack.c.b16 %v4000, %v3993
    %v4869 = vpack.c.b16 %v4001, %v3994
    %v4870 = vpack.c.b16 %v4002, %v3995
    %v4871 = vpack.c.b16 %v4003, %v3996
    %v4872 = vpack.c.b16 %v4004, %v3997
    %v4873 = vpack.c.b16 %v4012, %v4005
    %v4874 = vpack.c.b16 %v4013, %v4006
    %v4875 = vpack.c.b16 %v4014, %v4007
    %v4876 = vpack.c.b16 %v4015, %v4008
    %v4877 = vpack.c.b16 %v4016, %v4009
    %v4878 = vpack.c.b16 %v4017, %v4010
    %v4879 = vpack.c.b16 %v4018, %v4011
    %v4880 = vpack.c.b16 %v4026, %v4019
    %v4881 = vpack.c.b16 %v4027, %v4020
    %v4882 = vpack.c.b16 %v4028, %v4021
    %v4883 = vpack.c.b16 %v4029, %v4022
    %v4884 = vpack.c.b16 %v4030, %v4023
    %v4885 = vpack.c.b16 %v4031, %v4024
    %v4886 = vpack.c.b16 %v4032, %v4025
    %v4887 = vpack.c.b16 %v4040, %v4033
    %v4888 = vpack.c.b16 %v4041, %v4034
    %v4889 = vpack.c.b16 %v4042, %v4035
    %v4890 = vpack.c.b16 %v4043, %v4036
    %v4891 = vpack.c.b16 %v4044, %v4037
    %v4892 = vpack.c.b16 %v4045, %v4038
    %v4893 = vpack.c.b16 %v4046, %v4039
    %v4894 = vpack.c.b16 %v4054, %v4047
    %v4895 = vpack.c.b16 %v4055, %v4048
    %v4896 = vpack.c.b16 %v4056, %v4049
    %v4897 = vpack.c.b16 %v4057, %v4050
    %v4898 = vpack.c.b16 %v4058, %v4051
    %v4899 = vpack.c.b16 %v4059, %v4052
    %v4900 = vpack.c.b16 %v4060, %v4053
    %v4901 = vpack.c.b16 %v4068, %v4061
    %v4902 = vpack.c.b16 %v4069, %v4062
    %v4903 = vpack.c.b16 %v4070, %v4063
    %v4904 = vpack.c.b16 %v4071, %v4064
    %v4905 = vpack.c.b16 %v4072, %v4065
    %v4906 = vpack.c.b16 %v4073, %v4066
    %v4907 = vpack.c.b16 %v4074, %v4067
    %v4908 = vpack.c.b16 %v4082, %v4075
    %v4909 = vpack.c.b16 %v4083, %v4076
    %v4910 = vpack.c.b16 %v4084, %v4077
    %v4911 = vpack.c.b16 %v4085, %v4078
    %v4912 = vpack.c.b16 %v4086, %v4079
    %v4913 = vpack.c.b16 %v4087, %v4080
    %v4914 = vpack.c.b16 %v4088, %v4081
    %v4915 = vpack.c.b16 %v4096, %v4089
    %v4916 = vpack.c.b16 %v4097, %v4090
    %v4917 = vpack.c.b16 %v4098, %v4091
    %v4918 = vpack.c.b16 %v4099, %v4092
    %v4919 = vpack.c.b16 %v4100, %v4093
    %v4920 = vpack.c.b16 %v4101, %v4094
    %v4921 = vpack.c.b16 %v4102, %v4095
    %v4922 = vpack.c.b16 %v4110, %v4103
    %v4923 = vpack.c.b16 %v4111, %v4104
    %v4924 = vpack.c.b16 %v4112, %v4105
    %v4925 = vpack.c.b16 %v4113, %v4106
    %v4926 = vpack.c.b16 %v4114, %v4107
    %v4927 = vpack.c.b16 %v4115, %v4108
    %v4928 = vpack.c.b16 %v4116, %v4109
    %v4929 = vpack.c.b16 %v4124, %v4117
    %v4930 = vpack.c.b16 %v4125, %v4118
    %v4931 = vpack.c.b16 %v4126, %v4119
    %v4932 = vpack.c.b16 %v4127, %v4120
    %v4933 = vpack.c.b16 %v4128, %v4121
    %v4934 = vpack.c.b16 %v4129, %v4122
    %v4935 = vpack.c.b16 %v4130, %v4123
    %v4936 = vpack.c.b16 %v4138, %v4131
    %v4937 = vpack.c.b16 %v4139, %v4132
    %v4938 = vpack.c.b16 %v4140, %v4133
    %v4939 = vpack.c.b16 %v4141, %v4134
    %v4940 = vpack.c.b16 %v4142, %v4135
    %v4941 = vpack.c.b16 %v4143, %v4136
    %v4942 = vpack.c.b16 %v4144, %v4137
    %v4943 = vpack.c.b16 %v4152, %v4145
    %v4944 = vpack.c.b16 %v4153, %v4146
    %v4945 = vpack.c.b16 %v4154, %v4147
    %v4946 = vpack.c.b16 %v4155, %v4148
    %v4947 = vpack.c.b16 %v4156, %v4149
    %v4948 = vpack.c.b16 %v4157, %v4150
    %v4949 = vpack.c.b16 %v4158, %v4151
    %v4950 = vpack.c.b16 %v4166, %v4159
    %v4951 = vpack.c.b16 %v4167, %v4160
    %v4952 = vpack.c.b16 %v4168, %v4161
    %v4953 = vpack.c.b16 %v4169, %v4162
    %v4954 = vpack.c.b16 %v4170, %v4163
    %v4955 = vpack.c.b16 %v4171, %v4164
    %v4956 = vpack.c.b16 %v4172, %v4165
    %v4957 = vpack.c.b16 %v4180, %v4173
    %v4958 = vpack.c.b16 %v4181, %v4174
    %v4959 = vpack.c.b16 %v4182, %v4175
    %v4960 = vpack.c.b16 %v4183, %v4176
    %v4961 = vpack.c.b16 %v4184, %v4177
    %v4962 = vpack.c.b16 %v4185, %v4178
    %v4963 = vpack.c.b16 %v4186, %v4179
    %v4964 = vpack.c.b16 %v4194, %v4187
    %v4965 = vpack.c.b16 %v4195, %v4188
    %v4966 = vpack.c.b16 %v4196, %v4189
    %v4967 = vpack.c.b16 %v4197, %v4190
    %v4968 = vpack.c.b16 %v4198, %v4191
    %v4969 = vpack.c.b16 %v4199, %v4192
    %v4970 = vpack.c.b16 %v4200, %v4193
    %v4971 = vpack.c.b16 %v4208, %v4201
    %v4972 = vpack.c.b16 %v4209, %v4202
    %v4973 = vpack.c.b16 %v4210, %v4203
    %v4974 = vpack.c.b16 %v4211, %v4204
    %v4975 = vpack.c.b16 %v4212, %v4205
    %v4976 = vpack.c.b16 %v4213, %v4206
    %v4977 = vpack.c.b16 %v4214, %v4207
    %v4978 = vpack.c.b16 %v4222, %v4215
    %v4979 = vpack.c.b16 %v4223, %v4216
    %v4980 = vpack.c.b16 %v4224, %v4217
    %v4981 = vpack.c.b16 %v4225, %v4218
    %v4982 = vpack.c.b16 %v4226, %v4219
    %v4983 = vpack.c.b16 %v4227, %v4220
    %v4984 = vpack.c.b16 %v4228, %v4221
    %v4985 = vpack.c.b16 %v4236, %v4229
    %v4986 = vpack.c.b16 %v4237, %v4230
    %v4987 = vpack.c.b16 %v4238, %v4231
    %v4988 = vpack.c.b16 %v4239, %v4232
    %v4989 = vpack.c.b16 %v4240, %v4233
    %v4990 = vpack.c.b16 %v4241, %v4234
    %v4991 = vpack.c.b16 %v4242, %v4235
    %v4992 = vpack.c.b16 %v4250, %v4243
    %v4993 = vpack.c.b16 %v4251, %v4244
    %v4994 = vpack.c.b16 %v4252, %v4245
    %v4995 = vpack.c.b16 %v4253, %v4246
    %v4996 = vpack.c.b16 %v4254, %v4247
    %v4997 = vpack.c.b16 %v4255, %v4248
    %v4998 = vpack.c.b16 %v4256, %v4249
    %v4999 = vpack.c.b16 %v4264, %v4257
    %v5000 = vpack.c.b16 %v4265, %v4258
    %v5001 = vpack.c.b16 %v4266, %v4259
    %v5002 = vpack.c.b16 %v4267, %v4260
    %v5003 = vpack.c.b16 %v4268, %v4261
    %v5004 = vpack.c.b16 %v4269, %v4262
    %v5005 = vpack.c.b16 %v4270, %v4263
    %v5006 = vpack.c.b16 %v4278, %v4271
    %v5007 = vpack.c.b16 %v4279, %v4272
    %v5008 = vpack.c.b16 %v4280, %v4273
    %v5009 = vpack.c.b16 %v4281, %v4274
    %v5010 = vpack.c.b16 %v4282, %v4275
    %v5011 = vpack.c.b16 %v4283, %v4276
    %v5012 = vpack.c.b16 %v4284, %v4277
    %v5013 = vpack.c.b16 %v4292, %v4285
    %v5014 = vpack.c.b16 %v4293, %v4286
    %v5015 = vpack.c.b16 %v4294, %v4287
    %v5016 = vpack.c.b16 %v4295, %v4288
    %v5017 = vpack.c.b16 %v4296, %v4289
    %v5018 = vpack.c.b16 %v4297, %v4290
    %v5019 = vpack.c.b16 %v4298, %v4291
    %v5020 = vpack.c.b16 %v4306, %v4299
    %v5021 = vpack.c.b16 %v4307, %v4300
    %v5022 = vpack.c.b16 %v4308, %v4301
    %v5023 = vpack.c.b16 %v4309, %v4302
    %v5024 = vpack.c.b16 %v4310, %v4303
    %v5025 = vpack.c.b16 %v4311, %v4304
    %v5026 = vpack.c.b16 %v4312, %v4305
    %v5027 = vpack.c.b16 %v4320, %v4313
    %v5028 = vpack.c.b16 %v4321, %v4314
    %v5029 = vpack.c.b16 %v4322, %v4315
    %v5030 = vpack.c.b16 %v4323, %v4316
    %v5031 = vpack.c.b16 %v4324, %v4317
    %v5032 = vpack.c.b16 %v4325, %v4318
    %v5033 = vpack.c.b16 %v4326, %v4319
    %v5034 = vpack.c.b16 %v4334, %v4327
    %v5035 = vpack.c.b16 %v4335, %v4328
    %v5036 = vpack.c.b16 %v4336, %v4329
    %v5037 = vpack.c.b16 %v4337, %v4330
    %v5038 = vpack.c.b16 %v4338, %v4331
    %v5039 = vpack.c.b16 %v4339, %v4332
    %v5040 = vpack.c.b16 %v4340, %v4333
    %v5041 = vpack.c.b16 %v4348, %v4341
    %v5042 = vpack.c.b16 %v4349, %v4342
    %v5043 = vpack.c.b16 %v4350, %v4343
    %v5044 = vpack.c.b16 %v4351, %v4344
    %v5045 = vpack.c.b16 %v4352, %v4345
    %v5046 = vpack.c.b16 %v4353, %v4346
    %v5047 = vpack.c.b16 %v4354, %v4347
    %v5048 = vpack.c.b16 %v4362, %v4355
    %v5049 = vpack.c.b16 %v4363, %v4356
    %v5050 = vpack.c.b16 %v4364, %v4357
    %v5051 = vpack.c.b16 %v4365, %v4358
    %v5052 = vpack.c.b16 %v4366, %v4359
    %v5053 = vpack.c.b16 %v4367, %v4360
    %v5054 = vpack.c.b16 %v4368, %v4361
    %v5055 = vpack.c.b16 %v4376, %v4369
    %v5056 = vpack.c.b16 %v4377, %v4370
    %v5057 = vpack.c.b16 %v4378, %v4371
    %v5058 = vpack.c.b16 %v4379, %v4372
    %v5059 = vpack.c.b16 %v4380, %v4373
    %v5060 = vpack.c.b16 %v4381, %v4374
    %v5061 = vpack.c.b16 %v4382, %v4375
    %v5062 = vpack.c.b16 %v4390, %v4383
    %v5063 = vpack.c.b16 %v4391, %v4384
    %v5064 = vpack.c.b16 %v4392, %v4385
    %v5065 = vpack.c.b16 %v4393, %v4386
    %v5066 = vpack.c.b16 %v4394, %v4387
    %v5067 = vpack.c.b16 %v4395, %v4388
    %v5068 = vpack.c.b16 %v4396, %v4389
    %v5069 = vpack.c.b16 %v4404, %v4397
    %v5070 = vpack.c.b16 %v4405, %v4398
    %v5071 = vpack.c.b16 %v4406, %v4399
    %v5072 = vpack.c.b16 %v4407, %v4400
    %v5073 = vpack.c.b16 %v4408, %v4401
    %v5074 = vpack.c.b16 %v4409, %v4402
    %v5075 = vpack.c.b16 %v4410, %v4403
    %v5076 = vpack.c.b16 %v4418, %v4411
    %v5077 = vpack.c.b16 %v4419, %v4412
    %v5078 = vpack.c.b16 %v4420, %v4413
    %v5079 = vpack.c.b16 %v4421, %v4414
    %v5080 = vpack.c.b16 %v4422, %v4415
    %v5081 = vpack.c.b16 %v4423, %v4416
    %v5082 = vpack.c.b16 %v4424, %v4417
    %v5083 = vpack.c.b16 %v4432, %v4425
    %v5084 = vpack.c.b16 %v4433, %v4426
    %v5085 = vpack.c.b16 %v4434, %v4427
    %v5086 = vpack.c.b16 %v4435, %v4428
    %v5087 = vpack.c.b16 %v4436, %v4429
    %v5088 = vpack.c.b16 %v4437, %v4430
    %v5089 = vpack.c.b16 %v4438, %v4431
    %v5090 = vpack.c.b16 %v4446, %v4439
    %v5091 = vpack.c.b16 %v4447, %v4440
    %v5092 = vpack.c.b16 %v4448, %v4441
    %v5093 = vpack.c.b16 %v4449, %v4442
    %v5094 = vpack.c.b16 %v4450, %v4443
    %v5095 = vpack.c.b16 %v4451, %v4444
    %v5096 = vpack.c.b16 %v4452, %v4445
    %v5097 = vpack.c.b16 %v4460, %v4453
    %v5098 = vpack.c.b16 %v4461, %v4454
    %v5099 = vpack.c.b16 %v4462, %v4455
    %v5100 = vpack.c.b16 %v4463, %v4456
    %v5101 = vpack.c.b16 %v4464, %v4457
    %v5102 = vpack.c.b16 %v4465, %v4458
    %v5103 = vpack.c.b16 %v4466, %v4459
    %v5104 = vpack.c.b16 %v4474, %v4467
    %v5105 = vpack.c.b16 %v4475, %v4468
    %v5106 = vpack.c.b16 %v4476, %v4469
    %v5107 = vpack.c.b16 %v4477, %v4470
    %v5108 = vpack.c.b16 %v4478, %v4471
    %v5109 = vpack.c.b16 %v4479, %v4472
    %v5110 = vpack.c.b16 %v4480, %v4473
    %v5111 = vpack.c.b16 %v4488, %v4481
    %v5112 = vpack.c.b16 %v4489, %v4482
    %v5113 = vpack.c.b16 %v4490, %v4483
    %v5114 = vpack.c.b16 %v4491, %v4484
    %v5115 = vpack.c.b16 %v4492, %v4485
    %v5116 = vpack.c.b16 %v4493, %v4486
    %v5117 = vpack.c.b16 %v4494, %v4487
    %v5118 = vpack.c.b16 %v4502, %v4495
    %v5119 = vpack.c.b16 %v4503, %v4496
    %v5120 = vpack.c.b16 %v4504, %v4497
    %v5121 = vpack.c.b16 %v4505, %v4498
    %v5122 = vpack.c.b16 %v4506, %v4499
    %v5123 = vpack.c.b16 %v4507, %v4500
    %v5124 = vpack.c.b16 %v4508, %v4501
    %v5125 = vpack.c.b16 %v4516, %v4509
    %v5126 = vpack.c.b16 %v4517, %v4510
    %v5127 = vpack.c.b16 %v4518, %v4511
    %v5128 = vpack.c.b16 %v4519, %v4512
    %v5129 = vpack.c.b16 %v4520, %v4513
    %v5130 = vpack.c.b16 %v4521, %v4514
    %v5131 = vpack.c.b16 %v4522, %v4515
    %v5132 = vpack.c.b16 %v4530, %v4523
    %v5133 = vpack.c.b16 %v4531, %v4524
    %v5134 = vpack.c.b16 %v4532, %v4525
    %v5135 = vpack.c.b16 %v4533, %v4526
    %v5136 = vpack.c.b16 %v4534, %v4527
    %v5137 = vpack.c.b16 %v4535, %v4528
    %v5138 = vpack.c.b16 %v4536, %v4529
    %v5139 = vpack.c.b16 %v4544, %v4537
    %v5140 = vpack.c.b16 %v4545, %v4538
    %v5141 = vpack.c.b16 %v4546, %v4539
    %v5142 = vpack.c.b16 %v4547, %v4540
    %v5143 = vpack.c.b16 %v4548, %v4541
    %v5144 = vpack.c.b16 %v4549, %v4542
    %v5145 = vpack.c.b16 %v4550, %v4543
    %v5146 = vpack.c.b16 %v4558, %v4551
    %v5147 = vpack.c.b16 %v4559, %v4552
    %v5148 = vpack.c.b16 %v4560, %v4553
    %v5149 = vpack.c.b16 %v4561, %v4554
    %v5150 = vpack.c.b16 %v4562, %v4555
    %v5151 = vpack.c.b16 %v4563, %v4556
    %v5152 = vpack.c.b16 %v4564, %v4557
    %v5153 = vpack.c.b16 %v4572, %v4565
    %v5154 = vpack.c.b16 %v4573, %v4566
    %v5155 = vpack.c.b16 %v4574, %v4567
    %v5156 = vpack.c.b16 %v4575, %v4568
    %v5157 = vpack.c.b16 %v4576, %v4569
    %v5158 = vpack.c.b16 %v4577, %v4570
    %v5159 = vpack.c.b16 %v4578, %v4571
    %v5160 = vpack.c.b16 %v4586, %v4579
    %v5161 = vpack.c.b16 %v4587, %v4580
    %v5162 = vpack.c.b16 %v4588, %v4581
    %v5163 = vpack.c.b16 %v4589, %v4582
    %v5164 = vpack.c.b16 %v4590, %v4583
    %v5165 = vpack.c.b16 %v4591, %v4584
    %v5166 = vpack.c.b16 %v4592, %v4585
    %v5167 = vpack.c.b16 %v4600, %v4593
    %v5168 = vpack.c.b16 %v4601, %v4594
    %v5169 = vpack.c.b16 %v4602, %v4595
    %v5170 = vpack.c.b16 %v4603, %v4596
    %v5171 = vpack.c.b16 %v4604, %v4597
    %v5172 = vpack.c.b16 %v4605, %v4598
    %v5173 = vpack.c.b16 %v4606, %v4599
    %v5174 = vpack.c.b16 %v4614, %v4607
    %v5175 = vpack.c.b16 %v4615, %v4608
    %v5176 = vpack.c.b16 %v4616, %v4609
    %v5177 = vpack.c.b16 %v4617, %v4610
    %v5178 = vpack.c.b16 %v4618, %v4611
    %v5179 = vpack.c.b16 %v4619, %v4612
    %v5180 = vpack.c.b16 %v4620, %v4613
    %v5181 = vpack.c.b16 %v4628, %v4621
    %v5182 = vpack.c.b16 %v4629, %v4622
    %v5183 = vpack.c.b16 %v4630, %v4623
    %v5184 = vpack.c.b16 %v4631, %v4624
    %v5185 = vpack.c.b16 %v4632, %v4625
    %v5186 = vpack.c.b16 %v4633, %v4626
    %v5187 = vpack.c.b16 %v4634, %v4627
    %v5188 = vpack.c.b16 %v4642, %v4635
    %v5189 = vpack.c.b16 %v4643, %v4636
    %v5190 = vpack.c.b16 %v4644, %v4637
    %v5191 = vpack.c.b16 %v4645, %v4638
    %v5192 = vpack.c.b16 %v4646, %v4639
    %v5193 = vpack.c.b16 %v4647, %v4640
    %v5194 = vpack.c.b16 %v4648, %v4641
    %v5195 = vpack.c.b16 %v4656, %v4649
    %v5196 = vpack.c.b16 %v4657, %v4650
    %v5197 = vpack.c.b16 %v4658, %v4651
    %v5198 = vpack.c.b16 %v4659, %v4652
    %v5199 = vpack.c.b16 %v4660, %v4653
    %v5200 = vpack.c.b16 %v4661, %v4654
    %v5201 = vpack.c.b16 %v4662, %v4655
    %v5202 = vpack.c.b16 %v4670, %v4663
    %v5203 = vpack.c.b16 %v4671, %v4664
    %v5204 = vpack.c.b16 %v4672, %v4665
    %v5205 = vpack.c.b16 %v4673, %v4666
    %v5206 = vpack.c.b16 %v4674, %v4667
    %v5207 = vpack.c.b16 %v4675, %v4668
    %v5208 = vpack.c.b16 %v4676, %v4669
    %v5209 = vpack.c.b16 %v4684, %v4677
    %v5210 = vpack.c.b16 %v4685, %v4678
    %v5211 = vpack.c.b16 %v4686, %v4679
    %v5212 = vpack.c.b16 %v4687, %v4680
    %v5213 = vpack.c.b16 %v4688, %v4681
    %v5214 = vpack.c.b16 %v4689, %v4682
    %v5215 = vpack.c.b16 %v4690, %v4683
    %v5216 = vpack.c.b16 %v4698, %v4691
    %v5217 = vpack.c.b16 %v4699, %v4692
    %v5218 = vpack.c.b16 %v4700, %v4693
    %v5219 = vpack.c.b16 %v4701, %v4694
    %v5220 = vpack.c.b16 %v4702, %v4695
    %v5221 = vpack.c.b16 %v4703, %v4696
    %v5222 = vpack.c.b16 %v4704, %v4697
    %v5223 = vpack.c.b16 %v4712, %v4705
    %v5224 = vpack.c.b16 %v4713, %v4706
    %v5225 = vpack.c.b16 %v4714, %v4707
    %v5226 = vpack.c.b16 %v4715, %v4708
    %v5227 = vpack.c.b16 %v4716, %v4709
    %v5228 = vpack.c.b16 %v4717, %v4710
    %v5229 = vpack.c.b16 %v4718, %v4711
    %v5230 = vpack.c.b16 %v4726, %v4719
    %v5231 = vpack.c.b16 %v4727, %v4720
    %v5232 = vpack.c.b16 %v4728, %v4721
    %v5233 = vpack.c.b16 %v4729, %v4722
    %v5234 = vpack.c.b16 %v4730, %v4723
    %v5235 = vpack.c.b16 %v4731, %v4724
    %v5236 = vpack.c.b16 %v4732, %v4725
    %v5237 = vpack.c.b16 %v4740, %v4733
    %v5238 = vpack.c.b16 %v4741, %v4734
    %v5239 = vpack.c.b16 %v4742, %v4735
    %v5240 = vpack.c.b16 %v4743, %v4736
    %v5241 = vpack.c.b16 %v4744, %v4737
    %v5242 = vpack.c.b16 %v4745, %v4738
    %v5243 = vpack.c.b16 %v4746, %v4739
    %v5244 = vpack.c.b16 %v4754, %v4747
    %v5245 = vpack.c.b16 %v4755, %v4748
    %v5246 = vpack.c.b16 %v4756, %v4749
    %v5247 = vpack.c.b16 %v4757, %v4750
    %v5248 = vpack.c.b16 %v4758, %v4751
    %v5249 = vpack.c.b16 %v4759, %v4752
    %v5250 = vpack.c.b16 %v4760, %v4753
    %v5251 = vpack.c.b16 %v4768, %v4761
    %v5252 = vpack.c.b16 %v4769, %v4762
    %v5253 = vpack.c.b16 %v4770, %v4763
    %v5254 = vpack.c.b16 %v4771, %v4764
    %v5255 = vpack.c.b16 %v4772, %v4765
    %v5256 = vpack.c.b16 %v4773, %v4766
    %v5257 = vpack.c.b16 %v4774, %v4767
    %v5258 = vpack.c.b16 %v4782, %v4775
    %v5259 = vpack.c.b16 %v4783, %v4776
    %v5260 = vpack.c.b16 %v4784, %v4777
    %v5261 = vpack.c.b16 %v4785, %v4778
    %v5262 = vpack.c.b16 %v4786, %v4779
    %v5263 = vpack.c.b16 %v4787, %v4780
    %v5264 = vpack.c.b16 %v4788, %v4781
    %v5265 = vpack.c.b16 %v4796, %v4789
    %v5266 = vpack.c.b16 %v4797, %v4790
    %v5267 = vpack.c.b16 %v4798, %v4791
    %v5268 = vpack.c.b16 %v4799, %v4792
    %v5269 = vpack.c.b16 %v4800, %v4793
    %v5270 = vpack.c.b16 %v4801, %v4794
    %v5271 = vpack.c.b16 %v4802, %v4795
    %v5272 = vpack.c.b16 %v4810, %v4803
    %v5273 = vpack.c.b16 %v4811, %v4804
    %v5274 = vpack.c.b16 %v4812, %v4805
    %v5275 = vpack.c.b16 %v4813, %v4806
    %v5276 = vpack.c.b16 %v4814, %v4807
    %v5277 = vpack.c.b16 %v4815, %v4808
    %v5278 = vpack.c.b16 %v4816, %v4809
    %v5279 = vpack.c.b16 %v4824, %v4817
    %v5280 = vpack.c.b16 %v4825, %v4818
    %v5281 = vpack.c.b16 %v4826, %v4819
    %v5282 = vpack.c.b16 %v4827, %v4820
    %v5283 = vpack.c.b16 %v4828, %v4821
    %v5284 = vpack.c.b16 %v4829, %v4822
    %v5285 = vpack.c.b16 %v4830, %v4823
    %v5286 = vpack.c.b16 %v4838, %v4831
    %v5287 = vpack.c.b16 %v4839, %v4832
    %v5288 = vpack.c.b16 %v4840, %v4833
    %v5289 = vpack.c.b16 %v4841, %v4834
    %v5290 = vpack.c.b16 %v4842, %v4835
    %v5291 = vpack.c.b16 %v4843, %v4836
    %v5292 = vpack.c.b16 %v4844, %v4837
    %5741 = vmatpush.bf16.msra.mxu0 %v4894
    %5742 = vmatpush.bf16.msra.mxu0 %v4887
    %5743 = vmatpush.bf16.msra.mxu0 %v4880
    %5744 = vmatpush.bf16.msra.mxu0 %v4873
    %5745 = vmatpush.bf16.msra.mxu0 %v4866
    %5746 = vmatpush.bf16.msra.mxu0 %v4859
    %5747 = vmatpush.bf16.msra.mxu0 %v4852
    %5748 = vmatpush.bf16.msra.mxu0 %v4845
    %5749 = vmatmul.bf16.gmra.mxu0 %v3414
    %v5750 = vpop.f32.mrf.mxu0
    %v5751 = vadd.f32 %v3423, %v5750
    %v5752 = vpop.f32.mrf.mxu0
    %v5753 = vadd.f32 %v3423, %v5752
    %5754 = vdwg.mxu0
    %5755 = vmatpush.bf16.msra.mxu0 %v4950
    %5756 = vmatpush.bf16.msra.mxu0 %v4943
    %5757 = vmatpush.bf16.msra.mxu0 %v4936
    %5758 = vmatpush.bf16.msra.mxu0 %v4929
    %5759 = vmatpush.bf16.msra.mxu0 %v4922
    %5760 = vmatpush.bf16.msra.mxu0 %v4915
    %5761 = vmatpush.bf16.msra.mxu0 %v4908
    %5762 = vmatpush.bf16.msra.mxu0 %v4901
    %5763 = vmatmul.bf16.gmra.mxu0 %v3415
    %v5764 = vpop.f32.mrf.mxu0
    %v5765 = vadd.f32 %v5751, %v5764
    %v5766 = vpop.f32.mrf.mxu0
    %v5767 = vadd.f32 %v5753, %v5766
    %5768 = vdwg.mxu0
    %5769 = vmatpush.bf16.msra.mxu0 %v5006
    %5770 = vmatpush.bf16.msra.mxu0 %v4999
    %5771 = vmatpush.bf16.msra.mxu0 %v4992
    %5772 = vmatpush.bf16.msra.mxu0 %v4985
    %5773 = vmatpush.bf16.msra.mxu0 %v4978
    %5774 = vmatpush.bf16.msra.mxu0 %v4971
    %5775 = vmatpush.bf16.msra.mxu0 %v4964
    %5776 = vmatpush.bf16.msra.mxu0 %v4957
    %5777 = vmatmul.bf16.gmra.mxu0 %v3416
    %v5778 = vpop.f32.mrf.mxu0
    %v5779 = vadd.f32 %v5765, %v5778
    %v5780 = vpop.f32.mrf.mxu0
    %v5781 = vadd.f32 %v5767, %v5780
    %5782 = vdwg.mxu0
    %5783 = vmatpush.bf16.msra.mxu0 %v5062
    %5784 = vmatpush.bf16.msra.mxu0 %v5055
    %5785 = vmatpush.bf16.msra.mxu0 %v5048
    %5786 = vmatpush.bf16.msra.mxu0 %v5041
    %5787 = vmatpush.bf16.msra.mxu0 %v5034
    %5788 = vmatpush.bf16.msra.mxu0 %v5027
    %5789 = vmatpush.bf16.msra.mxu0 %v5020
    %5790 = vmatpush.bf16.msra.mxu0 %v5013
    %5791 = vmatmul.bf16.gmra.mxu0 %v3417
    %v5792 = vpop.f32.mrf.mxu0
    %v5793 = vadd.f32 %v5779, %v5792
    %v5794 = vpop.f32.mrf.mxu0
    %v5795 = vadd.f32 %v5781, %v5794
    %5796 = vdwg.mxu0
    %5797 = vmatpush.bf16.msra.mxu0 %v5118
    %5798 = vmatpush.bf16.msra.mxu0 %v5111
    %5799 = vmatpush.bf16.msra.mxu0 %v5104
    %5800 = vmatpush.bf16.msra.mxu0 %v5097
    %5801 = vmatpush.bf16.msra.mxu0 %v5090
    %5802 = vmatpush.bf16.msra.mxu0 %v5083
    %5803 = vmatpush.bf16.msra.mxu0 %v5076
    %5804 = vmatpush.bf16.msra.mxu0 %v5069
    %5805 = vmatmul.bf16.gmra.mxu0 %v3418
    %v5806 = vpop.f32.mrf.mxu0
    %v5807 = vadd.f32 %v5793, %v5806
    %v5808 = vpop.f32.mrf.mxu0
    %v5809 = vadd.f32 %v5795, %v5808
    %5810 = vdwg.mxu0
    %5811 = vmatpush.bf16.msra.mxu0 %v5174
    %5812 = vmatpush.bf16.msra.mxu0 %v5167
    %5813 = vmatpush.bf16.msra.mxu0 %v5160
    %5814 = vmatpush.bf16.msra.mxu0 %v5153
    %5815 = vmatpush.bf16.msra.mxu0 %v5146
    %5816 = vmatpush.bf16.msra.mxu0 %v5139
    %5817 = vmatpush.bf16.msra.mxu0 %v5132
    %5818 = vmatpush.bf16.msra.mxu0 %v5125
    %5819 = vmatmul.bf16.gmra.mxu0 %v3419
    %v5820 = vpop.f32.mrf.mxu0
    %v5821 = vadd.f32 %v5807, %v5820
    %v5822 = vpop.f32.mrf.mxu0
    %v5823 = vadd.f32 %v5809, %v5822
    %5824 = vdwg.mxu0
    %5825 = vmatpush.bf16.msra.mxu0 %v5230
    %5826 = vmatpush.bf16.msra.mxu0 %v5223
    %5827 = vmatpush.bf16.msra.mxu0 %v5216
    %5828 = vmatpush.bf16.msra.mxu0 %v5209
    %5829 = vmatpush.bf16.msra.mxu0 %v5202
    %5830 = vmatpush.bf16.msra.mxu0 %v5195
    %5831 = vmatpush.bf16.msra.mxu0 %v5188
    %5832 = vmatpush.bf16.msra.mxu0 %v5181
    %5833 = vmatmul.bf16.gmra.mxu0 %v3420
    %v5834 = vpop.f32.mrf.mxu0
    %v5835 = vadd.f32 %v5821, %v5834
    %v5836 = vpop.f32.mrf.mxu0
    %v5837 = vadd.f32 %v5823, %v5836
    %5838 = vdwg.mxu0
    %5839 = vmatpush.bf16.msra.mxu0 %v5286
    %5840 = vmatpush.bf16.msra.mxu0 %v5279
    %5841 = vmatpush.bf16.msra.mxu0 %v5272
    %5842 = vmatpush.bf16.msra.mxu0 %v5265
    %5843 = vmatpush.bf16.msra.mxu0 %v5258
    %5844 = vmatpush.bf16.msra.mxu0 %v5251
    %5845 = vmatpush.bf16.msra.mxu0 %v5244
    %5846 = vmatpush.bf16.msra.mxu0 %v5237
    %5847 = vmatmul.bf16.gmra.mxu0 %v3421
    %v5848 = vpop.f32.mrf.mxu0
    %v5849 = vadd.f32 %v5835, %v5848
    %v5850 = vpop.f32.mrf.mxu0
    %v5851 = vadd.f32 %v5837, %v5850
    %5852 = vdwg.mxu0
    %5853 = vmatpush.bf16.msra.mxu0 %v4895
    %5854 = vmatpush.bf16.msra.mxu0 %v4888
    %5855 = vmatpush.bf16.msra.mxu0 %v4881
    %5856 = vmatpush.bf16.msra.mxu0 %v4874
    %5857 = vmatpush.bf16.msra.mxu0 %v4867
    %5858 = vmatpush.bf16.msra.mxu0 %v4860
    %5859 = vmatpush.bf16.msra.mxu0 %v4853
    %5860 = vmatpush.bf16.msra.mxu0 %v4846
    %5861 = vmatmul.bf16.gmra.mxu0 %v3414
    %v5862 = vpop.f32.mrf.mxu0
    %v5863 = vadd.f32 %v3424, %v5862
    %v5864 = vpop.f32.mrf.mxu0
    %v5865 = vadd.f32 %v3424, %v5864
    %5866 = vdwg.mxu0
    %5867 = vmatpush.bf16.msra.mxu0 %v4951
    %5868 = vmatpush.bf16.msra.mxu0 %v4944
    %5869 = vmatpush.bf16.msra.mxu0 %v4937
    %5870 = vmatpush.bf16.msra.mxu0 %v4930
    %5871 = vmatpush.bf16.msra.mxu0 %v4923
    %5872 = vmatpush.bf16.msra.mxu0 %v4916
    %5873 = vmatpush.bf16.msra.mxu0 %v4909
    %5874 = vmatpush.bf16.msra.mxu0 %v4902
    %5875 = vmatmul.bf16.gmra.mxu0 %v3415
    %v5876 = vpop.f32.mrf.mxu0
    %v5877 = vadd.f32 %v5863, %v5876
    %v5878 = vpop.f32.mrf.mxu0
    %v5879 = vadd.f32 %v5865, %v5878
    %5880 = vdwg.mxu0
    %5881 = vmatpush.bf16.msra.mxu0 %v5007
    %5882 = vmatpush.bf16.msra.mxu0 %v5000
    %5883 = vmatpush.bf16.msra.mxu0 %v4993
    %5884 = vmatpush.bf16.msra.mxu0 %v4986
    %5885 = vmatpush.bf16.msra.mxu0 %v4979
    %5886 = vmatpush.bf16.msra.mxu0 %v4972
    %5887 = vmatpush.bf16.msra.mxu0 %v4965
    %5888 = vmatpush.bf16.msra.mxu0 %v4958
    %5889 = vmatmul.bf16.gmra.mxu0 %v3416
    %v5890 = vpop.f32.mrf.mxu0
    %v5891 = vadd.f32 %v5877, %v5890
    %v5892 = vpop.f32.mrf.mxu0
    %v5893 = vadd.f32 %v5879, %v5892
    %5894 = vdwg.mxu0
    %5895 = vmatpush.bf16.msra.mxu0 %v5063
    %5896 = vmatpush.bf16.msra.mxu0 %v5056
    %5897 = vmatpush.bf16.msra.mxu0 %v5049
    %5898 = vmatpush.bf16.msra.mxu0 %v5042
    %5899 = vmatpush.bf16.msra.mxu0 %v5035
    %5900 = vmatpush.bf16.msra.mxu0 %v5028
    %5901 = vmatpush.bf16.msra.mxu0 %v5021
    %5902 = vmatpush.bf16.msra.mxu0 %v5014
    %5903 = vmatmul.bf16.gmra.mxu0 %v3417
    %v5904 = vpop.f32.mrf.mxu0
    %v5905 = vadd.f32 %v5891, %v5904
    %v5906 = vpop.f32.mrf.mxu0
    %v5907 = vadd.f32 %v5893, %v5906
    %5908 = vdwg.mxu0
    %5909 = vmatpush.bf16.msra.mxu0 %v5119
    %5910 = vmatpush.bf16.msra.mxu0 %v5112
    %5911 = vmatpush.bf16.msra.mxu0 %v5105
    %5912 = vmatpush.bf16.msra.mxu0 %v5098
    %5913 = vmatpush.bf16.msra.mxu0 %v5091
    %5914 = vmatpush.bf16.msra.mxu0 %v5084
    %5915 = vmatpush.bf16.msra.mxu0 %v5077
    %5916 = vmatpush.bf16.msra.mxu0 %v5070
    %5917 = vmatmul.bf16.gmra.mxu0 %v3418
    %v5918 = vpop.f32.mrf.mxu0
    %v5919 = vadd.f32 %v5905, %v5918
    %v5920 = vpop.f32.mrf.mxu0
    %v5921 = vadd.f32 %v5907, %v5920
    %5922 = vdwg.mxu0
    %5923 = vmatpush.bf16.msra.mxu0 %v5175
    %5924 = vmatpush.bf16.msra.mxu0 %v5168
    %5925 = vmatpush.bf16.msra.mxu0 %v5161
    %5926 = vmatpush.bf16.msra.mxu0 %v5154
    %5927 = vmatpush.bf16.msra.mxu0 %v5147
    %5928 = vmatpush.bf16.msra.mxu0 %v5140
    %5929 = vmatpush.bf16.msra.mxu0 %v5133
    %5930 = vmatpush.bf16.msra.mxu0 %v5126
    %5931 = vmatmul.bf16.gmra.mxu0 %v3419
    %v5932 = vpop.f32.mrf.mxu0
    %v5933 = vadd.f32 %v5919, %v5932
    %v5934 = vpop.f32.mrf.mxu0
    %v5935 = vadd.f32 %v5921, %v5934
    %5936 = vdwg.mxu0
    %5937 = vmatpush.bf16.msra.mxu0 %v5231
    %5938 = vmatpush.bf16.msra.mxu0 %v5224
    %5939 = vmatpush.bf16.msra.mxu0 %v5217
    %5940 = vmatpush.bf16.msra.mxu0 %v5210
    %5941 = vmatpush.bf16.msra.mxu0 %v5203
    %5942 = vmatpush.bf16.msra.mxu0 %v5196
    %5943 = vmatpush.bf16.msra.mxu0 %v5189
    %5944 = vmatpush.bf16.msra.mxu0 %v5182
    %5945 = vmatmul.bf16.gmra.mxu0 %v3420
    %v5946 = vpop.f32.mrf.mxu0
    %v5947 = vadd.f32 %v5933, %v5946
    %v5948 = vpop.f32.mrf.mxu0
    %v5949 = vadd.f32 %v5935, %v5948
    %5950 = vdwg.mxu0
    %5951 = vmatpush.bf16.msra.mxu0 %v5287
    %5952 = vmatpush.bf16.msra.mxu0 %v5280
    %5953 = vmatpush.bf16.msra.mxu0 %v5273
    %5954 = vmatpush.bf16.msra.mxu0 %v5266
    %5955 = vmatpush.bf16.msra.mxu0 %v5259
    %5956 = vmatpush.bf16.msra.mxu0 %v5252
    %5957 = vmatpush.bf16.msra.mxu0 %v5245
    %5958 = vmatpush.bf16.msra.mxu0 %v5238
    %5959 = vmatmul.bf16.gmra.mxu0 %v3421
    %v5960 = vpop.f32.mrf.mxu0
    %v5961 = vadd.f32 %v5947, %v5960
    %v5962 = vpop.f32.mrf.mxu0
    %v5963 = vadd.f32 %v5949, %v5962
    %5964 = vdwg.mxu0
    %5965 = vmatpush.bf16.msra.mxu0 %v4896
    %5966 = vmatpush.bf16.msra.mxu0 %v4889
    %5967 = vmatpush.bf16.msra.mxu0 %v4882
    %5968 = vmatpush.bf16.msra.mxu0 %v4875
    %5969 = vmatpush.bf16.msra.mxu0 %v4868
    %5970 = vmatpush.bf16.msra.mxu0 %v4861
    %5971 = vmatpush.bf16.msra.mxu0 %v4854
    %5972 = vmatpush.bf16.msra.mxu0 %v4847
    %5973 = vmatmul.bf16.gmra.mxu0 %v3414
    %v5974 = vpop.f32.mrf.mxu0
    %v5975 = vadd.f32 %v3425, %v5974
    %v5976 = vpop.f32.mrf.mxu0
    %v5977 = vadd.f32 %v3425, %v5976
    %5978 = vdwg.mxu0
    %5979 = vmatpush.bf16.msra.mxu0 %v4952
    %5980 = vmatpush.bf16.msra.mxu0 %v4945
    %5981 = vmatpush.bf16.msra.mxu0 %v4938
    %5982 = vmatpush.bf16.msra.mxu0 %v4931
    %5983 = vmatpush.bf16.msra.mxu0 %v4924
    %5984 = vmatpush.bf16.msra.mxu0 %v4917
    %5985 = vmatpush.bf16.msra.mxu0 %v4910
    %5986 = vmatpush.bf16.msra.mxu0 %v4903
    %5987 = vmatmul.bf16.gmra.mxu0 %v3415
    %v5988 = vpop.f32.mrf.mxu0
    %v5989 = vadd.f32 %v5975, %v5988
    %v5990 = vpop.f32.mrf.mxu0
    %v5991 = vadd.f32 %v5977, %v5990
    %5992 = vdwg.mxu0
    %5993 = vmatpush.bf16.msra.mxu0 %v5008
    %5994 = vmatpush.bf16.msra.mxu0 %v5001
    %5995 = vmatpush.bf16.msra.mxu0 %v4994
    %5996 = vmatpush.bf16.msra.mxu0 %v4987
    %5997 = vmatpush.bf16.msra.mxu0 %v4980
    %5998 = vmatpush.bf16.msra.mxu0 %v4973
    %5999 = vmatpush.bf16.msra.mxu0 %v4966
    %6000 = vmatpush.bf16.msra.mxu0 %v4959
    %6001 = vmatmul.bf16.gmra.mxu0 %v3416
    %v6002 = vpop.f32.mrf.mxu0
    %v6003 = vadd.f32 %v5989, %v6002
    %v6004 = vpop.f32.mrf.mxu0
    %v6005 = vadd.f32 %v5991, %v6004
    %6006 = vdwg.mxu0
    %6007 = vmatpush.bf16.msra.mxu0 %v5064
    %6008 = vmatpush.bf16.msra.mxu0 %v5057
    %6009 = vmatpush.bf16.msra.mxu0 %v5050
    %6010 = vmatpush.bf16.msra.mxu0 %v5043
    %6011 = vmatpush.bf16.msra.mxu0 %v5036
    %6012 = vmatpush.bf16.msra.mxu0 %v5029
    %6013 = vmatpush.bf16.msra.mxu0 %v5022
    %6014 = vmatpush.bf16.msra.mxu0 %v5015
    %6015 = vmatmul.bf16.gmra.mxu0 %v3417
    %v6016 = vpop.f32.mrf.mxu0
    %v6017 = vadd.f32 %v6003, %v6016
    %v6018 = vpop.f32.mrf.mxu0
    %v6019 = vadd.f32 %v6005, %v6018
    %6020 = vdwg.mxu0
    %6021 = vmatpush.bf16.msra.mxu0 %v5120
    %6022 = vmatpush.bf16.msra.mxu0 %v5113
    %6023 = vmatpush.bf16.msra.mxu0 %v5106
    %6024 = vmatpush.bf16.msra.mxu0 %v5099
    %6025 = vmatpush.bf16.msra.mxu0 %v5092
    %6026 = vmatpush.bf16.msra.mxu0 %v5085
    %6027 = vmatpush.bf16.msra.mxu0 %v5078
    %6028 = vmatpush.bf16.msra.mxu0 %v5071
    %6029 = vmatmul.bf16.gmra.mxu0 %v3418
    %v6030 = vpop.f32.mrf.mxu0
    %v6031 = vadd.f32 %v6017, %v6030
    %v6032 = vpop.f32.mrf.mxu0
    %v6033 = vadd.f32 %v6019, %v6032
    %6034 = vdwg.mxu0
    %6035 = vmatpush.bf16.msra.mxu0 %v5176
    %6036 = vmatpush.bf16.msra.mxu0 %v5169
    %6037 = vmatpush.bf16.msra.mxu0 %v5162
    %6038 = vmatpush.bf16.msra.mxu0 %v5155
    %6039 = vmatpush.bf16.msra.mxu0 %v5148
    %6040 = vmatpush.bf16.msra.mxu0 %v5141
    %6041 = vmatpush.bf16.msra.mxu0 %v5134
    %6042 = vmatpush.bf16.msra.mxu0 %v5127
    %6043 = vmatmul.bf16.gmra.mxu0 %v3419
    %v6044 = vpop.f32.mrf.mxu0
    %v6045 = vadd.f32 %v6031, %v6044
    %v6046 = vpop.f32.mrf.mxu0
    %v6047 = vadd.f32 %v6033, %v6046
    %6048 = vdwg.mxu0
    %6049 = vmatpush.bf16.msra.mxu0 %v5232
    %6050 = vmatpush.bf16.msra.mxu0 %v5225
    %6051 = vmatpush.bf16.msra.mxu0 %v5218
    %6052 = vmatpush.bf16.msra.mxu0 %v5211
    %6053 = vmatpush.bf16.msra.mxu0 %v5204
    %6054 = vmatpush.bf16.msra.mxu0 %v5197
    %6055 = vmatpush.bf16.msra.mxu0 %v5190
    %6056 = vmatpush.bf16.msra.mxu0 %v5183
    %6057 = vmatmul.bf16.gmra.mxu0 %v3420
    %v6058 = vpop.f32.mrf.mxu0
    %v6059 = vadd.f32 %v6045, %v6058
    %v6060 = vpop.f32.mrf.mxu0
    %v6061 = vadd.f32 %v6047, %v6060
    %6062 = vdwg.mxu0
    %6063 = vmatpush.bf16.msra.mxu0 %v5288
    %6064 = vmatpush.bf16.msra.mxu0 %v5281
    %6065 = vmatpush.bf16.msra.mxu0 %v5274
    %6066 = vmatpush.bf16.msra.mxu0 %v5267
    %6067 = vmatpush.bf16.msra.mxu0 %v5260
    %6068 = vmatpush.bf16.msra.mxu0 %v5253
    %6069 = vmatpush.bf16.msra.mxu0 %v5246
    %6070 = vmatpush.bf16.msra.mxu0 %v5239
    %6071 = vmatmul.bf16.gmra.mxu0 %v3421
    %v6072 = vpop.f32.mrf.mxu0
    %v6073 = vadd.f32 %v6059, %v6072
    %v6074 = vpop.f32.mrf.mxu0
    %v6075 = vadd.f32 %v6061, %v6074
    %6076 = vdwg.mxu0
    %6077 = vmatpush.bf16.msra.mxu0 %v4897
    %6078 = vmatpush.bf16.msra.mxu0 %v4890
    %6079 = vmatpush.bf16.msra.mxu0 %v4883
    %6080 = vmatpush.bf16.msra.mxu0 %v4876
    %6081 = vmatpush.bf16.msra.mxu0 %v4869
    %6082 = vmatpush.bf16.msra.mxu0 %v4862
    %6083 = vmatpush.bf16.msra.mxu0 %v4855
    %6084 = vmatpush.bf16.msra.mxu0 %v4848
    %6085 = vmatmul.bf16.gmra.mxu0 %v3414
    %v6086 = vpop.f32.mrf.mxu0
    %v6087 = vadd.f32 %v3426, %v6086
    %v6088 = vpop.f32.mrf.mxu0
    %v6089 = vadd.f32 %v3426, %v6088
    %6090 = vdwg.mxu0
    %6091 = vmatpush.bf16.msra.mxu0 %v4953
    %6092 = vmatpush.bf16.msra.mxu0 %v4946
    %6093 = vmatpush.bf16.msra.mxu0 %v4939
    %6094 = vmatpush.bf16.msra.mxu0 %v4932
    %6095 = vmatpush.bf16.msra.mxu0 %v4925
    %6096 = vmatpush.bf16.msra.mxu0 %v4918
    %6097 = vmatpush.bf16.msra.mxu0 %v4911
    %6098 = vmatpush.bf16.msra.mxu0 %v4904
    %6099 = vmatmul.bf16.gmra.mxu0 %v3415
    %v6100 = vpop.f32.mrf.mxu0
    %v6101 = vadd.f32 %v6087, %v6100
    %v6102 = vpop.f32.mrf.mxu0
    %v6103 = vadd.f32 %v6089, %v6102
    %6104 = vdwg.mxu0
    %6105 = vmatpush.bf16.msra.mxu0 %v5009
    %6106 = vmatpush.bf16.msra.mxu0 %v5002
    %6107 = vmatpush.bf16.msra.mxu0 %v4995
    %6108 = vmatpush.bf16.msra.mxu0 %v4988
    %6109 = vmatpush.bf16.msra.mxu0 %v4981
    %6110 = vmatpush.bf16.msra.mxu0 %v4974
    %6111 = vmatpush.bf16.msra.mxu0 %v4967
    %6112 = vmatpush.bf16.msra.mxu0 %v4960
    %6113 = vmatmul.bf16.gmra.mxu0 %v3416
    %v6114 = vpop.f32.mrf.mxu0
    %v6115 = vadd.f32 %v6101, %v6114
    %v6116 = vpop.f32.mrf.mxu0
    %v6117 = vadd.f32 %v6103, %v6116
    %6118 = vdwg.mxu0
    %6119 = vmatpush.bf16.msra.mxu0 %v5065
    %6120 = vmatpush.bf16.msra.mxu0 %v5058
    %6121 = vmatpush.bf16.msra.mxu0 %v5051
    %6122 = vmatpush.bf16.msra.mxu0 %v5044
    %6123 = vmatpush.bf16.msra.mxu0 %v5037
    %6124 = vmatpush.bf16.msra.mxu0 %v5030
    %6125 = vmatpush.bf16.msra.mxu0 %v5023
    %6126 = vmatpush.bf16.msra.mxu0 %v5016
    %6127 = vmatmul.bf16.gmra.mxu0 %v3417
    %v6128 = vpop.f32.mrf.mxu0
    %v6129 = vadd.f32 %v6115, %v6128
    %v6130 = vpop.f32.mrf.mxu0
    %v6131 = vadd.f32 %v6117, %v6130
    %6132 = vdwg.mxu0
    %6133 = vmatpush.bf16.msra.mxu0 %v5121
    %6134 = vmatpush.bf16.msra.mxu0 %v5114
    %6135 = vmatpush.bf16.msra.mxu0 %v5107
    %6136 = vmatpush.bf16.msra.mxu0 %v5100
    %6137 = vmatpush.bf16.msra.mxu0 %v5093
    %6138 = vmatpush.bf16.msra.mxu0 %v5086
    %6139 = vmatpush.bf16.msra.mxu0 %v5079
    %6140 = vmatpush.bf16.msra.mxu0 %v5072
    %6141 = vmatmul.bf16.gmra.mxu0 %v3418
    %v6142 = vpop.f32.mrf.mxu0
    %v6143 = vadd.f32 %v6129, %v6142
    %v6144 = vpop.f32.mrf.mxu0
    %v6145 = vadd.f32 %v6131, %v6144
    %6146 = vdwg.mxu0
    %6147 = vmatpush.bf16.msra.mxu0 %v5177
    %6148 = vmatpush.bf16.msra.mxu0 %v5170
    %6149 = vmatpush.bf16.msra.mxu0 %v5163
    %6150 = vmatpush.bf16.msra.mxu0 %v5156
    %6151 = vmatpush.bf16.msra.mxu0 %v5149
    %6152 = vmatpush.bf16.msra.mxu0 %v5142
    %6153 = vmatpush.bf16.msra.mxu0 %v5135
    %6154 = vmatpush.bf16.msra.mxu0 %v5128
    %6155 = vmatmul.bf16.gmra.mxu0 %v3419
    %v6156 = vpop.f32.mrf.mxu0
    %v6157 = vadd.f32 %v6143, %v6156
    %v6158 = vpop.f32.mrf.mxu0
    %v6159 = vadd.f32 %v6145, %v6158
    %6160 = vdwg.mxu0
    %6161 = vmatpush.bf16.msra.mxu0 %v5233
    %6162 = vmatpush.bf16.msra.mxu0 %v5226
    %6163 = vmatpush.bf16.msra.mxu0 %v5219
    %6164 = vmatpush.bf16.msra.mxu0 %v5212
    %6165 = vmatpush.bf16.msra.mxu0 %v5205
    %6166 = vmatpush.bf16.msra.mxu0 %v5198
    %6167 = vmatpush.bf16.msra.mxu0 %v5191
    %6168 = vmatpush.bf16.msra.mxu0 %v5184
    %6169 = vmatmul.bf16.gmra.mxu0 %v3420
    %v6170 = vpop.f32.mrf.mxu0
    %v6171 = vadd.f32 %v6157, %v6170
    %v6172 = vpop.f32.mrf.mxu0
    %v6173 = vadd.f32 %v6159, %v6172
    %6174 = vdwg.mxu0
    %6175 = vmatpush.bf16.msra.mxu0 %v5289
    %6176 = vmatpush.bf16.msra.mxu0 %v5282
    %6177 = vmatpush.bf16.msra.mxu0 %v5275
    %6178 = vmatpush.bf16.msra.mxu0 %v5268
    %6179 = vmatpush.bf16.msra.mxu0 %v5261
    %6180 = vmatpush.bf16.msra.mxu0 %v5254
    %6181 = vmatpush.bf16.msra.mxu0 %v5247
    %6182 = vmatpush.bf16.msra.mxu0 %v5240
    %6183 = vmatmul.bf16.gmra.mxu0 %v3421
    %v6184 = vpop.f32.mrf.mxu0
    %v6185 = vadd.f32 %v6171, %v6184
    %v6186 = vpop.f32.mrf.mxu0
    %v6187 = vadd.f32 %v6173, %v6186
    %6188 = vdwg.mxu0
    %6189 = vmatpush.bf16.msra.mxu0 %v4898
    %6190 = vmatpush.bf16.msra.mxu0 %v4891
    %6191 = vmatpush.bf16.msra.mxu0 %v4884
    %6192 = vmatpush.bf16.msra.mxu0 %v4877
    %6193 = vmatpush.bf16.msra.mxu0 %v4870
    %6194 = vmatpush.bf16.msra.mxu0 %v4863
    %6195 = vmatpush.bf16.msra.mxu0 %v4856
    %6196 = vmatpush.bf16.msra.mxu0 %v4849
    %6197 = vmatmul.bf16.gmra.mxu0 %v3414
    %v6198 = vpop.f32.mrf.mxu0
    %v6199 = vadd.f32 %v3427, %v6198
    %v6200 = vpop.f32.mrf.mxu0
    %v6201 = vadd.f32 %v3427, %v6200
    %6202 = vdwg.mxu0
    %6203 = vmatpush.bf16.msra.mxu0 %v4954
    %6204 = vmatpush.bf16.msra.mxu0 %v4947
    %6205 = vmatpush.bf16.msra.mxu0 %v4940
    %6206 = vmatpush.bf16.msra.mxu0 %v4933
    %6207 = vmatpush.bf16.msra.mxu0 %v4926
    %6208 = vmatpush.bf16.msra.mxu0 %v4919
    %6209 = vmatpush.bf16.msra.mxu0 %v4912
    %6210 = vmatpush.bf16.msra.mxu0 %v4905
    %6211 = vmatmul.bf16.gmra.mxu0 %v3415
    %v6212 = vpop.f32.mrf.mxu0
    %v6213 = vadd.f32 %v6199, %v6212
    %v6214 = vpop.f32.mrf.mxu0
    %v6215 = vadd.f32 %v6201, %v6214
    %6216 = vdwg.mxu0
    %6217 = vmatpush.bf16.msra.mxu0 %v5010
    %6218 = vmatpush.bf16.msra.mxu0 %v5003
    %6219 = vmatpush.bf16.msra.mxu0 %v4996
    %6220 = vmatpush.bf16.msra.mxu0 %v4989
    %6221 = vmatpush.bf16.msra.mxu0 %v4982
    %6222 = vmatpush.bf16.msra.mxu0 %v4975
    %6223 = vmatpush.bf16.msra.mxu0 %v4968
    %6224 = vmatpush.bf16.msra.mxu0 %v4961
    %6225 = vmatmul.bf16.gmra.mxu0 %v3416
    %v6226 = vpop.f32.mrf.mxu0
    %v6227 = vadd.f32 %v6213, %v6226
    %v6228 = vpop.f32.mrf.mxu0
    %v6229 = vadd.f32 %v6215, %v6228
    %6230 = vdwg.mxu0
    %6231 = vmatpush.bf16.msra.mxu0 %v5066
    %6232 = vmatpush.bf16.msra.mxu0 %v5059
    %6233 = vmatpush.bf16.msra.mxu0 %v5052
    %6234 = vmatpush.bf16.msra.mxu0 %v5045
    %6235 = vmatpush.bf16.msra.mxu0 %v5038
    %6236 = vmatpush.bf16.msra.mxu0 %v5031
    %6237 = vmatpush.bf16.msra.mxu0 %v5024
    %6238 = vmatpush.bf16.msra.mxu0 %v5017
    %6239 = vmatmul.bf16.gmra.mxu0 %v3417
    %v6240 = vpop.f32.mrf.mxu0
    %v6241 = vadd.f32 %v6227, %v6240
    %v6242 = vpop.f32.mrf.mxu0
    %v6243 = vadd.f32 %v6229, %v6242
    %6244 = vdwg.mxu0
    %6245 = vmatpush.bf16.msra.mxu0 %v5122
    %6246 = vmatpush.bf16.msra.mxu0 %v5115
    %6247 = vmatpush.bf16.msra.mxu0 %v5108
    %6248 = vmatpush.bf16.msra.mxu0 %v5101
    %6249 = vmatpush.bf16.msra.mxu0 %v5094
    %6250 = vmatpush.bf16.msra.mxu0 %v5087
    %6251 = vmatpush.bf16.msra.mxu0 %v5080
    %6252 = vmatpush.bf16.msra.mxu0 %v5073
    %6253 = vmatmul.bf16.gmra.mxu0 %v3418
    %v6254 = vpop.f32.mrf.mxu0
    %v6255 = vadd.f32 %v6241, %v6254
    %v6256 = vpop.f32.mrf.mxu0
    %v6257 = vadd.f32 %v6243, %v6256
    %6258 = vdwg.mxu0
    %6259 = vmatpush.bf16.msra.mxu0 %v5178
    %6260 = vmatpush.bf16.msra.mxu0 %v5171
    %6261 = vmatpush.bf16.msra.mxu0 %v5164
    %6262 = vmatpush.bf16.msra.mxu0 %v5157
    %6263 = vmatpush.bf16.msra.mxu0 %v5150
    %6264 = vmatpush.bf16.msra.mxu0 %v5143
    %6265 = vmatpush.bf16.msra.mxu0 %v5136
    %6266 = vmatpush.bf16.msra.mxu0 %v5129
    %6267 = vmatmul.bf16.gmra.mxu0 %v3419
    %v6268 = vpop.f32.mrf.mxu0
    %v6269 = vadd.f32 %v6255, %v6268
    %v6270 = vpop.f32.mrf.mxu0
    %v6271 = vadd.f32 %v6257, %v6270
    %6272 = vdwg.mxu0
    %6273 = vmatpush.bf16.msra.mxu0 %v5234
    %6274 = vmatpush.bf16.msra.mxu0 %v5227
    %6275 = vmatpush.bf16.msra.mxu0 %v5220
    %6276 = vmatpush.bf16.msra.mxu0 %v5213
    %6277 = vmatpush.bf16.msra.mxu0 %v5206
    %6278 = vmatpush.bf16.msra.mxu0 %v5199
    %6279 = vmatpush.bf16.msra.mxu0 %v5192
    %6280 = vmatpush.bf16.msra.mxu0 %v5185
    %6281 = vmatmul.bf16.gmra.mxu0 %v3420
    %v6282 = vpop.f32.mrf.mxu0
    %v6283 = vadd.f32 %v6269, %v6282
    %v6284 = vpop.f32.mrf.mxu0
    %v6285 = vadd.f32 %v6271, %v6284
    %6286 = vdwg.mxu0
    %6287 = vmatpush.bf16.msra.mxu0 %v5290
    %6288 = vmatpush.bf16.msra.mxu0 %v5283
    %6289 = vmatpush.bf16.msra.mxu0 %v5276
    %6290 = vmatpush.bf16.msra.mxu0 %v5269
    %6291 = vmatpush.bf16.msra.mxu0 %v5262
    %6292 = vmatpush.bf16.msra.mxu0 %v5255
    %6293 = vmatpush.bf16.msra.mxu0 %v5248
    %6294 = vmatpush.bf16.msra.mxu0 %v5241
    %6295 = vmatmul.bf16.gmra.mxu0 %v3421
    %v6296 = vpop.f32.mrf.mxu0
    %v6297 = vadd.f32 %v6283, %v6296
    %v6298 = vpop.f32.mrf.mxu0
    %v6299 = vadd.f32 %v6285, %v6298
    %6300 = vdwg.mxu0
    %6301 = vmatpush.bf16.msra.mxu0 %v4899
    %6302 = vmatpush.bf16.msra.mxu0 %v4892
    %6303 = vmatpush.bf16.msra.mxu0 %v4885
    %6304 = vmatpush.bf16.msra.mxu0 %v4878
    %6305 = vmatpush.bf16.msra.mxu0 %v4871
    %6306 = vmatpush.bf16.msra.mxu0 %v4864
    %6307 = vmatpush.bf16.msra.mxu0 %v4857
    %6308 = vmatpush.bf16.msra.mxu0 %v4850
    %6309 = vmatmul.bf16.gmra.mxu0 %v3414
    %v6310 = vpop.f32.mrf.mxu0
    %v6311 = vadd.f32 %v3428, %v6310
    %v6312 = vpop.f32.mrf.mxu0
    %v6313 = vadd.f32 %v3428, %v6312
    %6314 = vdwg.mxu0
    %6315 = vmatpush.bf16.msra.mxu0 %v4955
    %6316 = vmatpush.bf16.msra.mxu0 %v4948
    %6317 = vmatpush.bf16.msra.mxu0 %v4941
    %6318 = vmatpush.bf16.msra.mxu0 %v4934
    %6319 = vmatpush.bf16.msra.mxu0 %v4927
    %6320 = vmatpush.bf16.msra.mxu0 %v4920
    %6321 = vmatpush.bf16.msra.mxu0 %v4913
    %6322 = vmatpush.bf16.msra.mxu0 %v4906
    %6323 = vmatmul.bf16.gmra.mxu0 %v3415
    %v6324 = vpop.f32.mrf.mxu0
    %v6325 = vadd.f32 %v6311, %v6324
    %v6326 = vpop.f32.mrf.mxu0
    %v6327 = vadd.f32 %v6313, %v6326
    %6328 = vdwg.mxu0
    %6329 = vmatpush.bf16.msra.mxu0 %v5011
    %6330 = vmatpush.bf16.msra.mxu0 %v5004
    %6331 = vmatpush.bf16.msra.mxu0 %v4997
    %6332 = vmatpush.bf16.msra.mxu0 %v4990
    %6333 = vmatpush.bf16.msra.mxu0 %v4983
    %6334 = vmatpush.bf16.msra.mxu0 %v4976
    %6335 = vmatpush.bf16.msra.mxu0 %v4969
    %6336 = vmatpush.bf16.msra.mxu0 %v4962
    %6337 = vmatmul.bf16.gmra.mxu0 %v3416
    %v6338 = vpop.f32.mrf.mxu0
    %v6339 = vadd.f32 %v6325, %v6338
    %v6340 = vpop.f32.mrf.mxu0
    %v6341 = vadd.f32 %v6327, %v6340
    %6342 = vdwg.mxu0
    %6343 = vmatpush.bf16.msra.mxu0 %v5067
    %6344 = vmatpush.bf16.msra.mxu0 %v5060
    %6345 = vmatpush.bf16.msra.mxu0 %v5053
    %6346 = vmatpush.bf16.msra.mxu0 %v5046
    %6347 = vmatpush.bf16.msra.mxu0 %v5039
    %6348 = vmatpush.bf16.msra.mxu0 %v5032
    %6349 = vmatpush.bf16.msra.mxu0 %v5025
    %6350 = vmatpush.bf16.msra.mxu0 %v5018
    %6351 = vmatmul.bf16.gmra.mxu0 %v3417
    %v6352 = vpop.f32.mrf.mxu0
    %v6353 = vadd.f32 %v6339, %v6352
    %v6354 = vpop.f32.mrf.mxu0
    %v6355 = vadd.f32 %v6341, %v6354
    %6356 = vdwg.mxu0
    %6357 = vmatpush.bf16.msra.mxu0 %v5123
    %6358 = vmatpush.bf16.msra.mxu0 %v5116
    %6359 = vmatpush.bf16.msra.mxu0 %v5109
    %6360 = vmatpush.bf16.msra.mxu0 %v5102
    %6361 = vmatpush.bf16.msra.mxu0 %v5095
    %6362 = vmatpush.bf16.msra.mxu0 %v5088
    %6363 = vmatpush.bf16.msra.mxu0 %v5081
    %6364 = vmatpush.bf16.msra.mxu0 %v5074
    %6365 = vmatmul.bf16.gmra.mxu0 %v3418
    %v6366 = vpop.f32.mrf.mxu0
    %v6367 = vadd.f32 %v6353, %v6366
    %v6368 = vpop.f32.mrf.mxu0
    %v6369 = vadd.f32 %v6355, %v6368
    %6370 = vdwg.mxu0
    %6371 = vmatpush.bf16.msra.mxu0 %v5179
    %6372 = vmatpush.bf16.msra.mxu0 %v5172
    %6373 = vmatpush.bf16.msra.mxu0 %v5165
    %6374 = vmatpush.bf16.msra.mxu0 %v5158
    %6375 = vmatpush.bf16.msra.mxu0 %v5151
    %6376 = vmatpush.bf16.msra.mxu0 %v5144
    %6377 = vmatpush.bf16.msra.mxu0 %v5137
    %6378 = vmatpush.bf16.msra.mxu0 %v5130
    %6379 = vmatmul.bf16.gmra.mxu0 %v3419
    %v6380 = vpop.f32.mrf.mxu0
    %v6381 = vadd.f32 %v6367, %v6380
    %v6382 = vpop.f32.mrf.mxu0
    %v6383 = vadd.f32 %v6369, %v6382
    %6384 = vdwg.mxu0
    %6385 = vmatpush.bf16.msra.mxu0 %v5235
    %6386 = vmatpush.bf16.msra.mxu0 %v5228
    %6387 = vmatpush.bf16.msra.mxu0 %v5221
    %6388 = vmatpush.bf16.msra.mxu0 %v5214
    %6389 = vmatpush.bf16.msra.mxu0 %v5207
    %6390 = vmatpush.bf16.msra.mxu0 %v5200
    %6391 = vmatpush.bf16.msra.mxu0 %v5193
    %6392 = vmatpush.bf16.msra.mxu0 %v5186
    %6393 = vmatmul.bf16.gmra.mxu0 %v3420
    %v6394 = vpop.f32.mrf.mxu0
    %v6395 = vadd.f32 %v6381, %v6394
    %v6396 = vpop.f32.mrf.mxu0
    %v6397 = vadd.f32 %v6383, %v6396
    %6398 = vdwg.mxu0
    %6399 = vmatpush.bf16.msra.mxu0 %v5291
    %6400 = vmatpush.bf16.msra.mxu0 %v5284
    %6401 = vmatpush.bf16.msra.mxu0 %v5277
    %6402 = vmatpush.bf16.msra.mxu0 %v5270
    %6403 = vmatpush.bf16.msra.mxu0 %v5263
    %6404 = vmatpush.bf16.msra.mxu0 %v5256
    %6405 = vmatpush.bf16.msra.mxu0 %v5249
    %6406 = vmatpush.bf16.msra.mxu0 %v5242
    %6407 = vmatmul.bf16.gmra.mxu0 %v3421
    %v6408 = vpop.f32.mrf.mxu0
    %v6409 = vadd.f32 %v6395, %v6408
    %v6410 = vpop.f32.mrf.mxu0
    %v6411 = vadd.f32 %v6397, %v6410
    %6412 = vdwg.mxu0
    %6413 = vmatpush.bf16.msra.mxu0 %v4900
    %6414 = vmatpush.bf16.msra.mxu0 %v4893
    %6415 = vmatpush.bf16.msra.mxu0 %v4886
    %6416 = vmatpush.bf16.msra.mxu0 %v4879
    %6417 = vmatpush.bf16.msra.mxu0 %v4872
    %6418 = vmatpush.bf16.msra.mxu0 %v4865
    %6419 = vmatpush.bf16.msra.mxu0 %v4858
    %6420 = vmatpush.bf16.msra.mxu0 %v4851
    %6421 = vmatmul.bf16.gmra.mxu0 %v3414
    %v6422 = vpop.f32.mrf.mxu0
    %v6423 = vadd.f32 %v3429, %v6422
    %v6424 = vpop.f32.mrf.mxu0
    %v6425 = vadd.f32 %v3429, %v6424
    %6426 = vdwg.mxu0
    %6427 = vmatpush.bf16.msra.mxu0 %v4956
    %6428 = vmatpush.bf16.msra.mxu0 %v4949
    %6429 = vmatpush.bf16.msra.mxu0 %v4942
    %6430 = vmatpush.bf16.msra.mxu0 %v4935
    %6431 = vmatpush.bf16.msra.mxu0 %v4928
    %6432 = vmatpush.bf16.msra.mxu0 %v4921
    %6433 = vmatpush.bf16.msra.mxu0 %v4914
    %6434 = vmatpush.bf16.msra.mxu0 %v4907
    %6435 = vmatmul.bf16.gmra.mxu0 %v3415
    %v6436 = vpop.f32.mrf.mxu0
    %v6437 = vadd.f32 %v6423, %v6436
    %v6438 = vpop.f32.mrf.mxu0
    %v6439 = vadd.f32 %v6425, %v6438
    %6440 = vdwg.mxu0
    %6441 = vmatpush.bf16.msra.mxu0 %v5012
    %6442 = vmatpush.bf16.msra.mxu0 %v5005
    %6443 = vmatpush.bf16.msra.mxu0 %v4998
    %6444 = vmatpush.bf16.msra.mxu0 %v4991
    %6445 = vmatpush.bf16.msra.mxu0 %v4984
    %6446 = vmatpush.bf16.msra.mxu0 %v4977
    %6447 = vmatpush.bf16.msra.mxu0 %v4970
    %6448 = vmatpush.bf16.msra.mxu0 %v4963
    %6449 = vmatmul.bf16.gmra.mxu0 %v3416
    %v6450 = vpop.f32.mrf.mxu0
    %v6451 = vadd.f32 %v6437, %v6450
    %v6452 = vpop.f32.mrf.mxu0
    %v6453 = vadd.f32 %v6439, %v6452
    %6454 = vdwg.mxu0
    %6455 = vmatpush.bf16.msra.mxu0 %v5068
    %6456 = vmatpush.bf16.msra.mxu0 %v5061
    %6457 = vmatpush.bf16.msra.mxu0 %v5054
    %6458 = vmatpush.bf16.msra.mxu0 %v5047
    %6459 = vmatpush.bf16.msra.mxu0 %v5040
    %6460 = vmatpush.bf16.msra.mxu0 %v5033
    %6461 = vmatpush.bf16.msra.mxu0 %v5026
    %6462 = vmatpush.bf16.msra.mxu0 %v5019
    %6463 = vmatmul.bf16.gmra.mxu0 %v3417
    %v6464 = vpop.f32.mrf.mxu0
    %v6465 = vadd.f32 %v6451, %v6464
    %v6466 = vpop.f32.mrf.mxu0
    %v6467 = vadd.f32 %v6453, %v6466
    %6468 = vdwg.mxu0
    %6469 = vmatpush.bf16.msra.mxu0 %v5124
    %6470 = vmatpush.bf16.msra.mxu0 %v5117
    %6471 = vmatpush.bf16.msra.mxu0 %v5110
    %6472 = vmatpush.bf16.msra.mxu0 %v5103
    %6473 = vmatpush.bf16.msra.mxu0 %v5096
    %6474 = vmatpush.bf16.msra.mxu0 %v5089
    %6475 = vmatpush.bf16.msra.mxu0 %v5082
    %6476 = vmatpush.bf16.msra.mxu0 %v5075
    %6477 = vmatmul.bf16.gmra.mxu0 %v3418
    %v6478 = vpop.f32.mrf.mxu0
    %v6479 = vadd.f32 %v6465, %v6478
    %v6480 = vpop.f32.mrf.mxu0
    %v6481 = vadd.f32 %v6467, %v6480
    %6482 = vdwg.mxu0
    %6483 = vmatpush.bf16.msra.mxu0 %v5180
    %6484 = vmatpush.bf16.msra.mxu0 %v5173
    %6485 = vmatpush.bf16.msra.mxu0 %v5166
    %6486 = vmatpush.bf16.msra.mxu0 %v5159
    %6487 = vmatpush.bf16.msra.mxu0 %v5152
    %6488 = vmatpush.bf16.msra.mxu0 %v5145
    %6489 = vmatpush.bf16.msra.mxu0 %v5138
    %6490 = vmatpush.bf16.msra.mxu0 %v5131
    %6491 = vmatmul.bf16.gmra.mxu0 %v3419
    %v6492 = vpop.f32.mrf.mxu0
    %v6493 = vadd.f32 %v6479, %v6492
    %v6494 = vpop.f32.mrf.mxu0
    %v6495 = vadd.f32 %v6481, %v6494
    %6496 = vdwg.mxu0
    %6497 = vmatpush.bf16.msra.mxu0 %v5236
    %6498 = vmatpush.bf16.msra.mxu0 %v5229
    %6499 = vmatpush.bf16.msra.mxu0 %v5222
    %6500 = vmatpush.bf16.msra.mxu0 %v5215
    %6501 = vmatpush.bf16.msra.mxu0 %v5208
    %6502 = vmatpush.bf16.msra.mxu0 %v5201
    %6503 = vmatpush.bf16.msra.mxu0 %v5194
    %6504 = vmatpush.bf16.msra.mxu0 %v5187
    %6505 = vmatmul.bf16.gmra.mxu0 %v3420
    %v6506 = vpop.f32.mrf.mxu0
    %v6507 = vadd.f32 %v6493, %v6506
    %v6508 = vpop.f32.mrf.mxu0
    %v6509 = vadd.f32 %v6495, %v6508
    %6510 = vdwg.mxu0
    %6511 = vmatpush.bf16.msra.mxu0 %v5292
    %6512 = vmatpush.bf16.msra.mxu0 %v5285
    %6513 = vmatpush.bf16.msra.mxu0 %v5278
    %6514 = vmatpush.bf16.msra.mxu0 %v5271
    %6515 = vmatpush.bf16.msra.mxu0 %v5264
    %6516 = vmatpush.bf16.msra.mxu0 %v5257
    %6517 = vmatpush.bf16.msra.mxu0 %v5250
    %6518 = vmatpush.bf16.msra.mxu0 %v5243
    %6519 = vmatmul.bf16.gmra.mxu0 %v3421
    %v6520 = vpop.f32.mrf.mxu0
    %v6521 = vadd.f32 %v6507, %v6520
    %v6522 = vpop.f32.mrf.mxu0
    %v6523 = vadd.f32 %v6509, %v6522
    %6524 = vdwg.mxu0
    %v6525 = vtanh.pop %v5849
    %v6526 = vtanh.pop %v5961
    %v6527 = vtanh.pop %v6073
    %v6528 = vtanh.pop %v6185
    %v6529 = vtanh.pop %v6297
    %v6530 = vtanh.pop %v6409
    %v6531 = vtanh.pop %v6521
    %v6532 = vtanh.pop %v5851
    %v6533 = vtanh.pop %v5963
    %v6534 = vtanh.pop %v6075
    %v6535 = vtanh.pop %v6187
    %v6536 = vtanh.pop %v6299
    %v6537 = vtanh.pop %v6411
    %v6538 = vtanh.pop %v6523
    %6539 = vst [vmem:[#allocation17] sm:$0xff] %v6525
    %6540 = vst [vmem:[#allocation17 + $0x8] sm:$0xff] %v6526
    %6541 = vst [vmem:[#allocation17 + $0x10] sm:$0xff] %v6527
    %6542 = vst [vmem:[#allocation17 + $0x18] sm:$0xff] %v6528
    %6543 = vst [vmem:[#allocation17 + $0x20] sm:$0xff] %v6529
    %6544 = vst [vmem:[#allocation17 + $0x28] sm:$0xff] %v6530
    %6545 = vst [vmem:[#allocation17 + $0x30] sm:$0xff] %v6531
    %6546 = vst [vmem:[#allocation17 + $0x38] sm:$0xff] %v6532
    %6547 = vst [vmem:[#allocation17 + $0x40] sm:$0xff] %v6533
    %6548 = vst [vmem:[#allocation17 + $0x48] sm:$0xff] %v6534
    %6549 = vst [vmem:[#allocation17 + $0x50] sm:$0xff] %v6535
    %6550 = vst [vmem:[#allocation17 + $0x58] sm:$0xff] %v6536
    %6551 = vst [vmem:[#allocation17 + $0x60] sm:$0xff] %v6537
    %6552 = vst [vmem:[#allocation17 + $0x68] sm:$0xff] %v6538
    // Predicated region
    $region66: #{tpu_custom_call.1} parent=1 // pred_check
      _
    $region67: #{tpu_custom_call.1} parent=1 // pred_check_branch
      %6554 = sbr.rel (0) target = $region69
    $region68: #{tpu_custom_call.1} parent=1 // pred_region
      %6556 = vsyncadd [#allocation7], 0
      %s6557 = sshll.u32 [#allocation17], 4
      %s6558 = int_to_ptr.vmem [resolvable:$true] %s6557
      %s6559 = sshll.u32 %s9, 4
      %s6560 = int_to_ptr.hbm [resolvable:$true] %s6559
      %6565 = dma.vmem_to_hbm [thread:$0]  %s6558, 1792, %s6560, [#allocation7], 896, 896, 56
    $region69: #{tpu_custom_call.1} parent=1 // pred_fallthru
      _
    // Predicated region
    $region70: #{tpu_custom_call.1} parent=1 // pred_check
      _
    $region71: #{tpu_custom_call.1} parent=1 // pred_check_branch
      %6567 = sbr.rel (0) target = $region73
    $region72: #{tpu_custom_call.1} parent=1 // pred_region
      %6569 = dma.done [#allocation7], 1792
    $region73: #{tpu_custom_call.1} parent=1 // pred_fallthru
      _
    %6570 = vsyncpa [#allocation6], 1
    %6571 = vsyncpa [#allocation9], 1
    %6572 = vsyncpa [#allocation12], 1
    %6573 = vsyncpa [#allocation15], 1
    %6574 = vsyncpa [#allocation7], 1
  %6575 = vsyncmov [#allocation4]
  %s6576 = vpop.sfrf %6575
  %p6577 = scmp.eq.s32.totalorder %s6576, 0
  %p6578 = pneg %p6577
  %6580 = shalt.err (%p6578)
  %s6581 = scalar_lea.sflag [#allocation4], 1
  %6582 = vsyncmov %s6581
  %s6583 = vpop.sfrf %6582
  %p6584 = scmp.eq.s32.totalorder %s6583, 0
  %p6585 = pneg %p6584
  %6587 = shalt.err (%p6585)

</llo_original>
